<compile_context>
chip_gen: v7x
topology: tpu7x:2x2x1
jax: 0.10.0
libtpu: 0.0.40
codegen_flags: <defaults>
</compile_context>

<pallas_src>
import functools

import jax
import jax.numpy as jnp
from jax.experimental import pallas as pl
from jax.experimental.pallas import tpu as pltpu

LN_EPS = 1e-5  # PyTorch nn.LayerNorm default


def _vmem_spec():
    return pl.BlockSpec(memory_space=pltpu.MemorySpace.VMEM)


def _layernorm(v, w, b):
    # One-pass: var = E[x^2] - mu^2 (biased, matching nn.LayerNorm); the two
    # cross-lane reductions are independent -> shorter XLU serial chain.
    mu = jnp.mean(v, axis=-1, keepdims=True)
    ms = jnp.mean(v * v, axis=-1, keepdims=True)
    var = ms - mu * mu
    return (v - mu) * jax.lax.rsqrt(var + LN_EPS) * w + b


# ---------------------------------------------------------------------------
# Single fused kernel: streams -> stacks -> fusion block -> pool -> classifier
# ---------------------------------------------------------------------------
def gtn3d_kernel(xc_ref, xr_ref,
                 pw_ref, pb_ref,
                 sln_ref, saw_ref, sab_ref,
                 sfw1_ref, sfb1_ref, sfw2_ref, sfb2_ref,
                 fln_ref, fqw_ref, fqb_ref, fow_ref, fob_ref,
                 ffw1_ref, ffb1_ref, ffw2_ref, ffb2_ref,
                 cw_ref, cb_ref, gate_ref,
                 o_ref, *, num_layers, nhead):
    L = num_layers
    f32 = jnp.float32
    B = xc_ref.shape[0]
    D = pw_ref.shape[-1]

    def dot(a, b):
        return jnp.dot(a, b, preferred_element_type=f32)

    # All gate sigmoids in one EUP op; each use is a (1,1) lane slice.
    gsig = jax.nn.sigmoid(gate_ref[...].astype(f32))            # (1, 3L+1)

    xc = xc_ref[...].astype(f32)
    xr = xr_ref[...].astype(f32)
    stream_inputs = [xc, xr, xc - xr]        # consigne, reponse, difference

    stream_outputs = []
    for s in range(3):                       # static unroll: one program, 3 chains
        x = dot(stream_inputs[s], pw_ref[s]) + pb_ref[s]        # (B, D)
        for i in range(L):                   # static unroll over layers
            # seq == 1 per stream => softmax over a single key == 1, so
            # MultiheadAttention(x,x,x)[0] == out_proj(v_proj(norm(x))) exactly
            # (no mask / positional terms in the torch model; dropout is eval-mode).
            nx1 = _layernorm(x, sln_ref[s, i, 0], sln_ref[s, i, 1])
            a1 = dot(dot(nx1, saw_ref[s, i, 0]) + sab_ref[s, i, 0],
                     saw_ref[s, i, 1]) + sab_ref[s, i, 1]
            nx2 = _layernorm(x, sln_ref[s, i, 2], sln_ref[s, i, 3])
            a2 = dot(dot(nx2, saw_ref[s, i, 2]) + sab_ref[s, i, 2],
                     saw_ref[s, i, 3]) + sab_ref[s, i, 3]
            g = gsig[:, s * L + i: s * L + i + 1]               # (1, 1)
            x = x + g * a1 + (1.0 - g) * a2
            # feed-forward on norm2 of the UPDATED residual (exactly as in torch)
            nxf = _layernorm(x, sln_ref[s, i, 2], sln_ref[s, i, 3])
            h = jnp.maximum(dot(nxf, sfw1_ref[s, i]) + sfb1_ref[s, i], 0.0)
            x = x + dot(h, sfw2_ref[s, i]) + sfb2_ref[s, i]
        stream_outputs.append(x)

    # torch.cat(dim=1) of the three seq-1 streams -> (B, 3, D), stays in VMEM.
    comb = jnp.concatenate([v.reshape(B, 1, D) for v in stream_outputs], axis=1)
    S = 3
    hd = D // nhead
    scale = 1.0 / float(hd) ** 0.5

    def mha(xn, a):
        # Full-width (D,D) q/k/v/out projections (lane-dense, 4 MXU pushes per MHA);
        # only the tiny per-head softmax/context contractions are unrolled by head.
        x2 = xn.reshape(B * S, D)
        q = (dot(x2, fqw_ref[a, 0]) + fqb_ref[a, 0]).reshape(B, S, D) * scale
        k = (dot(x2, fqw_ref[a, 1]) + fqb_ref[a, 1]).reshape(B, S, D)
        v = (dot(x2, fqw_ref[a, 2]) + fqb_ref[a, 2]).reshape(B, S, D)
        ctx = []
        for h in range(nhead):               # static unroll (nhead small)
            lo, hi = h * hd, (h + 1) * hd
            qh, kh, vh = q[:, :, lo:hi], k[:, :, lo:hi], v[:, :, lo:hi]
            sc = jnp.einsum('bqd,bkd->bqk', qh, kh, preferred_element_type=f32)
            sc = sc - jnp.max(sc, axis=-1, keepdims=True)
            p = jnp.exp(sc)
            p = p * pl.reciprocal(jnp.sum(p, axis=-1, keepdims=True), approx=False)
            ctx.append(jnp.einsum('bqk,bkd->bqd', p, vh, preferred_element_type=f32))
        ctx = jnp.concatenate(ctx, axis=-1).reshape(B * S, D)
        return (dot(ctx, fow_ref[a]) + fob_ref[a]).reshape(B, S, D)

    nx1 = _layernorm(comb, fln_ref[0], fln_ref[1])
    a1 = mha(nx1, 0)
    nx2 = _layernorm(comb, fln_ref[2], fln_ref[3])
    a2 = mha(nx2, 1)
    g = gsig[:, 3 * L: 3 * L + 1]                                # (1, 1)
    xf = comb + g * a1 + (1.0 - g) * a2

    nxf = _layernorm(xf, fln_ref[2], fln_ref[3]).reshape(B * S, D)
    h = jnp.maximum(dot(nxf, ffw1_ref[...]) + ffb1_ref[...], 0.0)
    xf = xf + (dot(h, ffw2_ref[...]) + ffb2_ref[...]).reshape(B, S, D)

    # AdaptiveAvgPool1d(1) over seq (after the torch transpose(1,2)) + classifier.
    pooled = jnp.mean(xf, axis=1)                                # (B, D)
    o_ref[...] = (dot(pooled, cw_ref[...]) + cb_ref[...]).astype(o_ref.dtype)


# ---------------------------------------------------------------------------
# Wrapper: exactly ONE pallas_call, no auxiliary XLA ops.
# ---------------------------------------------------------------------------
def gtn3d_forward(params, x_consigne, x_reponse, *, nhead, num_layers):
    B = x_consigne.shape[0]
    C = params['cls_w'].shape[-1]
    args = (x_consigne, x_reponse,
            params['proj_w'], params['proj_b'],
            params['s_ln'], params['s_attn_w'], params['s_attn_b'],
            params['s_ff_w1'], params['s_ff_b1'],
            params['s_ff_w2'], params['s_ff_b2'],
            params['f_ln'], params['f_qkv_w'], params['f_qkv_b'],
            params['f_out_w'], params['f_out_b'],
            params['f_ff_w1'], params['f_ff_b1'],
            params['f_ff_w2'], params['f_ff_b2'],
            params['cls_w'], params['cls_b'], params['gates'])
    return pl.pallas_call(
        functools.partial(gtn3d_kernel, num_layers=num_layers, nhead=nhead),
        out_shape=jax.ShapeDtypeStruct((B, C), jnp.float32),
        in_specs=[_vmem_spec() for _ in args],
        out_specs=_vmem_spec(),
        compiler_params=pltpu.CompilerParams(vmem_limit_bytes=32 * 1024 * 1024),
    )(*args)


# ---------------------------------------------------------------------------
# Deterministic synthetic parameters (shapes mirror the PyTorch module, stored
# in kernel-ready packed layouts).
# ---------------------------------------------------------------------------
def init_params(key, consigne_dim, model_dim, num_classes, nhead, num_layers):
    d, L = model_dim, num_layers
    keys = iter(jax.random.split(key, 16))

    def w(shape):
        return jax.random.normal(next(keys), shape, jnp.float32) * 0.02

    def z(shape):
        return jnp.zeros(shape, jnp.float32)

    def o(shape):
        return jnp.ones(shape, jnp.float32)

    # LayerNorm params packed as [n1_w, n1_b, n2_w, n2_b]
    s_ln = jnp.stack([o((3, L, 1, d)), z((3, L, 1, d)),
                      o((3, L, 1, d)), z((3, L, 1, d))], axis=2)   # (3, L, 4, 1, d)
    f_ln = jnp.stack([o((1, d)), z((1, d)), o((1, d)), z((1, d))], axis=0)  # (4, 1, d)

    return {
        # consigne / reponse / difference input projections (stream axis leading)
        'proj_w': w((3, consigne_dim, d)),
        'proj_b': z((3, 1, d)),
        # Stream GatedTransformerBlocks: since seq==1, only V and output
        # projections of each MultiheadAttention are mathematically used.
        's_ln': s_ln,
        's_attn_w': w((3, L, 4, d, d)),      # [attn1_V, attn1_O, attn2_V, attn2_O]
        's_attn_b': z((3, L, 4, 1, d)),
        's_ff_w1': w((3, L, d, 4 * d)),
        's_ff_b1': z((3, L, 1, 4 * d)),
        's_ff_w2': w((3, L, 4 * d, d)),
        's_ff_b2': z((3, L, 1, d)),
        # Fusion block (seq=3): full-width q/k/v/out projection weights.
        'f_ln': f_ln,
        'f_qkv_w': w((2, 3, d, d)),          # [attn1, attn2] x [q, k, v]
        'f_qkv_b': z((2, 3, 1, d)),
        'f_out_w': w((2, d, d)),
        'f_out_b': z((2, 1, d)),
        'f_ff_w1': w((d, 4 * d)),
        'f_ff_b1': z((1, 4 * d)),
        'f_ff_w2': w((4 * d, d)),
        'f_ff_b2': z((1, d)),
        'cls_w': w((d, num_classes)),
        'cls_b': z((1, num_classes)),
        # raw gates (nn.Parameter(torch.zeros(1)) per block): 3*L stream + 1 fusion
        'gates': z((1, 3 * L + 1)),
    }


if __name__ == "__main__":
    B = 2
    consigne_dim = reponse_dim = 16
    model_dim = 32
    num_classes = 5
    nhead = 4
    num_layers = 2

    key = jax.random.PRNGKey(0)
    kp, kc, kr = jax.random.split(key, 3)
    params = init_params(kp, consigne_dim, model_dim, num_classes, nhead, num_layers)

    x_consigne = jax.random.normal(kc, (B, consigne_dim), jnp.float32)
    x_reponse = jax.random.normal(kr, (B, reponse_dim), jnp.float32)

    fwd = jax.jit(functools.partial(gtn3d_forward, nhead=nhead,
                                    num_layers=num_layers))
    out = jax.block_until_ready(fwd(params, x_consigne, x_reponse))

    assert out.shape == (B, num_classes), out.shape
    assert bool(jnp.all(jnp.isfinite(out)))
    # TODO(synk): nn.Dropout layers are identity (eval-mode forward only).
    print("KERNEL_OK")
</pallas_src>

<mosaic_0001>
module attributes {stable_mosaic.version = 11 : i64} {
  func.func @gtn3d_kernel(%arg0: memref<2x16xf32, #tpu.memory_space<vmem>>, %arg1: memref<2x16xf32, #tpu.memory_space<vmem>>, %arg2: memref<3x16x32xf32, #tpu.memory_space<vmem>>, %arg3: memref<3x1x32xf32, #tpu.memory_space<vmem>>, %arg4: memref<3x2x4x1x32xf32, #tpu.memory_space<vmem>>, %arg5: memref<3x2x4x32x32xf32, #tpu.memory_space<vmem>>, %arg6: memref<3x2x4x1x32xf32, #tpu.memory_space<vmem>>, %arg7: memref<3x2x32x128xf32, #tpu.memory_space<vmem>>, %arg8: memref<3x2x1x128xf32, #tpu.memory_space<vmem>>, %arg9: memref<3x2x128x32xf32, #tpu.memory_space<vmem>>, %arg10: memref<3x2x1x32xf32, #tpu.memory_space<vmem>>, %arg11: memref<4x1x32xf32, #tpu.memory_space<vmem>>, %arg12: memref<2x3x32x32xf32, #tpu.memory_space<vmem>>, %arg13: memref<2x3x1x32xf32, #tpu.memory_space<vmem>>, %arg14: memref<2x32x32xf32, #tpu.memory_space<vmem>>, %arg15: memref<2x1x32xf32, #tpu.memory_space<vmem>>, %arg16: memref<32x128xf32, #tpu.memory_space<vmem>>, %arg17: memref<1x128xf32, #tpu.memory_space<vmem>>, %arg18: memref<128x32xf32, #tpu.memory_space<vmem>>, %arg19: memref<1x32xf32, #tpu.memory_space<vmem>>, %arg20: memref<32x5xf32, #tpu.memory_space<vmem>>, %arg21: memref<1x5xf32, #tpu.memory_space<vmem>>, %arg22: memref<1x7xf32, #tpu.memory_space<vmem>>, %arg23: memref<2x5xf32, #tpu.memory_space<vmem>>) attributes {dimension_semantics = [], scalar_prefetch = 0 : i64, scratch_operands = 0 : i64, tpu.core_type = #tpu.core_type<tc>} {
    %c0 = arith.constant 0 : index
    %c0_0 = arith.constant 0 : index
    %0 = vector.load %arg22[%c0, %c0_0] : memref<1x7xf32, #tpu.memory_space<vmem>>, vector<1x7xf32>
    %1 = arith.negf %0 : vector<1x7xf32>
    %2 = math.exp %1 : vector<1x7xf32>
    %cst = arith.constant 1.000000e+00 : f32
    %3 = vector.broadcast %cst : f32 to vector<1x7xf32>
    %4 = arith.addf %3, %2 : vector<1x7xf32>
    %5 = arith.divf %3, %4 : vector<1x7xf32>
    %c0_1 = arith.constant 0 : index
    %c0_2 = arith.constant 0 : index
    %6 = vector.load %arg0[%c0_1, %c0_2] : memref<2x16xf32, #tpu.memory_space<vmem>>, vector<2x16xf32>
    %c0_3 = arith.constant 0 : index
    %c0_4 = arith.constant 0 : index
    %7 = vector.load %arg1[%c0_3, %c0_4] : memref<2x16xf32, #tpu.memory_space<vmem>>, vector<2x16xf32>
    %8 = arith.subf %6, %7 : vector<2x16xf32>
    %c0_5 = arith.constant 0 : index
    %c0_6 = arith.constant 0 : index
    %c0_7 = arith.constant 0 : index
    %9 = vector.load %arg2[%c0_5, %c0_6, %c0_7] : memref<3x16x32xf32, #tpu.memory_space<vmem>>, vector<1x16x32xf32>
    %10 = vector.shape_cast %9 : vector<1x16x32xf32> to vector<16x32xf32>
    %cst_8 = arith.constant dense<0.000000e+00> : vector<2x32xf32>
    %11 = tpu.matmul %6, %10, %cst_8 {dimension_numbers = #tpu.dot_dimension_numbers<[1], [0], [0], [1], [0, 0, 1, 1], [], []>} : vector<2x16xf32>, vector<16x32xf32>, vector<2x32xf32> -> vector<2x32xf32>
    %c0_9 = arith.constant 0 : index
    %c0_10 = arith.constant 0 : index
    %c0_11 = arith.constant 0 : index
    %12 = vector.load %arg3[%c0_9, %c0_10, %c0_11] : memref<3x1x32xf32, #tpu.memory_space<vmem>>, vector<1x1x32xf32>
    %13 = vector.shape_cast %12 : vector<1x1x32xf32> to vector<1x32xf32>
    %14 = vector.broadcast %13 : vector<1x32xf32> to vector<2x32xf32>
    %15 = arith.addf %11, %14 : vector<2x32xf32>
    %c0_12 = arith.constant 0 : index
    %c0_13 = arith.constant 0 : index
    %c0_14 = arith.constant 0 : index
    %c0_15 = arith.constant 0 : index
    %c0_16 = arith.constant 0 : index
    %16 = vector.load %arg4[%c0_12, %c0_13, %c0_14, %c0_15, %c0_16] : memref<3x2x4x1x32xf32, #tpu.memory_space<vmem>>, vector<1x1x1x1x32xf32>
    %17 = vector.shape_cast %16 : vector<1x1x1x1x32xf32> to vector<1x32xf32>
    %c0_17 = arith.constant 0 : index
    %c0_18 = arith.constant 0 : index
    %c1 = arith.constant 1 : index
    %c0_19 = arith.constant 0 : index
    %c0_20 = arith.constant 0 : index
    %18 = vector.load %arg4[%c0_17, %c0_18, %c1, %c0_19, %c0_20] : memref<3x2x4x1x32xf32, #tpu.memory_space<vmem>>, vector<1x1x1x1x32xf32>
    %19 = vector.shape_cast %18 : vector<1x1x1x1x32xf32> to vector<1x32xf32>
    %cst_21 = arith.constant dense<0.000000e+00> : vector<2xf32>
    %20 = vector.multi_reduction <add>, %15, %cst_21 [1] : vector<2x32xf32> to vector<2xf32>
    %21 = vector.shape_cast %20 : vector<2xf32> to vector<2x1xf32>
    %cst_22 = arith.constant 3.200000e+01 : f32
    %22 = vector.broadcast %cst_22 : f32 to vector<2x1xf32>
    %23 = arith.divf %21, %22 : vector<2x1xf32>
    %24 = arith.mulf %15, %15 : vector<2x32xf32>
    %cst_23 = arith.constant dense<0.000000e+00> : vector<2xf32>
    %25 = vector.multi_reduction <add>, %24, %cst_23 [1] : vector<2x32xf32> to vector<2xf32>
    %26 = vector.shape_cast %25 : vector<2xf32> to vector<2x1xf32>
    %cst_24 = arith.constant 3.200000e+01 : f32
    %27 = vector.broadcast %cst_24 : f32 to vector<2x1xf32>
    %28 = arith.divf %26, %27 : vector<2x1xf32>
    %29 = arith.mulf %23, %23 : vector<2x1xf32>
    %30 = arith.subf %28, %29 : vector<2x1xf32>
    %31 = vector.broadcast %23 : vector<2x1xf32> to vector<2x32xf32>
    %32 = arith.subf %15, %31 : vector<2x32xf32>
    %cst_25 = arith.constant 9.99999974E-6 : f32
    %33 = vector.broadcast %cst_25 : f32 to vector<2x1xf32>
    %34 = arith.addf %30, %33 : vector<2x1xf32>
    %35 = math.rsqrt %34 : vector<2x1xf32>
    %36 = vector.broadcast %35 : vector<2x1xf32> to vector<2x32xf32>
    %37 = arith.mulf %32, %36 : vector<2x32xf32>
    %38 = vector.broadcast %17 : vector<1x32xf32> to vector<2x32xf32>
    %39 = arith.mulf %37, %38 : vector<2x32xf32>
    %40 = vector.broadcast %19 : vector<1x32xf32> to vector<2x32xf32>
    %41 = arith.addf %39, %40 : vector<2x32xf32>
    %c0_26 = arith.constant 0 : index
    %c0_27 = arith.constant 0 : index
    %c0_28 = arith.constant 0 : index
    %c0_29 = arith.constant 0 : index
    %c0_30 = arith.constant 0 : index
    %42 = vector.load %arg5[%c0_26, %c0_27, %c0_28, %c0_29, %c0_30] : memref<3x2x4x32x32xf32, #tpu.memory_space<vmem>>, vector<1x1x1x32x32xf32>
    %43 = vector.shape_cast %42 : vector<1x1x1x32x32xf32> to vector<32x32xf32>
    %cst_31 = arith.constant dense<0.000000e+00> : vector<2x32xf32>
    %44 = tpu.matmul %41, %43, %cst_31 {dimension_numbers = #tpu.dot_dimension_numbers<[1], [0], [0], [1], [0, 0, 1, 1], [], []>} : vector<2x32xf32>, vector<32x32xf32>, vector<2x32xf32> -> vector<2x32xf32>
    %c0_32 = arith.constant 0 : index
    %c0_33 = arith.constant 0 : index
    %c0_34 = arith.constant 0 : index
    %c0_35 = arith.constant 0 : index
    %c0_36 = arith.constant 0 : index
    %45 = vector.load %arg6[%c0_32, %c0_33, %c0_34, %c0_35, %c0_36] : memref<3x2x4x1x32xf32, #tpu.memory_space<vmem>>, vector<1x1x1x1x32xf32>
    %46 = vector.shape_cast %45 : vector<1x1x1x1x32xf32> to vector<1x32xf32>
    %47 = vector.broadcast %46 : vector<1x32xf32> to vector<2x32xf32>
    %48 = arith.addf %44, %47 : vector<2x32xf32>
    %c0_37 = arith.constant 0 : index
    %c0_38 = arith.constant 0 : index
    %c1_39 = arith.constant 1 : index
    %c0_40 = arith.constant 0 : index
    %c0_41 = arith.constant 0 : index
    %49 = vector.load %arg5[%c0_37, %c0_38, %c1_39, %c0_40, %c0_41] : memref<3x2x4x32x32xf32, #tpu.memory_space<vmem>>, vector<1x1x1x32x32xf32>
    %50 = vector.shape_cast %49 : vector<1x1x1x32x32xf32> to vector<32x32xf32>
    %cst_42 = arith.constant dense<0.000000e+00> : vector<2x32xf32>
    %51 = tpu.matmul %48, %50, %cst_42 {dimension_numbers = #tpu.dot_dimension_numbers<[1], [0], [0], [1], [0, 0, 1, 1], [], []>} : vector<2x32xf32>, vector<32x32xf32>, vector<2x32xf32> -> vector<2x32xf32>
    %c0_43 = arith.constant 0 : index
    %c0_44 = arith.constant 0 : index
    %c1_45 = arith.constant 1 : index
    %c0_46 = arith.constant 0 : index
    %c0_47 = arith.constant 0 : index
    %52 = vector.load %arg6[%c0_43, %c0_44, %c1_45, %c0_46, %c0_47] : memref<3x2x4x1x32xf32, #tpu.memory_space<vmem>>, vector<1x1x1x1x32xf32>
    %53 = vector.shape_cast %52 : vector<1x1x1x1x32xf32> to vector<1x32xf32>
    %54 = vector.broadcast %53 : vector<1x32xf32> to vector<2x32xf32>
    %55 = arith.addf %51, %54 : vector<2x32xf32>
    %c0_48 = arith.constant 0 : index
    %c0_49 = arith.constant 0 : index
    %c2 = arith.constant 2 : index
    %c0_50 = arith.constant 0 : index
    %c0_51 = arith.constant 0 : index
    %56 = vector.load %arg4[%c0_48, %c0_49, %c2, %c0_50, %c0_51] : memref<3x2x4x1x32xf32, #tpu.memory_space<vmem>>, vector<1x1x1x1x32xf32>
    %57 = vector.shape_cast %56 : vector<1x1x1x1x32xf32> to vector<1x32xf32>
    %c0_52 = arith.constant 0 : index
    %c0_53 = arith.constant 0 : index
    %c3 = arith.constant 3 : index
    %c0_54 = arith.constant 0 : index
    %c0_55 = arith.constant 0 : index
    %58 = vector.load %arg4[%c0_52, %c0_53, %c3, %c0_54, %c0_55] : memref<3x2x4x1x32xf32, #tpu.memory_space<vmem>>, vector<1x1x1x1x32xf32>
    %59 = vector.shape_cast %58 : vector<1x1x1x1x32xf32> to vector<1x32xf32>
    %cst_56 = arith.constant dense<0.000000e+00> : vector<2xf32>
    %60 = vector.multi_reduction <add>, %15, %cst_56 [1] : vector<2x32xf32> to vector<2xf32>
    %61 = vector.shape_cast %60 : vector<2xf32> to vector<2x1xf32>
    %cst_57 = arith.constant 3.200000e+01 : f32
    %62 = vector.broadcast %cst_57 : f32 to vector<2x1xf32>
    %63 = arith.divf %61, %62 : vector<2x1xf32>
    %64 = arith.mulf %15, %15 : vector<2x32xf32>
    %cst_58 = arith.constant dense<0.000000e+00> : vector<2xf32>
    %65 = vector.multi_reduction <add>, %64, %cst_58 [1] : vector<2x32xf32> to vector<2xf32>
    %66 = vector.shape_cast %65 : vector<2xf32> to vector<2x1xf32>
    %cst_59 = arith.constant 3.200000e+01 : f32
    %67 = vector.broadcast %cst_59 : f32 to vector<2x1xf32>
    %68 = arith.divf %66, %67 : vector<2x1xf32>
    %69 = arith.mulf %63, %63 : vector<2x1xf32>
    %70 = arith.subf %68, %69 : vector<2x1xf32>
    %71 = vector.broadcast %63 : vector<2x1xf32> to vector<2x32xf32>
    %72 = arith.subf %15, %71 : vector<2x32xf32>
    %cst_60 = arith.constant 9.99999974E-6 : f32
    %73 = vector.broadcast %cst_60 : f32 to vector<2x1xf32>
    %74 = arith.addf %70, %73 : vector<2x1xf32>
    %75 = math.rsqrt %74 : vector<2x1xf32>
    %76 = vector.broadcast %75 : vector<2x1xf32> to vector<2x32xf32>
    %77 = arith.mulf %72, %76 : vector<2x32xf32>
    %78 = vector.broadcast %57 : vector<1x32xf32> to vector<2x32xf32>
    %79 = arith.mulf %77, %78 : vector<2x32xf32>
    %80 = vector.broadcast %59 : vector<1x32xf32> to vector<2x32xf32>
    %81 = arith.addf %79, %80 : vector<2x32xf32>
    %c0_61 = arith.constant 0 : index
    %c0_62 = arith.constant 0 : index
    %c2_63 = arith.constant 2 : index
    %c0_64 = arith.constant 0 : index
    %c0_65 = arith.constant 0 : index
    %82 = vector.load %arg5[%c0_61, %c0_62, %c2_63, %c0_64, %c0_65] : memref<3x2x4x32x32xf32, #tpu.memory_space<vmem>>, vector<1x1x1x32x32xf32>
    %83 = vector.shape_cast %82 : vector<1x1x1x32x32xf32> to vector<32x32xf32>
    %cst_66 = arith.constant dense<0.000000e+00> : vector<2x32xf32>
    %84 = tpu.matmul %81, %83, %cst_66 {dimension_numbers = #tpu.dot_dimension_numbers<[1], [0], [0], [1], [0, 0, 1, 1], [], []>} : vector<2x32xf32>, vector<32x32xf32>, vector<2x32xf32> -> vector<2x32xf32>
    %c0_67 = arith.constant 0 : index
    %c0_68 = arith.constant 0 : index
    %c2_69 = arith.constant 2 : index
    %c0_70 = arith.constant 0 : index
    %c0_71 = arith.constant 0 : index
    %85 = vector.load %arg6[%c0_67, %c0_68, %c2_69, %c0_70, %c0_71] : memref<3x2x4x1x32xf32, #tpu.memory_space<vmem>>, vector<1x1x1x1x32xf32>
    %86 = vector.shape_cast %85 : vector<1x1x1x1x32xf32> to vector<1x32xf32>
    %87 = vector.broadcast %86 : vector<1x32xf32> to vector<2x32xf32>
    %88 = arith.addf %84, %87 : vector<2x32xf32>
    %c0_72 = arith.constant 0 : index
    %c0_73 = arith.constant 0 : index
    %c3_74 = arith.constant 3 : index
    %c0_75 = arith.constant 0 : index
    %c0_76 = arith.constant 0 : index
    %89 = vector.load %arg5[%c0_72, %c0_73, %c3_74, %c0_75, %c0_76] : memref<3x2x4x32x32xf32, #tpu.memory_space<vmem>>, vector<1x1x1x32x32xf32>
    %90 = vector.shape_cast %89 : vector<1x1x1x32x32xf32> to vector<32x32xf32>
    %cst_77 = arith.constant dense<0.000000e+00> : vector<2x32xf32>
    %91 = tpu.matmul %88, %90, %cst_77 {dimension_numbers = #tpu.dot_dimension_numbers<[1], [0], [0], [1], [0, 0, 1, 1], [], []>} : vector<2x32xf32>, vector<32x32xf32>, vector<2x32xf32> -> vector<2x32xf32>
    %c0_78 = arith.constant 0 : index
    %c0_79 = arith.constant 0 : index
    %c3_80 = arith.constant 3 : index
    %c0_81 = arith.constant 0 : index
    %c0_82 = arith.constant 0 : index
    %92 = vector.load %arg6[%c0_78, %c0_79, %c3_80, %c0_81, %c0_82] : memref<3x2x4x1x32xf32, #tpu.memory_space<vmem>>, vector<1x1x1x1x32xf32>
    %93 = vector.shape_cast %92 : vector<1x1x1x1x32xf32> to vector<1x32xf32>
    %94 = vector.broadcast %93 : vector<1x32xf32> to vector<2x32xf32>
    %95 = arith.addf %91, %94 : vector<2x32xf32>
    %96 = vector.extract_strided_slice %5 {offsets = [0, 0], sizes = [1, 1], strides = [1, 1]} : vector<1x7xf32> to vector<1x1xf32>
    %97 = vector.broadcast %96 : vector<1x1xf32> to vector<2x32xf32>
    %98 = arith.mulf %97, %55 : vector<2x32xf32>
    %99 = arith.addf %15, %98 : vector<2x32xf32>
    %cst_83 = arith.constant 1.000000e+00 : f32
    %100 = vector.broadcast %cst_83 : f32 to vector<1x1xf32>
    %101 = arith.subf %100, %96 : vector<1x1xf32>
    %102 = vector.broadcast %101 : vector<1x1xf32> to vector<2x32xf32>
    %103 = arith.mulf %102, %95 : vector<2x32xf32>
    %104 = arith.addf %99, %103 : vector<2x32xf32>
    %c0_84 = arith.constant 0 : index
    %c0_85 = arith.constant 0 : index
    %c2_86 = arith.constant 2 : index
    %c0_87 = arith.constant 0 : index
    %c0_88 = arith.constant 0 : index
    %105 = vector.load %arg4[%c0_84, %c0_85, %c2_86, %c0_87, %c0_88] : memref<3x2x4x1x32xf32, #tpu.memory_space<vmem>>, vector<1x1x1x1x32xf32>
    %106 = vector.shape_cast %105 : vector<1x1x1x1x32xf32> to vector<1x32xf32>
    %c0_89 = arith.constant 0 : index
    %c0_90 = arith.constant 0 : index
    %c3_91 = arith.constant 3 : index
    %c0_92 = arith.constant 0 : index
    %c0_93 = arith.constant 0 : index
    %107 = vector.load %arg4[%c0_89, %c0_90, %c3_91, %c0_92, %c0_93] : memref<3x2x4x1x32xf32, #tpu.memory_space<vmem>>, vector<1x1x1x1x32xf32>
    %108 = vector.shape_cast %107 : vector<1x1x1x1x32xf32> to vector<1x32xf32>
    %cst_94 = arith.constant dense<0.000000e+00> : vector<2xf32>
    %109 = vector.multi_reduction <add>, %104, %cst_94 [1] : vector<2x32xf32> to vector<2xf32>
    %110 = vector.shape_cast %109 : vector<2xf32> to vector<2x1xf32>
    %cst_95 = arith.constant 3.200000e+01 : f32
    %111 = vector.broadcast %cst_95 : f32 to vector<2x1xf32>
    %112 = arith.divf %110, %111 : vector<2x1xf32>
    %113 = arith.mulf %104, %104 : vector<2x32xf32>
    %cst_96 = arith.constant dense<0.000000e+00> : vector<2xf32>
    %114 = vector.multi_reduction <add>, %113, %cst_96 [1] : vector<2x32xf32> to vector<2xf32>
    %115 = vector.shape_cast %114 : vector<2xf32> to vector<2x1xf32>
    %cst_97 = arith.constant 3.200000e+01 : f32
    %116 = vector.broadcast %cst_97 : f32 to vector<2x1xf32>
    %117 = arith.divf %115, %116 : vector<2x1xf32>
    %118 = arith.mulf %112, %112 : vector<2x1xf32>
    %119 = arith.subf %117, %118 : vector<2x1xf32>
    %120 = vector.broadcast %112 : vector<2x1xf32> to vector<2x32xf32>
    %121 = arith.subf %104, %120 : vector<2x32xf32>
    %cst_98 = arith.constant 9.99999974E-6 : f32
    %122 = vector.broadcast %cst_98 : f32 to vector<2x1xf32>
    %123 = arith.addf %119, %122 : vector<2x1xf32>
    %124 = math.rsqrt %123 : vector<2x1xf32>
    %125 = vector.broadcast %124 : vector<2x1xf32> to vector<2x32xf32>
    %126 = arith.mulf %121, %125 : vector<2x32xf32>
    %127 = vector.broadcast %106 : vector<1x32xf32> to vector<2x32xf32>
    %128 = arith.mulf %126, %127 : vector<2x32xf32>
    %129 = vector.broadcast %108 : vector<1x32xf32> to vector<2x32xf32>
    %130 = arith.addf %128, %129 : vector<2x32xf32>
    %c0_99 = arith.constant 0 : index
    %c0_100 = arith.constant 0 : index
    %c0_101 = arith.constant 0 : index
    %c0_102 = arith.constant 0 : index
    %131 = vector.load %arg7[%c0_99, %c0_100, %c0_101, %c0_102] : memref<3x2x32x128xf32, #tpu.memory_space<vmem>>, vector<1x1x32x128xf32>
    %132 = vector.shape_cast %131 : vector<1x1x32x128xf32> to vector<32x128xf32>
    %cst_103 = arith.constant dense<0.000000e+00> : vector<2x128xf32>
    %133 = tpu.matmul %130, %132, %cst_103 {dimension_numbers = #tpu.dot_dimension_numbers<[1], [0], [0], [1], [0, 0, 1, 1], [], []>} : vector<2x32xf32>, vector<32x128xf32>, vector<2x128xf32> -> vector<2x128xf32>
    %c0_104 = arith.constant 0 : index
    %c0_105 = arith.constant 0 : index
    %c0_106 = arith.constant 0 : index
    %c0_107 = arith.constant 0 : index
    %134 = vector.load %arg8[%c0_104, %c0_105, %c0_106, %c0_107] : memref<3x2x1x128xf32, #tpu.memory_space<vmem>>, vector<1x1x1x128xf32>
    %135 = vector.shape_cast %134 : vector<1x1x1x128xf32> to vector<1x128xf32>
    %136 = vector.broadcast %135 : vector<1x128xf32> to vector<2x128xf32>
    %137 = arith.addf %133, %136 : vector<2x128xf32>
    %cst_108 = arith.constant 0.000000e+00 : f32
    %138 = vector.broadcast %cst_108 : f32 to vector<2x128xf32>
    %139 = arith.maximumf %137, %138 : vector<2x128xf32>
    %c0_109 = arith.constant 0 : index
    %c0_110 = arith.constant 0 : index
    %c0_111 = arith.constant 0 : index
    %c0_112 = arith.constant 0 : index
    %140 = vector.load %arg9[%c0_109, %c0_110, %c0_111, %c0_112] : memref<3x2x128x32xf32, #tpu.memory_space<vmem>>, vector<1x1x128x32xf32>
    %141 = vector.shape_cast %140 : vector<1x1x128x32xf32> to vector<128x32xf32>
    %cst_113 = arith.constant dense<0.000000e+00> : vector<2x32xf32>
    %142 = tpu.matmul %139, %141, %cst_113 {dimension_numbers = #tpu.dot_dimension_numbers<[1], [0], [0], [1], [0, 0, 1, 1], [], []>} : vector<2x128xf32>, vector<128x32xf32>, vector<2x32xf32> -> vector<2x32xf32>
    %143 = arith.addf %104, %142 : vector<2x32xf32>
    %c0_114 = arith.constant 0 : index
    %c0_115 = arith.constant 0 : index
    %c0_116 = arith.constant 0 : index
    %c0_117 = arith.constant 0 : index
    %144 = vector.load %arg10[%c0_114, %c0_115, %c0_116, %c0_117] : memref<3x2x1x32xf32, #tpu.memory_space<vmem>>, vector<1x1x1x32xf32>
    %145 = vector.shape_cast %144 : vector<1x1x1x32xf32> to vector<1x32xf32>
    %146 = vector.broadcast %145 : vector<1x32xf32> to vector<2x32xf32>
    %147 = arith.addf %143, %146 : vector<2x32xf32>
    %c0_118 = arith.constant 0 : index
    %c1_119 = arith.constant 1 : index
    %c0_120 = arith.constant 0 : index
    %c0_121 = arith.constant 0 : index
    %c0_122 = arith.constant 0 : index
    %148 = vector.load %arg4[%c0_118, %c1_119, %c0_120, %c0_121, %c0_122] : memref<3x2x4x1x32xf32, #tpu.memory_space<vmem>>, vector<1x1x1x1x32xf32>
    %149 = vector.shape_cast %148 : vector<1x1x1x1x32xf32> to vector<1x32xf32>
    %c0_123 = arith.constant 0 : index
    %c1_124 = arith.constant 1 : index
    %c1_125 = arith.constant 1 : index
    %c0_126 = arith.constant 0 : index
    %c0_127 = arith.constant 0 : index
    %150 = vector.load %arg4[%c0_123, %c1_124, %c1_125, %c0_126, %c0_127] : memref<3x2x4x1x32xf32, #tpu.memory_space<vmem>>, vector<1x1x1x1x32xf32>
    %151 = vector.shape_cast %150 : vector<1x1x1x1x32xf32> to vector<1x32xf32>
    %cst_128 = arith.constant dense<0.000000e+00> : vector<2xf32>
    %152 = vector.multi_reduction <add>, %147, %cst_128 [1] : vector<2x32xf32> to vector<2xf32>
    %153 = vector.shape_cast %152 : vector<2xf32> to vector<2x1xf32>
    %cst_129 = arith.constant 3.200000e+01 : f32
    %154 = vector.broadcast %cst_129 : f32 to vector<2x1xf32>
    %155 = arith.divf %153, %154 : vector<2x1xf32>
    %156 = arith.mulf %147, %147 : vector<2x32xf32>
    %cst_130 = arith.constant dense<0.000000e+00> : vector<2xf32>
    %157 = vector.multi_reduction <add>, %156, %cst_130 [1] : vector<2x32xf32> to vector<2xf32>
    %158 = vector.shape_cast %157 : vector<2xf32> to vector<2x1xf32>
    %cst_131 = arith.constant 3.200000e+01 : f32
    %159 = vector.broadcast %cst_131 : f32 to vector<2x1xf32>
    %160 = arith.divf %158, %159 : vector<2x1xf32>
    %161 = arith.mulf %155, %155 : vector<2x1xf32>
    %162 = arith.subf %160, %161 : vector<2x1xf32>
    %163 = vector.broadcast %155 : vector<2x1xf32> to vector<2x32xf32>
    %164 = arith.subf %147, %163 : vector<2x32xf32>
    %cst_132 = arith.constant 9.99999974E-6 : f32
    %165 = vector.broadcast %cst_132 : f32 to vector<2x1xf32>
    %166 = arith.addf %162, %165 : vector<2x1xf32>
    %167 = math.rsqrt %166 : vector<2x1xf32>
    %168 = vector.broadcast %167 : vector<2x1xf32> to vector<2x32xf32>
    %169 = arith.mulf %164, %168 : vector<2x32xf32>
    %170 = vector.broadcast %149 : vector<1x32xf32> to vector<2x32xf32>
    %171 = arith.mulf %169, %170 : vector<2x32xf32>
    %172 = vector.broadcast %151 : vector<1x32xf32> to vector<2x32xf32>
    %173 = arith.addf %171, %172 : vector<2x32xf32>
    %c0_133 = arith.constant 0 : index
    %c1_134 = arith.constant 1 : index
    %c0_135 = arith.constant 0 : index
    %c0_136 = arith.constant 0 : index
    %c0_137 = arith.constant 0 : index
    %174 = vector.load %arg5[%c0_133, %c1_134, %c0_135, %c0_136, %c0_137] : memref<3x2x4x32x32xf32, #tpu.memory_space<vmem>>, vector<1x1x1x32x32xf32>
    %175 = vector.shape_cast %174 : vector<1x1x1x32x32xf32> to vector<32x32xf32>
    %cst_138 = arith.constant dense<0.000000e+00> : vector<2x32xf32>
    %176 = tpu.matmul %173, %175, %cst_138 {dimension_numbers = #tpu.dot_dimension_numbers<[1], [0], [0], [1], [0, 0, 1, 1], [], []>} : vector<2x32xf32>, vector<32x32xf32>, vector<2x32xf32> -> vector<2x32xf32>
    %c0_139 = arith.constant 0 : index
    %c1_140 = arith.constant 1 : index
    %c0_141 = arith.constant 0 : index
    %c0_142 = arith.constant 0 : index
    %c0_143 = arith.constant 0 : index
    %177 = vector.load %arg6[%c0_139, %c1_140, %c0_141, %c0_142, %c0_143] : memref<3x2x4x1x32xf32, #tpu.memory_space<vmem>>, vector<1x1x1x1x32xf32>
    %178 = vector.shape_cast %177 : vector<1x1x1x1x32xf32> to vector<1x32xf32>
    %179 = vector.broadcast %178 : vector<1x32xf32> to vector<2x32xf32>
    %180 = arith.addf %176, %179 : vector<2x32xf32>
    %c0_144 = arith.constant 0 : index
    %c1_145 = arith.constant 1 : index
    %c1_146 = arith.constant 1 : index
    %c0_147 = arith.constant 0 : index
    %c0_148 = arith.constant 0 : index
    %181 = vector.load %arg5[%c0_144, %c1_145, %c1_146, %c0_147, %c0_148] : memref<3x2x4x32x32xf32, #tpu.memory_space<vmem>>, vector<1x1x1x32x32xf32>
    %182 = vector.shape_cast %181 : vector<1x1x1x32x32xf32> to vector<32x32xf32>
    %cst_149 = arith.constant dense<0.000000e+00> : vector<2x32xf32>
    %183 = tpu.matmul %180, %182, %cst_149 {dimension_numbers = #tpu.dot_dimension_numbers<[1], [0], [0], [1], [0, 0, 1, 1], [], []>} : vector<2x32xf32>, vector<32x32xf32>, vector<2x32xf32> -> vector<2x32xf32>
    %c0_150 = arith.constant 0 : index
    %c1_151 = arith.constant 1 : index
    %c1_152 = arith.constant 1 : index
    %c0_153 = arith.constant 0 : index
    %c0_154 = arith.constant 0 : index
    %184 = vector.load %arg6[%c0_150, %c1_151, %c1_152, %c0_153, %c0_154] : memref<3x2x4x1x32xf32, #tpu.memory_space<vmem>>, vector<1x1x1x1x32xf32>
    %185 = vector.shape_cast %184 : vector<1x1x1x1x32xf32> to vector<1x32xf32>
    %186 = vector.broadcast %185 : vector<1x32xf32> to vector<2x32xf32>
    %187 = arith.addf %183, %186 : vector<2x32xf32>
    %c0_155 = arith.constant 0 : index
    %c1_156 = arith.constant 1 : index
    %c2_157 = arith.constant 2 : index
    %c0_158 = arith.constant 0 : index
    %c0_159 = arith.constant 0 : index
    %188 = vector.load %arg4[%c0_155, %c1_156, %c2_157, %c0_158, %c0_159] : memref<3x2x4x1x32xf32, #tpu.memory_space<vmem>>, vector<1x1x1x1x32xf32>
    %189 = vector.shape_cast %188 : vector<1x1x1x1x32xf32> to vector<1x32xf32>
    %c0_160 = arith.constant 0 : index
    %c1_161 = arith.constant 1 : index
    %c3_162 = arith.constant 3 : index
    %c0_163 = arith.constant 0 : index
    %c0_164 = arith.constant 0 : index
    %190 = vector.load %arg4[%c0_160, %c1_161, %c3_162, %c0_163, %c0_164] : memref<3x2x4x1x32xf32, #tpu.memory_space<vmem>>, vector<1x1x1x1x32xf32>
    %191 = vector.shape_cast %190 : vector<1x1x1x1x32xf32> to vector<1x32xf32>
    %cst_165 = arith.constant dense<0.000000e+00> : vector<2xf32>
    %192 = vector.multi_reduction <add>, %147, %cst_165 [1] : vector<2x32xf32> to vector<2xf32>
    %193 = vector.shape_cast %192 : vector<2xf32> to vector<2x1xf32>
    %cst_166 = arith.constant 3.200000e+01 : f32
    %194 = vector.broadcast %cst_166 : f32 to vector<2x1xf32>
    %195 = arith.divf %193, %194 : vector<2x1xf32>
    %196 = arith.mulf %147, %147 : vector<2x32xf32>
    %cst_167 = arith.constant dense<0.000000e+00> : vector<2xf32>
    %197 = vector.multi_reduction <add>, %196, %cst_167 [1] : vector<2x32xf32> to vector<2xf32>
    %198 = vector.shape_cast %197 : vector<2xf32> to vector<2x1xf32>
    %cst_168 = arith.constant 3.200000e+01 : f32
    %199 = vector.broadcast %cst_168 : f32 to vector<2x1xf32>
    %200 = arith.divf %198, %199 : vector<2x1xf32>
    %201 = arith.mulf %195, %195 : vector<2x1xf32>
    %202 = arith.subf %200, %201 : vector<2x1xf32>
    %203 = vector.broadcast %195 : vector<2x1xf32> to vector<2x32xf32>
    %204 = arith.subf %147, %203 : vector<2x32xf32>
    %cst_169 = arith.constant 9.99999974E-6 : f32
    %205 = vector.broadcast %cst_169 : f32 to vector<2x1xf32>
    %206 = arith.addf %202, %205 : vector<2x1xf32>
    %207 = math.rsqrt %206 : vector<2x1xf32>
    %208 = vector.broadcast %207 : vector<2x1xf32> to vector<2x32xf32>
    %209 = arith.mulf %204, %208 : vector<2x32xf32>
    %210 = vector.broadcast %189 : vector<1x32xf32> to vector<2x32xf32>
    %211 = arith.mulf %209, %210 : vector<2x32xf32>
    %212 = vector.broadcast %191 : vector<1x32xf32> to vector<2x32xf32>
    %213 = arith.addf %211, %212 : vector<2x32xf32>
    %c0_170 = arith.constant 0 : index
    %c1_171 = arith.constant 1 : index
    %c2_172 = arith.constant 2 : index
    %c0_173 = arith.constant 0 : index
    %c0_174 = arith.constant 0 : index
    %214 = vector.load %arg5[%c0_170, %c1_171, %c2_172, %c0_173, %c0_174] : memref<3x2x4x32x32xf32, #tpu.memory_space<vmem>>, vector<1x1x1x32x32xf32>
    %215 = vector.shape_cast %214 : vector<1x1x1x32x32xf32> to vector<32x32xf32>
    %cst_175 = arith.constant dense<0.000000e+00> : vector<2x32xf32>
    %216 = tpu.matmul %213, %215, %cst_175 {dimension_numbers = #tpu.dot_dimension_numbers<[1], [0], [0], [1], [0, 0, 1, 1], [], []>} : vector<2x32xf32>, vector<32x32xf32>, vector<2x32xf32> -> vector<2x32xf32>
    %c0_176 = arith.constant 0 : index
    %c1_177 = arith.constant 1 : index
    %c2_178 = arith.constant 2 : index
    %c0_179 = arith.constant 0 : index
    %c0_180 = arith.constant 0 : index
    %217 = vector.load %arg6[%c0_176, %c1_177, %c2_178, %c0_179, %c0_180] : memref<3x2x4x1x32xf32, #tpu.memory_space<vmem>>, vector<1x1x1x1x32xf32>
    %218 = vector.shape_cast %217 : vector<1x1x1x1x32xf32> to vector<1x32xf32>
    %219 = vector.broadcast %218 : vector<1x32xf32> to vector<2x32xf32>
    %220 = arith.addf %216, %219 : vector<2x32xf32>
    %c0_181 = arith.constant 0 : index
    %c1_182 = arith.constant 1 : index
    %c3_183 = arith.constant 3 : index
    %c0_184 = arith.constant 0 : index
    %c0_185 = arith.constant 0 : index
    %221 = vector.load %arg5[%c0_181, %c1_182, %c3_183, %c0_184, %c0_185] : memref<3x2x4x32x32xf32, #tpu.memory_space<vmem>>, vector<1x1x1x32x32xf32>
    %222 = vector.shape_cast %221 : vector<1x1x1x32x32xf32> to vector<32x32xf32>
    %cst_186 = arith.constant dense<0.000000e+00> : vector<2x32xf32>
    %223 = tpu.matmul %220, %222, %cst_186 {dimension_numbers = #tpu.dot_dimension_numbers<[1], [0], [0], [1], [0, 0, 1, 1], [], []>} : vector<2x32xf32>, vector<32x32xf32>, vector<2x32xf32> -> vector<2x32xf32>
    %c0_187 = arith.constant 0 : index
    %c1_188 = arith.constant 1 : index
    %c3_189 = arith.constant 3 : index
    %c0_190 = arith.constant 0 : index
    %c0_191 = arith.constant 0 : index
    %224 = vector.load %arg6[%c0_187, %c1_188, %c3_189, %c0_190, %c0_191] : memref<3x2x4x1x32xf32, #tpu.memory_space<vmem>>, vector<1x1x1x1x32xf32>
    %225 = vector.shape_cast %224 : vector<1x1x1x1x32xf32> to vector<1x32xf32>
    %226 = vector.broadcast %225 : vector<1x32xf32> to vector<2x32xf32>
    %227 = arith.addf %223, %226 : vector<2x32xf32>
    %228 = vector.extract_strided_slice %5 {offsets = [0, 1], sizes = [1, 1], strides = [1, 1]} : vector<1x7xf32> to vector<1x1xf32>
    %229 = vector.broadcast %228 : vector<1x1xf32> to vector<2x32xf32>
    %230 = arith.mulf %229, %187 : vector<2x32xf32>
    %231 = arith.addf %147, %230 : vector<2x32xf32>
    %cst_192 = arith.constant 1.000000e+00 : f32
    %232 = vector.broadcast %cst_192 : f32 to vector<1x1xf32>
    %233 = arith.subf %232, %228 : vector<1x1xf32>
    %234 = vector.broadcast %233 : vector<1x1xf32> to vector<2x32xf32>
    %235 = arith.mulf %234, %227 : vector<2x32xf32>
    %236 = arith.addf %231, %235 : vector<2x32xf32>
    %c0_193 = arith.constant 0 : index
    %c1_194 = arith.constant 1 : index
    %c2_195 = arith.constant 2 : index
    %c0_196 = arith.constant 0 : index
    %c0_197 = arith.constant 0 : index
    %237 = vector.load %arg4[%c0_193, %c1_194, %c2_195, %c0_196, %c0_197] : memref<3x2x4x1x32xf32, #tpu.memory_space<vmem>>, vector<1x1x1x1x32xf32>
    %238 = vector.shape_cast %237 : vector<1x1x1x1x32xf32> to vector<1x32xf32>
    %c0_198 = arith.constant 0 : index
    %c1_199 = arith.constant 1 : index
    %c3_200 = arith.constant 3 : index
    %c0_201 = arith.constant 0 : index
    %c0_202 = arith.constant 0 : index
    %239 = vector.load %arg4[%c0_198, %c1_199, %c3_200, %c0_201, %c0_202] : memref<3x2x4x1x32xf32, #tpu.memory_space<vmem>>, vector<1x1x1x1x32xf32>
    %240 = vector.shape_cast %239 : vector<1x1x1x1x32xf32> to vector<1x32xf32>
    %cst_203 = arith.constant dense<0.000000e+00> : vector<2xf32>
    %241 = vector.multi_reduction <add>, %236, %cst_203 [1] : vector<2x32xf32> to vector<2xf32>
    %242 = vector.shape_cast %241 : vector<2xf32> to vector<2x1xf32>
    %cst_204 = arith.constant 3.200000e+01 : f32
    %243 = vector.broadcast %cst_204 : f32 to vector<2x1xf32>
    %244 = arith.divf %242, %243 : vector<2x1xf32>
    %245 = arith.mulf %236, %236 : vector<2x32xf32>
    %cst_205 = arith.constant dense<0.000000e+00> : vector<2xf32>
    %246 = vector.multi_reduction <add>, %245, %cst_205 [1] : vector<2x32xf32> to vector<2xf32>
    %247 = vector.shape_cast %246 : vector<2xf32> to vector<2x1xf32>
    %cst_206 = arith.constant 3.200000e+01 : f32
    %248 = vector.broadcast %cst_206 : f32 to vector<2x1xf32>
    %249 = arith.divf %247, %248 : vector<2x1xf32>
    %250 = arith.mulf %244, %244 : vector<2x1xf32>
    %251 = arith.subf %249, %250 : vector<2x1xf32>
    %252 = vector.broadcast %244 : vector<2x1xf32> to vector<2x32xf32>
    %253 = arith.subf %236, %252 : vector<2x32xf32>
    %cst_207 = arith.constant 9.99999974E-6 : f32
    %254 = vector.broadcast %cst_207 : f32 to vector<2x1xf32>
    %255 = arith.addf %251, %254 : vector<2x1xf32>
    %256 = math.rsqrt %255 : vector<2x1xf32>
    %257 = vector.broadcast %256 : vector<2x1xf32> to vector<2x32xf32>
    %258 = arith.mulf %253, %257 : vector<2x32xf32>
    %259 = vector.broadcast %238 : vector<1x32xf32> to vector<2x32xf32>
    %260 = arith.mulf %258, %259 : vector<2x32xf32>
    %261 = vector.broadcast %240 : vector<1x32xf32> to vector<2x32xf32>
    %262 = arith.addf %260, %261 : vector<2x32xf32>
    %c0_208 = arith.constant 0 : index
    %c1_209 = arith.constant 1 : index
    %c0_210 = arith.constant 0 : index
    %c0_211 = arith.constant 0 : index
    %263 = vector.load %arg7[%c0_208, %c1_209, %c0_210, %c0_211] : memref<3x2x32x128xf32, #tpu.memory_space<vmem>>, vector<1x1x32x128xf32>
    %264 = vector.shape_cast %263 : vector<1x1x32x128xf32> to vector<32x128xf32>
    %cst_212 = arith.constant dense<0.000000e+00> : vector<2x128xf32>
    %265 = tpu.matmul %262, %264, %cst_212 {dimension_numbers = #tpu.dot_dimension_numbers<[1], [0], [0], [1], [0, 0, 1, 1], [], []>} : vector<2x32xf32>, vector<32x128xf32>, vector<2x128xf32> -> vector<2x128xf32>
    %c0_213 = arith.constant 0 : index
    %c1_214 = arith.constant 1 : index
    %c0_215 = arith.constant 0 : index
    %c0_216 = arith.constant 0 : index
    %266 = vector.load %arg8[%c0_213, %c1_214, %c0_215, %c0_216] : memref<3x2x1x128xf32, #tpu.memory_space<vmem>>, vector<1x1x1x128xf32>
    %267 = vector.shape_cast %266 : vector<1x1x1x128xf32> to vector<1x128xf32>
    %268 = vector.broadcast %267 : vector<1x128xf32> to vector<2x128xf32>
    %269 = arith.addf %265, %268 : vector<2x128xf32>
    %cst_217 = arith.constant 0.000000e+00 : f32
    %270 = vector.broadcast %cst_217 : f32 to vector<2x128xf32>
    %271 = arith.maximumf %269, %270 : vector<2x128xf32>
    %c0_218 = arith.constant 0 : index
    %c1_219 = arith.constant 1 : index
    %c0_220 = arith.constant 0 : index
    %c0_221 = arith.constant 0 : index
    %272 = vector.load %arg9[%c0_218, %c1_219, %c0_220, %c0_221] : memref<3x2x128x32xf32, #tpu.memory_space<vmem>>, vector<1x1x128x32xf32>
    %273 = vector.shape_cast %272 : vector<1x1x128x32xf32> to vector<128x32xf32>
    %cst_222 = arith.constant dense<0.000000e+00> : vector<2x32xf32>
    %274 = tpu.matmul %271, %273, %cst_222 {dimension_numbers = #tpu.dot_dimension_numbers<[1], [0], [0], [1], [0, 0, 1, 1], [], []>} : vector<2x128xf32>, vector<128x32xf32>, vector<2x32xf32> -> vector<2x32xf32>
    %275 = arith.addf %236, %274 : vector<2x32xf32>
    %c0_223 = arith.constant 0 : index
    %c1_224 = arith.constant 1 : index
    %c0_225 = arith.constant 0 : index
    %c0_226 = arith.constant 0 : index
    %276 = vector.load %arg10[%c0_223, %c1_224, %c0_225, %c0_226] : memref<3x2x1x32xf32, #tpu.memory_space<vmem>>, vector<1x1x1x32xf32>
    %277 = vector.shape_cast %276 : vector<1x1x1x32xf32> to vector<1x32xf32>
    %278 = vector.broadcast %277 : vector<1x32xf32> to vector<2x32xf32>
    %279 = arith.addf %275, %278 : vector<2x32xf32>
    %c1_227 = arith.constant 1 : index
    %c0_228 = arith.constant 0 : index
    %c0_229 = arith.constant 0 : index
    %280 = vector.load %arg2[%c1_227, %c0_228, %c0_229] : memref<3x16x32xf32, #tpu.memory_space<vmem>>, vector<1x16x32xf32>
    %281 = vector.shape_cast %280 : vector<1x16x32xf32> to vector<16x32xf32>
    %cst_230 = arith.constant dense<0.000000e+00> : vector<2x32xf32>
    %282 = tpu.matmul %7, %281, %cst_230 {dimension_numbers = #tpu.dot_dimension_numbers<[1], [0], [0], [1], [0, 0, 1, 1], [], []>} : vector<2x16xf32>, vector<16x32xf32>, vector<2x32xf32> -> vector<2x32xf32>
    %c1_231 = arith.constant 1 : index
    %c0_232 = arith.constant 0 : index
    %c0_233 = arith.constant 0 : index
    %283 = vector.load %arg3[%c1_231, %c0_232, %c0_233] : memref<3x1x32xf32, #tpu.memory_space<vmem>>, vector<1x1x32xf32>
    %284 = vector.shape_cast %283 : vector<1x1x32xf32> to vector<1x32xf32>
    %285 = vector.broadcast %284 : vector<1x32xf32> to vector<2x32xf32>
    %286 = arith.addf %282, %285 : vector<2x32xf32>
    %c1_234 = arith.constant 1 : index
    %c0_235 = arith.constant 0 : index
    %c0_236 = arith.constant 0 : index
    %c0_237 = arith.constant 0 : index
    %c0_238 = arith.constant 0 : index
    %287 = vector.load %arg4[%c1_234, %c0_235, %c0_236, %c0_237, %c0_238] : memref<3x2x4x1x32xf32, #tpu.memory_space<vmem>>, vector<1x1x1x1x32xf32>
    %288 = vector.shape_cast %287 : vector<1x1x1x1x32xf32> to vector<1x32xf32>
    %c1_239 = arith.constant 1 : index
    %c0_240 = arith.constant 0 : index
    %c1_241 = arith.constant 1 : index
    %c0_242 = arith.constant 0 : index
    %c0_243 = arith.constant 0 : index
    %289 = vector.load %arg4[%c1_239, %c0_240, %c1_241, %c0_242, %c0_243] : memref<3x2x4x1x32xf32, #tpu.memory_space<vmem>>, vector<1x1x1x1x32xf32>
    %290 = vector.shape_cast %289 : vector<1x1x1x1x32xf32> to vector<1x32xf32>
    %cst_244 = arith.constant dense<0.000000e+00> : vector<2xf32>
    %291 = vector.multi_reduction <add>, %286, %cst_244 [1] : vector<2x32xf32> to vector<2xf32>
    %292 = vector.shape_cast %291 : vector<2xf32> to vector<2x1xf32>
    %cst_245 = arith.constant 3.200000e+01 : f32
    %293 = vector.broadcast %cst_245 : f32 to vector<2x1xf32>
    %294 = arith.divf %292, %293 : vector<2x1xf32>
    %295 = arith.mulf %286, %286 : vector<2x32xf32>
    %cst_246 = arith.constant dense<0.000000e+00> : vector<2xf32>
    %296 = vector.multi_reduction <add>, %295, %cst_246 [1] : vector<2x32xf32> to vector<2xf32>
    %297 = vector.shape_cast %296 : vector<2xf32> to vector<2x1xf32>
    %cst_247 = arith.constant 3.200000e+01 : f32
    %298 = vector.broadcast %cst_247 : f32 to vector<2x1xf32>
    %299 = arith.divf %297, %298 : vector<2x1xf32>
    %300 = arith.mulf %294, %294 : vector<2x1xf32>
    %301 = arith.subf %299, %300 : vector<2x1xf32>
    %302 = vector.broadcast %294 : vector<2x1xf32> to vector<2x32xf32>
    %303 = arith.subf %286, %302 : vector<2x32xf32>
    %cst_248 = arith.constant 9.99999974E-6 : f32
    %304 = vector.broadcast %cst_248 : f32 to vector<2x1xf32>
    %305 = arith.addf %301, %304 : vector<2x1xf32>
    %306 = math.rsqrt %305 : vector<2x1xf32>
    %307 = vector.broadcast %306 : vector<2x1xf32> to vector<2x32xf32>
    %308 = arith.mulf %303, %307 : vector<2x32xf32>
    %309 = vector.broadcast %288 : vector<1x32xf32> to vector<2x32xf32>
    %310 = arith.mulf %308, %309 : vector<2x32xf32>
    %311 = vector.broadcast %290 : vector<1x32xf32> to vector<2x32xf32>
    %312 = arith.addf %310, %311 : vector<2x32xf32>
    %c1_249 = arith.constant 1 : index
    %c0_250 = arith.constant 0 : index
    %c0_251 = arith.constant 0 : index
    %c0_252 = arith.constant 0 : index
    %c0_253 = arith.constant 0 : index
    %313 = vector.load %arg5[%c1_249, %c0_250, %c0_251, %c0_252, %c0_253] : memref<3x2x4x32x32xf32, #tpu.memory_space<vmem>>, vector<1x1x1x32x32xf32>
    %314 = vector.shape_cast %313 : vector<1x1x1x32x32xf32> to vector<32x32xf32>
    %cst_254 = arith.constant dense<0.000000e+00> : vector<2x32xf32>
    %315 = tpu.matmul %312, %314, %cst_254 {dimension_numbers = #tpu.dot_dimension_numbers<[1], [0], [0], [1], [0, 0, 1, 1], [], []>} : vector<2x32xf32>, vector<32x32xf32>, vector<2x32xf32> -> vector<2x32xf32>
    %c1_255 = arith.constant 1 : index
    %c0_256 = arith.constant 0 : index
    %c0_257 = arith.constant 0 : index
    %c0_258 = arith.constant 0 : index
    %c0_259 = arith.constant 0 : index
    %316 = vector.load %arg6[%c1_255, %c0_256, %c0_257, %c0_258, %c0_259] : memref<3x2x4x1x32xf32, #tpu.memory_space<vmem>>, vector<1x1x1x1x32xf32>
    %317 = vector.shape_cast %316 : vector<1x1x1x1x32xf32> to vector<1x32xf32>
    %318 = vector.broadcast %317 : vector<1x32xf32> to vector<2x32xf32>
    %319 = arith.addf %315, %318 : vector<2x32xf32>
    %c1_260 = arith.constant 1 : index
    %c0_261 = arith.constant 0 : index
    %c1_262 = arith.constant 1 : index
    %c0_263 = arith.constant 0 : index
    %c0_264 = arith.constant 0 : index
    %320 = vector.load %arg5[%c1_260, %c0_261, %c1_262, %c0_263, %c0_264] : memref<3x2x4x32x32xf32, #tpu.memory_space<vmem>>, vector<1x1x1x32x32xf32>
    %321 = vector.shape_cast %320 : vector<1x1x1x32x32xf32> to vector<32x32xf32>
    %cst_265 = arith.constant dense<0.000000e+00> : vector<2x32xf32>
    %322 = tpu.matmul %319, %321, %cst_265 {dimension_numbers = #tpu.dot_dimension_numbers<[1], [0], [0], [1], [0, 0, 1, 1], [], []>} : vector<2x32xf32>, vector<32x32xf32>, vector<2x32xf32> -> vector<2x32xf32>
    %c1_266 = arith.constant 1 : index
    %c0_267 = arith.constant 0 : index
    %c1_268 = arith.constant 1 : index
    %c0_269 = arith.constant 0 : index
    %c0_270 = arith.constant 0 : index
    %323 = vector.load %arg6[%c1_266, %c0_267, %c1_268, %c0_269, %c0_270] : memref<3x2x4x1x32xf32, #tpu.memory_space<vmem>>, vector<1x1x1x1x32xf32>
    %324 = vector.shape_cast %323 : vector<1x1x1x1x32xf32> to vector<1x32xf32>
    %325 = vector.broadcast %324 : vector<1x32xf32> to vector<2x32xf32>
    %326 = arith.addf %322, %325 : vector<2x32xf32>
    %c1_271 = arith.constant 1 : index
    %c0_272 = arith.constant 0 : index
    %c2_273 = arith.constant 2 : index
    %c0_274 = arith.constant 0 : index
    %c0_275 = arith.constant 0 : index
    %327 = vector.load %arg4[%c1_271, %c0_272, %c2_273, %c0_274, %c0_275] : memref<3x2x4x1x32xf32, #tpu.memory_space<vmem>>, vector<1x1x1x1x32xf32>
    %328 = vector.shape_cast %327 : vector<1x1x1x1x32xf32> to vector<1x32xf32>
    %c1_276 = arith.constant 1 : index
    %c0_277 = arith.constant 0 : index
    %c3_278 = arith.constant 3 : index
    %c0_279 = arith.constant 0 : index
    %c0_280 = arith.constant 0 : index
    %329 = vector.load %arg4[%c1_276, %c0_277, %c3_278, %c0_279, %c0_280] : memref<3x2x4x1x32xf32, #tpu.memory_space<vmem>>, vector<1x1x1x1x32xf32>
    %330 = vector.shape_cast %329 : vector<1x1x1x1x32xf32> to vector<1x32xf32>
    %cst_281 = arith.constant dense<0.000000e+00> : vector<2xf32>
    %331 = vector.multi_reduction <add>, %286, %cst_281 [1] : vector<2x32xf32> to vector<2xf32>
    %332 = vector.shape_cast %331 : vector<2xf32> to vector<2x1xf32>
    %cst_282 = arith.constant 3.200000e+01 : f32
    %333 = vector.broadcast %cst_282 : f32 to vector<2x1xf32>
    %334 = arith.divf %332, %333 : vector<2x1xf32>
    %335 = arith.mulf %286, %286 : vector<2x32xf32>
    %cst_283 = arith.constant dense<0.000000e+00> : vector<2xf32>
    %336 = vector.multi_reduction <add>, %335, %cst_283 [1] : vector<2x32xf32> to vector<2xf32>
    %337 = vector.shape_cast %336 : vector<2xf32> to vector<2x1xf32>
    %cst_284 = arith.constant 3.200000e+01 : f32
    %338 = vector.broadcast %cst_284 : f32 to vector<2x1xf32>
    %339 = arith.divf %337, %338 : vector<2x1xf32>
    %340 = arith.mulf %334, %334 : vector<2x1xf32>
    %341 = arith.subf %339, %340 : vector<2x1xf32>
    %342 = vector.broadcast %334 : vector<2x1xf32> to vector<2x32xf32>
    %343 = arith.subf %286, %342 : vector<2x32xf32>
    %cst_285 = arith.constant 9.99999974E-6 : f32
    %344 = vector.broadcast %cst_285 : f32 to vector<2x1xf32>
    %345 = arith.addf %341, %344 : vector<2x1xf32>
    %346 = math.rsqrt %345 : vector<2x1xf32>
    %347 = vector.broadcast %346 : vector<2x1xf32> to vector<2x32xf32>
    %348 = arith.mulf %343, %347 : vector<2x32xf32>
    %349 = vector.broadcast %328 : vector<1x32xf32> to vector<2x32xf32>
    %350 = arith.mulf %348, %349 : vector<2x32xf32>
    %351 = vector.broadcast %330 : vector<1x32xf32> to vector<2x32xf32>
    %352 = arith.addf %350, %351 : vector<2x32xf32>
    %c1_286 = arith.constant 1 : index
    %c0_287 = arith.constant 0 : index
    %c2_288 = arith.constant 2 : index
    %c0_289 = arith.constant 0 : index
    %c0_290 = arith.constant 0 : index
    %353 = vector.load %arg5[%c1_286, %c0_287, %c2_288, %c0_289, %c0_290] : memref<3x2x4x32x32xf32, #tpu.memory_space<vmem>>, vector<1x1x1x32x32xf32>
    %354 = vector.shape_cast %353 : vector<1x1x1x32x32xf32> to vector<32x32xf32>
    %cst_291 = arith.constant dense<0.000000e+00> : vector<2x32xf32>
    %355 = tpu.matmul %352, %354, %cst_291 {dimension_numbers = #tpu.dot_dimension_numbers<[1], [0], [0], [1], [0, 0, 1, 1], [], []>} : vector<2x32xf32>, vector<32x32xf32>, vector<2x32xf32> -> vector<2x32xf32>
    %c1_292 = arith.constant 1 : index
    %c0_293 = arith.constant 0 : index
    %c2_294 = arith.constant 2 : index
    %c0_295 = arith.constant 0 : index
    %c0_296 = arith.constant 0 : index
    %356 = vector.load %arg6[%c1_292, %c0_293, %c2_294, %c0_295, %c0_296] : memref<3x2x4x1x32xf32, #tpu.memory_space<vmem>>, vector<1x1x1x1x32xf32>
    %357 = vector.shape_cast %356 : vector<1x1x1x1x32xf32> to vector<1x32xf32>
    %358 = vector.broadcast %357 : vector<1x32xf32> to vector<2x32xf32>
    %359 = arith.addf %355, %358 : vector<2x32xf32>
    %c1_297 = arith.constant 1 : index
    %c0_298 = arith.constant 0 : index
    %c3_299 = arith.constant 3 : index
    %c0_300 = arith.constant 0 : index
    %c0_301 = arith.constant 0 : index
    %360 = vector.load %arg5[%c1_297, %c0_298, %c3_299, %c0_300, %c0_301] : memref<3x2x4x32x32xf32, #tpu.memory_space<vmem>>, vector<1x1x1x32x32xf32>
    %361 = vector.shape_cast %360 : vector<1x1x1x32x32xf32> to vector<32x32xf32>
    %cst_302 = arith.constant dense<0.000000e+00> : vector<2x32xf32>
    %362 = tpu.matmul %359, %361, %cst_302 {dimension_numbers = #tpu.dot_dimension_numbers<[1], [0], [0], [1], [0, 0, 1, 1], [], []>} : vector<2x32xf32>, vector<32x32xf32>, vector<2x32xf32> -> vector<2x32xf32>
    %c1_303 = arith.constant 1 : index
    %c0_304 = arith.constant 0 : index
    %c3_305 = arith.constant 3 : index
    %c0_306 = arith.constant 0 : index
    %c0_307 = arith.constant 0 : index
    %363 = vector.load %arg6[%c1_303, %c0_304, %c3_305, %c0_306, %c0_307] : memref<3x2x4x1x32xf32, #tpu.memory_space<vmem>>, vector<1x1x1x1x32xf32>
    %364 = vector.shape_cast %363 : vector<1x1x1x1x32xf32> to vector<1x32xf32>
    %365 = vector.broadcast %364 : vector<1x32xf32> to vector<2x32xf32>
    %366 = arith.addf %362, %365 : vector<2x32xf32>
    %367 = vector.extract_strided_slice %5 {offsets = [0, 2], sizes = [1, 1], strides = [1, 1]} : vector<1x7xf32> to vector<1x1xf32>
    %368 = vector.broadcast %367 : vector<1x1xf32> to vector<2x32xf32>
    %369 = arith.mulf %368, %326 : vector<2x32xf32>
    %370 = arith.addf %286, %369 : vector<2x32xf32>
    %cst_308 = arith.constant 1.000000e+00 : f32
    %371 = vector.broadcast %cst_308 : f32 to vector<1x1xf32>
    %372 = arith.subf %371, %367 : vector<1x1xf32>
    %373 = vector.broadcast %372 : vector<1x1xf32> to vector<2x32xf32>
    %374 = arith.mulf %373, %366 : vector<2x32xf32>
    %375 = arith.addf %370, %374 : vector<2x32xf32>
    %c1_309 = arith.constant 1 : index
    %c0_310 = arith.constant 0 : index
    %c2_311 = arith.constant 2 : index
    %c0_312 = arith.constant 0 : index
    %c0_313 = arith.constant 0 : index
    %376 = vector.load %arg4[%c1_309, %c0_310, %c2_311, %c0_312, %c0_313] : memref<3x2x4x1x32xf32, #tpu.memory_space<vmem>>, vector<1x1x1x1x32xf32>
    %377 = vector.shape_cast %376 : vector<1x1x1x1x32xf32> to vector<1x32xf32>
    %c1_314 = arith.constant 1 : index
    %c0_315 = arith.constant 0 : index
    %c3_316 = arith.constant 3 : index
    %c0_317 = arith.constant 0 : index
    %c0_318 = arith.constant 0 : index
    %378 = vector.load %arg4[%c1_314, %c0_315, %c3_316, %c0_317, %c0_318] : memref<3x2x4x1x32xf32, #tpu.memory_space<vmem>>, vector<1x1x1x1x32xf32>
    %379 = vector.shape_cast %378 : vector<1x1x1x1x32xf32> to vector<1x32xf32>
    %cst_319 = arith.constant dense<0.000000e+00> : vector<2xf32>
    %380 = vector.multi_reduction <add>, %375, %cst_319 [1] : vector<2x32xf32> to vector<2xf32>
    %381 = vector.shape_cast %380 : vector<2xf32> to vector<2x1xf32>
    %cst_320 = arith.constant 3.200000e+01 : f32
    %382 = vector.broadcast %cst_320 : f32 to vector<2x1xf32>
    %383 = arith.divf %381, %382 : vector<2x1xf32>
    %384 = arith.mulf %375, %375 : vector<2x32xf32>
    %cst_321 = arith.constant dense<0.000000e+00> : vector<2xf32>
    %385 = vector.multi_reduction <add>, %384, %cst_321 [1] : vector<2x32xf32> to vector<2xf32>
    %386 = vector.shape_cast %385 : vector<2xf32> to vector<2x1xf32>
    %cst_322 = arith.constant 3.200000e+01 : f32
    %387 = vector.broadcast %cst_322 : f32 to vector<2x1xf32>
    %388 = arith.divf %386, %387 : vector<2x1xf32>
    %389 = arith.mulf %383, %383 : vector<2x1xf32>
    %390 = arith.subf %388, %389 : vector<2x1xf32>
    %391 = vector.broadcast %383 : vector<2x1xf32> to vector<2x32xf32>
    %392 = arith.subf %375, %391 : vector<2x32xf32>
    %cst_323 = arith.constant 9.99999974E-6 : f32
    %393 = vector.broadcast %cst_323 : f32 to vector<2x1xf32>
    %394 = arith.addf %390, %393 : vector<2x1xf32>
    %395 = math.rsqrt %394 : vector<2x1xf32>
    %396 = vector.broadcast %395 : vector<2x1xf32> to vector<2x32xf32>
    %397 = arith.mulf %392, %396 : vector<2x32xf32>
    %398 = vector.broadcast %377 : vector<1x32xf32> to vector<2x32xf32>
    %399 = arith.mulf %397, %398 : vector<2x32xf32>
    %400 = vector.broadcast %379 : vector<1x32xf32> to vector<2x32xf32>
    %401 = arith.addf %399, %400 : vector<2x32xf32>
    %c1_324 = arith.constant 1 : index
    %c0_325 = arith.constant 0 : index
    %c0_326 = arith.constant 0 : index
    %c0_327 = arith.constant 0 : index
    %402 = vector.load %arg7[%c1_324, %c0_325, %c0_326, %c0_327] : memref<3x2x32x128xf32, #tpu.memory_space<vmem>>, vector<1x1x32x128xf32>
    %403 = vector.shape_cast %402 : vector<1x1x32x128xf32> to vector<32x128xf32>
    %cst_328 = arith.constant dense<0.000000e+00> : vector<2x128xf32>
    %404 = tpu.matmul %401, %403, %cst_328 {dimension_numbers = #tpu.dot_dimension_numbers<[1], [0], [0], [1], [0, 0, 1, 1], [], []>} : vector<2x32xf32>, vector<32x128xf32>, vector<2x128xf32> -> vector<2x128xf32>
    %c1_329 = arith.constant 1 : index
    %c0_330 = arith.constant 0 : index
    %c0_331 = arith.constant 0 : index
    %c0_332 = arith.constant 0 : index
    %405 = vector.load %arg8[%c1_329, %c0_330, %c0_331, %c0_332] : memref<3x2x1x128xf32, #tpu.memory_space<vmem>>, vector<1x1x1x128xf32>
    %406 = vector.shape_cast %405 : vector<1x1x1x128xf32> to vector<1x128xf32>
    %407 = vector.broadcast %406 : vector<1x128xf32> to vector<2x128xf32>
    %408 = arith.addf %404, %407 : vector<2x128xf32>
    %cst_333 = arith.constant 0.000000e+00 : f32
    %409 = vector.broadcast %cst_333 : f32 to vector<2x128xf32>
    %410 = arith.maximumf %408, %409 : vector<2x128xf32>
    %c1_334 = arith.constant 1 : index
    %c0_335 = arith.constant 0 : index
    %c0_336 = arith.constant 0 : index
    %c0_337 = arith.constant 0 : index
    %411 = vector.load %arg9[%c1_334, %c0_335, %c0_336, %c0_337] : memref<3x2x128x32xf32, #tpu.memory_space<vmem>>, vector<1x1x128x32xf32>
    %412 = vector.shape_cast %411 : vector<1x1x128x32xf32> to vector<128x32xf32>
    %cst_338 = arith.constant dense<0.000000e+00> : vector<2x32xf32>
    %413 = tpu.matmul %410, %412, %cst_338 {dimension_numbers = #tpu.dot_dimension_numbers<[1], [0], [0], [1], [0, 0, 1, 1], [], []>} : vector<2x128xf32>, vector<128x32xf32>, vector<2x32xf32> -> vector<2x32xf32>
    %414 = arith.addf %375, %413 : vector<2x32xf32>
    %c1_339 = arith.constant 1 : index
    %c0_340 = arith.constant 0 : index
    %c0_341 = arith.constant 0 : index
    %c0_342 = arith.constant 0 : index
    %415 = vector.load %arg10[%c1_339, %c0_340, %c0_341, %c0_342] : memref<3x2x1x32xf32, #tpu.memory_space<vmem>>, vector<1x1x1x32xf32>
    %416 = vector.shape_cast %415 : vector<1x1x1x32xf32> to vector<1x32xf32>
    %417 = vector.broadcast %416 : vector<1x32xf32> to vector<2x32xf32>
    %418 = arith.addf %414, %417 : vector<2x32xf32>
    %c1_343 = arith.constant 1 : index
    %c1_344 = arith.constant 1 : index
    %c0_345 = arith.constant 0 : index
    %c0_346 = arith.constant 0 : index
    %c0_347 = arith.constant 0 : index
    %419 = vector.load %arg4[%c1_343, %c1_344, %c0_345, %c0_346, %c0_347] : memref<3x2x4x1x32xf32, #tpu.memory_space<vmem>>, vector<1x1x1x1x32xf32>
    %420 = vector.shape_cast %419 : vector<1x1x1x1x32xf32> to vector<1x32xf32>
    %c1_348 = arith.constant 1 : index
    %c1_349 = arith.constant 1 : index
    %c1_350 = arith.constant 1 : index
    %c0_351 = arith.constant 0 : index
    %c0_352 = arith.constant 0 : index
    %421 = vector.load %arg4[%c1_348, %c1_349, %c1_350, %c0_351, %c0_352] : memref<3x2x4x1x32xf32, #tpu.memory_space<vmem>>, vector<1x1x1x1x32xf32>
    %422 = vector.shape_cast %421 : vector<1x1x1x1x32xf32> to vector<1x32xf32>
    %cst_353 = arith.constant dense<0.000000e+00> : vector<2xf32>
    %423 = vector.multi_reduction <add>, %418, %cst_353 [1] : vector<2x32xf32> to vector<2xf32>
    %424 = vector.shape_cast %423 : vector<2xf32> to vector<2x1xf32>
    %cst_354 = arith.constant 3.200000e+01 : f32
    %425 = vector.broadcast %cst_354 : f32 to vector<2x1xf32>
    %426 = arith.divf %424, %425 : vector<2x1xf32>
    %427 = arith.mulf %418, %418 : vector<2x32xf32>
    %cst_355 = arith.constant dense<0.000000e+00> : vector<2xf32>
    %428 = vector.multi_reduction <add>, %427, %cst_355 [1] : vector<2x32xf32> to vector<2xf32>
    %429 = vector.shape_cast %428 : vector<2xf32> to vector<2x1xf32>
    %cst_356 = arith.constant 3.200000e+01 : f32
    %430 = vector.broadcast %cst_356 : f32 to vector<2x1xf32>
    %431 = arith.divf %429, %430 : vector<2x1xf32>
    %432 = arith.mulf %426, %426 : vector<2x1xf32>
    %433 = arith.subf %431, %432 : vector<2x1xf32>
    %434 = vector.broadcast %426 : vector<2x1xf32> to vector<2x32xf32>
    %435 = arith.subf %418, %434 : vector<2x32xf32>
    %cst_357 = arith.constant 9.99999974E-6 : f32
    %436 = vector.broadcast %cst_357 : f32 to vector<2x1xf32>
    %437 = arith.addf %433, %436 : vector<2x1xf32>
    %438 = math.rsqrt %437 : vector<2x1xf32>
    %439 = vector.broadcast %438 : vector<2x1xf32> to vector<2x32xf32>
    %440 = arith.mulf %435, %439 : vector<2x32xf32>
    %441 = vector.broadcast %420 : vector<1x32xf32> to vector<2x32xf32>
    %442 = arith.mulf %440, %441 : vector<2x32xf32>
    %443 = vector.broadcast %422 : vector<1x32xf32> to vector<2x32xf32>
    %444 = arith.addf %442, %443 : vector<2x32xf32>
    %c1_358 = arith.constant 1 : index
    %c1_359 = arith.constant 1 : index
    %c0_360 = arith.constant 0 : index
    %c0_361 = arith.constant 0 : index
    %c0_362 = arith.constant 0 : index
    %445 = vector.load %arg5[%c1_358, %c1_359, %c0_360, %c0_361, %c0_362] : memref<3x2x4x32x32xf32, #tpu.memory_space<vmem>>, vector<1x1x1x32x32xf32>
    %446 = vector.shape_cast %445 : vector<1x1x1x32x32xf32> to vector<32x32xf32>
    %cst_363 = arith.constant dense<0.000000e+00> : vector<2x32xf32>
    %447 = tpu.matmul %444, %446, %cst_363 {dimension_numbers = #tpu.dot_dimension_numbers<[1], [0], [0], [1], [0, 0, 1, 1], [], []>} : vector<2x32xf32>, vector<32x32xf32>, vector<2x32xf32> -> vector<2x32xf32>
    %c1_364 = arith.constant 1 : index
    %c1_365 = arith.constant 1 : index
    %c0_366 = arith.constant 0 : index
    %c0_367 = arith.constant 0 : index
    %c0_368 = arith.constant 0 : index
    %448 = vector.load %arg6[%c1_364, %c1_365, %c0_366, %c0_367, %c0_368] : memref<3x2x4x1x32xf32, #tpu.memory_space<vmem>>, vector<1x1x1x1x32xf32>
    %449 = vector.shape_cast %448 : vector<1x1x1x1x32xf32> to vector<1x32xf32>
    %450 = vector.broadcast %449 : vector<1x32xf32> to vector<2x32xf32>
    %451 = arith.addf %447, %450 : vector<2x32xf32>
    %c1_369 = arith.constant 1 : index
    %c1_370 = arith.constant 1 : index
    %c1_371 = arith.constant 1 : index
    %c0_372 = arith.constant 0 : index
    %c0_373 = arith.constant 0 : index
    %452 = vector.load %arg5[%c1_369, %c1_370, %c1_371, %c0_372, %c0_373] : memref<3x2x4x32x32xf32, #tpu.memory_space<vmem>>, vector<1x1x1x32x32xf32>
    %453 = vector.shape_cast %452 : vector<1x1x1x32x32xf32> to vector<32x32xf32>
    %cst_374 = arith.constant dense<0.000000e+00> : vector<2x32xf32>
    %454 = tpu.matmul %451, %453, %cst_374 {dimension_numbers = #tpu.dot_dimension_numbers<[1], [0], [0], [1], [0, 0, 1, 1], [], []>} : vector<2x32xf32>, vector<32x32xf32>, vector<2x32xf32> -> vector<2x32xf32>
    %c1_375 = arith.constant 1 : index
    %c1_376 = arith.constant 1 : index
    %c1_377 = arith.constant 1 : index
    %c0_378 = arith.constant 0 : index
    %c0_379 = arith.constant 0 : index
    %455 = vector.load %arg6[%c1_375, %c1_376, %c1_377, %c0_378, %c0_379] : memref<3x2x4x1x32xf32, #tpu.memory_space<vmem>>, vector<1x1x1x1x32xf32>
    %456 = vector.shape_cast %455 : vector<1x1x1x1x32xf32> to vector<1x32xf32>
    %457 = vector.broadcast %456 : vector<1x32xf32> to vector<2x32xf32>
    %458 = arith.addf %454, %457 : vector<2x32xf32>
    %c1_380 = arith.constant 1 : index
    %c1_381 = arith.constant 1 : index
    %c2_382 = arith.constant 2 : index
    %c0_383 = arith.constant 0 : index
    %c0_384 = arith.constant 0 : index
    %459 = vector.load %arg4[%c1_380, %c1_381, %c2_382, %c0_383, %c0_384] : memref<3x2x4x1x32xf32, #tpu.memory_space<vmem>>, vector<1x1x1x1x32xf32>
    %460 = vector.shape_cast %459 : vector<1x1x1x1x32xf32> to vector<1x32xf32>
    %c1_385 = arith.constant 1 : index
    %c1_386 = arith.constant 1 : index
    %c3_387 = arith.constant 3 : index
    %c0_388 = arith.constant 0 : index
    %c0_389 = arith.constant 0 : index
    %461 = vector.load %arg4[%c1_385, %c1_386, %c3_387, %c0_388, %c0_389] : memref<3x2x4x1x32xf32, #tpu.memory_space<vmem>>, vector<1x1x1x1x32xf32>
    %462 = vector.shape_cast %461 : vector<1x1x1x1x32xf32> to vector<1x32xf32>
    %cst_390 = arith.constant dense<0.000000e+00> : vector<2xf32>
    %463 = vector.multi_reduction <add>, %418, %cst_390 [1] : vector<2x32xf32> to vector<2xf32>
    %464 = vector.shape_cast %463 : vector<2xf32> to vector<2x1xf32>
    %cst_391 = arith.constant 3.200000e+01 : f32
    %465 = vector.broadcast %cst_391 : f32 to vector<2x1xf32>
    %466 = arith.divf %464, %465 : vector<2x1xf32>
    %467 = arith.mulf %418, %418 : vector<2x32xf32>
    %cst_392 = arith.constant dense<0.000000e+00> : vector<2xf32>
    %468 = vector.multi_reduction <add>, %467, %cst_392 [1] : vector<2x32xf32> to vector<2xf32>
    %469 = vector.shape_cast %468 : vector<2xf32> to vector<2x1xf32>
    %cst_393 = arith.constant 3.200000e+01 : f32
    %470 = vector.broadcast %cst_393 : f32 to vector<2x1xf32>
    %471 = arith.divf %469, %470 : vector<2x1xf32>
    %472 = arith.mulf %466, %466 : vector<2x1xf32>
    %473 = arith.subf %471, %472 : vector<2x1xf32>
    %474 = vector.broadcast %466 : vector<2x1xf32> to vector<2x32xf32>
    %475 = arith.subf %418, %474 : vector<2x32xf32>
    %cst_394 = arith.constant 9.99999974E-6 : f32
    %476 = vector.broadcast %cst_394 : f32 to vector<2x1xf32>
    %477 = arith.addf %473, %476 : vector<2x1xf32>
    %478 = math.rsqrt %477 : vector<2x1xf32>
    %479 = vector.broadcast %478 : vector<2x1xf32> to vector<2x32xf32>
    %480 = arith.mulf %475, %479 : vector<2x32xf32>
    %481 = vector.broadcast %460 : vector<1x32xf32> to vector<2x32xf32>
    %482 = arith.mulf %480, %481 : vector<2x32xf32>
    %483 = vector.broadcast %462 : vector<1x32xf32> to vector<2x32xf32>
    %484 = arith.addf %482, %483 : vector<2x32xf32>
    %c1_395 = arith.constant 1 : index
    %c1_396 = arith.constant 1 : index
    %c2_397 = arith.constant 2 : index
    %c0_398 = arith.constant 0 : index
    %c0_399 = arith.constant 0 : index
    %485 = vector.load %arg5[%c1_395, %c1_396, %c2_397, %c0_398, %c0_399] : memref<3x2x4x32x32xf32, #tpu.memory_space<vmem>>, vector<1x1x1x32x32xf32>
    %486 = vector.shape_cast %485 : vector<1x1x1x32x32xf32> to vector<32x32xf32>
    %cst_400 = arith.constant dense<0.000000e+00> : vector<2x32xf32>
    %487 = tpu.matmul %484, %486, %cst_400 {dimension_numbers = #tpu.dot_dimension_numbers<[1], [0], [0], [1], [0, 0, 1, 1], [], []>} : vector<2x32xf32>, vector<32x32xf32>, vector<2x32xf32> -> vector<2x32xf32>
    %c1_401 = arith.constant 1 : index
    %c1_402 = arith.constant 1 : index
    %c2_403 = arith.constant 2 : index
    %c0_404 = arith.constant 0 : index
    %c0_405 = arith.constant 0 : index
    %488 = vector.load %arg6[%c1_401, %c1_402, %c2_403, %c0_404, %c0_405] : memref<3x2x4x1x32xf32, #tpu.memory_space<vmem>>, vector<1x1x1x1x32xf32>
    %489 = vector.shape_cast %488 : vector<1x1x1x1x32xf32> to vector<1x32xf32>
    %490 = vector.broadcast %489 : vector<1x32xf32> to vector<2x32xf32>
    %491 = arith.addf %487, %490 : vector<2x32xf32>
    %c1_406 = arith.constant 1 : index
    %c1_407 = arith.constant 1 : index
    %c3_408 = arith.constant 3 : index
    %c0_409 = arith.constant 0 : index
    %c0_410 = arith.constant 0 : index
    %492 = vector.load %arg5[%c1_406, %c1_407, %c3_408, %c0_409, %c0_410] : memref<3x2x4x32x32xf32, #tpu.memory_space<vmem>>, vector<1x1x1x32x32xf32>
    %493 = vector.shape_cast %492 : vector<1x1x1x32x32xf32> to vector<32x32xf32>
    %cst_411 = arith.constant dense<0.000000e+00> : vector<2x32xf32>
    %494 = tpu.matmul %491, %493, %cst_411 {dimension_numbers = #tpu.dot_dimension_numbers<[1], [0], [0], [1], [0, 0, 1, 1], [], []>} : vector<2x32xf32>, vector<32x32xf32>, vector<2x32xf32> -> vector<2x32xf32>
    %c1_412 = arith.constant 1 : index
    %c1_413 = arith.constant 1 : index
    %c3_414 = arith.constant 3 : index
    %c0_415 = arith.constant 0 : index
    %c0_416 = arith.constant 0 : index
    %495 = vector.load %arg6[%c1_412, %c1_413, %c3_414, %c0_415, %c0_416] : memref<3x2x4x1x32xf32, #tpu.memory_space<vmem>>, vector<1x1x1x1x32xf32>
    %496 = vector.shape_cast %495 : vector<1x1x1x1x32xf32> to vector<1x32xf32>
    %497 = vector.broadcast %496 : vector<1x32xf32> to vector<2x32xf32>
    %498 = arith.addf %494, %497 : vector<2x32xf32>
    %499 = vector.extract_strided_slice %5 {offsets = [0, 3], sizes = [1, 1], strides = [1, 1]} : vector<1x7xf32> to vector<1x1xf32>
    %500 = vector.broadcast %499 : vector<1x1xf32> to vector<2x32xf32>
    %501 = arith.mulf %500, %458 : vector<2x32xf32>
    %502 = arith.addf %418, %501 : vector<2x32xf32>
    %cst_417 = arith.constant 1.000000e+00 : f32
    %503 = vector.broadcast %cst_417 : f32 to vector<1x1xf32>
    %504 = arith.subf %503, %499 : vector<1x1xf32>
    %505 = vector.broadcast %504 : vector<1x1xf32> to vector<2x32xf32>
    %506 = arith.mulf %505, %498 : vector<2x32xf32>
    %507 = arith.addf %502, %506 : vector<2x32xf32>
    %c1_418 = arith.constant 1 : index
    %c1_419 = arith.constant 1 : index
    %c2_420 = arith.constant 2 : index
    %c0_421 = arith.constant 0 : index
    %c0_422 = arith.constant 0 : index
    %508 = vector.load %arg4[%c1_418, %c1_419, %c2_420, %c0_421, %c0_422] : memref<3x2x4x1x32xf32, #tpu.memory_space<vmem>>, vector<1x1x1x1x32xf32>
    %509 = vector.shape_cast %508 : vector<1x1x1x1x32xf32> to vector<1x32xf32>
    %c1_423 = arith.constant 1 : index
    %c1_424 = arith.constant 1 : index
    %c3_425 = arith.constant 3 : index
    %c0_426 = arith.constant 0 : index
    %c0_427 = arith.constant 0 : index
    %510 = vector.load %arg4[%c1_423, %c1_424, %c3_425, %c0_426, %c0_427] : memref<3x2x4x1x32xf32, #tpu.memory_space<vmem>>, vector<1x1x1x1x32xf32>
    %511 = vector.shape_cast %510 : vector<1x1x1x1x32xf32> to vector<1x32xf32>
    %cst_428 = arith.constant dense<0.000000e+00> : vector<2xf32>
    %512 = vector.multi_reduction <add>, %507, %cst_428 [1] : vector<2x32xf32> to vector<2xf32>
    %513 = vector.shape_cast %512 : vector<2xf32> to vector<2x1xf32>
    %cst_429 = arith.constant 3.200000e+01 : f32
    %514 = vector.broadcast %cst_429 : f32 to vector<2x1xf32>
    %515 = arith.divf %513, %514 : vector<2x1xf32>
    %516 = arith.mulf %507, %507 : vector<2x32xf32>
    %cst_430 = arith.constant dense<0.000000e+00> : vector<2xf32>
    %517 = vector.multi_reduction <add>, %516, %cst_430 [1] : vector<2x32xf32> to vector<2xf32>
    %518 = vector.shape_cast %517 : vector<2xf32> to vector<2x1xf32>
    %cst_431 = arith.constant 3.200000e+01 : f32
    %519 = vector.broadcast %cst_431 : f32 to vector<2x1xf32>
    %520 = arith.divf %518, %519 : vector<2x1xf32>
    %521 = arith.mulf %515, %515 : vector<2x1xf32>
    %522 = arith.subf %520, %521 : vector<2x1xf32>
    %523 = vector.broadcast %515 : vector<2x1xf32> to vector<2x32xf32>
    %524 = arith.subf %507, %523 : vector<2x32xf32>
    %cst_432 = arith.constant 9.99999974E-6 : f32
    %525 = vector.broadcast %cst_432 : f32 to vector<2x1xf32>
    %526 = arith.addf %522, %525 : vector<2x1xf32>
    %527 = math.rsqrt %526 : vector<2x1xf32>
    %528 = vector.broadcast %527 : vector<2x1xf32> to vector<2x32xf32>
    %529 = arith.mulf %524, %528 : vector<2x32xf32>
    %530 = vector.broadcast %509 : vector<1x32xf32> to vector<2x32xf32>
    %531 = arith.mulf %529, %530 : vector<2x32xf32>
    %532 = vector.broadcast %511 : vector<1x32xf32> to vector<2x32xf32>
    %533 = arith.addf %531, %532 : vector<2x32xf32>
    %c1_433 = arith.constant 1 : index
    %c1_434 = arith.constant 1 : index
    %c0_435 = arith.constant 0 : index
    %c0_436 = arith.constant 0 : index
    %534 = vector.load %arg7[%c1_433, %c1_434, %c0_435, %c0_436] : memref<3x2x32x128xf32, #tpu.memory_space<vmem>>, vector<1x1x32x128xf32>
    %535 = vector.shape_cast %534 : vector<1x1x32x128xf32> to vector<32x128xf32>
    %cst_437 = arith.constant dense<0.000000e+00> : vector<2x128xf32>
    %536 = tpu.matmul %533, %535, %cst_437 {dimension_numbers = #tpu.dot_dimension_numbers<[1], [0], [0], [1], [0, 0, 1, 1], [], []>} : vector<2x32xf32>, vector<32x128xf32>, vector<2x128xf32> -> vector<2x128xf32>
    %c1_438 = arith.constant 1 : index
    %c1_439 = arith.constant 1 : index
    %c0_440 = arith.constant 0 : index
    %c0_441 = arith.constant 0 : index
    %537 = vector.load %arg8[%c1_438, %c1_439, %c0_440, %c0_441] : memref<3x2x1x128xf32, #tpu.memory_space<vmem>>, vector<1x1x1x128xf32>
    %538 = vector.shape_cast %537 : vector<1x1x1x128xf32> to vector<1x128xf32>
    %539 = vector.broadcast %538 : vector<1x128xf32> to vector<2x128xf32>
    %540 = arith.addf %536, %539 : vector<2x128xf32>
    %cst_442 = arith.constant 0.000000e+00 : f32
    %541 = vector.broadcast %cst_442 : f32 to vector<2x128xf32>
    %542 = arith.maximumf %540, %541 : vector<2x128xf32>
    %c1_443 = arith.constant 1 : index
    %c1_444 = arith.constant 1 : index
    %c0_445 = arith.constant 0 : index
    %c0_446 = arith.constant 0 : index
    %543 = vector.load %arg9[%c1_443, %c1_444, %c0_445, %c0_446] : memref<3x2x128x32xf32, #tpu.memory_space<vmem>>, vector<1x1x128x32xf32>
    %544 = vector.shape_cast %543 : vector<1x1x128x32xf32> to vector<128x32xf32>
    %cst_447 = arith.constant dense<0.000000e+00> : vector<2x32xf32>
    %545 = tpu.matmul %542, %544, %cst_447 {dimension_numbers = #tpu.dot_dimension_numbers<[1], [0], [0], [1], [0, 0, 1, 1], [], []>} : vector<2x128xf32>, vector<128x32xf32>, vector<2x32xf32> -> vector<2x32xf32>
    %546 = arith.addf %507, %545 : vector<2x32xf32>
    %c1_448 = arith.constant 1 : index
    %c1_449 = arith.constant 1 : index
    %c0_450 = arith.constant 0 : index
    %c0_451 = arith.constant 0 : index
    %547 = vector.load %arg10[%c1_448, %c1_449, %c0_450, %c0_451] : memref<3x2x1x32xf32, #tpu.memory_space<vmem>>, vector<1x1x1x32xf32>
    %548 = vector.shape_cast %547 : vector<1x1x1x32xf32> to vector<1x32xf32>
    %549 = vector.broadcast %548 : vector<1x32xf32> to vector<2x32xf32>
    %550 = arith.addf %546, %549 : vector<2x32xf32>
    %c2_452 = arith.constant 2 : index
    %c0_453 = arith.constant 0 : index
    %c0_454 = arith.constant 0 : index
    %551 = vector.load %arg2[%c2_452, %c0_453, %c0_454] : memref<3x16x32xf32, #tpu.memory_space<vmem>>, vector<1x16x32xf32>
    %552 = vector.shape_cast %551 : vector<1x16x32xf32> to vector<16x32xf32>
    %cst_455 = arith.constant dense<0.000000e+00> : vector<2x32xf32>
    %553 = tpu.matmul %8, %552, %cst_455 {dimension_numbers = #tpu.dot_dimension_numbers<[1], [0], [0], [1], [0, 0, 1, 1], [], []>} : vector<2x16xf32>, vector<16x32xf32>, vector<2x32xf32> -> vector<2x32xf32>
    %c2_456 = arith.constant 2 : index
    %c0_457 = arith.constant 0 : index
    %c0_458 = arith.constant 0 : index
    %554 = vector.load %arg3[%c2_456, %c0_457, %c0_458] : memref<3x1x32xf32, #tpu.memory_space<vmem>>, vector<1x1x32xf32>
    %555 = vector.shape_cast %554 : vector<1x1x32xf32> to vector<1x32xf32>
    %556 = vector.broadcast %555 : vector<1x32xf32> to vector<2x32xf32>
    %557 = arith.addf %553, %556 : vector<2x32xf32>
    %c2_459 = arith.constant 2 : index
    %c0_460 = arith.constant 0 : index
    %c0_461 = arith.constant 0 : index
    %c0_462 = arith.constant 0 : index
    %c0_463 = arith.constant 0 : index
    %558 = vector.load %arg4[%c2_459, %c0_460, %c0_461, %c0_462, %c0_463] : memref<3x2x4x1x32xf32, #tpu.memory_space<vmem>>, vector<1x1x1x1x32xf32>
    %559 = vector.shape_cast %558 : vector<1x1x1x1x32xf32> to vector<1x32xf32>
    %c2_464 = arith.constant 2 : index
    %c0_465 = arith.constant 0 : index
    %c1_466 = arith.constant 1 : index
    %c0_467 = arith.constant 0 : index
    %c0_468 = arith.constant 0 : index
    %560 = vector.load %arg4[%c2_464, %c0_465, %c1_466, %c0_467, %c0_468] : memref<3x2x4x1x32xf32, #tpu.memory_space<vmem>>, vector<1x1x1x1x32xf32>
    %561 = vector.shape_cast %560 : vector<1x1x1x1x32xf32> to vector<1x32xf32>
    %cst_469 = arith.constant dense<0.000000e+00> : vector<2xf32>
    %562 = vector.multi_reduction <add>, %557, %cst_469 [1] : vector<2x32xf32> to vector<2xf32>
    %563 = vector.shape_cast %562 : vector<2xf32> to vector<2x1xf32>
    %cst_470 = arith.constant 3.200000e+01 : f32
    %564 = vector.broadcast %cst_470 : f32 to vector<2x1xf32>
    %565 = arith.divf %563, %564 : vector<2x1xf32>
    %566 = arith.mulf %557, %557 : vector<2x32xf32>
    %cst_471 = arith.constant dense<0.000000e+00> : vector<2xf32>
    %567 = vector.multi_reduction <add>, %566, %cst_471 [1] : vector<2x32xf32> to vector<2xf32>
    %568 = vector.shape_cast %567 : vector<2xf32> to vector<2x1xf32>
    %cst_472 = arith.constant 3.200000e+01 : f32
    %569 = vector.broadcast %cst_472 : f32 to vector<2x1xf32>
    %570 = arith.divf %568, %569 : vector<2x1xf32>
    %571 = arith.mulf %565, %565 : vector<2x1xf32>
    %572 = arith.subf %570, %571 : vector<2x1xf32>
    %573 = vector.broadcast %565 : vector<2x1xf32> to vector<2x32xf32>
    %574 = arith.subf %557, %573 : vector<2x32xf32>
    %cst_473 = arith.constant 9.99999974E-6 : f32
    %575 = vector.broadcast %cst_473 : f32 to vector<2x1xf32>
    %576 = arith.addf %572, %575 : vector<2x1xf32>
    %577 = math.rsqrt %576 : vector<2x1xf32>
    %578 = vector.broadcast %577 : vector<2x1xf32> to vector<2x32xf32>
    %579 = arith.mulf %574, %578 : vector<2x32xf32>
    %580 = vector.broadcast %559 : vector<1x32xf32> to vector<2x32xf32>
    %581 = arith.mulf %579, %580 : vector<2x32xf32>
    %582 = vector.broadcast %561 : vector<1x32xf32> to vector<2x32xf32>
    %583 = arith.addf %581, %582 : vector<2x32xf32>
    %c2_474 = arith.constant 2 : index
    %c0_475 = arith.constant 0 : index
    %c0_476 = arith.constant 0 : index
    %c0_477 = arith.constant 0 : index
    %c0_478 = arith.constant 0 : index
    %584 = vector.load %arg5[%c2_474, %c0_475, %c0_476, %c0_477, %c0_478] : memref<3x2x4x32x32xf32, #tpu.memory_space<vmem>>, vector<1x1x1x32x32xf32>
    %585 = vector.shape_cast %584 : vector<1x1x1x32x32xf32> to vector<32x32xf32>
    %cst_479 = arith.constant dense<0.000000e+00> : vector<2x32xf32>
    %586 = tpu.matmul %583, %585, %cst_479 {dimension_numbers = #tpu.dot_dimension_numbers<[1], [0], [0], [1], [0, 0, 1, 1], [], []>} : vector<2x32xf32>, vector<32x32xf32>, vector<2x32xf32> -> vector<2x32xf32>
    %c2_480 = arith.constant 2 : index
    %c0_481 = arith.constant 0 : index
    %c0_482 = arith.constant 0 : index
    %c0_483 = arith.constant 0 : index
    %c0_484 = arith.constant 0 : index
    %587 = vector.load %arg6[%c2_480, %c0_481, %c0_482, %c0_483, %c0_484] : memref<3x2x4x1x32xf32, #tpu.memory_space<vmem>>, vector<1x1x1x1x32xf32>
    %588 = vector.shape_cast %587 : vector<1x1x1x1x32xf32> to vector<1x32xf32>
    %589 = vector.broadcast %588 : vector<1x32xf32> to vector<2x32xf32>
    %590 = arith.addf %586, %589 : vector<2x32xf32>
    %c2_485 = arith.constant 2 : index
    %c0_486 = arith.constant 0 : index
    %c1_487 = arith.constant 1 : index
    %c0_488 = arith.constant 0 : index
    %c0_489 = arith.constant 0 : index
    %591 = vector.load %arg5[%c2_485, %c0_486, %c1_487, %c0_488, %c0_489] : memref<3x2x4x32x32xf32, #tpu.memory_space<vmem>>, vector<1x1x1x32x32xf32>
    %592 = vector.shape_cast %591 : vector<1x1x1x32x32xf32> to vector<32x32xf32>
    %cst_490 = arith.constant dense<0.000000e+00> : vector<2x32xf32>
    %593 = tpu.matmul %590, %592, %cst_490 {dimension_numbers = #tpu.dot_dimension_numbers<[1], [0], [0], [1], [0, 0, 1, 1], [], []>} : vector<2x32xf32>, vector<32x32xf32>, vector<2x32xf32> -> vector<2x32xf32>
    %c2_491 = arith.constant 2 : index
    %c0_492 = arith.constant 0 : index
    %c1_493 = arith.constant 1 : index
    %c0_494 = arith.constant 0 : index
    %c0_495 = arith.constant 0 : index
    %594 = vector.load %arg6[%c2_491, %c0_492, %c1_493, %c0_494, %c0_495] : memref<3x2x4x1x32xf32, #tpu.memory_space<vmem>>, vector<1x1x1x1x32xf32>
    %595 = vector.shape_cast %594 : vector<1x1x1x1x32xf32> to vector<1x32xf32>
    %596 = vector.broadcast %595 : vector<1x32xf32> to vector<2x32xf32>
    %597 = arith.addf %593, %596 : vector<2x32xf32>
    %c2_496 = arith.constant 2 : index
    %c0_497 = arith.constant 0 : index
    %c2_498 = arith.constant 2 : index
    %c0_499 = arith.constant 0 : index
    %c0_500 = arith.constant 0 : index
    %598 = vector.load %arg4[%c2_496, %c0_497, %c2_498, %c0_499, %c0_500] : memref<3x2x4x1x32xf32, #tpu.memory_space<vmem>>, vector<1x1x1x1x32xf32>
    %599 = vector.shape_cast %598 : vector<1x1x1x1x32xf32> to vector<1x32xf32>
    %c2_501 = arith.constant 2 : index
    %c0_502 = arith.constant 0 : index
    %c3_503 = arith.constant 3 : index
    %c0_504 = arith.constant 0 : index
    %c0_505 = arith.constant 0 : index
    %600 = vector.load %arg4[%c2_501, %c0_502, %c3_503, %c0_504, %c0_505] : memref<3x2x4x1x32xf32, #tpu.memory_space<vmem>>, vector<1x1x1x1x32xf32>
    %601 = vector.shape_cast %600 : vector<1x1x1x1x32xf32> to vector<1x32xf32>
    %cst_506 = arith.constant dense<0.000000e+00> : vector<2xf32>
    %602 = vector.multi_reduction <add>, %557, %cst_506 [1] : vector<2x32xf32> to vector<2xf32>
    %603 = vector.shape_cast %602 : vector<2xf32> to vector<2x1xf32>
    %cst_507 = arith.constant 3.200000e+01 : f32
    %604 = vector.broadcast %cst_507 : f32 to vector<2x1xf32>
    %605 = arith.divf %603, %604 : vector<2x1xf32>
    %606 = arith.mulf %557, %557 : vector<2x32xf32>
    %cst_508 = arith.constant dense<0.000000e+00> : vector<2xf32>
    %607 = vector.multi_reduction <add>, %606, %cst_508 [1] : vector<2x32xf32> to vector<2xf32>
    %608 = vector.shape_cast %607 : vector<2xf32> to vector<2x1xf32>
    %cst_509 = arith.constant 3.200000e+01 : f32
    %609 = vector.broadcast %cst_509 : f32 to vector<2x1xf32>
    %610 = arith.divf %608, %609 : vector<2x1xf32>
    %611 = arith.mulf %605, %605 : vector<2x1xf32>
    %612 = arith.subf %610, %611 : vector<2x1xf32>
    %613 = vector.broadcast %605 : vector<2x1xf32> to vector<2x32xf32>
    %614 = arith.subf %557, %613 : vector<2x32xf32>
    %cst_510 = arith.constant 9.99999974E-6 : f32
    %615 = vector.broadcast %cst_510 : f32 to vector<2x1xf32>
    %616 = arith.addf %612, %615 : vector<2x1xf32>
    %617 = math.rsqrt %616 : vector<2x1xf32>
    %618 = vector.broadcast %617 : vector<2x1xf32> to vector<2x32xf32>
    %619 = arith.mulf %614, %618 : vector<2x32xf32>
    %620 = vector.broadcast %599 : vector<1x32xf32> to vector<2x32xf32>
    %621 = arith.mulf %619, %620 : vector<2x32xf32>
    %622 = vector.broadcast %601 : vector<1x32xf32> to vector<2x32xf32>
    %623 = arith.addf %621, %622 : vector<2x32xf32>
    %c2_511 = arith.constant 2 : index
    %c0_512 = arith.constant 0 : index
    %c2_513 = arith.constant 2 : index
    %c0_514 = arith.constant 0 : index
    %c0_515 = arith.constant 0 : index
    %624 = vector.load %arg5[%c2_511, %c0_512, %c2_513, %c0_514, %c0_515] : memref<3x2x4x32x32xf32, #tpu.memory_space<vmem>>, vector<1x1x1x32x32xf32>
    %625 = vector.shape_cast %624 : vector<1x1x1x32x32xf32> to vector<32x32xf32>
    %cst_516 = arith.constant dense<0.000000e+00> : vector<2x32xf32>
    %626 = tpu.matmul %623, %625, %cst_516 {dimension_numbers = #tpu.dot_dimension_numbers<[1], [0], [0], [1], [0, 0, 1, 1], [], []>} : vector<2x32xf32>, vector<32x32xf32>, vector<2x32xf32> -> vector<2x32xf32>
    %c2_517 = arith.constant 2 : index
    %c0_518 = arith.constant 0 : index
    %c2_519 = arith.constant 2 : index
    %c0_520 = arith.constant 0 : index
    %c0_521 = arith.constant 0 : index
    %627 = vector.load %arg6[%c2_517, %c0_518, %c2_519, %c0_520, %c0_521] : memref<3x2x4x1x32xf32, #tpu.memory_space<vmem>>, vector<1x1x1x1x32xf32>
    %628 = vector.shape_cast %627 : vector<1x1x1x1x32xf32> to vector<1x32xf32>
    %629 = vector.broadcast %628 : vector<1x32xf32> to vector<2x32xf32>
    %630 = arith.addf %626, %629 : vector<2x32xf32>
    %c2_522 = arith.constant 2 : index
    %c0_523 = arith.constant 0 : index
    %c3_524 = arith.constant 3 : index
    %c0_525 = arith.constant 0 : index
    %c0_526 = arith.constant 0 : index
    %631 = vector.load %arg5[%c2_522, %c0_523, %c3_524, %c0_525, %c0_526] : memref<3x2x4x32x32xf32, #tpu.memory_space<vmem>>, vector<1x1x1x32x32xf32>
    %632 = vector.shape_cast %631 : vector<1x1x1x32x32xf32> to vector<32x32xf32>
    %cst_527 = arith.constant dense<0.000000e+00> : vector<2x32xf32>
    %633 = tpu.matmul %630, %632, %cst_527 {dimension_numbers = #tpu.dot_dimension_numbers<[1], [0], [0], [1], [0, 0, 1, 1], [], []>} : vector<2x32xf32>, vector<32x32xf32>, vector<2x32xf32> -> vector<2x32xf32>
    %c2_528 = arith.constant 2 : index
    %c0_529 = arith.constant 0 : index
    %c3_530 = arith.constant 3 : index
    %c0_531 = arith.constant 0 : index
    %c0_532 = arith.constant 0 : index
    %634 = vector.load %arg6[%c2_528, %c0_529, %c3_530, %c0_531, %c0_532] : memref<3x2x4x1x32xf32, #tpu.memory_space<vmem>>, vector<1x1x1x1x32xf32>
    %635 = vector.shape_cast %634 : vector<1x1x1x1x32xf32> to vector<1x32xf32>
    %636 = vector.broadcast %635 : vector<1x32xf32> to vector<2x32xf32>
    %637 = arith.addf %633, %636 : vector<2x32xf32>
    %638 = vector.extract_strided_slice %5 {offsets = [0, 4], sizes = [1, 1], strides = [1, 1]} : vector<1x7xf32> to vector<1x1xf32>
    %639 = vector.broadcast %638 : vector<1x1xf32> to vector<2x32xf32>
    %640 = arith.mulf %639, %597 : vector<2x32xf32>
    %641 = arith.addf %557, %640 : vector<2x32xf32>
    %cst_533 = arith.constant 1.000000e+00 : f32
    %642 = vector.broadcast %cst_533 : f32 to vector<1x1xf32>
    %643 = arith.subf %642, %638 : vector<1x1xf32>
    %644 = vector.broadcast %643 : vector<1x1xf32> to vector<2x32xf32>
    %645 = arith.mulf %644, %637 : vector<2x32xf32>
    %646 = arith.addf %641, %645 : vector<2x32xf32>
    %c2_534 = arith.constant 2 : index
    %c0_535 = arith.constant 0 : index
    %c2_536 = arith.constant 2 : index
    %c0_537 = arith.constant 0 : index
    %c0_538 = arith.constant 0 : index
    %647 = vector.load %arg4[%c2_534, %c0_535, %c2_536, %c0_537, %c0_538] : memref<3x2x4x1x32xf32, #tpu.memory_space<vmem>>, vector<1x1x1x1x32xf32>
    %648 = vector.shape_cast %647 : vector<1x1x1x1x32xf32> to vector<1x32xf32>
    %c2_539 = arith.constant 2 : index
    %c0_540 = arith.constant 0 : index
    %c3_541 = arith.constant 3 : index
    %c0_542 = arith.constant 0 : index
    %c0_543 = arith.constant 0 : index
    %649 = vector.load %arg4[%c2_539, %c0_540, %c3_541, %c0_542, %c0_543] : memref<3x2x4x1x32xf32, #tpu.memory_space<vmem>>, vector<1x1x1x1x32xf32>
    %650 = vector.shape_cast %649 : vector<1x1x1x1x32xf32> to vector<1x32xf32>
    %cst_544 = arith.constant dense<0.000000e+00> : vector<2xf32>
    %651 = vector.multi_reduction <add>, %646, %cst_544 [1] : vector<2x32xf32> to vector<2xf32>
    %652 = vector.shape_cast %651 : vector<2xf32> to vector<2x1xf32>
    %cst_545 = arith.constant 3.200000e+01 : f32
    %653 = vector.broadcast %cst_545 : f32 to vector<2x1xf32>
    %654 = arith.divf %652, %653 : vector<2x1xf32>
    %655 = arith.mulf %646, %646 : vector<2x32xf32>
    %cst_546 = arith.constant dense<0.000000e+00> : vector<2xf32>
    %656 = vector.multi_reduction <add>, %655, %cst_546 [1] : vector<2x32xf32> to vector<2xf32>
    %657 = vector.shape_cast %656 : vector<2xf32> to vector<2x1xf32>
    %cst_547 = arith.constant 3.200000e+01 : f32
    %658 = vector.broadcast %cst_547 : f32 to vector<2x1xf32>
    %659 = arith.divf %657, %658 : vector<2x1xf32>
    %660 = arith.mulf %654, %654 : vector<2x1xf32>
    %661 = arith.subf %659, %660 : vector<2x1xf32>
    %662 = vector.broadcast %654 : vector<2x1xf32> to vector<2x32xf32>
    %663 = arith.subf %646, %662 : vector<2x32xf32>
    %cst_548 = arith.constant 9.99999974E-6 : f32
    %664 = vector.broadcast %cst_548 : f32 to vector<2x1xf32>
    %665 = arith.addf %661, %664 : vector<2x1xf32>
    %666 = math.rsqrt %665 : vector<2x1xf32>
    %667 = vector.broadcast %666 : vector<2x1xf32> to vector<2x32xf32>
    %668 = arith.mulf %663, %667 : vector<2x32xf32>
    %669 = vector.broadcast %648 : vector<1x32xf32> to vector<2x32xf32>
    %670 = arith.mulf %668, %669 : vector<2x32xf32>
    %671 = vector.broadcast %650 : vector<1x32xf32> to vector<2x32xf32>
    %672 = arith.addf %670, %671 : vector<2x32xf32>
    %c2_549 = arith.constant 2 : index
    %c0_550 = arith.constant 0 : index
    %c0_551 = arith.constant 0 : index
    %c0_552 = arith.constant 0 : index
    %673 = vector.load %arg7[%c2_549, %c0_550, %c0_551, %c0_552] : memref<3x2x32x128xf32, #tpu.memory_space<vmem>>, vector<1x1x32x128xf32>
    %674 = vector.shape_cast %673 : vector<1x1x32x128xf32> to vector<32x128xf32>
    %cst_553 = arith.constant dense<0.000000e+00> : vector<2x128xf32>
    %675 = tpu.matmul %672, %674, %cst_553 {dimension_numbers = #tpu.dot_dimension_numbers<[1], [0], [0], [1], [0, 0, 1, 1], [], []>} : vector<2x32xf32>, vector<32x128xf32>, vector<2x128xf32> -> vector<2x128xf32>
    %c2_554 = arith.constant 2 : index
    %c0_555 = arith.constant 0 : index
    %c0_556 = arith.constant 0 : index
    %c0_557 = arith.constant 0 : index
    %676 = vector.load %arg8[%c2_554, %c0_555, %c0_556, %c0_557] : memref<3x2x1x128xf32, #tpu.memory_space<vmem>>, vector<1x1x1x128xf32>
    %677 = vector.shape_cast %676 : vector<1x1x1x128xf32> to vector<1x128xf32>
    %678 = vector.broadcast %677 : vector<1x128xf32> to vector<2x128xf32>
    %679 = arith.addf %675, %678 : vector<2x128xf32>
    %cst_558 = arith.constant 0.000000e+00 : f32
    %680 = vector.broadcast %cst_558 : f32 to vector<2x128xf32>
    %681 = arith.maximumf %679, %680 : vector<2x128xf32>
    %c2_559 = arith.constant 2 : index
    %c0_560 = arith.constant 0 : index
    %c0_561 = arith.constant 0 : index
    %c0_562 = arith.constant 0 : index
    %682 = vector.load %arg9[%c2_559, %c0_560, %c0_561, %c0_562] : memref<3x2x128x32xf32, #tpu.memory_space<vmem>>, vector<1x1x128x32xf32>
    %683 = vector.shape_cast %682 : vector<1x1x128x32xf32> to vector<128x32xf32>
    %cst_563 = arith.constant dense<0.000000e+00> : vector<2x32xf32>
    %684 = tpu.matmul %681, %683, %cst_563 {dimension_numbers = #tpu.dot_dimension_numbers<[1], [0], [0], [1], [0, 0, 1, 1], [], []>} : vector<2x128xf32>, vector<128x32xf32>, vector<2x32xf32> -> vector<2x32xf32>
    %685 = arith.addf %646, %684 : vector<2x32xf32>
    %c2_564 = arith.constant 2 : index
    %c0_565 = arith.constant 0 : index
    %c0_566 = arith.constant 0 : index
    %c0_567 = arith.constant 0 : index
    %686 = vector.load %arg10[%c2_564, %c0_565, %c0_566, %c0_567] : memref<3x2x1x32xf32, #tpu.memory_space<vmem>>, vector<1x1x1x32xf32>
    %687 = vector.shape_cast %686 : vector<1x1x1x32xf32> to vector<1x32xf32>
    %688 = vector.broadcast %687 : vector<1x32xf32> to vector<2x32xf32>
    %689 = arith.addf %685, %688 : vector<2x32xf32>
    %c2_568 = arith.constant 2 : index
    %c1_569 = arith.constant 1 : index
    %c0_570 = arith.constant 0 : index
    %c0_571 = arith.constant 0 : index
    %c0_572 = arith.constant 0 : index
    %690 = vector.load %arg4[%c2_568, %c1_569, %c0_570, %c0_571, %c0_572] : memref<3x2x4x1x32xf32, #tpu.memory_space<vmem>>, vector<1x1x1x1x32xf32>
    %691 = vector.shape_cast %690 : vector<1x1x1x1x32xf32> to vector<1x32xf32>
    %c2_573 = arith.constant 2 : index
    %c1_574 = arith.constant 1 : index
    %c1_575 = arith.constant 1 : index
    %c0_576 = arith.constant 0 : index
    %c0_577 = arith.constant 0 : index
    %692 = vector.load %arg4[%c2_573, %c1_574, %c1_575, %c0_576, %c0_577] : memref<3x2x4x1x32xf32, #tpu.memory_space<vmem>>, vector<1x1x1x1x32xf32>
    %693 = vector.shape_cast %692 : vector<1x1x1x1x32xf32> to vector<1x32xf32>
    %cst_578 = arith.constant dense<0.000000e+00> : vector<2xf32>
    %694 = vector.multi_reduction <add>, %689, %cst_578 [1] : vector<2x32xf32> to vector<2xf32>
    %695 = vector.shape_cast %694 : vector<2xf32> to vector<2x1xf32>
    %cst_579 = arith.constant 3.200000e+01 : f32
    %696 = vector.broadcast %cst_579 : f32 to vector<2x1xf32>
    %697 = arith.divf %695, %696 : vector<2x1xf32>
    %698 = arith.mulf %689, %689 : vector<2x32xf32>
    %cst_580 = arith.constant dense<0.000000e+00> : vector<2xf32>
    %699 = vector.multi_reduction <add>, %698, %cst_580 [1] : vector<2x32xf32> to vector<2xf32>
    %700 = vector.shape_cast %699 : vector<2xf32> to vector<2x1xf32>
    %cst_581 = arith.constant 3.200000e+01 : f32
    %701 = vector.broadcast %cst_581 : f32 to vector<2x1xf32>
    %702 = arith.divf %700, %701 : vector<2x1xf32>
    %703 = arith.mulf %697, %697 : vector<2x1xf32>
    %704 = arith.subf %702, %703 : vector<2x1xf32>
    %705 = vector.broadcast %697 : vector<2x1xf32> to vector<2x32xf32>
    %706 = arith.subf %689, %705 : vector<2x32xf32>
    %cst_582 = arith.constant 9.99999974E-6 : f32
    %707 = vector.broadcast %cst_582 : f32 to vector<2x1xf32>
    %708 = arith.addf %704, %707 : vector<2x1xf32>
    %709 = math.rsqrt %708 : vector<2x1xf32>
    %710 = vector.broadcast %709 : vector<2x1xf32> to vector<2x32xf32>
    %711 = arith.mulf %706, %710 : vector<2x32xf32>
    %712 = vector.broadcast %691 : vector<1x32xf32> to vector<2x32xf32>
    %713 = arith.mulf %711, %712 : vector<2x32xf32>
    %714 = vector.broadcast %693 : vector<1x32xf32> to vector<2x32xf32>
    %715 = arith.addf %713, %714 : vector<2x32xf32>
    %c2_583 = arith.constant 2 : index
    %c1_584 = arith.constant 1 : index
    %c0_585 = arith.constant 0 : index
    %c0_586 = arith.constant 0 : index
    %c0_587 = arith.constant 0 : index
    %716 = vector.load %arg5[%c2_583, %c1_584, %c0_585, %c0_586, %c0_587] : memref<3x2x4x32x32xf32, #tpu.memory_space<vmem>>, vector<1x1x1x32x32xf32>
    %717 = vector.shape_cast %716 : vector<1x1x1x32x32xf32> to vector<32x32xf32>
    %cst_588 = arith.constant dense<0.000000e+00> : vector<2x32xf32>
    %718 = tpu.matmul %715, %717, %cst_588 {dimension_numbers = #tpu.dot_dimension_numbers<[1], [0], [0], [1], [0, 0, 1, 1], [], []>} : vector<2x32xf32>, vector<32x32xf32>, vector<2x32xf32> -> vector<2x32xf32>
    %c2_589 = arith.constant 2 : index
    %c1_590 = arith.constant 1 : index
    %c0_591 = arith.constant 0 : index
    %c0_592 = arith.constant 0 : index
    %c0_593 = arith.constant 0 : index
    %719 = vector.load %arg6[%c2_589, %c1_590, %c0_591, %c0_592, %c0_593] : memref<3x2x4x1x32xf32, #tpu.memory_space<vmem>>, vector<1x1x1x1x32xf32>
    %720 = vector.shape_cast %719 : vector<1x1x1x1x32xf32> to vector<1x32xf32>
    %721 = vector.broadcast %720 : vector<1x32xf32> to vector<2x32xf32>
    %722 = arith.addf %718, %721 : vector<2x32xf32>
    %c2_594 = arith.constant 2 : index
    %c1_595 = arith.constant 1 : index
    %c1_596 = arith.constant 1 : index
    %c0_597 = arith.constant 0 : index
    %c0_598 = arith.constant 0 : index
    %723 = vector.load %arg5[%c2_594, %c1_595, %c1_596, %c0_597, %c0_598] : memref<3x2x4x32x32xf32, #tpu.memory_space<vmem>>, vector<1x1x1x32x32xf32>
    %724 = vector.shape_cast %723 : vector<1x1x1x32x32xf32> to vector<32x32xf32>
    %cst_599 = arith.constant dense<0.000000e+00> : vector<2x32xf32>
    %725 = tpu.matmul %722, %724, %cst_599 {dimension_numbers = #tpu.dot_dimension_numbers<[1], [0], [0], [1], [0, 0, 1, 1], [], []>} : vector<2x32xf32>, vector<32x32xf32>, vector<2x32xf32> -> vector<2x32xf32>
    %c2_600 = arith.constant 2 : index
    %c1_601 = arith.constant 1 : index
    %c1_602 = arith.constant 1 : index
    %c0_603 = arith.constant 0 : index
    %c0_604 = arith.constant 0 : index
    %726 = vector.load %arg6[%c2_600, %c1_601, %c1_602, %c0_603, %c0_604] : memref<3x2x4x1x32xf32, #tpu.memory_space<vmem>>, vector<1x1x1x1x32xf32>
    %727 = vector.shape_cast %726 : vector<1x1x1x1x32xf32> to vector<1x32xf32>
    %728 = vector.broadcast %727 : vector<1x32xf32> to vector<2x32xf32>
    %729 = arith.addf %725, %728 : vector<2x32xf32>
    %c2_605 = arith.constant 2 : index
    %c1_606 = arith.constant 1 : index
    %c2_607 = arith.constant 2 : index
    %c0_608 = arith.constant 0 : index
    %c0_609 = arith.constant 0 : index
    %730 = vector.load %arg4[%c2_605, %c1_606, %c2_607, %c0_608, %c0_609] : memref<3x2x4x1x32xf32, #tpu.memory_space<vmem>>, vector<1x1x1x1x32xf32>
    %731 = vector.shape_cast %730 : vector<1x1x1x1x32xf32> to vector<1x32xf32>
    %c2_610 = arith.constant 2 : index
    %c1_611 = arith.constant 1 : index
    %c3_612 = arith.constant 3 : index
    %c0_613 = arith.constant 0 : index
    %c0_614 = arith.constant 0 : index
    %732 = vector.load %arg4[%c2_610, %c1_611, %c3_612, %c0_613, %c0_614] : memref<3x2x4x1x32xf32, #tpu.memory_space<vmem>>, vector<1x1x1x1x32xf32>
    %733 = vector.shape_cast %732 : vector<1x1x1x1x32xf32> to vector<1x32xf32>
    %cst_615 = arith.constant dense<0.000000e+00> : vector<2xf32>
    %734 = vector.multi_reduction <add>, %689, %cst_615 [1] : vector<2x32xf32> to vector<2xf32>
    %735 = vector.shape_cast %734 : vector<2xf32> to vector<2x1xf32>
    %cst_616 = arith.constant 3.200000e+01 : f32
    %736 = vector.broadcast %cst_616 : f32 to vector<2x1xf32>
    %737 = arith.divf %735, %736 : vector<2x1xf32>
    %738 = arith.mulf %689, %689 : vector<2x32xf32>
    %cst_617 = arith.constant dense<0.000000e+00> : vector<2xf32>
    %739 = vector.multi_reduction <add>, %738, %cst_617 [1] : vector<2x32xf32> to vector<2xf32>
    %740 = vector.shape_cast %739 : vector<2xf32> to vector<2x1xf32>
    %cst_618 = arith.constant 3.200000e+01 : f32
    %741 = vector.broadcast %cst_618 : f32 to vector<2x1xf32>
    %742 = arith.divf %740, %741 : vector<2x1xf32>
    %743 = arith.mulf %737, %737 : vector<2x1xf32>
    %744 = arith.subf %742, %743 : vector<2x1xf32>
    %745 = vector.broadcast %737 : vector<2x1xf32> to vector<2x32xf32>
    %746 = arith.subf %689, %745 : vector<2x32xf32>
    %cst_619 = arith.constant 9.99999974E-6 : f32
    %747 = vector.broadcast %cst_619 : f32 to vector<2x1xf32>
    %748 = arith.addf %744, %747 : vector<2x1xf32>
    %749 = math.rsqrt %748 : vector<2x1xf32>
    %750 = vector.broadcast %749 : vector<2x1xf32> to vector<2x32xf32>
    %751 = arith.mulf %746, %750 : vector<2x32xf32>
    %752 = vector.broadcast %731 : vector<1x32xf32> to vector<2x32xf32>
    %753 = arith.mulf %751, %752 : vector<2x32xf32>
    %754 = vector.broadcast %733 : vector<1x32xf32> to vector<2x32xf32>
    %755 = arith.addf %753, %754 : vector<2x32xf32>
    %c2_620 = arith.constant 2 : index
    %c1_621 = arith.constant 1 : index
    %c2_622 = arith.constant 2 : index
    %c0_623 = arith.constant 0 : index
    %c0_624 = arith.constant 0 : index
    %756 = vector.load %arg5[%c2_620, %c1_621, %c2_622, %c0_623, %c0_624] : memref<3x2x4x32x32xf32, #tpu.memory_space<vmem>>, vector<1x1x1x32x32xf32>
    %757 = vector.shape_cast %756 : vector<1x1x1x32x32xf32> to vector<32x32xf32>
    %cst_625 = arith.constant dense<0.000000e+00> : vector<2x32xf32>
    %758 = tpu.matmul %755, %757, %cst_625 {dimension_numbers = #tpu.dot_dimension_numbers<[1], [0], [0], [1], [0, 0, 1, 1], [], []>} : vector<2x32xf32>, vector<32x32xf32>, vector<2x32xf32> -> vector<2x32xf32>
    %c2_626 = arith.constant 2 : index
    %c1_627 = arith.constant 1 : index
    %c2_628 = arith.constant 2 : index
    %c0_629 = arith.constant 0 : index
    %c0_630 = arith.constant 0 : index
    %759 = vector.load %arg6[%c2_626, %c1_627, %c2_628, %c0_629, %c0_630] : memref<3x2x4x1x32xf32, #tpu.memory_space<vmem>>, vector<1x1x1x1x32xf32>
    %760 = vector.shape_cast %759 : vector<1x1x1x1x32xf32> to vector<1x32xf32>
    %761 = vector.broadcast %760 : vector<1x32xf32> to vector<2x32xf32>
    %762 = arith.addf %758, %761 : vector<2x32xf32>
    %c2_631 = arith.constant 2 : index
    %c1_632 = arith.constant 1 : index
    %c3_633 = arith.constant 3 : index
    %c0_634 = arith.constant 0 : index
    %c0_635 = arith.constant 0 : index
    %763 = vector.load %arg5[%c2_631, %c1_632, %c3_633, %c0_634, %c0_635] : memref<3x2x4x32x32xf32, #tpu.memory_space<vmem>>, vector<1x1x1x32x32xf32>
    %764 = vector.shape_cast %763 : vector<1x1x1x32x32xf32> to vector<32x32xf32>
    %cst_636 = arith.constant dense<0.000000e+00> : vector<2x32xf32>
    %765 = tpu.matmul %762, %764, %cst_636 {dimension_numbers = #tpu.dot_dimension_numbers<[1], [0], [0], [1], [0, 0, 1, 1], [], []>} : vector<2x32xf32>, vector<32x32xf32>, vector<2x32xf32> -> vector<2x32xf32>
    %c2_637 = arith.constant 2 : index
    %c1_638 = arith.constant 1 : index
    %c3_639 = arith.constant 3 : index
    %c0_640 = arith.constant 0 : index
    %c0_641 = arith.constant 0 : index
    %766 = vector.load %arg6[%c2_637, %c1_638, %c3_639, %c0_640, %c0_641] : memref<3x2x4x1x32xf32, #tpu.memory_space<vmem>>, vector<1x1x1x1x32xf32>
    %767 = vector.shape_cast %766 : vector<1x1x1x1x32xf32> to vector<1x32xf32>
    %768 = vector.broadcast %767 : vector<1x32xf32> to vector<2x32xf32>
    %769 = arith.addf %765, %768 : vector<2x32xf32>
    %770 = vector.extract_strided_slice %5 {offsets = [0, 5], sizes = [1, 1], strides = [1, 1]} : vector<1x7xf32> to vector<1x1xf32>
    %771 = vector.broadcast %770 : vector<1x1xf32> to vector<2x32xf32>
    %772 = arith.mulf %771, %729 : vector<2x32xf32>
    %773 = arith.addf %689, %772 : vector<2x32xf32>
    %cst_642 = arith.constant 1.000000e+00 : f32
    %774 = vector.broadcast %cst_642 : f32 to vector<1x1xf32>
    %775 = arith.subf %774, %770 : vector<1x1xf32>
    %776 = vector.broadcast %775 : vector<1x1xf32> to vector<2x32xf32>
    %777 = arith.mulf %776, %769 : vector<2x32xf32>
    %778 = arith.addf %773, %777 : vector<2x32xf32>
    %c2_643 = arith.constant 2 : index
    %c1_644 = arith.constant 1 : index
    %c2_645 = arith.constant 2 : index
    %c0_646 = arith.constant 0 : index
    %c0_647 = arith.constant 0 : index
    %779 = vector.load %arg4[%c2_643, %c1_644, %c2_645, %c0_646, %c0_647] : memref<3x2x4x1x32xf32, #tpu.memory_space<vmem>>, vector<1x1x1x1x32xf32>
    %780 = vector.shape_cast %779 : vector<1x1x1x1x32xf32> to vector<1x32xf32>
    %c2_648 = arith.constant 2 : index
    %c1_649 = arith.constant 1 : index
    %c3_650 = arith.constant 3 : index
    %c0_651 = arith.constant 0 : index
    %c0_652 = arith.constant 0 : index
    %781 = vector.load %arg4[%c2_648, %c1_649, %c3_650, %c0_651, %c0_652] : memref<3x2x4x1x32xf32, #tpu.memory_space<vmem>>, vector<1x1x1x1x32xf32>
    %782 = vector.shape_cast %781 : vector<1x1x1x1x32xf32> to vector<1x32xf32>
    %cst_653 = arith.constant dense<0.000000e+00> : vector<2xf32>
    %783 = vector.multi_reduction <add>, %778, %cst_653 [1] : vector<2x32xf32> to vector<2xf32>
    %784 = vector.shape_cast %783 : vector<2xf32> to vector<2x1xf32>
    %cst_654 = arith.constant 3.200000e+01 : f32
    %785 = vector.broadcast %cst_654 : f32 to vector<2x1xf32>
    %786 = arith.divf %784, %785 : vector<2x1xf32>
    %787 = arith.mulf %778, %778 : vector<2x32xf32>
    %cst_655 = arith.constant dense<0.000000e+00> : vector<2xf32>
    %788 = vector.multi_reduction <add>, %787, %cst_655 [1] : vector<2x32xf32> to vector<2xf32>
    %789 = vector.shape_cast %788 : vector<2xf32> to vector<2x1xf32>
    %cst_656 = arith.constant 3.200000e+01 : f32
    %790 = vector.broadcast %cst_656 : f32 to vector<2x1xf32>
    %791 = arith.divf %789, %790 : vector<2x1xf32>
    %792 = arith.mulf %786, %786 : vector<2x1xf32>
    %793 = arith.subf %791, %792 : vector<2x1xf32>
    %794 = vector.broadcast %786 : vector<2x1xf32> to vector<2x32xf32>
    %795 = arith.subf %778, %794 : vector<2x32xf32>
    %cst_657 = arith.constant 9.99999974E-6 : f32
    %796 = vector.broadcast %cst_657 : f32 to vector<2x1xf32>
    %797 = arith.addf %793, %796 : vector<2x1xf32>
    %798 = math.rsqrt %797 : vector<2x1xf32>
    %799 = vector.broadcast %798 : vector<2x1xf32> to vector<2x32xf32>
    %800 = arith.mulf %795, %799 : vector<2x32xf32>
    %801 = vector.broadcast %780 : vector<1x32xf32> to vector<2x32xf32>
    %802 = arith.mulf %800, %801 : vector<2x32xf32>
    %803 = vector.broadcast %782 : vector<1x32xf32> to vector<2x32xf32>
    %804 = arith.addf %802, %803 : vector<2x32xf32>
    %c2_658 = arith.constant 2 : index
    %c1_659 = arith.constant 1 : index
    %c0_660 = arith.constant 0 : index
    %c0_661 = arith.constant 0 : index
    %805 = vector.load %arg7[%c2_658, %c1_659, %c0_660, %c0_661] : memref<3x2x32x128xf32, #tpu.memory_space<vmem>>, vector<1x1x32x128xf32>
    %806 = vector.shape_cast %805 : vector<1x1x32x128xf32> to vector<32x128xf32>
    %cst_662 = arith.constant dense<0.000000e+00> : vector<2x128xf32>
    %807 = tpu.matmul %804, %806, %cst_662 {dimension_numbers = #tpu.dot_dimension_numbers<[1], [0], [0], [1], [0, 0, 1, 1], [], []>} : vector<2x32xf32>, vector<32x128xf32>, vector<2x128xf32> -> vector<2x128xf32>
    %c2_663 = arith.constant 2 : index
    %c1_664 = arith.constant 1 : index
    %c0_665 = arith.constant 0 : index
    %c0_666 = arith.constant 0 : index
    %808 = vector.load %arg8[%c2_663, %c1_664, %c0_665, %c0_666] : memref<3x2x1x128xf32, #tpu.memory_space<vmem>>, vector<1x1x1x128xf32>
    %809 = vector.shape_cast %808 : vector<1x1x1x128xf32> to vector<1x128xf32>
    %810 = vector.broadcast %809 : vector<1x128xf32> to vector<2x128xf32>
    %811 = arith.addf %807, %810 : vector<2x128xf32>
    %cst_667 = arith.constant 0.000000e+00 : f32
    %812 = vector.broadcast %cst_667 : f32 to vector<2x128xf32>
    %813 = arith.maximumf %811, %812 : vector<2x128xf32>
    %c2_668 = arith.constant 2 : index
    %c1_669 = arith.constant 1 : index
    %c0_670 = arith.constant 0 : index
    %c0_671 = arith.constant 0 : index
    %814 = vector.load %arg9[%c2_668, %c1_669, %c0_670, %c0_671] : memref<3x2x128x32xf32, #tpu.memory_space<vmem>>, vector<1x1x128x32xf32>
    %815 = vector.shape_cast %814 : vector<1x1x128x32xf32> to vector<128x32xf32>
    %cst_672 = arith.constant dense<0.000000e+00> : vector<2x32xf32>
    %816 = tpu.matmul %813, %815, %cst_672 {dimension_numbers = #tpu.dot_dimension_numbers<[1], [0], [0], [1], [0, 0, 1, 1], [], []>} : vector<2x128xf32>, vector<128x32xf32>, vector<2x32xf32> -> vector<2x32xf32>
    %817 = arith.addf %778, %816 : vector<2x32xf32>
    %c2_673 = arith.constant 2 : index
    %c1_674 = arith.constant 1 : index
    %c0_675 = arith.constant 0 : index
    %c0_676 = arith.constant 0 : index
    %818 = vector.load %arg10[%c2_673, %c1_674, %c0_675, %c0_676] : memref<3x2x1x32xf32, #tpu.memory_space<vmem>>, vector<1x1x1x32xf32>
    %819 = vector.shape_cast %818 : vector<1x1x1x32xf32> to vector<1x32xf32>
    %820 = vector.broadcast %819 : vector<1x32xf32> to vector<2x32xf32>
    %821 = arith.addf %817, %820 : vector<2x32xf32>
    %822 = vector.shape_cast %279 : vector<2x32xf32> to vector<2x1x32xf32>
    %823 = vector.shape_cast %550 : vector<2x32xf32> to vector<2x1x32xf32>
    %824 = vector.shape_cast %821 : vector<2x32xf32> to vector<2x1x32xf32>
    %825 = tpu.concatenate %822, %823, %824 in 1 : vector<2x1x32xf32>, vector<2x1x32xf32>, vector<2x1x32xf32> -> vector<2x3x32xf32>
    %c0_677 = arith.constant 0 : index
    %c0_678 = arith.constant 0 : index
    %c0_679 = arith.constant 0 : index
    %826 = vector.load %arg11[%c0_677, %c0_678, %c0_679] : memref<4x1x32xf32, #tpu.memory_space<vmem>>, vector<1x1x32xf32>
    %827 = vector.shape_cast %826 : vector<1x1x32xf32> to vector<1x32xf32>
    %c1_680 = arith.constant 1 : index
    %c0_681 = arith.constant 0 : index
    %c0_682 = arith.constant 0 : index
    %828 = vector.load %arg11[%c1_680, %c0_681, %c0_682] : memref<4x1x32xf32, #tpu.memory_space<vmem>>, vector<1x1x32xf32>
    %829 = vector.shape_cast %828 : vector<1x1x32xf32> to vector<1x32xf32>
    %cst_683 = arith.constant dense<0.000000e+00> : vector<2x3xf32>
    %830 = vector.multi_reduction <add>, %825, %cst_683 [2] : vector<2x3x32xf32> to vector<2x3xf32>
    %831 = vector.shape_cast %830 : vector<2x3xf32> to vector<2x3x1xf32>
    %cst_684 = arith.constant 3.200000e+01 : f32
    %832 = vector.broadcast %cst_684 : f32 to vector<2x3x1xf32>
    %833 = arith.divf %831, %832 : vector<2x3x1xf32>
    %834 = arith.mulf %825, %825 : vector<2x3x32xf32>
    %cst_685 = arith.constant dense<0.000000e+00> : vector<2x3xf32>
    %835 = vector.multi_reduction <add>, %834, %cst_685 [2] : vector<2x3x32xf32> to vector<2x3xf32>
    %836 = vector.shape_cast %835 : vector<2x3xf32> to vector<2x3x1xf32>
    %cst_686 = arith.constant 3.200000e+01 : f32
    %837 = vector.broadcast %cst_686 : f32 to vector<2x3x1xf32>
    %838 = arith.divf %836, %837 : vector<2x3x1xf32>
    %839 = arith.mulf %833, %833 : vector<2x3x1xf32>
    %840 = arith.subf %838, %839 : vector<2x3x1xf32>
    %841 = vector.broadcast %833 : vector<2x3x1xf32> to vector<2x3x32xf32>
    %842 = arith.subf %825, %841 : vector<2x3x32xf32>
    %cst_687 = arith.constant 9.99999974E-6 : f32
    %843 = vector.broadcast %cst_687 : f32 to vector<2x3x1xf32>
    %844 = arith.addf %840, %843 : vector<2x3x1xf32>
    %845 = math.rsqrt %844 : vector<2x3x1xf32>
    %846 = vector.broadcast %845 : vector<2x3x1xf32> to vector<2x3x32xf32>
    %847 = arith.mulf %842, %846 : vector<2x3x32xf32>
    %848 = vector.shape_cast %827 : vector<1x32xf32> to vector<1x1x32xf32>
    %849 = vector.broadcast %848 : vector<1x1x32xf32> to vector<2x3x32xf32>
    %850 = arith.mulf %847, %849 : vector<2x3x32xf32>
    %851 = vector.shape_cast %829 : vector<1x32xf32> to vector<1x1x32xf32>
    %852 = vector.broadcast %851 : vector<1x1x32xf32> to vector<2x3x32xf32>
    %853 = arith.addf %850, %852 : vector<2x3x32xf32>
    %854 = vector.shape_cast %853 : vector<2x3x32xf32> to vector<6x32xf32>
    %c0_688 = arith.constant 0 : index
    %c0_689 = arith.constant 0 : index
    %c0_690 = arith.constant 0 : index
    %c0_691 = arith.constant 0 : index
    %855 = vector.load %arg12[%c0_688, %c0_689, %c0_690, %c0_691] : memref<2x3x32x32xf32, #tpu.memory_space<vmem>>, vector<1x1x32x32xf32>
    %856 = vector.shape_cast %855 : vector<1x1x32x32xf32> to vector<32x32xf32>
    %cst_692 = arith.constant dense<0.000000e+00> : vector<6x32xf32>
    %857 = tpu.matmul %854, %856, %cst_692 {dimension_numbers = #tpu.dot_dimension_numbers<[1], [0], [0], [1], [0, 0, 1, 1], [], []>} : vector<6x32xf32>, vector<32x32xf32>, vector<6x32xf32> -> vector<6x32xf32>
    %c0_693 = arith.constant 0 : index
    %c0_694 = arith.constant 0 : index
    %c0_695 = arith.constant 0 : index
    %c0_696 = arith.constant 0 : index
    %858 = vector.load %arg13[%c0_693, %c0_694, %c0_695, %c0_696] : memref<2x3x1x32xf32, #tpu.memory_space<vmem>>, vector<1x1x1x32xf32>
    %859 = vector.shape_cast %858 : vector<1x1x1x32xf32> to vector<1x32xf32>
    %860 = vector.broadcast %859 : vector<1x32xf32> to vector<6x32xf32>
    %861 = arith.addf %857, %860 : vector<6x32xf32>
    %862 = vector.shape_cast %861 : vector<6x32xf32> to vector<2x3x32xf32>
    %cst_697 = arith.constant 0.353553385 : f32
    %863 = vector.broadcast %cst_697 : f32 to vector<2x3x32xf32>
    %864 = arith.mulf %862, %863 : vector<2x3x32xf32>
    %c0_698 = arith.constant 0 : index
    %c1_699 = arith.constant 1 : index
    %c0_700 = arith.constant 0 : index
    %c0_701 = arith.constant 0 : index
    %865 = vector.load %arg12[%c0_698, %c1_699, %c0_700, %c0_701] : memref<2x3x32x32xf32, #tpu.memory_space<vmem>>, vector<1x1x32x32xf32>
    %866 = vector.shape_cast %865 : vector<1x1x32x32xf32> to vector<32x32xf32>
    %cst_702 = arith.constant dense<0.000000e+00> : vector<6x32xf32>
    %867 = tpu.matmul %854, %866, %cst_702 {dimension_numbers = #tpu.dot_dimension_numbers<[1], [0], [0], [1], [0, 0, 1, 1], [], []>} : vector<6x32xf32>, vector<32x32xf32>, vector<6x32xf32> -> vector<6x32xf32>
    %c0_703 = arith.constant 0 : index
    %c1_704 = arith.constant 1 : index
    %c0_705 = arith.constant 0 : index
    %c0_706 = arith.constant 0 : index
    %868 = vector.load %arg13[%c0_703, %c1_704, %c0_705, %c0_706] : memref<2x3x1x32xf32, #tpu.memory_space<vmem>>, vector<1x1x1x32xf32>
    %869 = vector.shape_cast %868 : vector<1x1x1x32xf32> to vector<1x32xf32>
    %870 = vector.broadcast %869 : vector<1x32xf32> to vector<6x32xf32>
    %871 = arith.addf %867, %870 : vector<6x32xf32>
    %872 = vector.shape_cast %871 : vector<6x32xf32> to vector<2x3x32xf32>
    %c0_707 = arith.constant 0 : index
    %c2_708 = arith.constant 2 : index
    %c0_709 = arith.constant 0 : index
    %c0_710 = arith.constant 0 : index
    %873 = vector.load %arg12[%c0_707, %c2_708, %c0_709, %c0_710] : memref<2x3x32x32xf32, #tpu.memory_space<vmem>>, vector<1x1x32x32xf32>
    %874 = vector.shape_cast %873 : vector<1x1x32x32xf32> to vector<32x32xf32>
    %cst_711 = arith.constant dense<0.000000e+00> : vector<6x32xf32>
    %875 = tpu.matmul %854, %874, %cst_711 {dimension_numbers = #tpu.dot_dimension_numbers<[1], [0], [0], [1], [0, 0, 1, 1], [], []>} : vector<6x32xf32>, vector<32x32xf32>, vector<6x32xf32> -> vector<6x32xf32>
    %c0_712 = arith.constant 0 : index
    %c2_713 = arith.constant 2 : index
    %c0_714 = arith.constant 0 : index
    %c0_715 = arith.constant 0 : index
    %876 = vector.load %arg13[%c0_712, %c2_713, %c0_714, %c0_715] : memref<2x3x1x32xf32, #tpu.memory_space<vmem>>, vector<1x1x1x32xf32>
    %877 = vector.shape_cast %876 : vector<1x1x1x32xf32> to vector<1x32xf32>
    %878 = vector.broadcast %877 : vector<1x32xf32> to vector<6x32xf32>
    %879 = arith.addf %875, %878 : vector<6x32xf32>
    %880 = vector.shape_cast %879 : vector<6x32xf32> to vector<2x3x32xf32>
    %881 = vector.extract_strided_slice %864 {offsets = [0, 0, 0], sizes = [2, 3, 8], strides = [1, 1, 1]} : vector<2x3x32xf32> to vector<2x3x8xf32>
    %882 = vector.extract_strided_slice %872 {offsets = [0, 0, 0], sizes = [2, 3, 8], strides = [1, 1, 1]} : vector<2x3x32xf32> to vector<2x3x8xf32>
    %883 = vector.extract_strided_slice %880 {offsets = [0, 0, 0], sizes = [2, 3, 8], strides = [1, 1, 1]} : vector<2x3x32xf32> to vector<2x3x8xf32>
    "tpu.trace_start"() <{level = 10 : i32, message = "bqd,bkd->bqk"}> : () -> ()
    %cst_716 = arith.constant dense<0.000000e+00> : vector<2x3x3xf32>
    %884 = tpu.matmul %881, %882, %cst_716 {dimension_numbers = #tpu.dot_dimension_numbers<[2], [2], [1], [1], [0, 0, 0, 1, 1, 1], [0], [0]>} : vector<2x3x8xf32>, vector<2x3x8xf32>, vector<2x3x3xf32> -> vector<2x3x3xf32>
    "tpu.trace_stop"() : () -> ()
    %cst_717 = arith.constant dense<0xFF800000> : vector<2x3xf32>
    %885 = vector.multi_reduction <maximumf>, %884, %cst_717 [2] : vector<2x3x3xf32> to vector<2x3xf32>
    %886 = vector.shape_cast %885 : vector<2x3xf32> to vector<2x3x1xf32>
    %887 = vector.broadcast %886 : vector<2x3x1xf32> to vector<2x3x3xf32>
    %888 = arith.subf %884, %887 : vector<2x3x3xf32>
    %889 = math.exp %888 : vector<2x3x3xf32>
    %cst_718 = arith.constant dense<0.000000e+00> : vector<2x3xf32>
    %890 = vector.multi_reduction <add>, %889, %cst_718 [2] : vector<2x3x3xf32> to vector<2x3xf32>
    %891 = vector.shape_cast %890 : vector<2x3xf32> to vector<2x3x1xf32>
    %892 = tpu.reciprocal %891 : vector<2x3x1xf32> -> vector<2x3x1xf32>
    %893 = vector.broadcast %892 : vector<2x3x1xf32> to vector<2x3x3xf32>
    %894 = arith.mulf %889, %893 : vector<2x3x3xf32>
    "tpu.trace_start"() <{level = 10 : i32, message = "bqk,bkd->bqd"}> : () -> ()
    %cst_719 = arith.constant dense<0.000000e+00> : vector<2x3x8xf32>
    %895 = tpu.matmul %894, %883, %cst_719 {dimension_numbers = #tpu.dot_dimension_numbers<[2], [1], [1], [2], [0, 0, 0, 1, 1, 2], [0], [0]>} : vector<2x3x3xf32>, vector<2x3x8xf32>, vector<2x3x8xf32> -> vector<2x3x8xf32>
    "tpu.trace_stop"() : () -> ()
    %896 = vector.extract_strided_slice %864 {offsets = [0, 0, 8], sizes = [2, 3, 8], strides = [1, 1, 1]} : vector<2x3x32xf32> to vector<2x3x8xf32>
    %897 = vector.extract_strided_slice %872 {offsets = [0, 0, 8], sizes = [2, 3, 8], strides = [1, 1, 1]} : vector<2x3x32xf32> to vector<2x3x8xf32>
    %898 = vector.extract_strided_slice %880 {offsets = [0, 0, 8], sizes = [2, 3, 8], strides = [1, 1, 1]} : vector<2x3x32xf32> to vector<2x3x8xf32>
    "tpu.trace_start"() <{level = 10 : i32, message = "bqd,bkd->bqk"}> : () -> ()
    %cst_720 = arith.constant dense<0.000000e+00> : vector<2x3x3xf32>
    %899 = tpu.matmul %896, %897, %cst_720 {dimension_numbers = #tpu.dot_dimension_numbers<[2], [2], [1], [1], [0, 0, 0, 1, 1, 1], [0], [0]>} : vector<2x3x8xf32>, vector<2x3x8xf32>, vector<2x3x3xf32> -> vector<2x3x3xf32>
    "tpu.trace_stop"() : () -> ()
    %cst_721 = arith.constant dense<0xFF800000> : vector<2x3xf32>
    %900 = vector.multi_reduction <maximumf>, %899, %cst_721 [2] : vector<2x3x3xf32> to vector<2x3xf32>
    %901 = vector.shape_cast %900 : vector<2x3xf32> to vector<2x3x1xf32>
    %902 = vector.broadcast %901 : vector<2x3x1xf32> to vector<2x3x3xf32>
    %903 = arith.subf %899, %902 : vector<2x3x3xf32>
    %904 = math.exp %903 : vector<2x3x3xf32>
    %cst_722 = arith.constant dense<0.000000e+00> : vector<2x3xf32>
    %905 = vector.multi_reduction <add>, %904, %cst_722 [2] : vector<2x3x3xf32> to vector<2x3xf32>
    %906 = vector.shape_cast %905 : vector<2x3xf32> to vector<2x3x1xf32>
    %907 = tpu.reciprocal %906 : vector<2x3x1xf32> -> vector<2x3x1xf32>
    %908 = vector.broadcast %907 : vector<2x3x1xf32> to vector<2x3x3xf32>
    %909 = arith.mulf %904, %908 : vector<2x3x3xf32>
    "tpu.trace_start"() <{level = 10 : i32, message = "bqk,bkd->bqd"}> : () -> ()
    %cst_723 = arith.constant dense<0.000000e+00> : vector<2x3x8xf32>
    %910 = tpu.matmul %909, %898, %cst_723 {dimension_numbers = #tpu.dot_dimension_numbers<[2], [1], [1], [2], [0, 0, 0, 1, 1, 2], [0], [0]>} : vector<2x3x3xf32>, vector<2x3x8xf32>, vector<2x3x8xf32> -> vector<2x3x8xf32>
    "tpu.trace_stop"() : () -> ()
    %911 = vector.extract_strided_slice %864 {offsets = [0, 0, 16], sizes = [2, 3, 8], strides = [1, 1, 1]} : vector<2x3x32xf32> to vector<2x3x8xf32>
    %912 = vector.extract_strided_slice %872 {offsets = [0, 0, 16], sizes = [2, 3, 8], strides = [1, 1, 1]} : vector<2x3x32xf32> to vector<2x3x8xf32>
    %913 = vector.extract_strided_slice %880 {offsets = [0, 0, 16], sizes = [2, 3, 8], strides = [1, 1, 1]} : vector<2x3x32xf32> to vector<2x3x8xf32>
    "tpu.trace_start"() <{level = 10 : i32, message = "bqd,bkd->bqk"}> : () -> ()
    %cst_724 = arith.constant dense<0.000000e+00> : vector<2x3x3xf32>
    %914 = tpu.matmul %911, %912, %cst_724 {dimension_numbers = #tpu.dot_dimension_numbers<[2], [2], [1], [1], [0, 0, 0, 1, 1, 1], [0], [0]>} : vector<2x3x8xf32>, vector<2x3x8xf32>, vector<2x3x3xf32> -> vector<2x3x3xf32>
    "tpu.trace_stop"() : () -> ()
    %cst_725 = arith.constant dense<0xFF800000> : vector<2x3xf32>
    %915 = vector.multi_reduction <maximumf>, %914, %cst_725 [2] : vector<2x3x3xf32> to vector<2x3xf32>
    %916 = vector.shape_cast %915 : vector<2x3xf32> to vector<2x3x1xf32>
    %917 = vector.broadcast %916 : vector<2x3x1xf32> to vector<2x3x3xf32>
    %918 = arith.subf %914, %917 : vector<2x3x3xf32>
    %919 = math.exp %918 : vector<2x3x3xf32>
    %cst_726 = arith.constant dense<0.000000e+00> : vector<2x3xf32>
    %920 = vector.multi_reduction <add>, %919, %cst_726 [2] : vector<2x3x3xf32> to vector<2x3xf32>
    %921 = vector.shape_cast %920 : vector<2x3xf32> to vector<2x3x1xf32>
    %922 = tpu.reciprocal %921 : vector<2x3x1xf32> -> vector<2x3x1xf32>
    %923 = vector.broadcast %922 : vector<2x3x1xf32> to vector<2x3x3xf32>
    %924 = arith.mulf %919, %923 : vector<2x3x3xf32>
    "tpu.trace_start"() <{level = 10 : i32, message = "bqk,bkd->bqd"}> : () -> ()
    %cst_727 = arith.constant dense<0.000000e+00> : vector<2x3x8xf32>
    %925 = tpu.matmul %924, %913, %cst_727 {dimension_numbers = #tpu.dot_dimension_numbers<[2], [1], [1], [2], [0, 0, 0, 1, 1, 2], [0], [0]>} : vector<2x3x3xf32>, vector<2x3x8xf32>, vector<2x3x8xf32> -> vector<2x3x8xf32>
    "tpu.trace_stop"() : () -> ()
    %926 = vector.extract_strided_slice %864 {offsets = [0, 0, 24], sizes = [2, 3, 8], strides = [1, 1, 1]} : vector<2x3x32xf32> to vector<2x3x8xf32>
    %927 = vector.extract_strided_slice %872 {offsets = [0, 0, 24], sizes = [2, 3, 8], strides = [1, 1, 1]} : vector<2x3x32xf32> to vector<2x3x8xf32>
    %928 = vector.extract_strided_slice %880 {offsets = [0, 0, 24], sizes = [2, 3, 8], strides = [1, 1, 1]} : vector<2x3x32xf32> to vector<2x3x8xf32>
    "tpu.trace_start"() <{level = 10 : i32, message = "bqd,bkd->bqk"}> : () -> ()
    %cst_728 = arith.constant dense<0.000000e+00> : vector<2x3x3xf32>
    %929 = tpu.matmul %926, %927, %cst_728 {dimension_numbers = #tpu.dot_dimension_numbers<[2], [2], [1], [1], [0, 0, 0, 1, 1, 1], [0], [0]>} : vector<2x3x8xf32>, vector<2x3x8xf32>, vector<2x3x3xf32> -> vector<2x3x3xf32>
    "tpu.trace_stop"() : () -> ()
    %cst_729 = arith.constant dense<0xFF800000> : vector<2x3xf32>
    %930 = vector.multi_reduction <maximumf>, %929, %cst_729 [2] : vector<2x3x3xf32> to vector<2x3xf32>
    %931 = vector.shape_cast %930 : vector<2x3xf32> to vector<2x3x1xf32>
    %932 = vector.broadcast %931 : vector<2x3x1xf32> to vector<2x3x3xf32>
    %933 = arith.subf %929, %932 : vector<2x3x3xf32>
    %934 = math.exp %933 : vector<2x3x3xf32>
    %cst_730 = arith.constant dense<0.000000e+00> : vector<2x3xf32>
    %935 = vector.multi_reduction <add>, %934, %cst_730 [2] : vector<2x3x3xf32> to vector<2x3xf32>
    %936 = vector.shape_cast %935 : vector<2x3xf32> to vector<2x3x1xf32>
    %937 = tpu.reciprocal %936 : vector<2x3x1xf32> -> vector<2x3x1xf32>
    %938 = vector.broadcast %937 : vector<2x3x1xf32> to vector<2x3x3xf32>
    %939 = arith.mulf %934, %938 : vector<2x3x3xf32>
    "tpu.trace_start"() <{level = 10 : i32, message = "bqk,bkd->bqd"}> : () -> ()
    %cst_731 = arith.constant dense<0.000000e+00> : vector<2x3x8xf32>
    %940 = tpu.matmul %939, %928, %cst_731 {dimension_numbers = #tpu.dot_dimension_numbers<[2], [1], [1], [2], [0, 0, 0, 1, 1, 2], [0], [0]>} : vector<2x3x3xf32>, vector<2x3x8xf32>, vector<2x3x8xf32> -> vector<2x3x8xf32>
    "tpu.trace_stop"() : () -> ()
    %941 = tpu.concatenate %895, %910, %925, %940 in 2 : vector<2x3x8xf32>, vector<2x3x8xf32>, vector<2x3x8xf32>, vector<2x3x8xf32> -> vector<2x3x32xf32>
    %942 = vector.shape_cast %941 : vector<2x3x32xf32> to vector<6x32xf32>
    %c0_732 = arith.constant 0 : index
    %c0_733 = arith.constant 0 : index
    %c0_734 = arith.constant 0 : index
    %943 = vector.load %arg14[%c0_732, %c0_733, %c0_734] : memref<2x32x32xf32, #tpu.memory_space<vmem>>, vector<1x32x32xf32>
    %944 = vector.shape_cast %943 : vector<1x32x32xf32> to vector<32x32xf32>
    %cst_735 = arith.constant dense<0.000000e+00> : vector<6x32xf32>
    %945 = tpu.matmul %942, %944, %cst_735 {dimension_numbers = #tpu.dot_dimension_numbers<[1], [0], [0], [1], [0, 0, 1, 1], [], []>} : vector<6x32xf32>, vector<32x32xf32>, vector<6x32xf32> -> vector<6x32xf32>
    %c0_736 = arith.constant 0 : index
    %c0_737 = arith.constant 0 : index
    %c0_738 = arith.constant 0 : index
    %946 = vector.load %arg15[%c0_736, %c0_737, %c0_738] : memref<2x1x32xf32, #tpu.memory_space<vmem>>, vector<1x1x32xf32>
    %947 = vector.shape_cast %946 : vector<1x1x32xf32> to vector<1x32xf32>
    %948 = vector.broadcast %947 : vector<1x32xf32> to vector<6x32xf32>
    %949 = arith.addf %945, %948 : vector<6x32xf32>
    %950 = vector.shape_cast %949 : vector<6x32xf32> to vector<2x3x32xf32>
    %c2_739 = arith.constant 2 : index
    %c0_740 = arith.constant 0 : index
    %c0_741 = arith.constant 0 : index
    %951 = vector.load %arg11[%c2_739, %c0_740, %c0_741] : memref<4x1x32xf32, #tpu.memory_space<vmem>>, vector<1x1x32xf32>
    %952 = vector.shape_cast %951 : vector<1x1x32xf32> to vector<1x32xf32>
    %c3_742 = arith.constant 3 : index
    %c0_743 = arith.constant 0 : index
    %c0_744 = arith.constant 0 : index
    %953 = vector.load %arg11[%c3_742, %c0_743, %c0_744] : memref<4x1x32xf32, #tpu.memory_space<vmem>>, vector<1x1x32xf32>
    %954 = vector.shape_cast %953 : vector<1x1x32xf32> to vector<1x32xf32>
    %cst_745 = arith.constant dense<0.000000e+00> : vector<2x3xf32>
    %955 = vector.multi_reduction <add>, %825, %cst_745 [2] : vector<2x3x32xf32> to vector<2x3xf32>
    %956 = vector.shape_cast %955 : vector<2x3xf32> to vector<2x3x1xf32>
    %cst_746 = arith.constant 3.200000e+01 : f32
    %957 = vector.broadcast %cst_746 : f32 to vector<2x3x1xf32>
    %958 = arith.divf %956, %957 : vector<2x3x1xf32>
    %959 = arith.mulf %825, %825 : vector<2x3x32xf32>
    %cst_747 = arith.constant dense<0.000000e+00> : vector<2x3xf32>
    %960 = vector.multi_reduction <add>, %959, %cst_747 [2] : vector<2x3x32xf32> to vector<2x3xf32>
    %961 = vector.shape_cast %960 : vector<2x3xf32> to vector<2x3x1xf32>
    %cst_748 = arith.constant 3.200000e+01 : f32
    %962 = vector.broadcast %cst_748 : f32 to vector<2x3x1xf32>
    %963 = arith.divf %961, %962 : vector<2x3x1xf32>
    %964 = arith.mulf %958, %958 : vector<2x3x1xf32>
    %965 = arith.subf %963, %964 : vector<2x3x1xf32>
    %966 = vector.broadcast %958 : vector<2x3x1xf32> to vector<2x3x32xf32>
    %967 = arith.subf %825, %966 : vector<2x3x32xf32>
    %cst_749 = arith.constant 9.99999974E-6 : f32
    %968 = vector.broadcast %cst_749 : f32 to vector<2x3x1xf32>
    %969 = arith.addf %965, %968 : vector<2x3x1xf32>
    %970 = math.rsqrt %969 : vector<2x3x1xf32>
    %971 = vector.broadcast %970 : vector<2x3x1xf32> to vector<2x3x32xf32>
    %972 = arith.mulf %967, %971 : vector<2x3x32xf32>
    %973 = vector.shape_cast %952 : vector<1x32xf32> to vector<1x1x32xf32>
    %974 = vector.broadcast %973 : vector<1x1x32xf32> to vector<2x3x32xf32>
    %975 = arith.mulf %972, %974 : vector<2x3x32xf32>
    %976 = vector.shape_cast %954 : vector<1x32xf32> to vector<1x1x32xf32>
    %977 = vector.broadcast %976 : vector<1x1x32xf32> to vector<2x3x32xf32>
    %978 = arith.addf %975, %977 : vector<2x3x32xf32>
    %979 = vector.shape_cast %978 : vector<2x3x32xf32> to vector<6x32xf32>
    %c1_750 = arith.constant 1 : index
    %c0_751 = arith.constant 0 : index
    %c0_752 = arith.constant 0 : index
    %c0_753 = arith.constant 0 : index
    %980 = vector.load %arg12[%c1_750, %c0_751, %c0_752, %c0_753] : memref<2x3x32x32xf32, #tpu.memory_space<vmem>>, vector<1x1x32x32xf32>
    %981 = vector.shape_cast %980 : vector<1x1x32x32xf32> to vector<32x32xf32>
    %cst_754 = arith.constant dense<0.000000e+00> : vector<6x32xf32>
    %982 = tpu.matmul %979, %981, %cst_754 {dimension_numbers = #tpu.dot_dimension_numbers<[1], [0], [0], [1], [0, 0, 1, 1], [], []>} : vector<6x32xf32>, vector<32x32xf32>, vector<6x32xf32> -> vector<6x32xf32>
    %c1_755 = arith.constant 1 : index
    %c0_756 = arith.constant 0 : index
    %c0_757 = arith.constant 0 : index
    %c0_758 = arith.constant 0 : index
    %983 = vector.load %arg13[%c1_755, %c0_756, %c0_757, %c0_758] : memref<2x3x1x32xf32, #tpu.memory_space<vmem>>, vector<1x1x1x32xf32>
    %984 = vector.shape_cast %983 : vector<1x1x1x32xf32> to vector<1x32xf32>
    %985 = vector.broadcast %984 : vector<1x32xf32> to vector<6x32xf32>
    %986 = arith.addf %982, %985 : vector<6x32xf32>
    %987 = vector.shape_cast %986 : vector<6x32xf32> to vector<2x3x32xf32>
    %cst_759 = arith.constant 0.353553385 : f32
    %988 = vector.broadcast %cst_759 : f32 to vector<2x3x32xf32>
    %989 = arith.mulf %987, %988 : vector<2x3x32xf32>
    %c1_760 = arith.constant 1 : index
    %c1_761 = arith.constant 1 : index
    %c0_762 = arith.constant 0 : index
    %c0_763 = arith.constant 0 : index
    %990 = vector.load %arg12[%c1_760, %c1_761, %c0_762, %c0_763] : memref<2x3x32x32xf32, #tpu.memory_space<vmem>>, vector<1x1x32x32xf32>
    %991 = vector.shape_cast %990 : vector<1x1x32x32xf32> to vector<32x32xf32>
    %cst_764 = arith.constant dense<0.000000e+00> : vector<6x32xf32>
    %992 = tpu.matmul %979, %991, %cst_764 {dimension_numbers = #tpu.dot_dimension_numbers<[1], [0], [0], [1], [0, 0, 1, 1], [], []>} : vector<6x32xf32>, vector<32x32xf32>, vector<6x32xf32> -> vector<6x32xf32>
    %c1_765 = arith.constant 1 : index
    %c1_766 = arith.constant 1 : index
    %c0_767 = arith.constant 0 : index
    %c0_768 = arith.constant 0 : index
    %993 = vector.load %arg13[%c1_765, %c1_766, %c0_767, %c0_768] : memref<2x3x1x32xf32, #tpu.memory_space<vmem>>, vector<1x1x1x32xf32>
    %994 = vector.shape_cast %993 : vector<1x1x1x32xf32> to vector<1x32xf32>
    %995 = vector.broadcast %994 : vector<1x32xf32> to vector<6x32xf32>
    %996 = arith.addf %992, %995 : vector<6x32xf32>
    %997 = vector.shape_cast %996 : vector<6x32xf32> to vector<2x3x32xf32>
    %c1_769 = arith.constant 1 : index
    %c2_770 = arith.constant 2 : index
    %c0_771 = arith.constant 0 : index
    %c0_772 = arith.constant 0 : index
    %998 = vector.load %arg12[%c1_769, %c2_770, %c0_771, %c0_772] : memref<2x3x32x32xf32, #tpu.memory_space<vmem>>, vector<1x1x32x32xf32>
    %999 = vector.shape_cast %998 : vector<1x1x32x32xf32> to vector<32x32xf32>
    %cst_773 = arith.constant dense<0.000000e+00> : vector<6x32xf32>
    %1000 = tpu.matmul %979, %999, %cst_773 {dimension_numbers = #tpu.dot_dimension_numbers<[1], [0], [0], [1], [0, 0, 1, 1], [], []>} : vector<6x32xf32>, vector<32x32xf32>, vector<6x32xf32> -> vector<6x32xf32>
    %c1_774 = arith.constant 1 : index
    %c2_775 = arith.constant 2 : index
    %c0_776 = arith.constant 0 : index
    %c0_777 = arith.constant 0 : index
    %1001 = vector.load %arg13[%c1_774, %c2_775, %c0_776, %c0_777] : memref<2x3x1x32xf32, #tpu.memory_space<vmem>>, vector<1x1x1x32xf32>
    %1002 = vector.shape_cast %1001 : vector<1x1x1x32xf32> to vector<1x32xf32>
    %1003 = vector.broadcast %1002 : vector<1x32xf32> to vector<6x32xf32>
    %1004 = arith.addf %1000, %1003 : vector<6x32xf32>
    %1005 = vector.shape_cast %1004 : vector<6x32xf32> to vector<2x3x32xf32>
    %1006 = vector.extract_strided_slice %989 {offsets = [0, 0, 0], sizes = [2, 3, 8], strides = [1, 1, 1]} : vector<2x3x32xf32> to vector<2x3x8xf32>
    %1007 = vector.extract_strided_slice %997 {offsets = [0, 0, 0], sizes = [2, 3, 8], strides = [1, 1, 1]} : vector<2x3x32xf32> to vector<2x3x8xf32>
    %1008 = vector.extract_strided_slice %1005 {offsets = [0, 0, 0], sizes = [2, 3, 8], strides = [1, 1, 1]} : vector<2x3x32xf32> to vector<2x3x8xf32>
    "tpu.trace_start"() <{level = 10 : i32, message = "bqd,bkd->bqk"}> : () -> ()
    %cst_778 = arith.constant dense<0.000000e+00> : vector<2x3x3xf32>
    %1009 = tpu.matmul %1006, %1007, %cst_778 {dimension_numbers = #tpu.dot_dimension_numbers<[2], [2], [1], [1], [0, 0, 0, 1, 1, 1], [0], [0]>} : vector<2x3x8xf32>, vector<2x3x8xf32>, vector<2x3x3xf32> -> vector<2x3x3xf32>
    "tpu.trace_stop"() : () -> ()
    %cst_779 = arith.constant dense<0xFF800000> : vector<2x3xf32>
    %1010 = vector.multi_reduction <maximumf>, %1009, %cst_779 [2] : vector<2x3x3xf32> to vector<2x3xf32>
    %1011 = vector.shape_cast %1010 : vector<2x3xf32> to vector<2x3x1xf32>
    %1012 = vector.broadcast %1011 : vector<2x3x1xf32> to vector<2x3x3xf32>
    %1013 = arith.subf %1009, %1012 : vector<2x3x3xf32>
    %1014 = math.exp %1013 : vector<2x3x3xf32>
    %cst_780 = arith.constant dense<0.000000e+00> : vector<2x3xf32>
    %1015 = vector.multi_reduction <add>, %1014, %cst_780 [2] : vector<2x3x3xf32> to vector<2x3xf32>
    %1016 = vector.shape_cast %1015 : vector<2x3xf32> to vector<2x3x1xf32>
    %1017 = tpu.reciprocal %1016 : vector<2x3x1xf32> -> vector<2x3x1xf32>
    %1018 = vector.broadcast %1017 : vector<2x3x1xf32> to vector<2x3x3xf32>
    %1019 = arith.mulf %1014, %1018 : vector<2x3x3xf32>
    "tpu.trace_start"() <{level = 10 : i32, message = "bqk,bkd->bqd"}> : () -> ()
    %cst_781 = arith.constant dense<0.000000e+00> : vector<2x3x8xf32>
    %1020 = tpu.matmul %1019, %1008, %cst_781 {dimension_numbers = #tpu.dot_dimension_numbers<[2], [1], [1], [2], [0, 0, 0, 1, 1, 2], [0], [0]>} : vector<2x3x3xf32>, vector<2x3x8xf32>, vector<2x3x8xf32> -> vector<2x3x8xf32>
    "tpu.trace_stop"() : () -> ()
    %1021 = vector.extract_strided_slice %989 {offsets = [0, 0, 8], sizes = [2, 3, 8], strides = [1, 1, 1]} : vector<2x3x32xf32> to vector<2x3x8xf32>
    %1022 = vector.extract_strided_slice %997 {offsets = [0, 0, 8], sizes = [2, 3, 8], strides = [1, 1, 1]} : vector<2x3x32xf32> to vector<2x3x8xf32>
    %1023 = vector.extract_strided_slice %1005 {offsets = [0, 0, 8], sizes = [2, 3, 8], strides = [1, 1, 1]} : vector<2x3x32xf32> to vector<2x3x8xf32>
    "tpu.trace_start"() <{level = 10 : i32, message = "bqd,bkd->bqk"}> : () -> ()
    %cst_782 = arith.constant dense<0.000000e+00> : vector<2x3x3xf32>
    %1024 = tpu.matmul %1021, %1022, %cst_782 {dimension_numbers = #tpu.dot_dimension_numbers<[2], [2], [1], [1], [0, 0, 0, 1, 1, 1], [0], [0]>} : vector<2x3x8xf32>, vector<2x3x8xf32>, vector<2x3x3xf32> -> vector<2x3x3xf32>
    "tpu.trace_stop"() : () -> ()
    %cst_783 = arith.constant dense<0xFF800000> : vector<2x3xf32>
    %1025 = vector.multi_reduction <maximumf>, %1024, %cst_783 [2] : vector<2x3x3xf32> to vector<2x3xf32>
    %1026 = vector.shape_cast %1025 : vector<2x3xf32> to vector<2x3x1xf32>
    %1027 = vector.broadcast %1026 : vector<2x3x1xf32> to vector<2x3x3xf32>
    %1028 = arith.subf %1024, %1027 : vector<2x3x3xf32>
    %1029 = math.exp %1028 : vector<2x3x3xf32>
    %cst_784 = arith.constant dense<0.000000e+00> : vector<2x3xf32>
    %1030 = vector.multi_reduction <add>, %1029, %cst_784 [2] : vector<2x3x3xf32> to vector<2x3xf32>
    %1031 = vector.shape_cast %1030 : vector<2x3xf32> to vector<2x3x1xf32>
    %1032 = tpu.reciprocal %1031 : vector<2x3x1xf32> -> vector<2x3x1xf32>
    %1033 = vector.broadcast %1032 : vector<2x3x1xf32> to vector<2x3x3xf32>
    %1034 = arith.mulf %1029, %1033 : vector<2x3x3xf32>
    "tpu.trace_start"() <{level = 10 : i32, message = "bqk,bkd->bqd"}> : () -> ()
    %cst_785 = arith.constant dense<0.000000e+00> : vector<2x3x8xf32>
    %1035 = tpu.matmul %1034, %1023, %cst_785 {dimension_numbers = #tpu.dot_dimension_numbers<[2], [1], [1], [2], [0, 0, 0, 1, 1, 2], [0], [0]>} : vector<2x3x3xf32>, vector<2x3x8xf32>, vector<2x3x8xf32> -> vector<2x3x8xf32>
    "tpu.trace_stop"() : () -> ()
    %1036 = vector.extract_strided_slice %989 {offsets = [0, 0, 16], sizes = [2, 3, 8], strides = [1, 1, 1]} : vector<2x3x32xf32> to vector<2x3x8xf32>
    %1037 = vector.extract_strided_slice %997 {offsets = [0, 0, 16], sizes = [2, 3, 8], strides = [1, 1, 1]} : vector<2x3x32xf32> to vector<2x3x8xf32>
    %1038 = vector.extract_strided_slice %1005 {offsets = [0, 0, 16], sizes = [2, 3, 8], strides = [1, 1, 1]} : vector<2x3x32xf32> to vector<2x3x8xf32>
    "tpu.trace_start"() <{level = 10 : i32, message = "bqd,bkd->bqk"}> : () -> ()
    %cst_786 = arith.constant dense<0.000000e+00> : vector<2x3x3xf32>
    %1039 = tpu.matmul %1036, %1037, %cst_786 {dimension_numbers = #tpu.dot_dimension_numbers<[2], [2], [1], [1], [0, 0, 0, 1, 1, 1], [0], [0]>} : vector<2x3x8xf32>, vector<2x3x8xf32>, vector<2x3x3xf32> -> vector<2x3x3xf32>
    "tpu.trace_stop"() : () -> ()
    %cst_787 = arith.constant dense<0xFF800000> : vector<2x3xf32>
    %1040 = vector.multi_reduction <maximumf>, %1039, %cst_787 [2] : vector<2x3x3xf32> to vector<2x3xf32>
    %1041 = vector.shape_cast %1040 : vector<2x3xf32> to vector<2x3x1xf32>
    %1042 = vector.broadcast %1041 : vector<2x3x1xf32> to vector<2x3x3xf32>
    %1043 = arith.subf %1039, %1042 : vector<2x3x3xf32>
    %1044 = math.exp %1043 : vector<2x3x3xf32>
    %cst_788 = arith.constant dense<0.000000e+00> : vector<2x3xf32>
    %1045 = vector.multi_reduction <add>, %1044, %cst_788 [2] : vector<2x3x3xf32> to vector<2x3xf32>
    %1046 = vector.shape_cast %1045 : vector<2x3xf32> to vector<2x3x1xf32>
    %1047 = tpu.reciprocal %1046 : vector<2x3x1xf32> -> vector<2x3x1xf32>
    %1048 = vector.broadcast %1047 : vector<2x3x1xf32> to vector<2x3x3xf32>
    %1049 = arith.mulf %1044, %1048 : vector<2x3x3xf32>
    "tpu.trace_start"() <{level = 10 : i32, message = "bqk,bkd->bqd"}> : () -> ()
    %cst_789 = arith.constant dense<0.000000e+00> : vector<2x3x8xf32>
    %1050 = tpu.matmul %1049, %1038, %cst_789 {dimension_numbers = #tpu.dot_dimension_numbers<[2], [1], [1], [2], [0, 0, 0, 1, 1, 2], [0], [0]>} : vector<2x3x3xf32>, vector<2x3x8xf32>, vector<2x3x8xf32> -> vector<2x3x8xf32>
    "tpu.trace_stop"() : () -> ()
    %1051 = vector.extract_strided_slice %989 {offsets = [0, 0, 24], sizes = [2, 3, 8], strides = [1, 1, 1]} : vector<2x3x32xf32> to vector<2x3x8xf32>
    %1052 = vector.extract_strided_slice %997 {offsets = [0, 0, 24], sizes = [2, 3, 8], strides = [1, 1, 1]} : vector<2x3x32xf32> to vector<2x3x8xf32>
    %1053 = vector.extract_strided_slice %1005 {offsets = [0, 0, 24], sizes = [2, 3, 8], strides = [1, 1, 1]} : vector<2x3x32xf32> to vector<2x3x8xf32>
    "tpu.trace_start"() <{level = 10 : i32, message = "bqd,bkd->bqk"}> : () -> ()
    %cst_790 = arith.constant dense<0.000000e+00> : vector<2x3x3xf32>
    %1054 = tpu.matmul %1051, %1052, %cst_790 {dimension_numbers = #tpu.dot_dimension_numbers<[2], [2], [1], [1], [0, 0, 0, 1, 1, 1], [0], [0]>} : vector<2x3x8xf32>, vector<2x3x8xf32>, vector<2x3x3xf32> -> vector<2x3x3xf32>
    "tpu.trace_stop"() : () -> ()
    %cst_791 = arith.constant dense<0xFF800000> : vector<2x3xf32>
    %1055 = vector.multi_reduction <maximumf>, %1054, %cst_791 [2] : vector<2x3x3xf32> to vector<2x3xf32>
    %1056 = vector.shape_cast %1055 : vector<2x3xf32> to vector<2x3x1xf32>
    %1057 = vector.broadcast %1056 : vector<2x3x1xf32> to vector<2x3x3xf32>
    %1058 = arith.subf %1054, %1057 : vector<2x3x3xf32>
    %1059 = math.exp %1058 : vector<2x3x3xf32>
    %cst_792 = arith.constant dense<0.000000e+00> : vector<2x3xf32>
    %1060 = vector.multi_reduction <add>, %1059, %cst_792 [2] : vector<2x3x3xf32> to vector<2x3xf32>
    %1061 = vector.shape_cast %1060 : vector<2x3xf32> to vector<2x3x1xf32>
    %1062 = tpu.reciprocal %1061 : vector<2x3x1xf32> -> vector<2x3x1xf32>
    %1063 = vector.broadcast %1062 : vector<2x3x1xf32> to vector<2x3x3xf32>
    %1064 = arith.mulf %1059, %1063 : vector<2x3x3xf32>
    "tpu.trace_start"() <{level = 10 : i32, message = "bqk,bkd->bqd"}> : () -> ()
    %cst_793 = arith.constant dense<0.000000e+00> : vector<2x3x8xf32>
    %1065 = tpu.matmul %1064, %1053, %cst_793 {dimension_numbers = #tpu.dot_dimension_numbers<[2], [1], [1], [2], [0, 0, 0, 1, 1, 2], [0], [0]>} : vector<2x3x3xf32>, vector<2x3x8xf32>, vector<2x3x8xf32> -> vector<2x3x8xf32>
    "tpu.trace_stop"() : () -> ()
    %1066 = tpu.concatenate %1020, %1035, %1050, %1065 in 2 : vector<2x3x8xf32>, vector<2x3x8xf32>, vector<2x3x8xf32>, vector<2x3x8xf32> -> vector<2x3x32xf32>
    %1067 = vector.shape_cast %1066 : vector<2x3x32xf32> to vector<6x32xf32>
    %c1_794 = arith.constant 1 : index
    %c0_795 = arith.constant 0 : index
    %c0_796 = arith.constant 0 : index
    %1068 = vector.load %arg14[%c1_794, %c0_795, %c0_796] : memref<2x32x32xf32, #tpu.memory_space<vmem>>, vector<1x32x32xf32>
    %1069 = vector.shape_cast %1068 : vector<1x32x32xf32> to vector<32x32xf32>
    %cst_797 = arith.constant dense<0.000000e+00> : vector<6x32xf32>
    %1070 = tpu.matmul %1067, %1069, %cst_797 {dimension_numbers = #tpu.dot_dimension_numbers<[1], [0], [0], [1], [0, 0, 1, 1], [], []>} : vector<6x32xf32>, vector<32x32xf32>, vector<6x32xf32> -> vector<6x32xf32>
    %c1_798 = arith.constant 1 : index
    %c0_799 = arith.constant 0 : index
    %c0_800 = arith.constant 0 : index
    %1071 = vector.load %arg15[%c1_798, %c0_799, %c0_800] : memref<2x1x32xf32, #tpu.memory_space<vmem>>, vector<1x1x32xf32>
    %1072 = vector.shape_cast %1071 : vector<1x1x32xf32> to vector<1x32xf32>
    %1073 = vector.broadcast %1072 : vector<1x32xf32> to vector<6x32xf32>
    %1074 = arith.addf %1070, %1073 : vector<6x32xf32>
    %1075 = vector.shape_cast %1074 : vector<6x32xf32> to vector<2x3x32xf32>
    %1076 = vector.extract_strided_slice %5 {offsets = [0, 6], sizes = [1, 1], strides = [1, 1]} : vector<1x7xf32> to vector<1x1xf32>
    %1077 = vector.shape_cast %1076 : vector<1x1xf32> to vector<1x1x1xf32>
    %1078 = vector.broadcast %1077 : vector<1x1x1xf32> to vector<2x3x32xf32>
    %1079 = arith.mulf %1078, %950 : vector<2x3x32xf32>
    %1080 = arith.addf %825, %1079 : vector<2x3x32xf32>
    %cst_801 = arith.constant 1.000000e+00 : f32
    %1081 = vector.broadcast %cst_801 : f32 to vector<1x1xf32>
    %1082 = arith.subf %1081, %1076 : vector<1x1xf32>
    %1083 = vector.shape_cast %1082 : vector<1x1xf32> to vector<1x1x1xf32>
    %1084 = vector.broadcast %1083 : vector<1x1x1xf32> to vector<2x3x32xf32>
    %1085 = arith.mulf %1084, %1075 : vector<2x3x32xf32>
    %1086 = arith.addf %1080, %1085 : vector<2x3x32xf32>
    %c2_802 = arith.constant 2 : index
    %c0_803 = arith.constant 0 : index
    %c0_804 = arith.constant 0 : index
    %1087 = vector.load %arg11[%c2_802, %c0_803, %c0_804] : memref<4x1x32xf32, #tpu.memory_space<vmem>>, vector<1x1x32xf32>
    %1088 = vector.shape_cast %1087 : vector<1x1x32xf32> to vector<1x32xf32>
    %c3_805 = arith.constant 3 : index
    %c0_806 = arith.constant 0 : index
    %c0_807 = arith.constant 0 : index
    %1089 = vector.load %arg11[%c3_805, %c0_806, %c0_807] : memref<4x1x32xf32, #tpu.memory_space<vmem>>, vector<1x1x32xf32>
    %1090 = vector.shape_cast %1089 : vector<1x1x32xf32> to vector<1x32xf32>
    %cst_808 = arith.constant dense<0.000000e+00> : vector<2x3xf32>
    %1091 = vector.multi_reduction <add>, %1086, %cst_808 [2] : vector<2x3x32xf32> to vector<2x3xf32>
    %1092 = vector.shape_cast %1091 : vector<2x3xf32> to vector<2x3x1xf32>
    %cst_809 = arith.constant 3.200000e+01 : f32
    %1093 = vector.broadcast %cst_809 : f32 to vector<2x3x1xf32>
    %1094 = arith.divf %1092, %1093 : vector<2x3x1xf32>
    %1095 = arith.mulf %1086, %1086 : vector<2x3x32xf32>
    %cst_810 = arith.constant dense<0.000000e+00> : vector<2x3xf32>
    %1096 = vector.multi_reduction <add>, %1095, %cst_810 [2] : vector<2x3x32xf32> to vector<2x3xf32>
    %1097 = vector.shape_cast %1096 : vector<2x3xf32> to vector<2x3x1xf32>
    %cst_811 = arith.constant 3.200000e+01 : f32
    %1098 = vector.broadcast %cst_811 : f32 to vector<2x3x1xf32>
    %1099 = arith.divf %1097, %1098 : vector<2x3x1xf32>
    %1100 = arith.mulf %1094, %1094 : vector<2x3x1xf32>
    %1101 = arith.subf %1099, %1100 : vector<2x3x1xf32>
    %1102 = vector.broadcast %1094 : vector<2x3x1xf32> to vector<2x3x32xf32>
    %1103 = arith.subf %1086, %1102 : vector<2x3x32xf32>
    %cst_812 = arith.constant 9.99999974E-6 : f32
    %1104 = vector.broadcast %cst_812 : f32 to vector<2x3x1xf32>
    %1105 = arith.addf %1101, %1104 : vector<2x3x1xf32>
    %1106 = math.rsqrt %1105 : vector<2x3x1xf32>
    %1107 = vector.broadcast %1106 : vector<2x3x1xf32> to vector<2x3x32xf32>
    %1108 = arith.mulf %1103, %1107 : vector<2x3x32xf32>
    %1109 = vector.shape_cast %1088 : vector<1x32xf32> to vector<1x1x32xf32>
    %1110 = vector.broadcast %1109 : vector<1x1x32xf32> to vector<2x3x32xf32>
    %1111 = arith.mulf %1108, %1110 : vector<2x3x32xf32>
    %1112 = vector.shape_cast %1090 : vector<1x32xf32> to vector<1x1x32xf32>
    %1113 = vector.broadcast %1112 : vector<1x1x32xf32> to vector<2x3x32xf32>
    %1114 = arith.addf %1111, %1113 : vector<2x3x32xf32>
    %1115 = vector.shape_cast %1114 : vector<2x3x32xf32> to vector<6x32xf32>
    %c0_813 = arith.constant 0 : index
    %c0_814 = arith.constant 0 : index
    %1116 = vector.load %arg16[%c0_813, %c0_814] : memref<32x128xf32, #tpu.memory_space<vmem>>, vector<32x128xf32>
    %cst_815 = arith.constant dense<0.000000e+00> : vector<6x128xf32>
    %1117 = tpu.matmul %1115, %1116, %cst_815 {dimension_numbers = #tpu.dot_dimension_numbers<[1], [0], [0], [1], [0, 0, 1, 1], [], []>} : vector<6x32xf32>, vector<32x128xf32>, vector<6x128xf32> -> vector<6x128xf32>
    %c0_816 = arith.constant 0 : index
    %c0_817 = arith.constant 0 : index
    %1118 = vector.load %arg17[%c0_816, %c0_817] : memref<1x128xf32, #tpu.memory_space<vmem>>, vector<1x128xf32>
    %1119 = vector.broadcast %1118 : vector<1x128xf32> to vector<6x128xf32>
    %1120 = arith.addf %1117, %1119 : vector<6x128xf32>
    %cst_818 = arith.constant 0.000000e+00 : f32
    %1121 = vector.broadcast %cst_818 : f32 to vector<6x128xf32>
    %1122 = arith.maximumf %1120, %1121 : vector<6x128xf32>
    %c0_819 = arith.constant 0 : index
    %c0_820 = arith.constant 0 : index
    %1123 = vector.load %arg18[%c0_819, %c0_820] : memref<128x32xf32, #tpu.memory_space<vmem>>, vector<128x32xf32>
    %cst_821 = arith.constant dense<0.000000e+00> : vector<6x32xf32>
    %1124 = tpu.matmul %1122, %1123, %cst_821 {dimension_numbers = #tpu.dot_dimension_numbers<[1], [0], [0], [1], [0, 0, 1, 1], [], []>} : vector<6x128xf32>, vector<128x32xf32>, vector<6x32xf32> -> vector<6x32xf32>
    %c0_822 = arith.constant 0 : index
    %c0_823 = arith.constant 0 : index
    %1125 = vector.load %arg19[%c0_822, %c0_823] : memref<1x32xf32, #tpu.memory_space<vmem>>, vector<1x32xf32>
    %1126 = vector.broadcast %1125 : vector<1x32xf32> to vector<6x32xf32>
    %1127 = arith.addf %1124, %1126 : vector<6x32xf32>
    %1128 = vector.shape_cast %1127 : vector<6x32xf32> to vector<2x3x32xf32>
    %1129 = arith.addf %1086, %1128 : vector<2x3x32xf32>
    %cst_824 = arith.constant dense<0.000000e+00> : vector<2x32xf32>
    %1130 = vector.multi_reduction <add>, %1129, %cst_824 [1] : vector<2x3x32xf32> to vector<2x32xf32>
    %cst_825 = arith.constant 3.000000e+00 : f32
    %1131 = vector.broadcast %cst_825 : f32 to vector<2x32xf32>
    %1132 = arith.divf %1130, %1131 : vector<2x32xf32>
    %c0_826 = arith.constant 0 : index
    %c0_827 = arith.constant 0 : index
    %1133 = vector.load %arg20[%c0_826, %c0_827] : memref<32x5xf32, #tpu.memory_space<vmem>>, vector<32x5xf32>
    %cst_828 = arith.constant dense<0.000000e+00> : vector<2x5xf32>
    %1134 = tpu.matmul %1132, %1133, %cst_828 {dimension_numbers = #tpu.dot_dimension_numbers<[1], [0], [0], [1], [0, 0, 1, 1], [], []>} : vector<2x32xf32>, vector<32x5xf32>, vector<2x5xf32> -> vector<2x5xf32>
    %c0_829 = arith.constant 0 : index
    %c0_830 = arith.constant 0 : index
    %1135 = vector.load %arg21[%c0_829, %c0_830] : memref<1x5xf32, #tpu.memory_space<vmem>>, vector<1x5xf32>
    %1136 = vector.broadcast %1135 : vector<1x5xf32> to vector<2x5xf32>
    %1137 = arith.addf %1134, %1136 : vector<2x5xf32>
    %c0_831 = arith.constant 0 : index
    %c0_832 = arith.constant 0 : index
    %1138 = vector.load %arg23[%c0_831, %c0_832] : memref<2x5xf32, #tpu.memory_space<vmem>>, vector<2x5xf32>
    tpu.vector_store %arg23[%c0_831, %c0_832], %1137 {strides = array<i32>} : memref<2x5xf32, #tpu.memory_space<vmem>>, vector<2x5xf32>,
    return
  }
}

</mosaic_0001>

<llo_original>
// kernel: gtn3d_forward.1
$region0: #{gtn3d_forward.1}
  #allocation0 [shape = 'u32[]', space=smem, size = 0x4, offset = 0x4, fixed_abs, tag = 'smem constant byte address 0x4 - core index']
  #allocation1 [shape = 'u32[144,128]{1,0:T(1,128)}', space=vmem, size = 0x12000, scoped, tag = 'internal scratch']
  %s0 = inlined_call_operand.vmem [shape: f32[2,16], index: 0, kind: input, shape index: {}]
  %s1 = inlined_call_operand.vmem [shape: f32[2,16], index: 1, kind: input, shape index: {}]
  %s2 = inlined_call_operand.hbm [shape: f32[3,16,32], index: 2, kind: input, shape index: {}]
  %s3 = inlined_call_operand.hbm [shape: f32[3,1,32], index: 3, kind: input, shape index: {}]
  %s4 = inlined_call_operand.hbm [shape: f32[3,2,4,1,32], index: 4, kind: input, shape index: {}]
  %s5 = inlined_call_operand.vmem [shape: f32[3,2,4,32,32], index: 5, kind: input, shape index: {}]
  %s6 = inlined_call_operand.hbm [shape: f32[3,2,4,1,32], index: 6, kind: input, shape index: {}]
  %s7 = inlined_call_operand.vmem [shape: f32[3,2,32,128], index: 7, kind: input, shape index: {}]
  %s8 = inlined_call_operand.hbm [shape: f32[3,2,1,128], index: 8, kind: input, shape index: {}]
  %s9 = inlined_call_operand.vmem [shape: f32[3,2,128,32], index: 9, kind: input, shape index: {}]
  %s10 = inlined_call_operand.hbm [shape: f32[3,2,1,32], index: 10, kind: input, shape index: {}]
  %s11 = inlined_call_operand.hbm [shape: f32[4,1,32], index: 11, kind: input, shape index: {}]
  %s12 = inlined_call_operand.vmem [shape: f32[2,3,32,32], index: 12, kind: input, shape index: {}]
  %s13 = inlined_call_operand.hbm [shape: f32[2,3,1,32], index: 13, kind: input, shape index: {}]
  %s14 = inlined_call_operand.vmem [shape: f32[2,32,32], index: 14, kind: input, shape index: {}]
  %s15 = inlined_call_operand.hbm [shape: f32[2,1,32], index: 15, kind: input, shape index: {}]
  %s16 = inlined_call_operand.hbm [shape: f32[32,128], index: 16, kind: input, shape index: {}]
  %s17 = inlined_call_operand.hbm [shape: f32[1,128], index: 17, kind: input, shape index: {}]
  %s18 = inlined_call_operand.vmem [shape: f32[128,32], index: 18, kind: input, shape index: {}]
  %s19 = inlined_call_operand.hbm [shape: f32[1,32], index: 19, kind: input, shape index: {}]
  %s20 = inlined_call_operand.vmem [shape: f32[32,5], index: 20, kind: input, shape index: {}]
  %s21 = inlined_call_operand.hbm [shape: f32[1,5], index: 21, kind: input, shape index: {}]
  %s22 = inlined_call_operand.hbm [shape: f32[1,7], index: 22, kind: input, shape index: {}]
  %s23 = inlined_call_operand.hbm [shape: f32[2,5], index: 23, kind: output, shape index: {}]
  %s24 = sld [smem:[#allocation0]]
  $region158: #{gtn3d_forward.1} parent=0
    _
  %s26 = ssub.s32 1, %s24
  %s27 = scalar_select 0, %s26, %s24
  $region1: #{gtn3d_forward.1} parent=0
    #allocation2 [shape = 'u8[24576]{0}', space=vmem, size = 0x6000, scoped, tag = 'input window, operand 2, single buffered']
    #allocation3 [shape = 's32[1]{0}', space=sflag, size = 0x4, scoped, tag = 'scoped memory for gtn3d_forward.1']
    #allocation4 [shape = 's32[1]{0}', space=sflag, size = 0x4, scoped, tag = 'scoped memory for gtn3d_forward.1']
    #allocation5 [shape = 'u8[1536]{0}', space=vmem, size = 0x800, scoped, tag = 'input window, operand 3, single buffered']
    #allocation6 [shape = 's32[1]{0}', space=sflag, size = 0x4, scoped, tag = 'scoped memory for gtn3d_forward.1']
    #allocation7 [shape = 'u8[12288]{0}', space=vmem, size = 0x3000, scoped, tag = 'input window, operand 4, single buffered']
    #allocation8 [shape = 'u8[12288]{0}', space=vmem, size = 0x3000, scoped, tag = 'input window, operand 6, single buffered']
    #allocation9 [shape = 's32[1]{0}', space=sflag, size = 0x4, scoped, tag = 'scoped memory for gtn3d_forward.1']
    #allocation10 [shape = 'u8[3072]{0}', space=vmem, size = 0xc00, scoped, tag = 'input window, operand 8, single buffered']
    #allocation11 [shape = 'u8[3072]{0}', space=vmem, size = 0xc00, scoped, tag = 'input window, operand 10, single buffered']
    #allocation12 [shape = 's32[1]{0}', space=sflag, size = 0x4, scoped, tag = 'scoped memory for gtn3d_forward.1']
    #allocation13 [shape = 'u8[2048]{0}', space=vmem, size = 0x800, scoped, tag = 'input window, operand 11, single buffered']
    #allocation14 [shape = 'u8[3072]{0}', space=vmem, size = 0xc00, scoped, tag = 'input window, operand 13, single buffered']
    #allocation15 [shape = 's32[1]{0}', space=sflag, size = 0x4, scoped, tag = 'scoped memory for gtn3d_forward.1']
    #allocation16 [shape = 'u8[1024]{0}', space=vmem, size = 0x400, scoped, tag = 'input window, operand 15, single buffered']
    #allocation17 [shape = 'u8[16384]{0}', space=vmem, size = 0x4000, scoped, tag = 'input window, operand 16, single buffered']
    #allocation18 [shape = 's32[1]{0}', space=sflag, size = 0x4, scoped, tag = 'scoped memory for gtn3d_forward.1']
    #allocation19 [shape = 'u8[512]{0}', space=vmem, size = 0x400, scoped, tag = 'input window, operand 17, single buffered']
    #allocation20 [shape = 'u8[512]{0}', space=vmem, size = 0x400, scoped, tag = 'input window, operand 19, single buffered']
    #allocation21 [shape = 's32[1]{0}', space=sflag, size = 0x4, scoped, tag = 'scoped memory for gtn3d_forward.1']
    #allocation22 [shape = 'u8[512]{0}', space=vmem, size = 0x400, scoped, tag = 'input window, operand 21, single buffered']
    #allocation23 [shape = 'u8[512]{0}', space=vmem, size = 0x400, scoped, tag = 'input window, operand 22, single buffered']
    #allocation24 [shape = 's32[1]{0}', space=sflag, size = 0x4, scoped, tag = 'scoped memory for gtn3d_forward.1']
    #allocation25 [shape = 'u8[1024]{0}', space=vmem, size = 0x400, scoped, tag = 'output window, operand 0, single buffered']
    %28 = vsyncpa [#allocation3], 0
    %29 = vsyncpa [#allocation6], 0
    %30 = vsyncpa [#allocation9], 0
    %31 = vsyncpa [#allocation12], 0
    %32 = vsyncpa [#allocation15], 0
    %33 = vsyncpa [#allocation18], 0
    %34 = vsyncpa [#allocation21], 0
    %35 = vsyncpa [#allocation24], 0
    %36 = vsyncpa [#allocation4], 0
    // Predicated region
    $region2: #{gtn3d_forward.1} parent=1 // pred_check
      _
    $region3: #{gtn3d_forward.1} parent=1 // pred_check_branch
      %38 = sbr.rel (0) target = $region5
    $region4: #{gtn3d_forward.1} parent=1 // pred_region
      _
    $region5: #{gtn3d_forward.1} parent=1 // pred_fallthru
      _
    // Predicated region
    $region6: #{gtn3d_forward.1} parent=1 // pred_check
      _
    $region7: #{gtn3d_forward.1} parent=1 // pred_check_branch
      %40 = sbr.rel (0) target = $region9
    $region8: #{gtn3d_forward.1} parent=1 // pred_region
      _
    $region9: #{gtn3d_forward.1} parent=1 // pred_fallthru
      _
    // Predicated region
    $region10: #{gtn3d_forward.1} parent=1 // pred_check
      _
    $region11: #{gtn3d_forward.1} parent=1 // pred_check_branch
      %42 = sbr.rel (0) target = $region13
    $region12: #{gtn3d_forward.1} parent=1 // pred_region
      %s44 = ssub.s32 768, 768
      %45 = vsyncadd [#allocation3], %s44
      %s46 = sshll.u32 [#allocation2], 4
      %s47 = int_to_ptr.vmem [resolvable:$true] %s46
      %52 = dma.hbm_to_vmem [thread:$0]  %s2, 768, %s47, [#allocation3], 128, 128, 8
    $region13: #{gtn3d_forward.1} parent=1 // pred_fallthru
      _
    // Predicated region
    $region14: #{gtn3d_forward.1} parent=1 // pred_check
      _
    $region15: #{gtn3d_forward.1} parent=1 // pred_check_branch
      %54 = sbr.rel (0) target = $region17
    $region16: #{gtn3d_forward.1} parent=1 // pred_region
      %s56 = ssub.s32 48, 48
      %57 = vsyncadd [#allocation6], %s56
      %s58 = sshll.u32 [#allocation5], 4
      %s59 = int_to_ptr.vmem [resolvable:$true] %s58
      %64 = dma.hbm_to_vmem [thread:$0]  %s3, 48, %s59, [#allocation6], 16, 16, 1
    $region17: #{gtn3d_forward.1} parent=1 // pred_fallthru
      _
    // Predicated region
    $region18: #{gtn3d_forward.1} parent=1 // pred_check
      _
    $region19: #{gtn3d_forward.1} parent=1 // pred_check_branch
      %66 = sbr.rel (0) target = $region21
    $region20: #{gtn3d_forward.1} parent=1 // pred_region
      %s68 = ssub.s32 384, 384
      %69 = vsyncadd [#allocation6], %s68
      %s70 = sshll.u32 [#allocation7], 4
      %s71 = int_to_ptr.vmem [resolvable:$true] %s70
      %76 = dma.hbm_to_vmem [thread:$0]  %s4, 384, %s71, [#allocation6], 16, 16, 1
    $region21: #{gtn3d_forward.1} parent=1 // pred_fallthru
      _
    // Predicated region
    $region22: #{gtn3d_forward.1} parent=1 // pred_check
      _
    $region23: #{gtn3d_forward.1} parent=1 // pred_check_branch
      %78 = sbr.rel (0) target = $region25
    $region24: #{gtn3d_forward.1} parent=1 // pred_region
      _
    $region25: #{gtn3d_forward.1} parent=1 // pred_fallthru
      _
    // Predicated region
    $region26: #{gtn3d_forward.1} parent=1 // pred_check
      _
    $region27: #{gtn3d_forward.1} parent=1 // pred_check_branch
      %80 = sbr.rel (0) target = $region29
    $region28: #{gtn3d_forward.1} parent=1 // pred_region
      %s82 = ssub.s32 384, 384
      %83 = vsyncadd [#allocation9], %s82
      %s84 = sshll.u32 [#allocation8], 4
      %s85 = int_to_ptr.vmem [resolvable:$true] %s84
      %90 = dma.hbm_to_vmem [thread:$0]  %s6, 384, %s85, [#allocation9], 16, 16, 1
    $region29: #{gtn3d_forward.1} parent=1 // pred_fallthru
      _
    // Predicated region
    $region30: #{gtn3d_forward.1} parent=1 // pred_check
      _
    $region31: #{gtn3d_forward.1} parent=1 // pred_check_branch
      %92 = sbr.rel (0) target = $region33
    $region32: #{gtn3d_forward.1} parent=1 // pred_region
      _
    $region33: #{gtn3d_forward.1} parent=1 // pred_fallthru
      _
    // Predicated region
    $region34: #{gtn3d_forward.1} parent=1 // pred_check
      _
    $region35: #{gtn3d_forward.1} parent=1 // pred_check_branch
      %94 = sbr.rel (0) target = $region37
    $region36: #{gtn3d_forward.1} parent=1 // pred_region
      %s96 = ssub.s32 96, 96
      %97 = vsyncadd [#allocation9], %s96
      %s98 = sshll.u32 [#allocation10], 4
      %s99 = int_to_ptr.vmem [resolvable:$true] %s98
      %104 = dma.hbm_to_vmem [thread:$0]  %s8, 96, %s99, [#allocation9], 16, 16, 1
    $region37: #{gtn3d_forward.1} parent=1 // pred_fallthru
      _
    // Predicated region
    $region38: #{gtn3d_forward.1} parent=1 // pred_check
      _
    $region39: #{gtn3d_forward.1} parent=1 // pred_check_branch
      %106 = sbr.rel (0) target = $region41
    $region40: #{gtn3d_forward.1} parent=1 // pred_region
      _
    $region41: #{gtn3d_forward.1} parent=1 // pred_fallthru
      _
    // Predicated region
    $region42: #{gtn3d_forward.1} parent=1 // pred_check
      _
    $region43: #{gtn3d_forward.1} parent=1 // pred_check_branch
      %108 = sbr.rel (0) target = $region45
    $region44: #{gtn3d_forward.1} parent=1 // pred_region
      %s110 = ssub.s32 96, 96
      %111 = vsyncadd [#allocation12], %s110
      %s112 = sshll.u32 [#allocation11], 4
      %s113 = int_to_ptr.vmem [resolvable:$true] %s112
      %118 = dma.hbm_to_vmem [thread:$0]  %s10, 96, %s113, [#allocation12], 16, 16, 1
    $region45: #{gtn3d_forward.1} parent=1 // pred_fallthru
      _
    // Predicated region
    $region46: #{gtn3d_forward.1} parent=1 // pred_check
      _
    $region47: #{gtn3d_forward.1} parent=1 // pred_check_branch
      %120 = sbr.rel (0) target = $region49
    $region48: #{gtn3d_forward.1} parent=1 // pred_region
      %s122 = ssub.s32 64, 64
      %123 = vsyncadd [#allocation12], %s122
      %s124 = sshll.u32 [#allocation13], 4
      %s125 = int_to_ptr.vmem [resolvable:$true] %s124
      %130 = dma.hbm_to_vmem [thread:$0]  %s11, 64, %s125, [#allocation12], 16, 16, 1
    $region49: #{gtn3d_forward.1} parent=1 // pred_fallthru
      _
    // Predicated region
    $region50: #{gtn3d_forward.1} parent=1 // pred_check
      _
    $region51: #{gtn3d_forward.1} parent=1 // pred_check_branch
      %132 = sbr.rel (0) target = $region53
    $region52: #{gtn3d_forward.1} parent=1 // pred_region
      _
    $region53: #{gtn3d_forward.1} parent=1 // pred_fallthru
      _
    // Predicated region
    $region54: #{gtn3d_forward.1} parent=1 // pred_check
      _
    $region55: #{gtn3d_forward.1} parent=1 // pred_check_branch
      %134 = sbr.rel (0) target = $region57
    $region56: #{gtn3d_forward.1} parent=1 // pred_region
      %s136 = ssub.s32 96, 96
      %137 = vsyncadd [#allocation15], %s136
      %s138 = sshll.u32 [#allocation14], 4
      %s139 = int_to_ptr.vmem [resolvable:$true] %s138
      %144 = dma.hbm_to_vmem [thread:$0]  %s13, 96, %s139, [#allocation15], 16, 16, 1
    $region57: #{gtn3d_forward.1} parent=1 // pred_fallthru
      _
    // Predicated region
    $region58: #{gtn3d_forward.1} parent=1 // pred_check
      _
    $region59: #{gtn3d_forward.1} parent=1 // pred_check_branch
      %146 = sbr.rel (0) target = $region61
    $region60: #{gtn3d_forward.1} parent=1 // pred_region
      _
    $region61: #{gtn3d_forward.1} parent=1 // pred_fallthru
      _
    // Predicated region
    $region62: #{gtn3d_forward.1} parent=1 // pred_check
      _
    $region63: #{gtn3d_forward.1} parent=1 // pred_check_branch
      %148 = sbr.rel (0) target = $region65
    $region64: #{gtn3d_forward.1} parent=1 // pred_region
      %s150 = ssub.s32 32, 32
      %151 = vsyncadd [#allocation15], %s150
      %s152 = sshll.u32 [#allocation16], 4
      %s153 = int_to_ptr.vmem [resolvable:$true] %s152
      %158 = dma.hbm_to_vmem [thread:$0]  %s15, 32, %s153, [#allocation15], 16, 16, 1
    $region65: #{gtn3d_forward.1} parent=1 // pred_fallthru
      _
    // Predicated region
    $region66: #{gtn3d_forward.1} parent=1 // pred_check
      _
    $region67: #{gtn3d_forward.1} parent=1 // pred_check_branch
      %160 = sbr.rel (0) target = $region69
    $region68: #{gtn3d_forward.1} parent=1 // pred_region
      %s162 = ssub.s32 512, 512
      %163 = vsyncadd [#allocation18], %s162
      %s164 = sshll.u32 [#allocation17], 4
      %s165 = int_to_ptr.vmem [resolvable:$true] %s164
      %170 = dma.hbm_to_vmem [thread:$0]  %s16, 512, %s165, [#allocation18], 128, 128, 8
    $region69: #{gtn3d_forward.1} parent=1 // pred_fallthru
      _
    // Predicated region
    $region70: #{gtn3d_forward.1} parent=1 // pred_check
      _
    $region71: #{gtn3d_forward.1} parent=1 // pred_check_branch
      %172 = sbr.rel (0) target = $region73
    $region72: #{gtn3d_forward.1} parent=1 // pred_region
      %s174 = ssub.s32 16, 16
      %175 = vsyncadd [#allocation18], %s174
      %s177 = sshll.u32 [#allocation19], 4
      %s178 = int_to_ptr.vmem [resolvable:$true] %s177
      %180 = dma.hbm_to_vmem [thread:$0]  %s17, 16, %s178, [#allocation18]
    $region73: #{gtn3d_forward.1} parent=1 // pred_fallthru
      _
    // Predicated region
    $region74: #{gtn3d_forward.1} parent=1 // pred_check
      _
    $region75: #{gtn3d_forward.1} parent=1 // pred_check_branch
      %182 = sbr.rel (0) target = $region77
    $region76: #{gtn3d_forward.1} parent=1 // pred_region
      _
    $region77: #{gtn3d_forward.1} parent=1 // pred_fallthru
      _
    // Predicated region
    $region78: #{gtn3d_forward.1} parent=1 // pred_check
      _
    $region79: #{gtn3d_forward.1} parent=1 // pred_check_branch
      %184 = sbr.rel (0) target = $region81
    $region80: #{gtn3d_forward.1} parent=1 // pred_region
      %s186 = ssub.s32 16, 16
      %187 = vsyncadd [#allocation21], %s186
      %s189 = sshll.u32 [#allocation20], 4
      %s190 = int_to_ptr.vmem [resolvable:$true] %s189
      %192 = dma.hbm_to_vmem [thread:$0]  %s19, 16, %s190, [#allocation21]
    $region81: #{gtn3d_forward.1} parent=1 // pred_fallthru
      _
    // Predicated region
    $region82: #{gtn3d_forward.1} parent=1 // pred_check
      _
    $region83: #{gtn3d_forward.1} parent=1 // pred_check_branch
      %194 = sbr.rel (0) target = $region85
    $region84: #{gtn3d_forward.1} parent=1 // pred_region
      _
    $region85: #{gtn3d_forward.1} parent=1 // pred_fallthru
      _
    // Predicated region
    $region86: #{gtn3d_forward.1} parent=1 // pred_check
      _
    $region87: #{gtn3d_forward.1} parent=1 // pred_check_branch
      %196 = sbr.rel (0) target = $region89
    $region88: #{gtn3d_forward.1} parent=1 // pred_region
      %s198 = ssub.s32 16, 16
      %199 = vsyncadd [#allocation21], %s198
      %s201 = sshll.u32 [#allocation22], 4
      %s202 = int_to_ptr.vmem [resolvable:$true] %s201
      %204 = dma.hbm_to_vmem [thread:$0]  %s21, 16, %s202, [#allocation21]
    $region89: #{gtn3d_forward.1} parent=1 // pred_fallthru
      _
    // Predicated region
    $region90: #{gtn3d_forward.1} parent=1 // pred_check
      _
    $region91: #{gtn3d_forward.1} parent=1 // pred_check_branch
      %206 = sbr.rel (0) target = $region93
    $region92: #{gtn3d_forward.1} parent=1 // pred_region
      %s208 = ssub.s32 16, 16
      %209 = vsyncadd [#allocation24], %s208
      %s211 = sshll.u32 [#allocation23], 4
      %s212 = int_to_ptr.vmem [resolvable:$true] %s211
      %214 = dma.hbm_to_vmem [thread:$0]  %s22, 16, %s212, [#allocation24]
    $region93: #{gtn3d_forward.1} parent=1 // pred_fallthru
      _
    // Predicated region
    $region94: #{gtn3d_forward.1} parent=1 // pred_check
      _
    $region95: #{gtn3d_forward.1} parent=1 // pred_check_branch
      %216 = sbr.rel (0) target = $region97
    $region96: #{gtn3d_forward.1} parent=1 // pred_region
      %217 = dma.done [#allocation3], 768
    $region97: #{gtn3d_forward.1} parent=1 // pred_fallthru
      _
    // Predicated region
    $region98: #{gtn3d_forward.1} parent=1 // pred_check
      _
    $region99: #{gtn3d_forward.1} parent=1 // pred_check_branch
      %219 = sbr.rel (0) target = $region101
    $region100: #{gtn3d_forward.1} parent=1 // pred_region
      %220 = dma.done [#allocation6], 48
    $region101: #{gtn3d_forward.1} parent=1 // pred_fallthru
      _
    // Predicated region
    $region102: #{gtn3d_forward.1} parent=1 // pred_check
      _
    $region103: #{gtn3d_forward.1} parent=1 // pred_check_branch
      %222 = sbr.rel (0) target = $region105
    $region104: #{gtn3d_forward.1} parent=1 // pred_region
      %223 = dma.done [#allocation6], 384
    $region105: #{gtn3d_forward.1} parent=1 // pred_fallthru
      _
    // Predicated region
    $region106: #{gtn3d_forward.1} parent=1 // pred_check
      _
    $region107: #{gtn3d_forward.1} parent=1 // pred_check_branch
      %225 = sbr.rel (0) target = $region109
    $region108: #{gtn3d_forward.1} parent=1 // pred_region
      %226 = dma.done [#allocation9], 384
    $region109: #{gtn3d_forward.1} parent=1 // pred_fallthru
      _
    // Predicated region
    $region110: #{gtn3d_forward.1} parent=1 // pred_check
      _
    $region111: #{gtn3d_forward.1} parent=1 // pred_check_branch
      %228 = sbr.rel (0) target = $region113
    $region112: #{gtn3d_forward.1} parent=1 // pred_region
      %229 = dma.done [#allocation9], 96
    $region113: #{gtn3d_forward.1} parent=1 // pred_fallthru
      _
    // Predicated region
    $region114: #{gtn3d_forward.1} parent=1 // pred_check
      _
    $region115: #{gtn3d_forward.1} parent=1 // pred_check_branch
      %231 = sbr.rel (0) target = $region117
    $region116: #{gtn3d_forward.1} parent=1 // pred_region
      %232 = dma.done [#allocation12], 96
    $region117: #{gtn3d_forward.1} parent=1 // pred_fallthru
      _
    // Predicated region
    $region118: #{gtn3d_forward.1} parent=1 // pred_check
      _
    $region119: #{gtn3d_forward.1} parent=1 // pred_check_branch
      %234 = sbr.rel (0) target = $region121
    $region120: #{gtn3d_forward.1} parent=1 // pred_region
      %235 = dma.done [#allocation12], 64
    $region121: #{gtn3d_forward.1} parent=1 // pred_fallthru
      _
    // Predicated region
    $region122: #{gtn3d_forward.1} parent=1 // pred_check
      _
    $region123: #{gtn3d_forward.1} parent=1 // pred_check_branch
      %237 = sbr.rel (0) target = $region125
    $region124: #{gtn3d_forward.1} parent=1 // pred_region
      %238 = dma.done [#allocation15], 96
    $region125: #{gtn3d_forward.1} parent=1 // pred_fallthru
      _
    // Predicated region
    $region126: #{gtn3d_forward.1} parent=1 // pred_check
      _
    $region127: #{gtn3d_forward.1} parent=1 // pred_check_branch
      %240 = sbr.rel (0) target = $region129
    $region128: #{gtn3d_forward.1} parent=1 // pred_region
      %241 = dma.done [#allocation15], 32
    $region129: #{gtn3d_forward.1} parent=1 // pred_fallthru
      _
    // Predicated region
    $region130: #{gtn3d_forward.1} parent=1 // pred_check
      _
    $region131: #{gtn3d_forward.1} parent=1 // pred_check_branch
      %243 = sbr.rel (0) target = $region133
    $region132: #{gtn3d_forward.1} parent=1 // pred_region
      %244 = dma.done [#allocation18], 512
    $region133: #{gtn3d_forward.1} parent=1 // pred_fallthru
      _
    // Predicated region
    $region134: #{gtn3d_forward.1} parent=1 // pred_check
      _
    $region135: #{gtn3d_forward.1} parent=1 // pred_check_branch
      %246 = sbr.rel (0) target = $region137
    $region136: #{gtn3d_forward.1} parent=1 // pred_region
      %247 = dma.done [#allocation18], 16
    $region137: #{gtn3d_forward.1} parent=1 // pred_fallthru
      _
    // Predicated region
    $region138: #{gtn3d_forward.1} parent=1 // pred_check
      _
    $region139: #{gtn3d_forward.1} parent=1 // pred_check_branch
      %249 = sbr.rel (0) target = $region141
    $region140: #{gtn3d_forward.1} parent=1 // pred_region
      %250 = dma.done [#allocation21], 16
    $region141: #{gtn3d_forward.1} parent=1 // pred_fallthru
      _
    // Predicated region
    $region142: #{gtn3d_forward.1} parent=1 // pred_check
      _
    $region143: #{gtn3d_forward.1} parent=1 // pred_check_branch
      %252 = sbr.rel (0) target = $region145
    $region144: #{gtn3d_forward.1} parent=1 // pred_region
      %253 = dma.done [#allocation21], 16
    $region145: #{gtn3d_forward.1} parent=1 // pred_fallthru
      _
    // Predicated region
    $region146: #{gtn3d_forward.1} parent=1 // pred_check
      _
    $region147: #{gtn3d_forward.1} parent=1 // pred_check_branch
      %255 = sbr.rel (0) target = $region149
    $region148: #{gtn3d_forward.1} parent=1 // pred_region
      %256 = dma.done [#allocation24], 16
    $region149: #{gtn3d_forward.1} parent=1 // pred_fallthru
      _
    %v257 = vld [vmem:[#allocation23] sm:$0x1]
    %v258 = vxor.u32 %v257, 2147483648
    %v259 = vmul.f32 %v258, 1.442695
    %v260 = vpow.pop %v259
    %v261 = vadd.f32 %v260, 1.0
    %v262 = vrcp.pop %v261
    %v263 = vmul.f32 1.0, %v262
    %v264 = vld [vmem:[%s0] sm:$0x3]
    %v265 = vld [vmem:[%s1] sm:$0x3]
    %v266 = vsub.f32 %v264, %v265
    %v267 = vld [vmem:[#allocation2] sm:$0xff]
    %v268 = vld [vmem:[#allocation2 + $0x8] sm:$0xff]
    %v269 = vld [vmem:[#allocation5] sm:$0x1]
    %v271 = vlaneseq
    %v272 = vshrl.u32 %v271, 7
    %v273 = vsub.s32 0, %v272
    %v274 = vrot.slane %v269, %v273
    %vm276 = vcmask 130048
    %v278 = vsel %vm276, %v264, 0
    %280 = vmatprep.subr.mxu0 0.0
    %281 = vmatpush1.msra.mxu0 %v267
    %282 = vmatprep.subr.mxu0 0.0
    %283 = vmatpush1.msra.mxu0 %v268
    %284 = vmatprep.subr.mxu0 0.0
    %285 = vmatpush1.msra.mxu0 0.0
    %286 = vmatprep.subr.mxu0 0.0
    %287 = vmatpush1.msra.mxu0 0.0
    %288 = vmatprep.subr.mxu0 0.0
    %289 = vmatpush1.msra.mxu0 0.0
    %290 = vmatprep.subr.mxu0 0.0
    %291 = vmatpush1.msra.mxu0 0.0
    %292 = vmatprep.subr.mxu0 0.0
    %293 = vmatpush1.msra.mxu0 0.0
    %294 = vmatprep.subr.mxu0 0.0
    %295 = vmatpush1.msra.mxu0 0.0
    %296 = vmatprep.subr.mxu0 0.0
    %297 = vmatpush1.msra.mxu0 0.0
    %298 = vmatprep.subr.mxu0 0.0
    %299 = vmatpush1.msra.mxu0 0.0
    %300 = vmatprep.subr.mxu0 0.0
    %301 = vmatpush1.msra.mxu0 0.0
    %302 = vmatprep.subr.mxu0 0.0
    %303 = vmatpush1.msra.mxu0 0.0
    %304 = vmatprep.subr.mxu0 0.0
    %305 = vmatpush1.msra.mxu0 0.0
    %306 = vmatprep.subr.mxu0 0.0
    %307 = vmatpush1.msra.mxu0 0.0
    %308 = vmatprep.subr.mxu0 0.0
    %309 = vmatpush1.msra.mxu0 0.0
    %310 = vmatprep.subr.mxu0 0.0
    %311 = vmatpush1.msra.mxu0 0.0
    %312 = vmatprep.subr.mxu0 0.0
    %313 = vmatpush1.msra.mxu0 0.0
    %314 = vmatprep.subr.mxu0 0.0
    %315 = vmatpush1.msra.mxu0 0.0
    %316 = vmatprep.subr.mxu0 0.0
    %317 = vmatpush1.msra.mxu0 0.0
    %318 = vmatprep.subr.mxu0 0.0
    %319 = vmatpush1.msra.mxu0 0.0
    %320 = vmatprep.subr.mxu0 0.0
    %321 = vmatpush1.msra.mxu0 0.0
    %322 = vmatprep.subr.mxu0 0.0
    %323 = vmatpush1.msra.mxu0 0.0
    %324 = vmatprep.subr.mxu0 0.0
    %325 = vmatpush1.msra.mxu0 0.0
    %326 = vmatprep.subr.mxu0 0.0
    %327 = vmatpush1.msra.mxu0 0.0
    %328 = vmatprep.subr.mxu0 0.0
    %329 = vmatpush1.msra.mxu0 0.0
    %330 = vmatprep.subr.mxu0 0.0
    %331 = vmatpush1.msra.mxu0 0.0
    %332 = vmatprep.subr.mxu0 0.0
    %333 = vmatpush1.msra.mxu0 0.0
    %334 = vmatprep.subr.mxu0 0.0
    %335 = vmatpush1.msra.mxu0 0.0
    %336 = vmatprep.subr.mxu0 0.0
    %337 = vmatpush1.msra.mxu0 0.0
    %338 = vmatprep.subr.mxu0 0.0
    %339 = vmatpush1.msra.mxu0 0.0
    %340 = vmatprep.subr.mxu0 0.0
    %341 = vmatpush1.msra.mxu0 0.0
    %342 = vmatprep.subr.mxu0 0.0
    %343 = vmatpush1.msra.mxu0 0.0
    %344 = vmatprep.mubr.f32.mxu0 0.0
    %345 = vmatmul.mubr.f32.gmra.mrb[0].mxu0 %v278
    %v346 = vpop.f32.mrb[0].mxu0
    %v347 = vadd.f32 %v274, %v346
    %v348 = vpop.f32.mrb[0].mxu0
    %349 = vdwg.mxu0
    %v350 = vld [vmem:[#allocation7] sm:$0x1]
    %s351 = scalar_lea.vmem [#allocation7], 1
    %v352 = vld [vmem:[%s351] sm:$0x1]
    %vm353 = vcmask 254976
    %v354 = vsel %vm353, %v347, 0.0
    %355 = vadd.xlane.f32.xlu0 %v354
    %v356 = vpop.xlane.xlu0 %355
    %v357 = vrcp.pop 32.0
    %v358 = vmul.f32 %v356, %v357
    %v359 = vmul.f32 %v347, %v347
    %v360 = vsel %vm353, %v359, 0.0
    %361 = vadd.xlane.f32.xlu0 %v360
    %v362 = vpop.xlane.xlu0 %361
    %v363 = vmul.f32 %v362, %v357
    %v364 = vmul.f32 %v358, %v358
    %v365 = vsub.f32 %v363, %v364
    %v366 = vsub.f32 %v347, %v358
    %v367 = vadd.f32 %v365, 1e-05
    %v368 = vrsqrt.pop %v367
    %v369 = vmul.f32 %v366, %v368
    %v371 = vlaneseq
    %v372 = vshrl.u32 %v371, 7
    %v373 = vsub.s32 0, %v372
    %v374 = vrot.slane %v350, %v373
    %v376 = vmul.f32 %v369, %v374
    %v378 = vlaneseq
    %v379 = vshrl.u32 %v378, 7
    %v380 = vsub.s32 0, %v379
    %v381 = vrot.slane %v352, %v380
    %v383 = vadd.f32 %v376, %v381
    %v384 = vld [vmem:[%s5] sm:$0xff]
    %v385 = vld [vmem:[%s5 + $0x8] sm:$0xff]
    %v386 = vld [vmem:[%s5 + $0x10] sm:$0xff]
    %v387 = vld [vmem:[%s5 + $0x18] sm:$0xff]
    %v388 = vld [vmem:[#allocation8] sm:$0x1]
    %v390 = vlaneseq
    %v391 = vshrl.u32 %v390, 7
    %v392 = vsub.s32 0, %v391
    %v393 = vrot.slane %v388, %v392
    %vm395 = vcmask 261120
    %v397 = vsel %vm395, %v383, 0
    %399 = vmatprep.subr.mxu0 0.0
    %400 = vmatpush1.msra.mxu0 %v384
    %401 = vmatprep.subr.mxu0 0.0
    %402 = vmatpush1.msra.mxu0 %v385
    %403 = vmatprep.subr.mxu0 0.0
    %404 = vmatpush1.msra.mxu0 %v386
    %405 = vmatprep.subr.mxu0 0.0
    %406 = vmatpush1.msra.mxu0 %v387
    %407 = vmatprep.subr.mxu0 0.0
    %408 = vmatpush1.msra.mxu0 0.0
    %409 = vmatprep.subr.mxu0 0.0
    %410 = vmatpush1.msra.mxu0 0.0
    %411 = vmatprep.subr.mxu0 0.0
    %412 = vmatpush1.msra.mxu0 0.0
    %413 = vmatprep.subr.mxu0 0.0
    %414 = vmatpush1.msra.mxu0 0.0
    %415 = vmatprep.subr.mxu0 0.0
    %416 = vmatpush1.msra.mxu0 0.0
    %417 = vmatprep.subr.mxu0 0.0
    %418 = vmatpush1.msra.mxu0 0.0
    %419 = vmatprep.subr.mxu0 0.0
    %420 = vmatpush1.msra.mxu0 0.0
    %421 = vmatprep.subr.mxu0 0.0
    %422 = vmatpush1.msra.mxu0 0.0
    %423 = vmatprep.subr.mxu0 0.0
    %424 = vmatpush1.msra.mxu0 0.0
    %425 = vmatprep.subr.mxu0 0.0
    %426 = vmatpush1.msra.mxu0 0.0
    %427 = vmatprep.subr.mxu0 0.0
    %428 = vmatpush1.msra.mxu0 0.0
    %429 = vmatprep.subr.mxu0 0.0
    %430 = vmatpush1.msra.mxu0 0.0
    %431 = vmatprep.subr.mxu0 0.0
    %432 = vmatpush1.msra.mxu0 0.0
    %433 = vmatprep.subr.mxu0 0.0
    %434 = vmatpush1.msra.mxu0 0.0
    %435 = vmatprep.subr.mxu0 0.0
    %436 = vmatpush1.msra.mxu0 0.0
    %437 = vmatprep.subr.mxu0 0.0
    %438 = vmatpush1.msra.mxu0 0.0
    %439 = vmatprep.subr.mxu0 0.0
    %440 = vmatpush1.msra.mxu0 0.0
    %441 = vmatprep.subr.mxu0 0.0
    %442 = vmatpush1.msra.mxu0 0.0
    %443 = vmatprep.subr.mxu0 0.0
    %444 = vmatpush1.msra.mxu0 0.0
    %445 = vmatprep.subr.mxu0 0.0
    %446 = vmatpush1.msra.mxu0 0.0
    %447 = vmatprep.subr.mxu0 0.0
    %448 = vmatpush1.msra.mxu0 0.0
    %449 = vmatprep.subr.mxu0 0.0
    %450 = vmatpush1.msra.mxu0 0.0
    %451 = vmatprep.subr.mxu0 0.0
    %452 = vmatpush1.msra.mxu0 0.0
    %453 = vmatprep.subr.mxu0 0.0
    %454 = vmatpush1.msra.mxu0 0.0
    %455 = vmatprep.subr.mxu0 0.0
    %456 = vmatpush1.msra.mxu0 0.0
    %457 = vmatprep.subr.mxu0 0.0
    %458 = vmatpush1.msra.mxu0 0.0
    %459 = vmatprep.subr.mxu0 0.0
    %460 = vmatpush1.msra.mxu0 0.0
    %461 = vmatprep.subr.mxu0 0.0
    %462 = vmatpush1.msra.mxu0 0.0
    %463 = vmatprep.mubr.f32.mxu0 0.0
    %464 = vmatmul.mubr.f32.gmra.mrb[0].mxu0 %v397
    %v465 = vpop.f32.mrb[0].mxu0
    %v466 = vadd.f32 %v393, %v465
    %v467 = vpop.f32.mrb[0].mxu0
    %468 = vdwg.mxu0
    %s469 = scalar_lea.vmem %s5, 32
    %v470 = vld [vmem:[%s469] sm:$0xff]
    %v471 = vld [vmem:[%s469 + $0x8] sm:$0xff]
    %v472 = vld [vmem:[%s469 + $0x10] sm:$0xff]
    %v473 = vld [vmem:[%s469 + $0x18] sm:$0xff]
    %s474 = scalar_lea.vmem [#allocation8], 1
    %v475 = vld [vmem:[%s474] sm:$0x1]
    %v477 = vlaneseq
    %v478 = vshrl.u32 %v477, 7
    %v479 = vsub.s32 0, %v478
    %v480 = vrot.slane %v475, %v479
    %v483 = vsel %vm395, %v466, 0
    %485 = vmatprep.subr.mxu0 0.0
    %486 = vmatpush1.msra.mxu0 %v470
    %487 = vmatprep.subr.mxu0 0.0
    %488 = vmatpush1.msra.mxu0 %v471
    %489 = vmatprep.subr.mxu0 0.0
    %490 = vmatpush1.msra.mxu0 %v472
    %491 = vmatprep.subr.mxu0 0.0
    %492 = vmatpush1.msra.mxu0 %v473
    %493 = vmatprep.subr.mxu0 0.0
    %494 = vmatpush1.msra.mxu0 0.0
    %495 = vmatprep.subr.mxu0 0.0
    %496 = vmatpush1.msra.mxu0 0.0
    %497 = vmatprep.subr.mxu0 0.0
    %498 = vmatpush1.msra.mxu0 0.0
    %499 = vmatprep.subr.mxu0 0.0
    %500 = vmatpush1.msra.mxu0 0.0
    %501 = vmatprep.subr.mxu0 0.0
    %502 = vmatpush1.msra.mxu0 0.0
    %503 = vmatprep.subr.mxu0 0.0
    %504 = vmatpush1.msra.mxu0 0.0
    %505 = vmatprep.subr.mxu0 0.0
    %506 = vmatpush1.msra.mxu0 0.0
    %507 = vmatprep.subr.mxu0 0.0
    %508 = vmatpush1.msra.mxu0 0.0
    %509 = vmatprep.subr.mxu0 0.0
    %510 = vmatpush1.msra.mxu0 0.0
    %511 = vmatprep.subr.mxu0 0.0
    %512 = vmatpush1.msra.mxu0 0.0
    %513 = vmatprep.subr.mxu0 0.0
    %514 = vmatpush1.msra.mxu0 0.0
    %515 = vmatprep.subr.mxu0 0.0
    %516 = vmatpush1.msra.mxu0 0.0
    %517 = vmatprep.subr.mxu0 0.0
    %518 = vmatpush1.msra.mxu0 0.0
    %519 = vmatprep.subr.mxu0 0.0
    %520 = vmatpush1.msra.mxu0 0.0
    %521 = vmatprep.subr.mxu0 0.0
    %522 = vmatpush1.msra.mxu0 0.0
    %523 = vmatprep.subr.mxu0 0.0
    %524 = vmatpush1.msra.mxu0 0.0
    %525 = vmatprep.subr.mxu0 0.0
    %526 = vmatpush1.msra.mxu0 0.0
    %527 = vmatprep.subr.mxu0 0.0
    %528 = vmatpush1.msra.mxu0 0.0
    %529 = vmatprep.subr.mxu0 0.0
    %530 = vmatpush1.msra.mxu0 0.0
    %531 = vmatprep.subr.mxu0 0.0
    %532 = vmatpush1.msra.mxu0 0.0
    %533 = vmatprep.subr.mxu0 0.0
    %534 = vmatpush1.msra.mxu0 0.0
    %535 = vmatprep.subr.mxu0 0.0
    %536 = vmatpush1.msra.mxu0 0.0
    %537 = vmatprep.subr.mxu0 0.0
    %538 = vmatpush1.msra.mxu0 0.0
    %539 = vmatprep.subr.mxu0 0.0
    %540 = vmatpush1.msra.mxu0 0.0
    %541 = vmatprep.subr.mxu0 0.0
    %542 = vmatpush1.msra.mxu0 0.0
    %543 = vmatprep.subr.mxu0 0.0
    %544 = vmatpush1.msra.mxu0 0.0
    %545 = vmatprep.subr.mxu0 0.0
    %546 = vmatpush1.msra.mxu0 0.0
    %547 = vmatprep.subr.mxu0 0.0
    %548 = vmatpush1.msra.mxu0 0.0
    %549 = vmatprep.mubr.f32.mxu0 0.0
    %550 = vmatmul.mubr.f32.gmra.mrb[0].mxu0 %v483
    %v551 = vpop.f32.mrb[0].mxu0
    %v552 = vadd.f32 %v480, %v551
    %v553 = vpop.f32.mrb[0].mxu0
    %554 = vdwg.mxu0
    %s555 = scalar_lea.vmem [#allocation7], 2
    %v556 = vld [vmem:[%s555] sm:$0x1]
    %s557 = scalar_lea.vmem [#allocation7], 3
    %v558 = vld [vmem:[%s557] sm:$0x1]
    %v560 = vlaneseq
    %v561 = vshrl.u32 %v560, 7
    %v562 = vsub.s32 0, %v561
    %v563 = vrot.slane %v556, %v562
    %v565 = vmul.f32 %v369, %v563
    %v567 = vlaneseq
    %v568 = vshrl.u32 %v567, 7
    %v569 = vsub.s32 0, %v568
    %v570 = vrot.slane %v558, %v569
    %v572 = vadd.f32 %v565, %v570
    %s573 = scalar_lea.vmem %s5, 64
    %v574 = vld [vmem:[%s573] sm:$0xff]
    %v575 = vld [vmem:[%s573 + $0x8] sm:$0xff]
    %v576 = vld [vmem:[%s573 + $0x10] sm:$0xff]
    %v577 = vld [vmem:[%s573 + $0x18] sm:$0xff]
    %s578 = scalar_lea.vmem [#allocation8], 2
    %v579 = vld [vmem:[%s578] sm:$0x1]
    %v581 = vlaneseq
    %v582 = vshrl.u32 %v581, 7
    %v583 = vsub.s32 0, %v582
    %v584 = vrot.slane %v579, %v583
    %v587 = vsel %vm395, %v572, 0
    %589 = vmatprep.subr.mxu0 0.0
    %590 = vmatpush1.msra.mxu0 %v574
    %591 = vmatprep.subr.mxu0 0.0
    %592 = vmatpush1.msra.mxu0 %v575
    %593 = vmatprep.subr.mxu0 0.0
    %594 = vmatpush1.msra.mxu0 %v576
    %595 = vmatprep.subr.mxu0 0.0
    %596 = vmatpush1.msra.mxu0 %v577
    %597 = vmatprep.subr.mxu0 0.0
    %598 = vmatpush1.msra.mxu0 0.0
    %599 = vmatprep.subr.mxu0 0.0
    %600 = vmatpush1.msra.mxu0 0.0
    %601 = vmatprep.subr.mxu0 0.0
    %602 = vmatpush1.msra.mxu0 0.0
    %603 = vmatprep.subr.mxu0 0.0
    %604 = vmatpush1.msra.mxu0 0.0
    %605 = vmatprep.subr.mxu0 0.0
    %606 = vmatpush1.msra.mxu0 0.0
    %607 = vmatprep.subr.mxu0 0.0
    %608 = vmatpush1.msra.mxu0 0.0
    %609 = vmatprep.subr.mxu0 0.0
    %610 = vmatpush1.msra.mxu0 0.0
    %611 = vmatprep.subr.mxu0 0.0
    %612 = vmatpush1.msra.mxu0 0.0
    %613 = vmatprep.subr.mxu0 0.0
    %614 = vmatpush1.msra.mxu0 0.0
    %615 = vmatprep.subr.mxu0 0.0
    %616 = vmatpush1.msra.mxu0 0.0
    %617 = vmatprep.subr.mxu0 0.0
    %618 = vmatpush1.msra.mxu0 0.0
    %619 = vmatprep.subr.mxu0 0.0
    %620 = vmatpush1.msra.mxu0 0.0
    %621 = vmatprep.subr.mxu0 0.0
    %622 = vmatpush1.msra.mxu0 0.0
    %623 = vmatprep.subr.mxu0 0.0
    %624 = vmatpush1.msra.mxu0 0.0
    %625 = vmatprep.subr.mxu0 0.0
    %626 = vmatpush1.msra.mxu0 0.0
    %627 = vmatprep.subr.mxu0 0.0
    %628 = vmatpush1.msra.mxu0 0.0
    %629 = vmatprep.subr.mxu0 0.0
    %630 = vmatpush1.msra.mxu0 0.0
    %631 = vmatprep.subr.mxu0 0.0
    %632 = vmatpush1.msra.mxu0 0.0
    %633 = vmatprep.subr.mxu0 0.0
    %634 = vmatpush1.msra.mxu0 0.0
    %635 = vmatprep.subr.mxu0 0.0
    %636 = vmatpush1.msra.mxu0 0.0
    %637 = vmatprep.subr.mxu0 0.0
    %638 = vmatpush1.msra.mxu0 0.0
    %639 = vmatprep.subr.mxu0 0.0
    %640 = vmatpush1.msra.mxu0 0.0
    %641 = vmatprep.subr.mxu0 0.0
    %642 = vmatpush1.msra.mxu0 0.0
    %643 = vmatprep.subr.mxu0 0.0
    %644 = vmatpush1.msra.mxu0 0.0
    %645 = vmatprep.subr.mxu0 0.0
    %646 = vmatpush1.msra.mxu0 0.0
    %647 = vmatprep.subr.mxu0 0.0
    %648 = vmatpush1.msra.mxu0 0.0
    %649 = vmatprep.subr.mxu0 0.0
    %650 = vmatpush1.msra.mxu0 0.0
    %651 = vmatprep.subr.mxu0 0.0
    %652 = vmatpush1.msra.mxu0 0.0
    %653 = vmatprep.mubr.f32.mxu0 0.0
    %654 = vmatmul.mubr.f32.gmra.mrb[0].mxu0 %v587
    %v655 = vpop.f32.mrb[0].mxu0
    %v656 = vadd.f32 %v584, %v655
    %v657 = vpop.f32.mrb[0].mxu0
    %658 = vdwg.mxu0
    %s659 = scalar_lea.vmem %s5, 96
    %v660 = vld [vmem:[%s659] sm:$0xff]
    %v661 = vld [vmem:[%s659 + $0x8] sm:$0xff]
    %v662 = vld [vmem:[%s659 + $0x10] sm:$0xff]
    %v663 = vld [vmem:[%s659 + $0x18] sm:$0xff]
    %s664 = scalar_lea.vmem [#allocation8], 3
    %v665 = vld [vmem:[%s664] sm:$0x1]
    %v667 = vlaneseq
    %v668 = vshrl.u32 %v667, 7
    %v669 = vsub.s32 0, %v668
    %v670 = vrot.slane %v665, %v669
    %v673 = vsel %vm395, %v656, 0
    %675 = vmatprep.subr.mxu0 0.0
    %676 = vmatpush1.msra.mxu0 %v660
    %677 = vmatprep.subr.mxu0 0.0
    %678 = vmatpush1.msra.mxu0 %v661
    %679 = vmatprep.subr.mxu0 0.0
    %680 = vmatpush1.msra.mxu0 %v662
    %681 = vmatprep.subr.mxu0 0.0
    %682 = vmatpush1.msra.mxu0 %v663
    %683 = vmatprep.subr.mxu0 0.0
    %684 = vmatpush1.msra.mxu0 0.0
    %685 = vmatprep.subr.mxu0 0.0
    %686 = vmatpush1.msra.mxu0 0.0
    %687 = vmatprep.subr.mxu0 0.0
    %688 = vmatpush1.msra.mxu0 0.0
    %689 = vmatprep.subr.mxu0 0.0
    %690 = vmatpush1.msra.mxu0 0.0
    %691 = vmatprep.subr.mxu0 0.0
    %692 = vmatpush1.msra.mxu0 0.0
    %693 = vmatprep.subr.mxu0 0.0
    %694 = vmatpush1.msra.mxu0 0.0
    %695 = vmatprep.subr.mxu0 0.0
    %696 = vmatpush1.msra.mxu0 0.0
    %697 = vmatprep.subr.mxu0 0.0
    %698 = vmatpush1.msra.mxu0 0.0
    %699 = vmatprep.subr.mxu0 0.0
    %700 = vmatpush1.msra.mxu0 0.0
    %701 = vmatprep.subr.mxu0 0.0
    %702 = vmatpush1.msra.mxu0 0.0
    %703 = vmatprep.subr.mxu0 0.0
    %704 = vmatpush1.msra.mxu0 0.0
    %705 = vmatprep.subr.mxu0 0.0
    %706 = vmatpush1.msra.mxu0 0.0
    %707 = vmatprep.subr.mxu0 0.0
    %708 = vmatpush1.msra.mxu0 0.0
    %709 = vmatprep.subr.mxu0 0.0
    %710 = vmatpush1.msra.mxu0 0.0
    %711 = vmatprep.subr.mxu0 0.0
    %712 = vmatpush1.msra.mxu0 0.0
    %713 = vmatprep.subr.mxu0 0.0
    %714 = vmatpush1.msra.mxu0 0.0
    %715 = vmatprep.subr.mxu0 0.0
    %716 = vmatpush1.msra.mxu0 0.0
    %717 = vmatprep.subr.mxu0 0.0
    %718 = vmatpush1.msra.mxu0 0.0
    %719 = vmatprep.subr.mxu0 0.0
    %720 = vmatpush1.msra.mxu0 0.0
    %721 = vmatprep.subr.mxu0 0.0
    %722 = vmatpush1.msra.mxu0 0.0
    %723 = vmatprep.subr.mxu0 0.0
    %724 = vmatpush1.msra.mxu0 0.0
    %725 = vmatprep.subr.mxu0 0.0
    %726 = vmatpush1.msra.mxu0 0.0
    %727 = vmatprep.subr.mxu0 0.0
    %728 = vmatpush1.msra.mxu0 0.0
    %729 = vmatprep.subr.mxu0 0.0
    %730 = vmatpush1.msra.mxu0 0.0
    %731 = vmatprep.subr.mxu0 0.0
    %732 = vmatpush1.msra.mxu0 0.0
    %733 = vmatprep.subr.mxu0 0.0
    %734 = vmatpush1.msra.mxu0 0.0
    %735 = vmatprep.subr.mxu0 0.0
    %736 = vmatpush1.msra.mxu0 0.0
    %737 = vmatprep.subr.mxu0 0.0
    %738 = vmatpush1.msra.mxu0 0.0
    %739 = vmatprep.mubr.f32.mxu0 0.0
    %740 = vmatmul.mubr.f32.gmra.mrb[0].mxu0 %v673
    %v741 = vpop.f32.mrb[0].mxu0
    %v742 = vadd.f32 %v670, %v741
    %v743 = vpop.f32.mrb[0].mxu0
    %744 = vdwg.mxu0
    %v746 = vlaneseq
    %v747 = vshrl.u32 %v746, 7
    %v748 = vsub.s32 0, %v747
    %v749 = vrot.slane %v263, %v748
    %750 = vset.pattern.permute.xlu0 0
    %751 = vperm.xlu0 %750, %v749
    %v752 = vpop.permute.xlu0 %751
    %v754 = vmul.f32 %v752, %v552
    %v755 = vadd.f32 %v347, %v754
    %v756 = vsub.f32 1.0, %v263
    %v758 = vlaneseq
    %v759 = vshrl.u32 %v758, 7
    %v760 = vsub.s32 0, %v759
    %v761 = vrot.slane %v756, %v760
    %762 = vset.pattern.permute.xlu0 0
    %763 = vperm.xlu0 %762, %v761
    %v764 = vpop.permute.xlu0 %763
    %v766 = vmul.f32 %v764, %v742
    %v767 = vadd.f32 %v755, %v766
    %v768 = vsel %vm353, %v767, 0.0
    %769 = vadd.xlane.f32.xlu0 %v768
    %v770 = vpop.xlane.xlu0 %769
    %v771 = vmul.f32 %v770, %v357
    %v772 = vmul.f32 %v767, %v767
    %v773 = vsel %vm353, %v772, 0.0
    %774 = vadd.xlane.f32.xlu0 %v773
    %v775 = vpop.xlane.xlu0 %774
    %v776 = vmul.f32 %v775, %v357
    %v777 = vmul.f32 %v771, %v771
    %v778 = vsub.f32 %v776, %v777
    %v779 = vsub.f32 %v767, %v771
    %v780 = vadd.f32 %v778, 1e-05
    %v781 = vrsqrt.pop %v780
    %v782 = vmul.f32 %v779, %v781
    %v783 = vmul.f32 %v782, %v563
    %v784 = vadd.f32 %v783, %v570
    %v785 = vld [vmem:[%s7] sm:$0xff]
    %v786 = vld [vmem:[%s7 + $0x8] sm:$0xff]
    %v787 = vld [vmem:[%s7 + $0x10] sm:$0xff]
    %v788 = vld [vmem:[%s7 + $0x18] sm:$0xff]
    %v789 = vld [vmem:[#allocation10] sm:$0x1]
    %v791 = vlaneseq
    %v792 = vshrl.u32 %v791, 7
    %v793 = vsub.s32 0, %v792
    %v794 = vrot.slane %v789, %v793
    %v797 = vsel %vm395, %v784, 0
    %799 = vmatprep.subr.mxu0 0.0
    %800 = vmatpush1.msra.mxu0 %v785
    %801 = vmatprep.subr.mxu0 0.0
    %802 = vmatpush1.msra.mxu0 %v786
    %803 = vmatprep.subr.mxu0 0.0
    %804 = vmatpush1.msra.mxu0 %v787
    %805 = vmatprep.subr.mxu0 0.0
    %806 = vmatpush1.msra.mxu0 %v788
    %807 = vmatprep.subr.mxu0 0.0
    %808 = vmatpush1.msra.mxu0 0.0
    %809 = vmatprep.subr.mxu0 0.0
    %810 = vmatpush1.msra.mxu0 0.0
    %811 = vmatprep.subr.mxu0 0.0
    %812 = vmatpush1.msra.mxu0 0.0
    %813 = vmatprep.subr.mxu0 0.0
    %814 = vmatpush1.msra.mxu0 0.0
    %815 = vmatprep.subr.mxu0 0.0
    %816 = vmatpush1.msra.mxu0 0.0
    %817 = vmatprep.subr.mxu0 0.0
    %818 = vmatpush1.msra.mxu0 0.0
    %819 = vmatprep.subr.mxu0 0.0
    %820 = vmatpush1.msra.mxu0 0.0
    %821 = vmatprep.subr.mxu0 0.0
    %822 = vmatpush1.msra.mxu0 0.0
    %823 = vmatprep.subr.mxu0 0.0
    %824 = vmatpush1.msra.mxu0 0.0
    %825 = vmatprep.subr.mxu0 0.0
    %826 = vmatpush1.msra.mxu0 0.0
    %827 = vmatprep.subr.mxu0 0.0
    %828 = vmatpush1.msra.mxu0 0.0
    %829 = vmatprep.subr.mxu0 0.0
    %830 = vmatpush1.msra.mxu0 0.0
    %831 = vmatprep.subr.mxu0 0.0
    %832 = vmatpush1.msra.mxu0 0.0
    %833 = vmatprep.subr.mxu0 0.0
    %834 = vmatpush1.msra.mxu0 0.0
    %835 = vmatprep.subr.mxu0 0.0
    %836 = vmatpush1.msra.mxu0 0.0
    %837 = vmatprep.subr.mxu0 0.0
    %838 = vmatpush1.msra.mxu0 0.0
    %839 = vmatprep.subr.mxu0 0.0
    %840 = vmatpush1.msra.mxu0 0.0
    %841 = vmatprep.subr.mxu0 0.0
    %842 = vmatpush1.msra.mxu0 0.0
    %843 = vmatprep.subr.mxu0 0.0
    %844 = vmatpush1.msra.mxu0 0.0
    %845 = vmatprep.subr.mxu0 0.0
    %846 = vmatpush1.msra.mxu0 0.0
    %847 = vmatprep.subr.mxu0 0.0
    %848 = vmatpush1.msra.mxu0 0.0
    %849 = vmatprep.subr.mxu0 0.0
    %850 = vmatpush1.msra.mxu0 0.0
    %851 = vmatprep.subr.mxu0 0.0
    %852 = vmatpush1.msra.mxu0 0.0
    %853 = vmatprep.subr.mxu0 0.0
    %854 = vmatpush1.msra.mxu0 0.0
    %855 = vmatprep.subr.mxu0 0.0
    %856 = vmatpush1.msra.mxu0 0.0
    %857 = vmatprep.subr.mxu0 0.0
    %858 = vmatpush1.msra.mxu0 0.0
    %859 = vmatprep.subr.mxu0 0.0
    %860 = vmatpush1.msra.mxu0 0.0
    %861 = vmatprep.subr.mxu0 0.0
    %862 = vmatpush1.msra.mxu0 0.0
    %863 = vmatprep.mubr.f32.mxu0 0.0
    %864 = vmatmul.mubr.f32.gmra.mrb[0].mxu0 %v797
    %v865 = vpop.f32.mrb[0].mxu0
    %v866 = vadd.f32 %v794, %v865
    %v867 = vpop.f32.mrb[0].mxu0
    %868 = vdwg.mxu0
    %v869 = vmax.f32 %v866, 0.0
    %v870 = vld [vmem:[%s9] sm:$0xff]
    %v871 = vld [vmem:[%s9 + $0x8] sm:$0xff]
    %v872 = vld [vmem:[%s9 + $0x10] sm:$0xff]
    %v873 = vld [vmem:[%s9 + $0x18] sm:$0xff]
    %v874 = vld [vmem:[%s9 + $0x20] sm:$0xff]
    %v875 = vld [vmem:[%s9 + $0x28] sm:$0xff]
    %v876 = vld [vmem:[%s9 + $0x30] sm:$0xff]
    %v877 = vld [vmem:[%s9 + $0x38] sm:$0xff]
    %v878 = vld [vmem:[%s9 + $0x40] sm:$0xff]
    %v879 = vld [vmem:[%s9 + $0x48] sm:$0xff]
    %v880 = vld [vmem:[%s9 + $0x50] sm:$0xff]
    %v881 = vld [vmem:[%s9 + $0x58] sm:$0xff]
    %v882 = vld [vmem:[%s9 + $0x60] sm:$0xff]
    %v883 = vld [vmem:[%s9 + $0x68] sm:$0xff]
    %v884 = vld [vmem:[%s9 + $0x70] sm:$0xff]
    %v885 = vld [vmem:[%s9 + $0x78] sm:$0xff]
    %886 = vmatprep.subr.mxu0 0.0
    %887 = vmatpush1.msra.mxu0 %v870
    %888 = vmatprep.subr.mxu0 0.0
    %889 = vmatpush1.msra.mxu0 %v871
    %890 = vmatprep.subr.mxu0 0.0
    %891 = vmatpush1.msra.mxu0 %v872
    %892 = vmatprep.subr.mxu0 0.0
    %893 = vmatpush1.msra.mxu0 %v873
    %894 = vmatprep.subr.mxu0 0.0
    %895 = vmatpush1.msra.mxu0 %v874
    %896 = vmatprep.subr.mxu0 0.0
    %897 = vmatpush1.msra.mxu0 %v875
    %898 = vmatprep.subr.mxu0 0.0
    %899 = vmatpush1.msra.mxu0 %v876
    %900 = vmatprep.subr.mxu0 0.0
    %901 = vmatpush1.msra.mxu0 %v877
    %902 = vmatprep.subr.mxu0 0.0
    %903 = vmatpush1.msra.mxu0 %v878
    %904 = vmatprep.subr.mxu0 0.0
    %905 = vmatpush1.msra.mxu0 %v879
    %906 = vmatprep.subr.mxu0 0.0
    %907 = vmatpush1.msra.mxu0 %v880
    %908 = vmatprep.subr.mxu0 0.0
    %909 = vmatpush1.msra.mxu0 %v881
    %910 = vmatprep.subr.mxu0 0.0
    %911 = vmatpush1.msra.mxu0 %v882
    %912 = vmatprep.subr.mxu0 0.0
    %913 = vmatpush1.msra.mxu0 %v883
    %914 = vmatprep.subr.mxu0 0.0
    %915 = vmatpush1.msra.mxu0 %v884
    %916 = vmatprep.subr.mxu0 0.0
    %917 = vmatpush1.msra.mxu0 %v885
    %918 = vmatprep.subr.mxu0 0.0
    %919 = vmatpush1.msra.mxu0 0.0
    %920 = vmatprep.subr.mxu0 0.0
    %921 = vmatpush1.msra.mxu0 0.0
    %922 = vmatprep.subr.mxu0 0.0
    %923 = vmatpush1.msra.mxu0 0.0
    %924 = vmatprep.subr.mxu0 0.0
    %925 = vmatpush1.msra.mxu0 0.0
    %926 = vmatprep.subr.mxu0 0.0
    %927 = vmatpush1.msra.mxu0 0.0
    %928 = vmatprep.subr.mxu0 0.0
    %929 = vmatpush1.msra.mxu0 0.0
    %930 = vmatprep.subr.mxu0 0.0
    %931 = vmatpush1.msra.mxu0 0.0
    %932 = vmatprep.subr.mxu0 0.0
    %933 = vmatpush1.msra.mxu0 0.0
    %934 = vmatprep.subr.mxu0 0.0
    %935 = vmatpush1.msra.mxu0 0.0
    %936 = vmatprep.subr.mxu0 0.0
    %937 = vmatpush1.msra.mxu0 0.0
    %938 = vmatprep.subr.mxu0 0.0
    %939 = vmatpush1.msra.mxu0 0.0
    %940 = vmatprep.subr.mxu0 0.0
    %941 = vmatpush1.msra.mxu0 0.0
    %942 = vmatprep.subr.mxu0 0.0
    %943 = vmatpush1.msra.mxu0 0.0
    %944 = vmatprep.subr.mxu0 0.0
    %945 = vmatpush1.msra.mxu0 0.0
    %946 = vmatprep.subr.mxu0 0.0
    %947 = vmatpush1.msra.mxu0 0.0
    %948 = vmatprep.subr.mxu0 0.0
    %949 = vmatpush1.msra.mxu0 0.0
    %950 = vmatprep.mubr.f32.mxu0 0.0
    %951 = vmatmul.mubr.f32.gmra.mrb[0].mxu0 %v869
    %v952 = vpop.f32.mrb[0].mxu0
    %v953 = vadd.f32 0.0, %v952
    %v954 = vpop.f32.mrb[0].mxu0
    %955 = vdwg.mxu0
    %v956 = vadd.f32 %v767, %v953
    %v957 = vld [vmem:[#allocation11] sm:$0x1]
    %v959 = vlaneseq
    %v960 = vshrl.u32 %v959, 7
    %v961 = vsub.s32 0, %v960
    %v962 = vrot.slane %v957, %v961
    %v964 = vadd.f32 %v956, %v962
    %s965 = scalar_lea.vmem [#allocation7], 4
    %v966 = vld [vmem:[%s965] sm:$0x1]
    %s967 = scalar_lea.vmem [#allocation7], 5
    %v968 = vld [vmem:[%s967] sm:$0x1]
    %v969 = vsel %vm353, %v964, 0.0
    %970 = vadd.xlane.f32.xlu0 %v969
    %v971 = vpop.xlane.xlu0 %970
    %v972 = vmul.f32 %v971, %v357
    %v973 = vmul.f32 %v964, %v964
    %v974 = vsel %vm353, %v973, 0.0
    %975 = vadd.xlane.f32.xlu0 %v974
    %v976 = vpop.xlane.xlu0 %975
    %v977 = vmul.f32 %v976, %v357
    %v978 = vmul.f32 %v972, %v972
    %v979 = vsub.f32 %v977, %v978
    %v980 = vsub.f32 %v964, %v972
    %v981 = vadd.f32 %v979, 1e-05
    %v982 = vrsqrt.pop %v981
    %v983 = vmul.f32 %v980, %v982
    %v985 = vlaneseq
    %v986 = vshrl.u32 %v985, 7
    %v987 = vsub.s32 0, %v986
    %v988 = vrot.slane %v966, %v987
    %v990 = vmul.f32 %v983, %v988
    %v992 = vlaneseq
    %v993 = vshrl.u32 %v992, 7
    %v994 = vsub.s32 0, %v993
    %v995 = vrot.slane %v968, %v994
    %v997 = vadd.f32 %v990, %v995
    %s998 = scalar_lea.vmem %s5, 128
    %v999 = vld [vmem:[%s998] sm:$0xff]
    %v1000 = vld [vmem:[%s998 + $0x8] sm:$0xff]
    %v1001 = vld [vmem:[%s998 + $0x10] sm:$0xff]
    %v1002 = vld [vmem:[%s998 + $0x18] sm:$0xff]
    %s1003 = scalar_lea.vmem [#allocation8], 4
    %v1004 = vld [vmem:[%s1003] sm:$0x1]
    %v1006 = vlaneseq
    %v1007 = vshrl.u32 %v1006, 7
    %v1008 = vsub.s32 0, %v1007
    %v1009 = vrot.slane %v1004, %v1008
    %v1012 = vsel %vm395, %v997, 0
    %1014 = vmatprep.subr.mxu0 0.0
    %1015 = vmatpush1.msra.mxu0 %v999
    %1016 = vmatprep.subr.mxu0 0.0
    %1017 = vmatpush1.msra.mxu0 %v1000
    %1018 = vmatprep.subr.mxu0 0.0
    %1019 = vmatpush1.msra.mxu0 %v1001
    %1020 = vmatprep.subr.mxu0 0.0
    %1021 = vmatpush1.msra.mxu0 %v1002
    %1022 = vmatprep.subr.mxu0 0.0
    %1023 = vmatpush1.msra.mxu0 0.0
    %1024 = vmatprep.subr.mxu0 0.0
    %1025 = vmatpush1.msra.mxu0 0.0
    %1026 = vmatprep.subr.mxu0 0.0
    %1027 = vmatpush1.msra.mxu0 0.0
    %1028 = vmatprep.subr.mxu0 0.0
    %1029 = vmatpush1.msra.mxu0 0.0
    %1030 = vmatprep.subr.mxu0 0.0
    %1031 = vmatpush1.msra.mxu0 0.0
    %1032 = vmatprep.subr.mxu0 0.0
    %1033 = vmatpush1.msra.mxu0 0.0
    %1034 = vmatprep.subr.mxu0 0.0
    %1035 = vmatpush1.msra.mxu0 0.0
    %1036 = vmatprep.subr.mxu0 0.0
    %1037 = vmatpush1.msra.mxu0 0.0
    %1038 = vmatprep.subr.mxu0 0.0
    %1039 = vmatpush1.msra.mxu0 0.0
    %1040 = vmatprep.subr.mxu0 0.0
    %1041 = vmatpush1.msra.mxu0 0.0
    %1042 = vmatprep.subr.mxu0 0.0
    %1043 = vmatpush1.msra.mxu0 0.0
    %1044 = vmatprep.subr.mxu0 0.0
    %1045 = vmatpush1.msra.mxu0 0.0
    %1046 = vmatprep.subr.mxu0 0.0
    %1047 = vmatpush1.msra.mxu0 0.0
    %1048 = vmatprep.subr.mxu0 0.0
    %1049 = vmatpush1.msra.mxu0 0.0
    %1050 = vmatprep.subr.mxu0 0.0
    %1051 = vmatpush1.msra.mxu0 0.0
    %1052 = vmatprep.subr.mxu0 0.0
    %1053 = vmatpush1.msra.mxu0 0.0
    %1054 = vmatprep.subr.mxu0 0.0
    %1055 = vmatpush1.msra.mxu0 0.0
    %1056 = vmatprep.subr.mxu0 0.0
    %1057 = vmatpush1.msra.mxu0 0.0
    %1058 = vmatprep.subr.mxu0 0.0
    %1059 = vmatpush1.msra.mxu0 0.0
    %1060 = vmatprep.subr.mxu0 0.0
    %1061 = vmatpush1.msra.mxu0 0.0
    %1062 = vmatprep.subr.mxu0 0.0
    %1063 = vmatpush1.msra.mxu0 0.0
    %1064 = vmatprep.subr.mxu0 0.0
    %1065 = vmatpush1.msra.mxu0 0.0
    %1066 = vmatprep.subr.mxu0 0.0
    %1067 = vmatpush1.msra.mxu0 0.0
    %1068 = vmatprep.subr.mxu0 0.0
    %1069 = vmatpush1.msra.mxu0 0.0
    %1070 = vmatprep.subr.mxu0 0.0
    %1071 = vmatpush1.msra.mxu0 0.0
    %1072 = vmatprep.subr.mxu0 0.0
    %1073 = vmatpush1.msra.mxu0 0.0
    %1074 = vmatprep.subr.mxu0 0.0
    %1075 = vmatpush1.msra.mxu0 0.0
    %1076 = vmatprep.subr.mxu0 0.0
    %1077 = vmatpush1.msra.mxu0 0.0
    %1078 = vmatprep.mubr.f32.mxu0 0.0
    %1079 = vmatmul.mubr.f32.gmra.mrb[0].mxu0 %v1012
    %v1080 = vpop.f32.mrb[0].mxu0
    %v1081 = vadd.f32 %v1009, %v1080
    %v1082 = vpop.f32.mrb[0].mxu0
    %1083 = vdwg.mxu0
    %s1084 = scalar_lea.vmem %s5, 160
    %v1085 = vld [vmem:[%s1084] sm:$0xff]
    %v1086 = vld [vmem:[%s1084 + $0x8] sm:$0xff]
    %v1087 = vld [vmem:[%s1084 + $0x10] sm:$0xff]
    %v1088 = vld [vmem:[%s1084 + $0x18] sm:$0xff]
    %s1089 = scalar_lea.vmem [#allocation8], 5
    %v1090 = vld [vmem:[%s1089] sm:$0x1]
    %v1092 = vlaneseq
    %v1093 = vshrl.u32 %v1092, 7
    %v1094 = vsub.s32 0, %v1093
    %v1095 = vrot.slane %v1090, %v1094
    %v1098 = vsel %vm395, %v1081, 0
    %1100 = vmatprep.subr.mxu0 0.0
    %1101 = vmatpush1.msra.mxu0 %v1085
    %1102 = vmatprep.subr.mxu0 0.0
    %1103 = vmatpush1.msra.mxu0 %v1086
    %1104 = vmatprep.subr.mxu0 0.0
    %1105 = vmatpush1.msra.mxu0 %v1087
    %1106 = vmatprep.subr.mxu0 0.0
    %1107 = vmatpush1.msra.mxu0 %v1088
    %1108 = vmatprep.subr.mxu0 0.0
    %1109 = vmatpush1.msra.mxu0 0.0
    %1110 = vmatprep.subr.mxu0 0.0
    %1111 = vmatpush1.msra.mxu0 0.0
    %1112 = vmatprep.subr.mxu0 0.0
    %1113 = vmatpush1.msra.mxu0 0.0
    %1114 = vmatprep.subr.mxu0 0.0
    %1115 = vmatpush1.msra.mxu0 0.0
    %1116 = vmatprep.subr.mxu0 0.0
    %1117 = vmatpush1.msra.mxu0 0.0
    %1118 = vmatprep.subr.mxu0 0.0
    %1119 = vmatpush1.msra.mxu0 0.0
    %1120 = vmatprep.subr.mxu0 0.0
    %1121 = vmatpush1.msra.mxu0 0.0
    %1122 = vmatprep.subr.mxu0 0.0
    %1123 = vmatpush1.msra.mxu0 0.0
    %1124 = vmatprep.subr.mxu0 0.0
    %1125 = vmatpush1.msra.mxu0 0.0
    %1126 = vmatprep.subr.mxu0 0.0
    %1127 = vmatpush1.msra.mxu0 0.0
    %1128 = vmatprep.subr.mxu0 0.0
    %1129 = vmatpush1.msra.mxu0 0.0
    %1130 = vmatprep.subr.mxu0 0.0
    %1131 = vmatpush1.msra.mxu0 0.0
    %1132 = vmatprep.subr.mxu0 0.0
    %1133 = vmatpush1.msra.mxu0 0.0
    %1134 = vmatprep.subr.mxu0 0.0
    %1135 = vmatpush1.msra.mxu0 0.0
    %1136 = vmatprep.subr.mxu0 0.0
    %1137 = vmatpush1.msra.mxu0 0.0
    %1138 = vmatprep.subr.mxu0 0.0
    %1139 = vmatpush1.msra.mxu0 0.0
    %1140 = vmatprep.subr.mxu0 0.0
    %1141 = vmatpush1.msra.mxu0 0.0
    %1142 = vmatprep.subr.mxu0 0.0
    %1143 = vmatpush1.msra.mxu0 0.0
    %1144 = vmatprep.subr.mxu0 0.0
    %1145 = vmatpush1.msra.mxu0 0.0
    %1146 = vmatprep.subr.mxu0 0.0
    %1147 = vmatpush1.msra.mxu0 0.0
    %1148 = vmatprep.subr.mxu0 0.0
    %1149 = vmatpush1.msra.mxu0 0.0
    %1150 = vmatprep.subr.mxu0 0.0
    %1151 = vmatpush1.msra.mxu0 0.0
    %1152 = vmatprep.subr.mxu0 0.0
    %1153 = vmatpush1.msra.mxu0 0.0
    %1154 = vmatprep.subr.mxu0 0.0
    %1155 = vmatpush1.msra.mxu0 0.0
    %1156 = vmatprep.subr.mxu0 0.0
    %1157 = vmatpush1.msra.mxu0 0.0
    %1158 = vmatprep.subr.mxu0 0.0
    %1159 = vmatpush1.msra.mxu0 0.0
    %1160 = vmatprep.subr.mxu0 0.0
    %1161 = vmatpush1.msra.mxu0 0.0
    %1162 = vmatprep.subr.mxu0 0.0
    %1163 = vmatpush1.msra.mxu0 0.0
    %1164 = vmatprep.mubr.f32.mxu0 0.0
    %1165 = vmatmul.mubr.f32.gmra.mrb[0].mxu0 %v1098
    %v1166 = vpop.f32.mrb[0].mxu0
    %v1167 = vadd.f32 %v1095, %v1166
    %v1168 = vpop.f32.mrb[0].mxu0
    %1169 = vdwg.mxu0
    %s1170 = scalar_lea.vmem [#allocation7], 6
    %v1171 = vld [vmem:[%s1170] sm:$0x1]
    %s1172 = scalar_lea.vmem [#allocation7], 7
    %v1173 = vld [vmem:[%s1172] sm:$0x1]
    %v1175 = vlaneseq
    %v1176 = vshrl.u32 %v1175, 7
    %v1177 = vsub.s32 0, %v1176
    %v1178 = vrot.slane %v1171, %v1177
    %v1180 = vmul.f32 %v983, %v1178
    %v1182 = vlaneseq
    %v1183 = vshrl.u32 %v1182, 7
    %v1184 = vsub.s32 0, %v1183
    %v1185 = vrot.slane %v1173, %v1184
    %v1187 = vadd.f32 %v1180, %v1185
    %s1188 = scalar_lea.vmem %s5, 192
    %v1189 = vld [vmem:[%s1188] sm:$0xff]
    %v1190 = vld [vmem:[%s1188 + $0x8] sm:$0xff]
    %v1191 = vld [vmem:[%s1188 + $0x10] sm:$0xff]
    %v1192 = vld [vmem:[%s1188 + $0x18] sm:$0xff]
    %s1193 = scalar_lea.vmem [#allocation8], 6
    %v1194 = vld [vmem:[%s1193] sm:$0x1]
    %v1196 = vlaneseq
    %v1197 = vshrl.u32 %v1196, 7
    %v1198 = vsub.s32 0, %v1197
    %v1199 = vrot.slane %v1194, %v1198
    %v1202 = vsel %vm395, %v1187, 0
    %1204 = vmatprep.subr.mxu0 0.0
    %1205 = vmatpush1.msra.mxu0 %v1189
    %1206 = vmatprep.subr.mxu0 0.0
    %1207 = vmatpush1.msra.mxu0 %v1190
    %1208 = vmatprep.subr.mxu0 0.0
    %1209 = vmatpush1.msra.mxu0 %v1191
    %1210 = vmatprep.subr.mxu0 0.0
    %1211 = vmatpush1.msra.mxu0 %v1192
    %1212 = vmatprep.subr.mxu0 0.0
    %1213 = vmatpush1.msra.mxu0 0.0
    %1214 = vmatprep.subr.mxu0 0.0
    %1215 = vmatpush1.msra.mxu0 0.0
    %1216 = vmatprep.subr.mxu0 0.0
    %1217 = vmatpush1.msra.mxu0 0.0
    %1218 = vmatprep.subr.mxu0 0.0
    %1219 = vmatpush1.msra.mxu0 0.0
    %1220 = vmatprep.subr.mxu0 0.0
    %1221 = vmatpush1.msra.mxu0 0.0
    %1222 = vmatprep.subr.mxu0 0.0
    %1223 = vmatpush1.msra.mxu0 0.0
    %1224 = vmatprep.subr.mxu0 0.0
    %1225 = vmatpush1.msra.mxu0 0.0
    %1226 = vmatprep.subr.mxu0 0.0
    %1227 = vmatpush1.msra.mxu0 0.0
    %1228 = vmatprep.subr.mxu0 0.0
    %1229 = vmatpush1.msra.mxu0 0.0
    %1230 = vmatprep.subr.mxu0 0.0
    %1231 = vmatpush1.msra.mxu0 0.0
    %1232 = vmatprep.subr.mxu0 0.0
    %1233 = vmatpush1.msra.mxu0 0.0
    %1234 = vmatprep.subr.mxu0 0.0
    %1235 = vmatpush1.msra.mxu0 0.0
    %1236 = vmatprep.subr.mxu0 0.0
    %1237 = vmatpush1.msra.mxu0 0.0
    %1238 = vmatprep.subr.mxu0 0.0
    %1239 = vmatpush1.msra.mxu0 0.0
    %1240 = vmatprep.subr.mxu0 0.0
    %1241 = vmatpush1.msra.mxu0 0.0
    %1242 = vmatprep.subr.mxu0 0.0
    %1243 = vmatpush1.msra.mxu0 0.0
    %1244 = vmatprep.subr.mxu0 0.0
    %1245 = vmatpush1.msra.mxu0 0.0
    %1246 = vmatprep.subr.mxu0 0.0
    %1247 = vmatpush1.msra.mxu0 0.0
    %1248 = vmatprep.subr.mxu0 0.0
    %1249 = vmatpush1.msra.mxu0 0.0
    %1250 = vmatprep.subr.mxu0 0.0
    %1251 = vmatpush1.msra.mxu0 0.0
    %1252 = vmatprep.subr.mxu0 0.0
    %1253 = vmatpush1.msra.mxu0 0.0
    %1254 = vmatprep.subr.mxu0 0.0
    %1255 = vmatpush1.msra.mxu0 0.0
    %1256 = vmatprep.subr.mxu0 0.0
    %1257 = vmatpush1.msra.mxu0 0.0
    %1258 = vmatprep.subr.mxu0 0.0
    %1259 = vmatpush1.msra.mxu0 0.0
    %1260 = vmatprep.subr.mxu0 0.0
    %1261 = vmatpush1.msra.mxu0 0.0
    %1262 = vmatprep.subr.mxu0 0.0
    %1263 = vmatpush1.msra.mxu0 0.0
    %1264 = vmatprep.subr.mxu0 0.0
    %1265 = vmatpush1.msra.mxu0 0.0
    %1266 = vmatprep.subr.mxu0 0.0
    %1267 = vmatpush1.msra.mxu0 0.0
    %1268 = vmatprep.mubr.f32.mxu0 0.0
    %1269 = vmatmul.mubr.f32.gmra.mrb[0].mxu0 %v1202
    %v1270 = vpop.f32.mrb[0].mxu0
    %v1271 = vadd.f32 %v1199, %v1270
    %v1272 = vpop.f32.mrb[0].mxu0
    %1273 = vdwg.mxu0
    %s1274 = scalar_lea.vmem %s5, 224
    %v1275 = vld [vmem:[%s1274] sm:$0xff]
    %v1276 = vld [vmem:[%s1274 + $0x8] sm:$0xff]
    %v1277 = vld [vmem:[%s1274 + $0x10] sm:$0xff]
    %v1278 = vld [vmem:[%s1274 + $0x18] sm:$0xff]
    %s1279 = scalar_lea.vmem [#allocation8], 7
    %v1280 = vld [vmem:[%s1279] sm:$0x1]
    %v1282 = vlaneseq
    %v1283 = vshrl.u32 %v1282, 7
    %v1284 = vsub.s32 0, %v1283
    %v1285 = vrot.slane %v1280, %v1284
    %v1288 = vsel %vm395, %v1271, 0
    %1290 = vmatprep.subr.mxu0 0.0
    %1291 = vmatpush1.msra.mxu0 %v1275
    %1292 = vmatprep.subr.mxu0 0.0
    %1293 = vmatpush1.msra.mxu0 %v1276
    %1294 = vmatprep.subr.mxu0 0.0
    %1295 = vmatpush1.msra.mxu0 %v1277
    %1296 = vmatprep.subr.mxu0 0.0
    %1297 = vmatpush1.msra.mxu0 %v1278
    %1298 = vmatprep.subr.mxu0 0.0
    %1299 = vmatpush1.msra.mxu0 0.0
    %1300 = vmatprep.subr.mxu0 0.0
    %1301 = vmatpush1.msra.mxu0 0.0
    %1302 = vmatprep.subr.mxu0 0.0
    %1303 = vmatpush1.msra.mxu0 0.0
    %1304 = vmatprep.subr.mxu0 0.0
    %1305 = vmatpush1.msra.mxu0 0.0
    %1306 = vmatprep.subr.mxu0 0.0
    %1307 = vmatpush1.msra.mxu0 0.0
    %1308 = vmatprep.subr.mxu0 0.0
    %1309 = vmatpush1.msra.mxu0 0.0
    %1310 = vmatprep.subr.mxu0 0.0
    %1311 = vmatpush1.msra.mxu0 0.0
    %1312 = vmatprep.subr.mxu0 0.0
    %1313 = vmatpush1.msra.mxu0 0.0
    %1314 = vmatprep.subr.mxu0 0.0
    %1315 = vmatpush1.msra.mxu0 0.0
    %1316 = vmatprep.subr.mxu0 0.0
    %1317 = vmatpush1.msra.mxu0 0.0
    %1318 = vmatprep.subr.mxu0 0.0
    %1319 = vmatpush1.msra.mxu0 0.0
    %1320 = vmatprep.subr.mxu0 0.0
    %1321 = vmatpush1.msra.mxu0 0.0
    %1322 = vmatprep.subr.mxu0 0.0
    %1323 = vmatpush1.msra.mxu0 0.0
    %1324 = vmatprep.subr.mxu0 0.0
    %1325 = vmatpush1.msra.mxu0 0.0
    %1326 = vmatprep.subr.mxu0 0.0
    %1327 = vmatpush1.msra.mxu0 0.0
    %1328 = vmatprep.subr.mxu0 0.0
    %1329 = vmatpush1.msra.mxu0 0.0
    %1330 = vmatprep.subr.mxu0 0.0
    %1331 = vmatpush1.msra.mxu0 0.0
    %1332 = vmatprep.subr.mxu0 0.0
    %1333 = vmatpush1.msra.mxu0 0.0
    %1334 = vmatprep.subr.mxu0 0.0
    %1335 = vmatpush1.msra.mxu0 0.0
    %1336 = vmatprep.subr.mxu0 0.0
    %1337 = vmatpush1.msra.mxu0 0.0
    %1338 = vmatprep.subr.mxu0 0.0
    %1339 = vmatpush1.msra.mxu0 0.0
    %1340 = vmatprep.subr.mxu0 0.0
    %1341 = vmatpush1.msra.mxu0 0.0
    %1342 = vmatprep.subr.mxu0 0.0
    %1343 = vmatpush1.msra.mxu0 0.0
    %1344 = vmatprep.subr.mxu0 0.0
    %1345 = vmatpush1.msra.mxu0 0.0
    %1346 = vmatprep.subr.mxu0 0.0
    %1347 = vmatpush1.msra.mxu0 0.0
    %1348 = vmatprep.subr.mxu0 0.0
    %1349 = vmatpush1.msra.mxu0 0.0
    %1350 = vmatprep.subr.mxu0 0.0
    %1351 = vmatpush1.msra.mxu0 0.0
    %1352 = vmatprep.subr.mxu0 0.0
    %1353 = vmatpush1.msra.mxu0 0.0
    %1354 = vmatprep.mubr.f32.mxu0 0.0
    %1355 = vmatmul.mubr.f32.gmra.mrb[0].mxu0 %v1288
    %v1356 = vpop.f32.mrb[0].mxu0
    %v1357 = vadd.f32 %v1285, %v1356
    %v1358 = vpop.f32.mrb[0].mxu0
    %1359 = vdwg.mxu0
    %1360 = vset.pattern.permute.xlu0 1
    %1361 = vperm.xlu0 %1360, %v749
    %v1362 = vpop.permute.xlu0 %1361
    %v1364 = vmul.f32 %v1362, %v1167
    %v1365 = vadd.f32 %v964, %v1364
    %1366 = vset.pattern.permute.xlu0 1
    %1367 = vperm.xlu0 %1366, %v761
    %v1368 = vpop.permute.xlu0 %1367
    %v1370 = vmul.f32 %v1368, %v1357
    %v1371 = vadd.f32 %v1365, %v1370
    %v1372 = vsel %vm353, %v1371, 0.0
    %1373 = vadd.xlane.f32.xlu0 %v1372
    %v1374 = vpop.xlane.xlu0 %1373
    %v1375 = vmul.f32 %v1374, %v357
    %v1376 = vmul.f32 %v1371, %v1371
    %v1377 = vsel %vm353, %v1376, 0.0
    %1378 = vadd.xlane.f32.xlu0 %v1377
    %v1379 = vpop.xlane.xlu0 %1378
    %v1380 = vmul.f32 %v1379, %v357
    %v1381 = vmul.f32 %v1375, %v1375
    %v1382 = vsub.f32 %v1380, %v1381
    %v1383 = vsub.f32 %v1371, %v1375
    %v1384 = vadd.f32 %v1382, 1e-05
    %v1385 = vrsqrt.pop %v1384
    %v1386 = vmul.f32 %v1383, %v1385
    %v1387 = vmul.f32 %v1386, %v1178
    %v1388 = vadd.f32 %v1387, %v1185
    %s1389 = scalar_lea.vmem %s7, 32
    %v1390 = vld [vmem:[%s1389] sm:$0xff]
    %v1391 = vld [vmem:[%s1389 + $0x8] sm:$0xff]
    %v1392 = vld [vmem:[%s1389 + $0x10] sm:$0xff]
    %v1393 = vld [vmem:[%s1389 + $0x18] sm:$0xff]
    %s1394 = scalar_lea.vmem [#allocation10], 1
    %v1395 = vld [vmem:[%s1394] sm:$0x1]
    %v1397 = vlaneseq
    %v1398 = vshrl.u32 %v1397, 7
    %v1399 = vsub.s32 0, %v1398
    %v1400 = vrot.slane %v1395, %v1399
    %v1403 = vsel %vm395, %v1388, 0
    %1405 = vmatprep.subr.mxu0 0.0
    %1406 = vmatpush1.msra.mxu0 %v1390
    %1407 = vmatprep.subr.mxu0 0.0
    %1408 = vmatpush1.msra.mxu0 %v1391
    %1409 = vmatprep.subr.mxu0 0.0
    %1410 = vmatpush1.msra.mxu0 %v1392
    %1411 = vmatprep.subr.mxu0 0.0
    %1412 = vmatpush1.msra.mxu0 %v1393
    %1413 = vmatprep.subr.mxu0 0.0
    %1414 = vmatpush1.msra.mxu0 0.0
    %1415 = vmatprep.subr.mxu0 0.0
    %1416 = vmatpush1.msra.mxu0 0.0
    %1417 = vmatprep.subr.mxu0 0.0
    %1418 = vmatpush1.msra.mxu0 0.0
    %1419 = vmatprep.subr.mxu0 0.0
    %1420 = vmatpush1.msra.mxu0 0.0
    %1421 = vmatprep.subr.mxu0 0.0
    %1422 = vmatpush1.msra.mxu0 0.0
    %1423 = vmatprep.subr.mxu0 0.0
    %1424 = vmatpush1.msra.mxu0 0.0
    %1425 = vmatprep.subr.mxu0 0.0
    %1426 = vmatpush1.msra.mxu0 0.0
    %1427 = vmatprep.subr.mxu0 0.0
    %1428 = vmatpush1.msra.mxu0 0.0
    %1429 = vmatprep.subr.mxu0 0.0
    %1430 = vmatpush1.msra.mxu0 0.0
    %1431 = vmatprep.subr.mxu0 0.0
    %1432 = vmatpush1.msra.mxu0 0.0
    %1433 = vmatprep.subr.mxu0 0.0
    %1434 = vmatpush1.msra.mxu0 0.0
    %1435 = vmatprep.subr.mxu0 0.0
    %1436 = vmatpush1.msra.mxu0 0.0
    %1437 = vmatprep.subr.mxu0 0.0
    %1438 = vmatpush1.msra.mxu0 0.0
    %1439 = vmatprep.subr.mxu0 0.0
    %1440 = vmatpush1.msra.mxu0 0.0
    %1441 = vmatprep.subr.mxu0 0.0
    %1442 = vmatpush1.msra.mxu0 0.0
    %1443 = vmatprep.subr.mxu0 0.0
    %1444 = vmatpush1.msra.mxu0 0.0
    %1445 = vmatprep.subr.mxu0 0.0
    %1446 = vmatpush1.msra.mxu0 0.0
    %1447 = vmatprep.subr.mxu0 0.0
    %1448 = vmatpush1.msra.mxu0 0.0
    %1449 = vmatprep.subr.mxu0 0.0
    %1450 = vmatpush1.msra.mxu0 0.0
    %1451 = vmatprep.subr.mxu0 0.0
    %1452 = vmatpush1.msra.mxu0 0.0
    %1453 = vmatprep.subr.mxu0 0.0
    %1454 = vmatpush1.msra.mxu0 0.0
    %1455 = vmatprep.subr.mxu0 0.0
    %1456 = vmatpush1.msra.mxu0 0.0
    %1457 = vmatprep.subr.mxu0 0.0
    %1458 = vmatpush1.msra.mxu0 0.0
    %1459 = vmatprep.subr.mxu0 0.0
    %1460 = vmatpush1.msra.mxu0 0.0
    %1461 = vmatprep.subr.mxu0 0.0
    %1462 = vmatpush1.msra.mxu0 0.0
    %1463 = vmatprep.subr.mxu0 0.0
    %1464 = vmatpush1.msra.mxu0 0.0
    %1465 = vmatprep.subr.mxu0 0.0
    %1466 = vmatpush1.msra.mxu0 0.0
    %1467 = vmatprep.subr.mxu0 0.0
    %1468 = vmatpush1.msra.mxu0 0.0
    %1469 = vmatprep.mubr.f32.mxu0 0.0
    %1470 = vmatmul.mubr.f32.gmra.mrb[0].mxu0 %v1403
    %v1471 = vpop.f32.mrb[0].mxu0
    %v1472 = vadd.f32 %v1400, %v1471
    %v1473 = vpop.f32.mrb[0].mxu0
    %1474 = vdwg.mxu0
    %v1475 = vmax.f32 %v1472, 0.0
    %s1476 = scalar_lea.vmem %s9, 128
    %v1477 = vld [vmem:[%s1476] sm:$0xff]
    %v1478 = vld [vmem:[%s1476 + $0x8] sm:$0xff]
    %v1479 = vld [vmem:[%s1476 + $0x10] sm:$0xff]
    %v1480 = vld [vmem:[%s1476 + $0x18] sm:$0xff]
    %v1481 = vld [vmem:[%s1476 + $0x20] sm:$0xff]
    %v1482 = vld [vmem:[%s1476 + $0x28] sm:$0xff]
    %v1483 = vld [vmem:[%s1476 + $0x30] sm:$0xff]
    %v1484 = vld [vmem:[%s1476 + $0x38] sm:$0xff]
    %v1485 = vld [vmem:[%s1476 + $0x40] sm:$0xff]
    %v1486 = vld [vmem:[%s1476 + $0x48] sm:$0xff]
    %v1487 = vld [vmem:[%s1476 + $0x50] sm:$0xff]
    %v1488 = vld [vmem:[%s1476 + $0x58] sm:$0xff]
    %v1489 = vld [vmem:[%s1476 + $0x60] sm:$0xff]
    %v1490 = vld [vmem:[%s1476 + $0x68] sm:$0xff]
    %v1491 = vld [vmem:[%s1476 + $0x70] sm:$0xff]
    %v1492 = vld [vmem:[%s1476 + $0x78] sm:$0xff]
    %1493 = vmatprep.subr.mxu0 0.0
    %1494 = vmatpush1.msra.mxu0 %v1477
    %1495 = vmatprep.subr.mxu0 0.0
    %1496 = vmatpush1.msra.mxu0 %v1478
    %1497 = vmatprep.subr.mxu0 0.0
    %1498 = vmatpush1.msra.mxu0 %v1479
    %1499 = vmatprep.subr.mxu0 0.0
    %1500 = vmatpush1.msra.mxu0 %v1480
    %1501 = vmatprep.subr.mxu0 0.0
    %1502 = vmatpush1.msra.mxu0 %v1481
    %1503 = vmatprep.subr.mxu0 0.0
    %1504 = vmatpush1.msra.mxu0 %v1482
    %1505 = vmatprep.subr.mxu0 0.0
    %1506 = vmatpush1.msra.mxu0 %v1483
    %1507 = vmatprep.subr.mxu0 0.0
    %1508 = vmatpush1.msra.mxu0 %v1484
    %1509 = vmatprep.subr.mxu0 0.0
    %1510 = vmatpush1.msra.mxu0 %v1485
    %1511 = vmatprep.subr.mxu0 0.0
    %1512 = vmatpush1.msra.mxu0 %v1486
    %1513 = vmatprep.subr.mxu0 0.0
    %1514 = vmatpush1.msra.mxu0 %v1487
    %1515 = vmatprep.subr.mxu0 0.0
    %1516 = vmatpush1.msra.mxu0 %v1488
    %1517 = vmatprep.subr.mxu0 0.0
    %1518 = vmatpush1.msra.mxu0 %v1489
    %1519 = vmatprep.subr.mxu0 0.0
    %1520 = vmatpush1.msra.mxu0 %v1490
    %1521 = vmatprep.subr.mxu0 0.0
    %1522 = vmatpush1.msra.mxu0 %v1491
    %1523 = vmatprep.subr.mxu0 0.0
    %1524 = vmatpush1.msra.mxu0 %v1492
    %1525 = vmatprep.subr.mxu0 0.0
    %1526 = vmatpush1.msra.mxu0 0.0
    %1527 = vmatprep.subr.mxu0 0.0
    %1528 = vmatpush1.msra.mxu0 0.0
    %1529 = vmatprep.subr.mxu0 0.0
    %1530 = vmatpush1.msra.mxu0 0.0
    %1531 = vmatprep.subr.mxu0 0.0
    %1532 = vmatpush1.msra.mxu0 0.0
    %1533 = vmatprep.subr.mxu0 0.0
    %1534 = vmatpush1.msra.mxu0 0.0
    %1535 = vmatprep.subr.mxu0 0.0
    %1536 = vmatpush1.msra.mxu0 0.0
    %1537 = vmatprep.subr.mxu0 0.0
    %1538 = vmatpush1.msra.mxu0 0.0
    %1539 = vmatprep.subr.mxu0 0.0
    %1540 = vmatpush1.msra.mxu0 0.0
    %1541 = vmatprep.subr.mxu0 0.0
    %1542 = vmatpush1.msra.mxu0 0.0
    %1543 = vmatprep.subr.mxu0 0.0
    %1544 = vmatpush1.msra.mxu0 0.0
    %1545 = vmatprep.subr.mxu0 0.0
    %1546 = vmatpush1.msra.mxu0 0.0
    %1547 = vmatprep.subr.mxu0 0.0
    %1548 = vmatpush1.msra.mxu0 0.0
    %1549 = vmatprep.subr.mxu0 0.0
    %1550 = vmatpush1.msra.mxu0 0.0
    %1551 = vmatprep.subr.mxu0 0.0
    %1552 = vmatpush1.msra.mxu0 0.0
    %1553 = vmatprep.subr.mxu0 0.0
    %1554 = vmatpush1.msra.mxu0 0.0
    %1555 = vmatprep.subr.mxu0 0.0
    %1556 = vmatpush1.msra.mxu0 0.0
    %1557 = vmatprep.mubr.f32.mxu0 0.0
    %1558 = vmatmul.mubr.f32.gmra.mrb[0].mxu0 %v1475
    %v1559 = vpop.f32.mrb[0].mxu0
    %v1560 = vadd.f32 0.0, %v1559
    %v1561 = vpop.f32.mrb[0].mxu0
    %1562 = vdwg.mxu0
    %v1563 = vadd.f32 %v1371, %v1560
    %s1564 = scalar_lea.vmem [#allocation11], 1
    %v1565 = vld [vmem:[%s1564] sm:$0x1]
    %v1567 = vlaneseq
    %v1568 = vshrl.u32 %v1567, 7
    %v1569 = vsub.s32 0, %v1568
    %v1570 = vrot.slane %v1565, %v1569
    %v1572 = vadd.f32 %v1563, %v1570
    %s1573 = scalar_lea.vmem [#allocation2], 16
    %v1574 = vld [vmem:[%s1573] sm:$0xff]
    %v1575 = vld [vmem:[%s1573 + $0x8] sm:$0xff]
    %s1576 = scalar_lea.vmem [#allocation5], 1
    %v1577 = vld [vmem:[%s1576] sm:$0x1]
    %v1579 = vlaneseq
    %v1580 = vshrl.u32 %v1579, 7
    %v1581 = vsub.s32 0, %v1580
    %v1582 = vrot.slane %v1577, %v1581
    %v1585 = vsel %vm276, %v265, 0
    %1587 = vmatprep.subr.mxu0 0.0
    %1588 = vmatpush1.msra.mxu0 %v1574
    %1589 = vmatprep.subr.mxu0 0.0
    %1590 = vmatpush1.msra.mxu0 %v1575
    %1591 = vmatprep.subr.mxu0 0.0
    %1592 = vmatpush1.msra.mxu0 0.0
    %1593 = vmatprep.subr.mxu0 0.0
    %1594 = vmatpush1.msra.mxu0 0.0
    %1595 = vmatprep.subr.mxu0 0.0
    %1596 = vmatpush1.msra.mxu0 0.0
    %1597 = vmatprep.subr.mxu0 0.0
    %1598 = vmatpush1.msra.mxu0 0.0
    %1599 = vmatprep.subr.mxu0 0.0
    %1600 = vmatpush1.msra.mxu0 0.0
    %1601 = vmatprep.subr.mxu0 0.0
    %1602 = vmatpush1.msra.mxu0 0.0
    %1603 = vmatprep.subr.mxu0 0.0
    %1604 = vmatpush1.msra.mxu0 0.0
    %1605 = vmatprep.subr.mxu0 0.0
    %1606 = vmatpush1.msra.mxu0 0.0
    %1607 = vmatprep.subr.mxu0 0.0
    %1608 = vmatpush1.msra.mxu0 0.0
    %1609 = vmatprep.subr.mxu0 0.0
    %1610 = vmatpush1.msra.mxu0 0.0
    %1611 = vmatprep.subr.mxu0 0.0
    %1612 = vmatpush1.msra.mxu0 0.0
    %1613 = vmatprep.subr.mxu0 0.0
    %1614 = vmatpush1.msra.mxu0 0.0
    %1615 = vmatprep.subr.mxu0 0.0
    %1616 = vmatpush1.msra.mxu0 0.0
    %1617 = vmatprep.subr.mxu0 0.0
    %1618 = vmatpush1.msra.mxu0 0.0
    %1619 = vmatprep.subr.mxu0 0.0
    %1620 = vmatpush1.msra.mxu0 0.0
    %1621 = vmatprep.subr.mxu0 0.0
    %1622 = vmatpush1.msra.mxu0 0.0
    %1623 = vmatprep.subr.mxu0 0.0
    %1624 = vmatpush1.msra.mxu0 0.0
    %1625 = vmatprep.subr.mxu0 0.0
    %1626 = vmatpush1.msra.mxu0 0.0
    %1627 = vmatprep.subr.mxu0 0.0
    %1628 = vmatpush1.msra.mxu0 0.0
    %1629 = vmatprep.subr.mxu0 0.0
    %1630 = vmatpush1.msra.mxu0 0.0
    %1631 = vmatprep.subr.mxu0 0.0
    %1632 = vmatpush1.msra.mxu0 0.0
    %1633 = vmatprep.subr.mxu0 0.0
    %1634 = vmatpush1.msra.mxu0 0.0
    %1635 = vmatprep.subr.mxu0 0.0
    %1636 = vmatpush1.msra.mxu0 0.0
    %1637 = vmatprep.subr.mxu0 0.0
    %1638 = vmatpush1.msra.mxu0 0.0
    %1639 = vmatprep.subr.mxu0 0.0
    %1640 = vmatpush1.msra.mxu0 0.0
    %1641 = vmatprep.subr.mxu0 0.0
    %1642 = vmatpush1.msra.mxu0 0.0
    %1643 = vmatprep.subr.mxu0 0.0
    %1644 = vmatpush1.msra.mxu0 0.0
    %1645 = vmatprep.subr.mxu0 0.0
    %1646 = vmatpush1.msra.mxu0 0.0
    %1647 = vmatprep.subr.mxu0 0.0
    %1648 = vmatpush1.msra.mxu0 0.0
    %1649 = vmatprep.subr.mxu0 0.0
    %1650 = vmatpush1.msra.mxu0 0.0
    %1651 = vmatprep.mubr.f32.mxu0 0.0
    %1652 = vmatmul.mubr.f32.gmra.mrb[0].mxu0 %v1585
    %v1653 = vpop.f32.mrb[0].mxu0
    %v1654 = vadd.f32 %v1582, %v1653
    %v1655 = vpop.f32.mrb[0].mxu0
    %1656 = vdwg.mxu0
    %s1657 = scalar_lea.vmem [#allocation7], 8
    %v1658 = vld [vmem:[%s1657] sm:$0x1]
    %s1659 = scalar_lea.vmem [#allocation7], 9
    %v1660 = vld [vmem:[%s1659] sm:$0x1]
    %v1661 = vsel %vm353, %v1654, 0.0
    %1662 = vadd.xlane.f32.xlu0 %v1661
    %v1663 = vpop.xlane.xlu0 %1662
    %v1664 = vmul.f32 %v1663, %v357
    %v1665 = vmul.f32 %v1654, %v1654
    %v1666 = vsel %vm353, %v1665, 0.0
    %1667 = vadd.xlane.f32.xlu0 %v1666
    %v1668 = vpop.xlane.xlu0 %1667
    %v1669 = vmul.f32 %v1668, %v357
    %v1670 = vmul.f32 %v1664, %v1664
    %v1671 = vsub.f32 %v1669, %v1670
    %v1672 = vsub.f32 %v1654, %v1664
    %v1673 = vadd.f32 %v1671, 1e-05
    %v1674 = vrsqrt.pop %v1673
    %v1675 = vmul.f32 %v1672, %v1674
    %v1677 = vlaneseq
    %v1678 = vshrl.u32 %v1677, 7
    %v1679 = vsub.s32 0, %v1678
    %v1680 = vrot.slane %v1658, %v1679
    %v1682 = vmul.f32 %v1675, %v1680
    %v1684 = vlaneseq
    %v1685 = vshrl.u32 %v1684, 7
    %v1686 = vsub.s32 0, %v1685
    %v1687 = vrot.slane %v1660, %v1686
    %v1689 = vadd.f32 %v1682, %v1687
    %s1690 = scalar_lea.vmem %s5, 256
    %v1691 = vld [vmem:[%s1690] sm:$0xff]
    %v1692 = vld [vmem:[%s1690 + $0x8] sm:$0xff]
    %v1693 = vld [vmem:[%s1690 + $0x10] sm:$0xff]
    %v1694 = vld [vmem:[%s1690 + $0x18] sm:$0xff]
    %s1695 = scalar_lea.vmem [#allocation8], 8
    %v1696 = vld [vmem:[%s1695] sm:$0x1]
    %v1698 = vlaneseq
    %v1699 = vshrl.u32 %v1698, 7
    %v1700 = vsub.s32 0, %v1699
    %v1701 = vrot.slane %v1696, %v1700
    %v1704 = vsel %vm395, %v1689, 0
    %1706 = vmatprep.subr.mxu0 0.0
    %1707 = vmatpush1.msra.mxu0 %v1691
    %1708 = vmatprep.subr.mxu0 0.0
    %1709 = vmatpush1.msra.mxu0 %v1692
    %1710 = vmatprep.subr.mxu0 0.0
    %1711 = vmatpush1.msra.mxu0 %v1693
    %1712 = vmatprep.subr.mxu0 0.0
    %1713 = vmatpush1.msra.mxu0 %v1694
    %1714 = vmatprep.subr.mxu0 0.0
    %1715 = vmatpush1.msra.mxu0 0.0
    %1716 = vmatprep.subr.mxu0 0.0
    %1717 = vmatpush1.msra.mxu0 0.0
    %1718 = vmatprep.subr.mxu0 0.0
    %1719 = vmatpush1.msra.mxu0 0.0
    %1720 = vmatprep.subr.mxu0 0.0
    %1721 = vmatpush1.msra.mxu0 0.0
    %1722 = vmatprep.subr.mxu0 0.0
    %1723 = vmatpush1.msra.mxu0 0.0
    %1724 = vmatprep.subr.mxu0 0.0
    %1725 = vmatpush1.msra.mxu0 0.0
    %1726 = vmatprep.subr.mxu0 0.0
    %1727 = vmatpush1.msra.mxu0 0.0
    %1728 = vmatprep.subr.mxu0 0.0
    %1729 = vmatpush1.msra.mxu0 0.0
    %1730 = vmatprep.subr.mxu0 0.0
    %1731 = vmatpush1.msra.mxu0 0.0
    %1732 = vmatprep.subr.mxu0 0.0
    %1733 = vmatpush1.msra.mxu0 0.0
    %1734 = vmatprep.subr.mxu0 0.0
    %1735 = vmatpush1.msra.mxu0 0.0
    %1736 = vmatprep.subr.mxu0 0.0
    %1737 = vmatpush1.msra.mxu0 0.0
    %1738 = vmatprep.subr.mxu0 0.0
    %1739 = vmatpush1.msra.mxu0 0.0
    %1740 = vmatprep.subr.mxu0 0.0
    %1741 = vmatpush1.msra.mxu0 0.0
    %1742 = vmatprep.subr.mxu0 0.0
    %1743 = vmatpush1.msra.mxu0 0.0
    %1744 = vmatprep.subr.mxu0 0.0
    %1745 = vmatpush1.msra.mxu0 0.0
    %1746 = vmatprep.subr.mxu0 0.0
    %1747 = vmatpush1.msra.mxu0 0.0
    %1748 = vmatprep.subr.mxu0 0.0
    %1749 = vmatpush1.msra.mxu0 0.0
    %1750 = vmatprep.subr.mxu0 0.0
    %1751 = vmatpush1.msra.mxu0 0.0
    %1752 = vmatprep.subr.mxu0 0.0
    %1753 = vmatpush1.msra.mxu0 0.0
    %1754 = vmatprep.subr.mxu0 0.0
    %1755 = vmatpush1.msra.mxu0 0.0
    %1756 = vmatprep.subr.mxu0 0.0
    %1757 = vmatpush1.msra.mxu0 0.0
    %1758 = vmatprep.subr.mxu0 0.0
    %1759 = vmatpush1.msra.mxu0 0.0
    %1760 = vmatprep.subr.mxu0 0.0
    %1761 = vmatpush1.msra.mxu0 0.0
    %1762 = vmatprep.subr.mxu0 0.0
    %1763 = vmatpush1.msra.mxu0 0.0
    %1764 = vmatprep.subr.mxu0 0.0
    %1765 = vmatpush1.msra.mxu0 0.0
    %1766 = vmatprep.subr.mxu0 0.0
    %1767 = vmatpush1.msra.mxu0 0.0
    %1768 = vmatprep.subr.mxu0 0.0
    %1769 = vmatpush1.msra.mxu0 0.0
    %1770 = vmatprep.mubr.f32.mxu0 0.0
    %1771 = vmatmul.mubr.f32.gmra.mrb[0].mxu0 %v1704
    %v1772 = vpop.f32.mrb[0].mxu0
    %v1773 = vadd.f32 %v1701, %v1772
    %v1774 = vpop.f32.mrb[0].mxu0
    %1775 = vdwg.mxu0
    %s1776 = scalar_lea.vmem %s5, 288
    %v1777 = vld [vmem:[%s1776] sm:$0xff]
    %v1778 = vld [vmem:[%s1776 + $0x8] sm:$0xff]
    %v1779 = vld [vmem:[%s1776 + $0x10] sm:$0xff]
    %v1780 = vld [vmem:[%s1776 + $0x18] sm:$0xff]
    %s1781 = scalar_lea.vmem [#allocation8], 9
    %v1782 = vld [vmem:[%s1781] sm:$0x1]
    %v1784 = vlaneseq
    %v1785 = vshrl.u32 %v1784, 7
    %v1786 = vsub.s32 0, %v1785
    %v1787 = vrot.slane %v1782, %v1786
    %v1790 = vsel %vm395, %v1773, 0
    %1792 = vmatprep.subr.mxu0 0.0
    %1793 = vmatpush1.msra.mxu0 %v1777
    %1794 = vmatprep.subr.mxu0 0.0
    %1795 = vmatpush1.msra.mxu0 %v1778
    %1796 = vmatprep.subr.mxu0 0.0
    %1797 = vmatpush1.msra.mxu0 %v1779
    %1798 = vmatprep.subr.mxu0 0.0
    %1799 = vmatpush1.msra.mxu0 %v1780
    %1800 = vmatprep.subr.mxu0 0.0
    %1801 = vmatpush1.msra.mxu0 0.0
    %1802 = vmatprep.subr.mxu0 0.0
    %1803 = vmatpush1.msra.mxu0 0.0
    %1804 = vmatprep.subr.mxu0 0.0
    %1805 = vmatpush1.msra.mxu0 0.0
    %1806 = vmatprep.subr.mxu0 0.0
    %1807 = vmatpush1.msra.mxu0 0.0
    %1808 = vmatprep.subr.mxu0 0.0
    %1809 = vmatpush1.msra.mxu0 0.0
    %1810 = vmatprep.subr.mxu0 0.0
    %1811 = vmatpush1.msra.mxu0 0.0
    %1812 = vmatprep.subr.mxu0 0.0
    %1813 = vmatpush1.msra.mxu0 0.0
    %1814 = vmatprep.subr.mxu0 0.0
    %1815 = vmatpush1.msra.mxu0 0.0
    %1816 = vmatprep.subr.mxu0 0.0
    %1817 = vmatpush1.msra.mxu0 0.0
    %1818 = vmatprep.subr.mxu0 0.0
    %1819 = vmatpush1.msra.mxu0 0.0
    %1820 = vmatprep.subr.mxu0 0.0
    %1821 = vmatpush1.msra.mxu0 0.0
    %1822 = vmatprep.subr.mxu0 0.0
    %1823 = vmatpush1.msra.mxu0 0.0
    %1824 = vmatprep.subr.mxu0 0.0
    %1825 = vmatpush1.msra.mxu0 0.0
    %1826 = vmatprep.subr.mxu0 0.0
    %1827 = vmatpush1.msra.mxu0 0.0
    %1828 = vmatprep.subr.mxu0 0.0
    %1829 = vmatpush1.msra.mxu0 0.0
    %1830 = vmatprep.subr.mxu0 0.0
    %1831 = vmatpush1.msra.mxu0 0.0
    %1832 = vmatprep.subr.mxu0 0.0
    %1833 = vmatpush1.msra.mxu0 0.0
    %1834 = vmatprep.subr.mxu0 0.0
    %1835 = vmatpush1.msra.mxu0 0.0
    %1836 = vmatprep.subr.mxu0 0.0
    %1837 = vmatpush1.msra.mxu0 0.0
    %1838 = vmatprep.subr.mxu0 0.0
    %1839 = vmatpush1.msra.mxu0 0.0
    %1840 = vmatprep.subr.mxu0 0.0
    %1841 = vmatpush1.msra.mxu0 0.0
    %1842 = vmatprep.subr.mxu0 0.0
    %1843 = vmatpush1.msra.mxu0 0.0
    %1844 = vmatprep.subr.mxu0 0.0
    %1845 = vmatpush1.msra.mxu0 0.0
    %1846 = vmatprep.subr.mxu0 0.0
    %1847 = vmatpush1.msra.mxu0 0.0
    %1848 = vmatprep.subr.mxu0 0.0
    %1849 = vmatpush1.msra.mxu0 0.0
    %1850 = vmatprep.subr.mxu0 0.0
    %1851 = vmatpush1.msra.mxu0 0.0
    %1852 = vmatprep.subr.mxu0 0.0
    %1853 = vmatpush1.msra.mxu0 0.0
    %1854 = vmatprep.subr.mxu0 0.0
    %1855 = vmatpush1.msra.mxu0 0.0
    %1856 = vmatprep.mubr.f32.mxu0 0.0
    %1857 = vmatmul.mubr.f32.gmra.mrb[0].mxu0 %v1790
    %v1858 = vpop.f32.mrb[0].mxu0
    %v1859 = vadd.f32 %v1787, %v1858
    %v1860 = vpop.f32.mrb[0].mxu0
    %1861 = vdwg.mxu0
    %s1862 = scalar_lea.vmem [#allocation7], 10
    %v1863 = vld [vmem:[%s1862] sm:$0x1]
    %s1864 = scalar_lea.vmem [#allocation7], 11
    %v1865 = vld [vmem:[%s1864] sm:$0x1]
    %v1867 = vlaneseq
    %v1868 = vshrl.u32 %v1867, 7
    %v1869 = vsub.s32 0, %v1868
    %v1870 = vrot.slane %v1863, %v1869
    %v1872 = vmul.f32 %v1675, %v1870
    %v1874 = vlaneseq
    %v1875 = vshrl.u32 %v1874, 7
    %v1876 = vsub.s32 0, %v1875
    %v1877 = vrot.slane %v1865, %v1876
    %v1879 = vadd.f32 %v1872, %v1877
    %s1880 = scalar_lea.vmem %s5, 320
    %v1881 = vld [vmem:[%s1880] sm:$0xff]
    %v1882 = vld [vmem:[%s1880 + $0x8] sm:$0xff]
    %v1883 = vld [vmem:[%s1880 + $0x10] sm:$0xff]
    %v1884 = vld [vmem:[%s1880 + $0x18] sm:$0xff]
    %s1885 = scalar_lea.vmem [#allocation8], 10
    %v1886 = vld [vmem:[%s1885] sm:$0x1]
    %v1888 = vlaneseq
    %v1889 = vshrl.u32 %v1888, 7
    %v1890 = vsub.s32 0, %v1889
    %v1891 = vrot.slane %v1886, %v1890
    %v1894 = vsel %vm395, %v1879, 0
    %1896 = vmatprep.subr.mxu0 0.0
    %1897 = vmatpush1.msra.mxu0 %v1881
    %1898 = vmatprep.subr.mxu0 0.0
    %1899 = vmatpush1.msra.mxu0 %v1882
    %1900 = vmatprep.subr.mxu0 0.0
    %1901 = vmatpush1.msra.mxu0 %v1883
    %1902 = vmatprep.subr.mxu0 0.0
    %1903 = vmatpush1.msra.mxu0 %v1884
    %1904 = vmatprep.subr.mxu0 0.0
    %1905 = vmatpush1.msra.mxu0 0.0
    %1906 = vmatprep.subr.mxu0 0.0
    %1907 = vmatpush1.msra.mxu0 0.0
    %1908 = vmatprep.subr.mxu0 0.0
    %1909 = vmatpush1.msra.mxu0 0.0
    %1910 = vmatprep.subr.mxu0 0.0
    %1911 = vmatpush1.msra.mxu0 0.0
    %1912 = vmatprep.subr.mxu0 0.0
    %1913 = vmatpush1.msra.mxu0 0.0
    %1914 = vmatprep.subr.mxu0 0.0
    %1915 = vmatpush1.msra.mxu0 0.0
    %1916 = vmatprep.subr.mxu0 0.0
    %1917 = vmatpush1.msra.mxu0 0.0
    %1918 = vmatprep.subr.mxu0 0.0
    %1919 = vmatpush1.msra.mxu0 0.0
    %1920 = vmatprep.subr.mxu0 0.0
    %1921 = vmatpush1.msra.mxu0 0.0
    %1922 = vmatprep.subr.mxu0 0.0
    %1923 = vmatpush1.msra.mxu0 0.0
    %1924 = vmatprep.subr.mxu0 0.0
    %1925 = vmatpush1.msra.mxu0 0.0
    %1926 = vmatprep.subr.mxu0 0.0
    %1927 = vmatpush1.msra.mxu0 0.0
    %1928 = vmatprep.subr.mxu0 0.0
    %1929 = vmatpush1.msra.mxu0 0.0
    %1930 = vmatprep.subr.mxu0 0.0
    %1931 = vmatpush1.msra.mxu0 0.0
    %1932 = vmatprep.subr.mxu0 0.0
    %1933 = vmatpush1.msra.mxu0 0.0
    %1934 = vmatprep.subr.mxu0 0.0
    %1935 = vmatpush1.msra.mxu0 0.0
    %1936 = vmatprep.subr.mxu0 0.0
    %1937 = vmatpush1.msra.mxu0 0.0
    %1938 = vmatprep.subr.mxu0 0.0
    %1939 = vmatpush1.msra.mxu0 0.0
    %1940 = vmatprep.subr.mxu0 0.0
    %1941 = vmatpush1.msra.mxu0 0.0
    %1942 = vmatprep.subr.mxu0 0.0
    %1943 = vmatpush1.msra.mxu0 0.0
    %1944 = vmatprep.subr.mxu0 0.0
    %1945 = vmatpush1.msra.mxu0 0.0
    %1946 = vmatprep.subr.mxu0 0.0
    %1947 = vmatpush1.msra.mxu0 0.0
    %1948 = vmatprep.subr.mxu0 0.0
    %1949 = vmatpush1.msra.mxu0 0.0
    %1950 = vmatprep.subr.mxu0 0.0
    %1951 = vmatpush1.msra.mxu0 0.0
    %1952 = vmatprep.subr.mxu0 0.0
    %1953 = vmatpush1.msra.mxu0 0.0
    %1954 = vmatprep.subr.mxu0 0.0
    %1955 = vmatpush1.msra.mxu0 0.0
    %1956 = vmatprep.subr.mxu0 0.0
    %1957 = vmatpush1.msra.mxu0 0.0
    %1958 = vmatprep.subr.mxu0 0.0
    %1959 = vmatpush1.msra.mxu0 0.0
    %1960 = vmatprep.mubr.f32.mxu0 0.0
    %1961 = vmatmul.mubr.f32.gmra.mrb[0].mxu0 %v1894
    %v1962 = vpop.f32.mrb[0].mxu0
    %v1963 = vadd.f32 %v1891, %v1962
    %v1964 = vpop.f32.mrb[0].mxu0
    %1965 = vdwg.mxu0
    %s1966 = scalar_lea.vmem %s5, 352
    %v1967 = vld [vmem:[%s1966] sm:$0xff]
    %v1968 = vld [vmem:[%s1966 + $0x8] sm:$0xff]
    %v1969 = vld [vmem:[%s1966 + $0x10] sm:$0xff]
    %v1970 = vld [vmem:[%s1966 + $0x18] sm:$0xff]
    %s1971 = scalar_lea.vmem [#allocation8], 11
    %v1972 = vld [vmem:[%s1971] sm:$0x1]
    %v1974 = vlaneseq
    %v1975 = vshrl.u32 %v1974, 7
    %v1976 = vsub.s32 0, %v1975
    %v1977 = vrot.slane %v1972, %v1976
    %v1980 = vsel %vm395, %v1963, 0
    %1982 = vmatprep.subr.mxu0 0.0
    %1983 = vmatpush1.msra.mxu0 %v1967
    %1984 = vmatprep.subr.mxu0 0.0
    %1985 = vmatpush1.msra.mxu0 %v1968
    %1986 = vmatprep.subr.mxu0 0.0
    %1987 = vmatpush1.msra.mxu0 %v1969
    %1988 = vmatprep.subr.mxu0 0.0
    %1989 = vmatpush1.msra.mxu0 %v1970
    %1990 = vmatprep.subr.mxu0 0.0
    %1991 = vmatpush1.msra.mxu0 0.0
    %1992 = vmatprep.subr.mxu0 0.0
    %1993 = vmatpush1.msra.mxu0 0.0
    %1994 = vmatprep.subr.mxu0 0.0
    %1995 = vmatpush1.msra.mxu0 0.0
    %1996 = vmatprep.subr.mxu0 0.0
    %1997 = vmatpush1.msra.mxu0 0.0
    %1998 = vmatprep.subr.mxu0 0.0
    %1999 = vmatpush1.msra.mxu0 0.0
    %2000 = vmatprep.subr.mxu0 0.0
    %2001 = vmatpush1.msra.mxu0 0.0
    %2002 = vmatprep.subr.mxu0 0.0
    %2003 = vmatpush1.msra.mxu0 0.0
    %2004 = vmatprep.subr.mxu0 0.0
    %2005 = vmatpush1.msra.mxu0 0.0
    %2006 = vmatprep.subr.mxu0 0.0
    %2007 = vmatpush1.msra.mxu0 0.0
    %2008 = vmatprep.subr.mxu0 0.0
    %2009 = vmatpush1.msra.mxu0 0.0
    %2010 = vmatprep.subr.mxu0 0.0
    %2011 = vmatpush1.msra.mxu0 0.0
    %2012 = vmatprep.subr.mxu0 0.0
    %2013 = vmatpush1.msra.mxu0 0.0
    %2014 = vmatprep.subr.mxu0 0.0
    %2015 = vmatpush1.msra.mxu0 0.0
    %2016 = vmatprep.subr.mxu0 0.0
    %2017 = vmatpush1.msra.mxu0 0.0
    %2018 = vmatprep.subr.mxu0 0.0
    %2019 = vmatpush1.msra.mxu0 0.0
    %2020 = vmatprep.subr.mxu0 0.0
    %2021 = vmatpush1.msra.mxu0 0.0
    %2022 = vmatprep.subr.mxu0 0.0
    %2023 = vmatpush1.msra.mxu0 0.0
    %2024 = vmatprep.subr.mxu0 0.0
    %2025 = vmatpush1.msra.mxu0 0.0
    %2026 = vmatprep.subr.mxu0 0.0
    %2027 = vmatpush1.msra.mxu0 0.0
    %2028 = vmatprep.subr.mxu0 0.0
    %2029 = vmatpush1.msra.mxu0 0.0
    %2030 = vmatprep.subr.mxu0 0.0
    %2031 = vmatpush1.msra.mxu0 0.0
    %2032 = vmatprep.subr.mxu0 0.0
    %2033 = vmatpush1.msra.mxu0 0.0
    %2034 = vmatprep.subr.mxu0 0.0
    %2035 = vmatpush1.msra.mxu0 0.0
    %2036 = vmatprep.subr.mxu0 0.0
    %2037 = vmatpush1.msra.mxu0 0.0
    %2038 = vmatprep.subr.mxu0 0.0
    %2039 = vmatpush1.msra.mxu0 0.0
    %2040 = vmatprep.subr.mxu0 0.0
    %2041 = vmatpush1.msra.mxu0 0.0
    %2042 = vmatprep.subr.mxu0 0.0
    %2043 = vmatpush1.msra.mxu0 0.0
    %2044 = vmatprep.subr.mxu0 0.0
    %2045 = vmatpush1.msra.mxu0 0.0
    %2046 = vmatprep.mubr.f32.mxu0 0.0
    %2047 = vmatmul.mubr.f32.gmra.mrb[0].mxu0 %v1980
    %v2048 = vpop.f32.mrb[0].mxu0
    %v2049 = vadd.f32 %v1977, %v2048
    %v2050 = vpop.f32.mrb[0].mxu0
    %2051 = vdwg.mxu0
    %2052 = vset.pattern.permute.xlu0 2
    %2053 = vperm.xlu0 %2052, %v749
    %v2054 = vpop.permute.xlu0 %2053
    %v2056 = vmul.f32 %v2054, %v1859
    %v2057 = vadd.f32 %v1654, %v2056
    %2058 = vset.pattern.permute.xlu0 2
    %2059 = vperm.xlu0 %2058, %v761
    %v2060 = vpop.permute.xlu0 %2059
    %v2062 = vmul.f32 %v2060, %v2049
    %v2063 = vadd.f32 %v2057, %v2062
    %v2064 = vsel %vm353, %v2063, 0.0
    %2065 = vadd.xlane.f32.xlu0 %v2064
    %v2066 = vpop.xlane.xlu0 %2065
    %v2067 = vmul.f32 %v2066, %v357
    %v2068 = vmul.f32 %v2063, %v2063
    %v2069 = vsel %vm353, %v2068, 0.0
    %2070 = vadd.xlane.f32.xlu0 %v2069
    %v2071 = vpop.xlane.xlu0 %2070
    %v2072 = vmul.f32 %v2071, %v357
    %v2073 = vmul.f32 %v2067, %v2067
    %v2074 = vsub.f32 %v2072, %v2073
    %v2075 = vsub.f32 %v2063, %v2067
    %v2076 = vadd.f32 %v2074, 1e-05
    %v2077 = vrsqrt.pop %v2076
    %v2078 = vmul.f32 %v2075, %v2077
    %v2079 = vmul.f32 %v2078, %v1870
    %v2080 = vadd.f32 %v2079, %v1877
    %s2081 = scalar_lea.vmem %s7, 64
    %v2082 = vld [vmem:[%s2081] sm:$0xff]
    %v2083 = vld [vmem:[%s2081 + $0x8] sm:$0xff]
    %v2084 = vld [vmem:[%s2081 + $0x10] sm:$0xff]
    %v2085 = vld [vmem:[%s2081 + $0x18] sm:$0xff]
    %s2086 = scalar_lea.vmem [#allocation10], 2
    %v2087 = vld [vmem:[%s2086] sm:$0x1]
    %v2089 = vlaneseq
    %v2090 = vshrl.u32 %v2089, 7
    %v2091 = vsub.s32 0, %v2090
    %v2092 = vrot.slane %v2087, %v2091
    %v2095 = vsel %vm395, %v2080, 0
    %2097 = vmatprep.subr.mxu0 0.0
    %2098 = vmatpush1.msra.mxu0 %v2082
    %2099 = vmatprep.subr.mxu0 0.0
    %2100 = vmatpush1.msra.mxu0 %v2083
    %2101 = vmatprep.subr.mxu0 0.0
    %2102 = vmatpush1.msra.mxu0 %v2084
    %2103 = vmatprep.subr.mxu0 0.0
    %2104 = vmatpush1.msra.mxu0 %v2085
    %2105 = vmatprep.subr.mxu0 0.0
    %2106 = vmatpush1.msra.mxu0 0.0
    %2107 = vmatprep.subr.mxu0 0.0
    %2108 = vmatpush1.msra.mxu0 0.0
    %2109 = vmatprep.subr.mxu0 0.0
    %2110 = vmatpush1.msra.mxu0 0.0
    %2111 = vmatprep.subr.mxu0 0.0
    %2112 = vmatpush1.msra.mxu0 0.0
    %2113 = vmatprep.subr.mxu0 0.0
    %2114 = vmatpush1.msra.mxu0 0.0
    %2115 = vmatprep.subr.mxu0 0.0
    %2116 = vmatpush1.msra.mxu0 0.0
    %2117 = vmatprep.subr.mxu0 0.0
    %2118 = vmatpush1.msra.mxu0 0.0
    %2119 = vmatprep.subr.mxu0 0.0
    %2120 = vmatpush1.msra.mxu0 0.0
    %2121 = vmatprep.subr.mxu0 0.0
    %2122 = vmatpush1.msra.mxu0 0.0
    %2123 = vmatprep.subr.mxu0 0.0
    %2124 = vmatpush1.msra.mxu0 0.0
    %2125 = vmatprep.subr.mxu0 0.0
    %2126 = vmatpush1.msra.mxu0 0.0
    %2127 = vmatprep.subr.mxu0 0.0
    %2128 = vmatpush1.msra.mxu0 0.0
    %2129 = vmatprep.subr.mxu0 0.0
    %2130 = vmatpush1.msra.mxu0 0.0
    %2131 = vmatprep.subr.mxu0 0.0
    %2132 = vmatpush1.msra.mxu0 0.0
    %2133 = vmatprep.subr.mxu0 0.0
    %2134 = vmatpush1.msra.mxu0 0.0
    %2135 = vmatprep.subr.mxu0 0.0
    %2136 = vmatpush1.msra.mxu0 0.0
    %2137 = vmatprep.subr.mxu0 0.0
    %2138 = vmatpush1.msra.mxu0 0.0
    %2139 = vmatprep.subr.mxu0 0.0
    %2140 = vmatpush1.msra.mxu0 0.0
    %2141 = vmatprep.subr.mxu0 0.0
    %2142 = vmatpush1.msra.mxu0 0.0
    %2143 = vmatprep.subr.mxu0 0.0
    %2144 = vmatpush1.msra.mxu0 0.0
    %2145 = vmatprep.subr.mxu0 0.0
    %2146 = vmatpush1.msra.mxu0 0.0
    %2147 = vmatprep.subr.mxu0 0.0
    %2148 = vmatpush1.msra.mxu0 0.0
    %2149 = vmatprep.subr.mxu0 0.0
    %2150 = vmatpush1.msra.mxu0 0.0
    %2151 = vmatprep.subr.mxu0 0.0
    %2152 = vmatpush1.msra.mxu0 0.0
    %2153 = vmatprep.subr.mxu0 0.0
    %2154 = vmatpush1.msra.mxu0 0.0
    %2155 = vmatprep.subr.mxu0 0.0
    %2156 = vmatpush1.msra.mxu0 0.0
    %2157 = vmatprep.subr.mxu0 0.0
    %2158 = vmatpush1.msra.mxu0 0.0
    %2159 = vmatprep.subr.mxu0 0.0
    %2160 = vmatpush1.msra.mxu0 0.0
    %2161 = vmatprep.mubr.f32.mxu0 0.0
    %2162 = vmatmul.mubr.f32.gmra.mrb[0].mxu0 %v2095
    %v2163 = vpop.f32.mrb[0].mxu0
    %v2164 = vadd.f32 %v2092, %v2163
    %v2165 = vpop.f32.mrb[0].mxu0
    %2166 = vdwg.mxu0
    %v2167 = vmax.f32 %v2164, 0.0
    %s2168 = scalar_lea.vmem %s9, 256
    %v2169 = vld [vmem:[%s2168] sm:$0xff]
    %v2170 = vld [vmem:[%s2168 + $0x8] sm:$0xff]
    %v2171 = vld [vmem:[%s2168 + $0x10] sm:$0xff]
    %v2172 = vld [vmem:[%s2168 + $0x18] sm:$0xff]
    %v2173 = vld [vmem:[%s2168 + $0x20] sm:$0xff]
    %v2174 = vld [vmem:[%s2168 + $0x28] sm:$0xff]
    %v2175 = vld [vmem:[%s2168 + $0x30] sm:$0xff]
    %v2176 = vld [vmem:[%s2168 + $0x38] sm:$0xff]
    %v2177 = vld [vmem:[%s2168 + $0x40] sm:$0xff]
    %v2178 = vld [vmem:[%s2168 + $0x48] sm:$0xff]
    %v2179 = vld [vmem:[%s2168 + $0x50] sm:$0xff]
    %v2180 = vld [vmem:[%s2168 + $0x58] sm:$0xff]
    %v2181 = vld [vmem:[%s2168 + $0x60] sm:$0xff]
    %v2182 = vld [vmem:[%s2168 + $0x68] sm:$0xff]
    %v2183 = vld [vmem:[%s2168 + $0x70] sm:$0xff]
    %v2184 = vld [vmem:[%s2168 + $0x78] sm:$0xff]
    %2185 = vmatprep.subr.mxu0 0.0
    %2186 = vmatpush1.msra.mxu0 %v2169
    %2187 = vmatprep.subr.mxu0 0.0
    %2188 = vmatpush1.msra.mxu0 %v2170
    %2189 = vmatprep.subr.mxu0 0.0
    %2190 = vmatpush1.msra.mxu0 %v2171
    %2191 = vmatprep.subr.mxu0 0.0
    %2192 = vmatpush1.msra.mxu0 %v2172
    %2193 = vmatprep.subr.mxu0 0.0
    %2194 = vmatpush1.msra.mxu0 %v2173
    %2195 = vmatprep.subr.mxu0 0.0
    %2196 = vmatpush1.msra.mxu0 %v2174
    %2197 = vmatprep.subr.mxu0 0.0
    %2198 = vmatpush1.msra.mxu0 %v2175
    %2199 = vmatprep.subr.mxu0 0.0
    %2200 = vmatpush1.msra.mxu0 %v2176
    %2201 = vmatprep.subr.mxu0 0.0
    %2202 = vmatpush1.msra.mxu0 %v2177
    %2203 = vmatprep.subr.mxu0 0.0
    %2204 = vmatpush1.msra.mxu0 %v2178
    %2205 = vmatprep.subr.mxu0 0.0
    %2206 = vmatpush1.msra.mxu0 %v2179
    %2207 = vmatprep.subr.mxu0 0.0
    %2208 = vmatpush1.msra.mxu0 %v2180
    %2209 = vmatprep.subr.mxu0 0.0
    %2210 = vmatpush1.msra.mxu0 %v2181
    %2211 = vmatprep.subr.mxu0 0.0
    %2212 = vmatpush1.msra.mxu0 %v2182
    %2213 = vmatprep.subr.mxu0 0.0
    %2214 = vmatpush1.msra.mxu0 %v2183
    %2215 = vmatprep.subr.mxu0 0.0
    %2216 = vmatpush1.msra.mxu0 %v2184
    %2217 = vmatprep.subr.mxu0 0.0
    %2218 = vmatpush1.msra.mxu0 0.0
    %2219 = vmatprep.subr.mxu0 0.0
    %2220 = vmatpush1.msra.mxu0 0.0
    %2221 = vmatprep.subr.mxu0 0.0
    %2222 = vmatpush1.msra.mxu0 0.0
    %2223 = vmatprep.subr.mxu0 0.0
    %2224 = vmatpush1.msra.mxu0 0.0
    %2225 = vmatprep.subr.mxu0 0.0
    %2226 = vmatpush1.msra.mxu0 0.0
    %2227 = vmatprep.subr.mxu0 0.0
    %2228 = vmatpush1.msra.mxu0 0.0
    %2229 = vmatprep.subr.mxu0 0.0
    %2230 = vmatpush1.msra.mxu0 0.0
    %2231 = vmatprep.subr.mxu0 0.0
    %2232 = vmatpush1.msra.mxu0 0.0
    %2233 = vmatprep.subr.mxu0 0.0
    %2234 = vmatpush1.msra.mxu0 0.0
    %2235 = vmatprep.subr.mxu0 0.0
    %2236 = vmatpush1.msra.mxu0 0.0
    %2237 = vmatprep.subr.mxu0 0.0
    %2238 = vmatpush1.msra.mxu0 0.0
    %2239 = vmatprep.subr.mxu0 0.0
    %2240 = vmatpush1.msra.mxu0 0.0
    %2241 = vmatprep.subr.mxu0 0.0
    %2242 = vmatpush1.msra.mxu0 0.0
    %2243 = vmatprep.subr.mxu0 0.0
    %2244 = vmatpush1.msra.mxu0 0.0
    %2245 = vmatprep.subr.mxu0 0.0
    %2246 = vmatpush1.msra.mxu0 0.0
    %2247 = vmatprep.subr.mxu0 0.0
    %2248 = vmatpush1.msra.mxu0 0.0
    %2249 = vmatprep.mubr.f32.mxu0 0.0
    %2250 = vmatmul.mubr.f32.gmra.mrb[0].mxu0 %v2167
    %v2251 = vpop.f32.mrb[0].mxu0
    %v2252 = vadd.f32 0.0, %v2251
    %v2253 = vpop.f32.mrb[0].mxu0
    %2254 = vdwg.mxu0
    %v2255 = vadd.f32 %v2063, %v2252
    %s2256 = scalar_lea.vmem [#allocation11], 2
    %v2257 = vld [vmem:[%s2256] sm:$0x1]
    %v2259 = vlaneseq
    %v2260 = vshrl.u32 %v2259, 7
    %v2261 = vsub.s32 0, %v2260
    %v2262 = vrot.slane %v2257, %v2261
    %v2264 = vadd.f32 %v2255, %v2262
    %s2265 = scalar_lea.vmem [#allocation7], 12
    %v2266 = vld [vmem:[%s2265] sm:$0x1]
    %s2267 = scalar_lea.vmem [#allocation7], 13
    %v2268 = vld [vmem:[%s2267] sm:$0x1]
    %v2269 = vsel %vm353, %v2264, 0.0
    %2270 = vadd.xlane.f32.xlu0 %v2269
    %v2271 = vpop.xlane.xlu0 %2270
    %v2272 = vmul.f32 %v2271, %v357
    %v2273 = vmul.f32 %v2264, %v2264
    %v2274 = vsel %vm353, %v2273, 0.0
    %2275 = vadd.xlane.f32.xlu0 %v2274
    %v2276 = vpop.xlane.xlu0 %2275
    %v2277 = vmul.f32 %v2276, %v357
    %v2278 = vmul.f32 %v2272, %v2272
    %v2279 = vsub.f32 %v2277, %v2278
    %v2280 = vsub.f32 %v2264, %v2272
    %v2281 = vadd.f32 %v2279, 1e-05
    %v2282 = vrsqrt.pop %v2281
    %v2283 = vmul.f32 %v2280, %v2282
    %v2285 = vlaneseq
    %v2286 = vshrl.u32 %v2285, 7
    %v2287 = vsub.s32 0, %v2286
    %v2288 = vrot.slane %v2266, %v2287
    %v2290 = vmul.f32 %v2283, %v2288
    %v2292 = vlaneseq
    %v2293 = vshrl.u32 %v2292, 7
    %v2294 = vsub.s32 0, %v2293
    %v2295 = vrot.slane %v2268, %v2294
    %v2297 = vadd.f32 %v2290, %v2295
    %s2298 = scalar_lea.vmem %s5, 384
    %v2299 = vld [vmem:[%s2298] sm:$0xff]
    %v2300 = vld [vmem:[%s2298 + $0x8] sm:$0xff]
    %v2301 = vld [vmem:[%s2298 + $0x10] sm:$0xff]
    %v2302 = vld [vmem:[%s2298 + $0x18] sm:$0xff]
    %s2303 = scalar_lea.vmem [#allocation8], 12
    %v2304 = vld [vmem:[%s2303] sm:$0x1]
    %v2306 = vlaneseq
    %v2307 = vshrl.u32 %v2306, 7
    %v2308 = vsub.s32 0, %v2307
    %v2309 = vrot.slane %v2304, %v2308
    %v2312 = vsel %vm395, %v2297, 0
    %2314 = vmatprep.subr.mxu0 0.0
    %2315 = vmatpush1.msra.mxu0 %v2299
    %2316 = vmatprep.subr.mxu0 0.0
    %2317 = vmatpush1.msra.mxu0 %v2300
    %2318 = vmatprep.subr.mxu0 0.0
    %2319 = vmatpush1.msra.mxu0 %v2301
    %2320 = vmatprep.subr.mxu0 0.0
    %2321 = vmatpush1.msra.mxu0 %v2302
    %2322 = vmatprep.subr.mxu0 0.0
    %2323 = vmatpush1.msra.mxu0 0.0
    %2324 = vmatprep.subr.mxu0 0.0
    %2325 = vmatpush1.msra.mxu0 0.0
    %2326 = vmatprep.subr.mxu0 0.0
    %2327 = vmatpush1.msra.mxu0 0.0
    %2328 = vmatprep.subr.mxu0 0.0
    %2329 = vmatpush1.msra.mxu0 0.0
    %2330 = vmatprep.subr.mxu0 0.0
    %2331 = vmatpush1.msra.mxu0 0.0
    %2332 = vmatprep.subr.mxu0 0.0
    %2333 = vmatpush1.msra.mxu0 0.0
    %2334 = vmatprep.subr.mxu0 0.0
    %2335 = vmatpush1.msra.mxu0 0.0
    %2336 = vmatprep.subr.mxu0 0.0
    %2337 = vmatpush1.msra.mxu0 0.0
    %2338 = vmatprep.subr.mxu0 0.0
    %2339 = vmatpush1.msra.mxu0 0.0
    %2340 = vmatprep.subr.mxu0 0.0
    %2341 = vmatpush1.msra.mxu0 0.0
    %2342 = vmatprep.subr.mxu0 0.0
    %2343 = vmatpush1.msra.mxu0 0.0
    %2344 = vmatprep.subr.mxu0 0.0
    %2345 = vmatpush1.msra.mxu0 0.0
    %2346 = vmatprep.subr.mxu0 0.0
    %2347 = vmatpush1.msra.mxu0 0.0
    %2348 = vmatprep.subr.mxu0 0.0
    %2349 = vmatpush1.msra.mxu0 0.0
    %2350 = vmatprep.subr.mxu0 0.0
    %2351 = vmatpush1.msra.mxu0 0.0
    %2352 = vmatprep.subr.mxu0 0.0
    %2353 = vmatpush1.msra.mxu0 0.0
    %2354 = vmatprep.subr.mxu0 0.0
    %2355 = vmatpush1.msra.mxu0 0.0
    %2356 = vmatprep.subr.mxu0 0.0
    %2357 = vmatpush1.msra.mxu0 0.0
    %2358 = vmatprep.subr.mxu0 0.0
    %2359 = vmatpush1.msra.mxu0 0.0
    %2360 = vmatprep.subr.mxu0 0.0
    %2361 = vmatpush1.msra.mxu0 0.0
    %2362 = vmatprep.subr.mxu0 0.0
    %2363 = vmatpush1.msra.mxu0 0.0
    %2364 = vmatprep.subr.mxu0 0.0
    %2365 = vmatpush1.msra.mxu0 0.0
    %2366 = vmatprep.subr.mxu0 0.0
    %2367 = vmatpush1.msra.mxu0 0.0
    %2368 = vmatprep.subr.mxu0 0.0
    %2369 = vmatpush1.msra.mxu0 0.0
    %2370 = vmatprep.subr.mxu0 0.0
    %2371 = vmatpush1.msra.mxu0 0.0
    %2372 = vmatprep.subr.mxu0 0.0
    %2373 = vmatpush1.msra.mxu0 0.0
    %2374 = vmatprep.subr.mxu0 0.0
    %2375 = vmatpush1.msra.mxu0 0.0
    %2376 = vmatprep.subr.mxu0 0.0
    %2377 = vmatpush1.msra.mxu0 0.0
    %2378 = vmatprep.mubr.f32.mxu0 0.0
    %2379 = vmatmul.mubr.f32.gmra.mrb[0].mxu0 %v2312
    %v2380 = vpop.f32.mrb[0].mxu0
    %v2381 = vadd.f32 %v2309, %v2380
    %v2382 = vpop.f32.mrb[0].mxu0
    %2383 = vdwg.mxu0
    %s2384 = scalar_lea.vmem %s5, 416
    %v2385 = vld [vmem:[%s2384] sm:$0xff]
    %v2386 = vld [vmem:[%s2384 + $0x8] sm:$0xff]
    %v2387 = vld [vmem:[%s2384 + $0x10] sm:$0xff]
    %v2388 = vld [vmem:[%s2384 + $0x18] sm:$0xff]
    %s2389 = scalar_lea.vmem [#allocation8], 13
    %v2390 = vld [vmem:[%s2389] sm:$0x1]
    %v2392 = vlaneseq
    %v2393 = vshrl.u32 %v2392, 7
    %v2394 = vsub.s32 0, %v2393
    %v2395 = vrot.slane %v2390, %v2394
    %v2398 = vsel %vm395, %v2381, 0
    %2400 = vmatprep.subr.mxu0 0.0
    %2401 = vmatpush1.msra.mxu0 %v2385
    %2402 = vmatprep.subr.mxu0 0.0
    %2403 = vmatpush1.msra.mxu0 %v2386
    %2404 = vmatprep.subr.mxu0 0.0
    %2405 = vmatpush1.msra.mxu0 %v2387
    %2406 = vmatprep.subr.mxu0 0.0
    %2407 = vmatpush1.msra.mxu0 %v2388
    %2408 = vmatprep.subr.mxu0 0.0
    %2409 = vmatpush1.msra.mxu0 0.0
    %2410 = vmatprep.subr.mxu0 0.0
    %2411 = vmatpush1.msra.mxu0 0.0
    %2412 = vmatprep.subr.mxu0 0.0
    %2413 = vmatpush1.msra.mxu0 0.0
    %2414 = vmatprep.subr.mxu0 0.0
    %2415 = vmatpush1.msra.mxu0 0.0
    %2416 = vmatprep.subr.mxu0 0.0
    %2417 = vmatpush1.msra.mxu0 0.0
    %2418 = vmatprep.subr.mxu0 0.0
    %2419 = vmatpush1.msra.mxu0 0.0
    %2420 = vmatprep.subr.mxu0 0.0
    %2421 = vmatpush1.msra.mxu0 0.0
    %2422 = vmatprep.subr.mxu0 0.0
    %2423 = vmatpush1.msra.mxu0 0.0
    %2424 = vmatprep.subr.mxu0 0.0
    %2425 = vmatpush1.msra.mxu0 0.0
    %2426 = vmatprep.subr.mxu0 0.0
    %2427 = vmatpush1.msra.mxu0 0.0
    %2428 = vmatprep.subr.mxu0 0.0
    %2429 = vmatpush1.msra.mxu0 0.0
    %2430 = vmatprep.subr.mxu0 0.0
    %2431 = vmatpush1.msra.mxu0 0.0
    %2432 = vmatprep.subr.mxu0 0.0
    %2433 = vmatpush1.msra.mxu0 0.0
    %2434 = vmatprep.subr.mxu0 0.0
    %2435 = vmatpush1.msra.mxu0 0.0
    %2436 = vmatprep.subr.mxu0 0.0
    %2437 = vmatpush1.msra.mxu0 0.0
    %2438 = vmatprep.subr.mxu0 0.0
    %2439 = vmatpush1.msra.mxu0 0.0
    %2440 = vmatprep.subr.mxu0 0.0
    %2441 = vmatpush1.msra.mxu0 0.0
    %2442 = vmatprep.subr.mxu0 0.0
    %2443 = vmatpush1.msra.mxu0 0.0
    %2444 = vmatprep.subr.mxu0 0.0
    %2445 = vmatpush1.msra.mxu0 0.0
    %2446 = vmatprep.subr.mxu0 0.0
    %2447 = vmatpush1.msra.mxu0 0.0
    %2448 = vmatprep.subr.mxu0 0.0
    %2449 = vmatpush1.msra.mxu0 0.0
    %2450 = vmatprep.subr.mxu0 0.0
    %2451 = vmatpush1.msra.mxu0 0.0
    %2452 = vmatprep.subr.mxu0 0.0
    %2453 = vmatpush1.msra.mxu0 0.0
    %2454 = vmatprep.subr.mxu0 0.0
    %2455 = vmatpush1.msra.mxu0 0.0
    %2456 = vmatprep.subr.mxu0 0.0
    %2457 = vmatpush1.msra.mxu0 0.0
    %2458 = vmatprep.subr.mxu0 0.0
    %2459 = vmatpush1.msra.mxu0 0.0
    %2460 = vmatprep.subr.mxu0 0.0
    %2461 = vmatpush1.msra.mxu0 0.0
    %2462 = vmatprep.subr.mxu0 0.0
    %2463 = vmatpush1.msra.mxu0 0.0
    %2464 = vmatprep.mubr.f32.mxu0 0.0
    %2465 = vmatmul.mubr.f32.gmra.mrb[0].mxu0 %v2398
    %v2466 = vpop.f32.mrb[0].mxu0
    %v2467 = vadd.f32 %v2395, %v2466
    %v2468 = vpop.f32.mrb[0].mxu0
    %2469 = vdwg.mxu0
    %s2470 = scalar_lea.vmem [#allocation7], 14
    %v2471 = vld [vmem:[%s2470] sm:$0x1]
    %s2472 = scalar_lea.vmem [#allocation7], 15
    %v2473 = vld [vmem:[%s2472] sm:$0x1]
    %v2475 = vlaneseq
    %v2476 = vshrl.u32 %v2475, 7
    %v2477 = vsub.s32 0, %v2476
    %v2478 = vrot.slane %v2471, %v2477
    %v2480 = vmul.f32 %v2283, %v2478
    %v2482 = vlaneseq
    %v2483 = vshrl.u32 %v2482, 7
    %v2484 = vsub.s32 0, %v2483
    %v2485 = vrot.slane %v2473, %v2484
    %v2487 = vadd.f32 %v2480, %v2485
    %s2488 = scalar_lea.vmem %s5, 448
    %v2489 = vld [vmem:[%s2488] sm:$0xff]
    %v2490 = vld [vmem:[%s2488 + $0x8] sm:$0xff]
    %v2491 = vld [vmem:[%s2488 + $0x10] sm:$0xff]
    %v2492 = vld [vmem:[%s2488 + $0x18] sm:$0xff]
    %s2493 = scalar_lea.vmem [#allocation8], 14
    %v2494 = vld [vmem:[%s2493] sm:$0x1]
    %v2496 = vlaneseq
    %v2497 = vshrl.u32 %v2496, 7
    %v2498 = vsub.s32 0, %v2497
    %v2499 = vrot.slane %v2494, %v2498
    %v2502 = vsel %vm395, %v2487, 0
    %2504 = vmatprep.subr.mxu0 0.0
    %2505 = vmatpush1.msra.mxu0 %v2489
    %2506 = vmatprep.subr.mxu0 0.0
    %2507 = vmatpush1.msra.mxu0 %v2490
    %2508 = vmatprep.subr.mxu0 0.0
    %2509 = vmatpush1.msra.mxu0 %v2491
    %2510 = vmatprep.subr.mxu0 0.0
    %2511 = vmatpush1.msra.mxu0 %v2492
    %2512 = vmatprep.subr.mxu0 0.0
    %2513 = vmatpush1.msra.mxu0 0.0
    %2514 = vmatprep.subr.mxu0 0.0
    %2515 = vmatpush1.msra.mxu0 0.0
    %2516 = vmatprep.subr.mxu0 0.0
    %2517 = vmatpush1.msra.mxu0 0.0
    %2518 = vmatprep.subr.mxu0 0.0
    %2519 = vmatpush1.msra.mxu0 0.0
    %2520 = vmatprep.subr.mxu0 0.0
    %2521 = vmatpush1.msra.mxu0 0.0
    %2522 = vmatprep.subr.mxu0 0.0
    %2523 = vmatpush1.msra.mxu0 0.0
    %2524 = vmatprep.subr.mxu0 0.0
    %2525 = vmatpush1.msra.mxu0 0.0
    %2526 = vmatprep.subr.mxu0 0.0
    %2527 = vmatpush1.msra.mxu0 0.0
    %2528 = vmatprep.subr.mxu0 0.0
    %2529 = vmatpush1.msra.mxu0 0.0
    %2530 = vmatprep.subr.mxu0 0.0
    %2531 = vmatpush1.msra.mxu0 0.0
    %2532 = vmatprep.subr.mxu0 0.0
    %2533 = vmatpush1.msra.mxu0 0.0
    %2534 = vmatprep.subr.mxu0 0.0
    %2535 = vmatpush1.msra.mxu0 0.0
    %2536 = vmatprep.subr.mxu0 0.0
    %2537 = vmatpush1.msra.mxu0 0.0
    %2538 = vmatprep.subr.mxu0 0.0
    %2539 = vmatpush1.msra.mxu0 0.0
    %2540 = vmatprep.subr.mxu0 0.0
    %2541 = vmatpush1.msra.mxu0 0.0
    %2542 = vmatprep.subr.mxu0 0.0
    %2543 = vmatpush1.msra.mxu0 0.0
    %2544 = vmatprep.subr.mxu0 0.0
    %2545 = vmatpush1.msra.mxu0 0.0
    %2546 = vmatprep.subr.mxu0 0.0
    %2547 = vmatpush1.msra.mxu0 0.0
    %2548 = vmatprep.subr.mxu0 0.0
    %2549 = vmatpush1.msra.mxu0 0.0
    %2550 = vmatprep.subr.mxu0 0.0
    %2551 = vmatpush1.msra.mxu0 0.0
    %2552 = vmatprep.subr.mxu0 0.0
    %2553 = vmatpush1.msra.mxu0 0.0
    %2554 = vmatprep.subr.mxu0 0.0
    %2555 = vmatpush1.msra.mxu0 0.0
    %2556 = vmatprep.subr.mxu0 0.0
    %2557 = vmatpush1.msra.mxu0 0.0
    %2558 = vmatprep.subr.mxu0 0.0
    %2559 = vmatpush1.msra.mxu0 0.0
    %2560 = vmatprep.subr.mxu0 0.0
    %2561 = vmatpush1.msra.mxu0 0.0
    %2562 = vmatprep.subr.mxu0 0.0
    %2563 = vmatpush1.msra.mxu0 0.0
    %2564 = vmatprep.subr.mxu0 0.0
    %2565 = vmatpush1.msra.mxu0 0.0
    %2566 = vmatprep.subr.mxu0 0.0
    %2567 = vmatpush1.msra.mxu0 0.0
    %2568 = vmatprep.mubr.f32.mxu0 0.0
    %2569 = vmatmul.mubr.f32.gmra.mrb[0].mxu0 %v2502
    %v2570 = vpop.f32.mrb[0].mxu0
    %v2571 = vadd.f32 %v2499, %v2570
    %v2572 = vpop.f32.mrb[0].mxu0
    %2573 = vdwg.mxu0
    %s2574 = scalar_lea.vmem %s5, 480
    %v2575 = vld [vmem:[%s2574] sm:$0xff]
    %v2576 = vld [vmem:[%s2574 + $0x8] sm:$0xff]
    %v2577 = vld [vmem:[%s2574 + $0x10] sm:$0xff]
    %v2578 = vld [vmem:[%s2574 + $0x18] sm:$0xff]
    %s2579 = scalar_lea.vmem [#allocation8], 15
    %v2580 = vld [vmem:[%s2579] sm:$0x1]
    %v2582 = vlaneseq
    %v2583 = vshrl.u32 %v2582, 7
    %v2584 = vsub.s32 0, %v2583
    %v2585 = vrot.slane %v2580, %v2584
    %v2588 = vsel %vm395, %v2571, 0
    %2590 = vmatprep.subr.mxu0 0.0
    %2591 = vmatpush1.msra.mxu0 %v2575
    %2592 = vmatprep.subr.mxu0 0.0
    %2593 = vmatpush1.msra.mxu0 %v2576
    %2594 = vmatprep.subr.mxu0 0.0
    %2595 = vmatpush1.msra.mxu0 %v2577
    %2596 = vmatprep.subr.mxu0 0.0
    %2597 = vmatpush1.msra.mxu0 %v2578
    %2598 = vmatprep.subr.mxu0 0.0
    %2599 = vmatpush1.msra.mxu0 0.0
    %2600 = vmatprep.subr.mxu0 0.0
    %2601 = vmatpush1.msra.mxu0 0.0
    %2602 = vmatprep.subr.mxu0 0.0
    %2603 = vmatpush1.msra.mxu0 0.0
    %2604 = vmatprep.subr.mxu0 0.0
    %2605 = vmatpush1.msra.mxu0 0.0
    %2606 = vmatprep.subr.mxu0 0.0
    %2607 = vmatpush1.msra.mxu0 0.0
    %2608 = vmatprep.subr.mxu0 0.0
    %2609 = vmatpush1.msra.mxu0 0.0
    %2610 = vmatprep.subr.mxu0 0.0
    %2611 = vmatpush1.msra.mxu0 0.0
    %2612 = vmatprep.subr.mxu0 0.0
    %2613 = vmatpush1.msra.mxu0 0.0
    %2614 = vmatprep.subr.mxu0 0.0
    %2615 = vmatpush1.msra.mxu0 0.0
    %2616 = vmatprep.subr.mxu0 0.0
    %2617 = vmatpush1.msra.mxu0 0.0
    %2618 = vmatprep.subr.mxu0 0.0
    %2619 = vmatpush1.msra.mxu0 0.0
    %2620 = vmatprep.subr.mxu0 0.0
    %2621 = vmatpush1.msra.mxu0 0.0
    %2622 = vmatprep.subr.mxu0 0.0
    %2623 = vmatpush1.msra.mxu0 0.0
    %2624 = vmatprep.subr.mxu0 0.0
    %2625 = vmatpush1.msra.mxu0 0.0
    %2626 = vmatprep.subr.mxu0 0.0
    %2627 = vmatpush1.msra.mxu0 0.0
    %2628 = vmatprep.subr.mxu0 0.0
    %2629 = vmatpush1.msra.mxu0 0.0
    %2630 = vmatprep.subr.mxu0 0.0
    %2631 = vmatpush1.msra.mxu0 0.0
    %2632 = vmatprep.subr.mxu0 0.0
    %2633 = vmatpush1.msra.mxu0 0.0
    %2634 = vmatprep.subr.mxu0 0.0
    %2635 = vmatpush1.msra.mxu0 0.0
    %2636 = vmatprep.subr.mxu0 0.0
    %2637 = vmatpush1.msra.mxu0 0.0
    %2638 = vmatprep.subr.mxu0 0.0
    %2639 = vmatpush1.msra.mxu0 0.0
    %2640 = vmatprep.subr.mxu0 0.0
    %2641 = vmatpush1.msra.mxu0 0.0
    %2642 = vmatprep.subr.mxu0 0.0
    %2643 = vmatpush1.msra.mxu0 0.0
    %2644 = vmatprep.subr.mxu0 0.0
    %2645 = vmatpush1.msra.mxu0 0.0
    %2646 = vmatprep.subr.mxu0 0.0
    %2647 = vmatpush1.msra.mxu0 0.0
    %2648 = vmatprep.subr.mxu0 0.0
    %2649 = vmatpush1.msra.mxu0 0.0
    %2650 = vmatprep.subr.mxu0 0.0
    %2651 = vmatpush1.msra.mxu0 0.0
    %2652 = vmatprep.subr.mxu0 0.0
    %2653 = vmatpush1.msra.mxu0 0.0
    %2654 = vmatprep.mubr.f32.mxu0 0.0
    %2655 = vmatmul.mubr.f32.gmra.mrb[0].mxu0 %v2588
    %v2656 = vpop.f32.mrb[0].mxu0
    %v2657 = vadd.f32 %v2585, %v2656
    %v2658 = vpop.f32.mrb[0].mxu0
    %2659 = vdwg.mxu0
    %2660 = vset.pattern.permute.xlu0 3
    %2661 = vperm.xlu0 %2660, %v749
    %v2662 = vpop.permute.xlu0 %2661
    %v2664 = vmul.f32 %v2662, %v2467
    %v2665 = vadd.f32 %v2264, %v2664
    %2666 = vset.pattern.permute.xlu0 3
    %2667 = vperm.xlu0 %2666, %v761
    %v2668 = vpop.permute.xlu0 %2667
    %v2670 = vmul.f32 %v2668, %v2657
    %v2671 = vadd.f32 %v2665, %v2670
    %v2672 = vsel %vm353, %v2671, 0.0
    %2673 = vadd.xlane.f32.xlu0 %v2672
    %v2674 = vpop.xlane.xlu0 %2673
    %v2675 = vmul.f32 %v2674, %v357
    %v2676 = vmul.f32 %v2671, %v2671
    %v2677 = vsel %vm353, %v2676, 0.0
    %2678 = vadd.xlane.f32.xlu0 %v2677
    %v2679 = vpop.xlane.xlu0 %2678
    %v2680 = vmul.f32 %v2679, %v357
    %v2681 = vmul.f32 %v2675, %v2675
    %v2682 = vsub.f32 %v2680, %v2681
    %v2683 = vsub.f32 %v2671, %v2675
    %v2684 = vadd.f32 %v2682, 1e-05
    %v2685 = vrsqrt.pop %v2684
    %v2686 = vmul.f32 %v2683, %v2685
    %v2687 = vmul.f32 %v2686, %v2478
    %v2688 = vadd.f32 %v2687, %v2485
    %s2689 = scalar_lea.vmem %s7, 96
    %v2690 = vld [vmem:[%s2689] sm:$0xff]
    %v2691 = vld [vmem:[%s2689 + $0x8] sm:$0xff]
    %v2692 = vld [vmem:[%s2689 + $0x10] sm:$0xff]
    %v2693 = vld [vmem:[%s2689 + $0x18] sm:$0xff]
    %s2694 = scalar_lea.vmem [#allocation10], 3
    %v2695 = vld [vmem:[%s2694] sm:$0x1]
    %v2697 = vlaneseq
    %v2698 = vshrl.u32 %v2697, 7
    %v2699 = vsub.s32 0, %v2698
    %v2700 = vrot.slane %v2695, %v2699
    %v2703 = vsel %vm395, %v2688, 0
    %2705 = vmatprep.subr.mxu0 0.0
    %2706 = vmatpush1.msra.mxu0 %v2690
    %2707 = vmatprep.subr.mxu0 0.0
    %2708 = vmatpush1.msra.mxu0 %v2691
    %2709 = vmatprep.subr.mxu0 0.0
    %2710 = vmatpush1.msra.mxu0 %v2692
    %2711 = vmatprep.subr.mxu0 0.0
    %2712 = vmatpush1.msra.mxu0 %v2693
    %2713 = vmatprep.subr.mxu0 0.0
    %2714 = vmatpush1.msra.mxu0 0.0
    %2715 = vmatprep.subr.mxu0 0.0
    %2716 = vmatpush1.msra.mxu0 0.0
    %2717 = vmatprep.subr.mxu0 0.0
    %2718 = vmatpush1.msra.mxu0 0.0
    %2719 = vmatprep.subr.mxu0 0.0
    %2720 = vmatpush1.msra.mxu0 0.0
    %2721 = vmatprep.subr.mxu0 0.0
    %2722 = vmatpush1.msra.mxu0 0.0
    %2723 = vmatprep.subr.mxu0 0.0
    %2724 = vmatpush1.msra.mxu0 0.0
    %2725 = vmatprep.subr.mxu0 0.0
    %2726 = vmatpush1.msra.mxu0 0.0
    %2727 = vmatprep.subr.mxu0 0.0
    %2728 = vmatpush1.msra.mxu0 0.0
    %2729 = vmatprep.subr.mxu0 0.0
    %2730 = vmatpush1.msra.mxu0 0.0
    %2731 = vmatprep.subr.mxu0 0.0
    %2732 = vmatpush1.msra.mxu0 0.0
    %2733 = vmatprep.subr.mxu0 0.0
    %2734 = vmatpush1.msra.mxu0 0.0
    %2735 = vmatprep.subr.mxu0 0.0
    %2736 = vmatpush1.msra.mxu0 0.0
    %2737 = vmatprep.subr.mxu0 0.0
    %2738 = vmatpush1.msra.mxu0 0.0
    %2739 = vmatprep.subr.mxu0 0.0
    %2740 = vmatpush1.msra.mxu0 0.0
    %2741 = vmatprep.subr.mxu0 0.0
    %2742 = vmatpush1.msra.mxu0 0.0
    %2743 = vmatprep.subr.mxu0 0.0
    %2744 = vmatpush1.msra.mxu0 0.0
    %2745 = vmatprep.subr.mxu0 0.0
    %2746 = vmatpush1.msra.mxu0 0.0
    %2747 = vmatprep.subr.mxu0 0.0
    %2748 = vmatpush1.msra.mxu0 0.0
    %2749 = vmatprep.subr.mxu0 0.0
    %2750 = vmatpush1.msra.mxu0 0.0
    %2751 = vmatprep.subr.mxu0 0.0
    %2752 = vmatpush1.msra.mxu0 0.0
    %2753 = vmatprep.subr.mxu0 0.0
    %2754 = vmatpush1.msra.mxu0 0.0
    %2755 = vmatprep.subr.mxu0 0.0
    %2756 = vmatpush1.msra.mxu0 0.0
    %2757 = vmatprep.subr.mxu0 0.0
    %2758 = vmatpush1.msra.mxu0 0.0
    %2759 = vmatprep.subr.mxu0 0.0
    %2760 = vmatpush1.msra.mxu0 0.0
    %2761 = vmatprep.subr.mxu0 0.0
    %2762 = vmatpush1.msra.mxu0 0.0
    %2763 = vmatprep.subr.mxu0 0.0
    %2764 = vmatpush1.msra.mxu0 0.0
    %2765 = vmatprep.subr.mxu0 0.0
    %2766 = vmatpush1.msra.mxu0 0.0
    %2767 = vmatprep.subr.mxu0 0.0
    %2768 = vmatpush1.msra.mxu0 0.0
    %2769 = vmatprep.mubr.f32.mxu0 0.0
    %2770 = vmatmul.mubr.f32.gmra.mrb[0].mxu0 %v2703
    %v2771 = vpop.f32.mrb[0].mxu0
    %v2772 = vadd.f32 %v2700, %v2771
    %v2773 = vpop.f32.mrb[0].mxu0
    %2774 = vdwg.mxu0
    %v2775 = vmax.f32 %v2772, 0.0
    %s2776 = scalar_lea.vmem %s9, 384
    %v2777 = vld [vmem:[%s2776] sm:$0xff]
    %v2778 = vld [vmem:[%s2776 + $0x8] sm:$0xff]
    %v2779 = vld [vmem:[%s2776 + $0x10] sm:$0xff]
    %v2780 = vld [vmem:[%s2776 + $0x18] sm:$0xff]
    %v2781 = vld [vmem:[%s2776 + $0x20] sm:$0xff]
    %v2782 = vld [vmem:[%s2776 + $0x28] sm:$0xff]
    %v2783 = vld [vmem:[%s2776 + $0x30] sm:$0xff]
    %v2784 = vld [vmem:[%s2776 + $0x38] sm:$0xff]
    %v2785 = vld [vmem:[%s2776 + $0x40] sm:$0xff]
    %v2786 = vld [vmem:[%s2776 + $0x48] sm:$0xff]
    %v2787 = vld [vmem:[%s2776 + $0x50] sm:$0xff]
    %v2788 = vld [vmem:[%s2776 + $0x58] sm:$0xff]
    %v2789 = vld [vmem:[%s2776 + $0x60] sm:$0xff]
    %v2790 = vld [vmem:[%s2776 + $0x68] sm:$0xff]
    %v2791 = vld [vmem:[%s2776 + $0x70] sm:$0xff]
    %v2792 = vld [vmem:[%s2776 + $0x78] sm:$0xff]
    %2793 = vmatprep.subr.mxu0 0.0
    %2794 = vmatpush1.msra.mxu0 %v2777
    %2795 = vmatprep.subr.mxu0 0.0
    %2796 = vmatpush1.msra.mxu0 %v2778
    %2797 = vmatprep.subr.mxu0 0.0
    %2798 = vmatpush1.msra.mxu0 %v2779
    %2799 = vmatprep.subr.mxu0 0.0
    %2800 = vmatpush1.msra.mxu0 %v2780
    %2801 = vmatprep.subr.mxu0 0.0
    %2802 = vmatpush1.msra.mxu0 %v2781
    %2803 = vmatprep.subr.mxu0 0.0
    %2804 = vmatpush1.msra.mxu0 %v2782
    %2805 = vmatprep.subr.mxu0 0.0
    %2806 = vmatpush1.msra.mxu0 %v2783
    %2807 = vmatprep.subr.mxu0 0.0
    %2808 = vmatpush1.msra.mxu0 %v2784
    %2809 = vmatprep.subr.mxu0 0.0
    %2810 = vmatpush1.msra.mxu0 %v2785
    %2811 = vmatprep.subr.mxu0 0.0
    %2812 = vmatpush1.msra.mxu0 %v2786
    %2813 = vmatprep.subr.mxu0 0.0
    %2814 = vmatpush1.msra.mxu0 %v2787
    %2815 = vmatprep.subr.mxu0 0.0
    %2816 = vmatpush1.msra.mxu0 %v2788
    %2817 = vmatprep.subr.mxu0 0.0
    %2818 = vmatpush1.msra.mxu0 %v2789
    %2819 = vmatprep.subr.mxu0 0.0
    %2820 = vmatpush1.msra.mxu0 %v2790
    %2821 = vmatprep.subr.mxu0 0.0
    %2822 = vmatpush1.msra.mxu0 %v2791
    %2823 = vmatprep.subr.mxu0 0.0
    %2824 = vmatpush1.msra.mxu0 %v2792
    %2825 = vmatprep.subr.mxu0 0.0
    %2826 = vmatpush1.msra.mxu0 0.0
    %2827 = vmatprep.subr.mxu0 0.0
    %2828 = vmatpush1.msra.mxu0 0.0
    %2829 = vmatprep.subr.mxu0 0.0
    %2830 = vmatpush1.msra.mxu0 0.0
    %2831 = vmatprep.subr.mxu0 0.0
    %2832 = vmatpush1.msra.mxu0 0.0
    %2833 = vmatprep.subr.mxu0 0.0
    %2834 = vmatpush1.msra.mxu0 0.0
    %2835 = vmatprep.subr.mxu0 0.0
    %2836 = vmatpush1.msra.mxu0 0.0
    %2837 = vmatprep.subr.mxu0 0.0
    %2838 = vmatpush1.msra.mxu0 0.0
    %2839 = vmatprep.subr.mxu0 0.0
    %2840 = vmatpush1.msra.mxu0 0.0
    %2841 = vmatprep.subr.mxu0 0.0
    %2842 = vmatpush1.msra.mxu0 0.0
    %2843 = vmatprep.subr.mxu0 0.0
    %2844 = vmatpush1.msra.mxu0 0.0
    %2845 = vmatprep.subr.mxu0 0.0
    %2846 = vmatpush1.msra.mxu0 0.0
    %2847 = vmatprep.subr.mxu0 0.0
    %2848 = vmatpush1.msra.mxu0 0.0
    %2849 = vmatprep.subr.mxu0 0.0
    %2850 = vmatpush1.msra.mxu0 0.0
    %2851 = vmatprep.subr.mxu0 0.0
    %2852 = vmatpush1.msra.mxu0 0.0
    %2853 = vmatprep.subr.mxu0 0.0
    %2854 = vmatpush1.msra.mxu0 0.0
    %2855 = vmatprep.subr.mxu0 0.0
    %2856 = vmatpush1.msra.mxu0 0.0
    %2857 = vmatprep.mubr.f32.mxu0 0.0
    %2858 = vmatmul.mubr.f32.gmra.mrb[0].mxu0 %v2775
    %v2859 = vpop.f32.mrb[0].mxu0
    %v2860 = vadd.f32 0.0, %v2859
    %v2861 = vpop.f32.mrb[0].mxu0
    %2862 = vdwg.mxu0
    %v2863 = vadd.f32 %v2671, %v2860
    %s2864 = scalar_lea.vmem [#allocation11], 3
    %v2865 = vld [vmem:[%s2864] sm:$0x1]
    %v2867 = vlaneseq
    %v2868 = vshrl.u32 %v2867, 7
    %v2869 = vsub.s32 0, %v2868
    %v2870 = vrot.slane %v2865, %v2869
    %v2872 = vadd.f32 %v2863, %v2870
    %s2873 = scalar_lea.vmem [#allocation2], 32
    %v2874 = vld [vmem:[%s2873] sm:$0xff]
    %v2875 = vld [vmem:[%s2873 + $0x8] sm:$0xff]
    %s2876 = scalar_lea.vmem [#allocation5], 2
    %v2877 = vld [vmem:[%s2876] sm:$0x1]
    %v2879 = vlaneseq
    %v2880 = vshrl.u32 %v2879, 7
    %v2881 = vsub.s32 0, %v2880
    %v2882 = vrot.slane %v2877, %v2881
    %v2885 = vsel %vm276, %v266, 0
    %2887 = vmatprep.subr.mxu0 0.0
    %2888 = vmatpush1.msra.mxu0 %v2874
    %2889 = vmatprep.subr.mxu0 0.0
    %2890 = vmatpush1.msra.mxu0 %v2875
    %2891 = vmatprep.subr.mxu0 0.0
    %2892 = vmatpush1.msra.mxu0 0.0
    %2893 = vmatprep.subr.mxu0 0.0
    %2894 = vmatpush1.msra.mxu0 0.0
    %2895 = vmatprep.subr.mxu0 0.0
    %2896 = vmatpush1.msra.mxu0 0.0
    %2897 = vmatprep.subr.mxu0 0.0
    %2898 = vmatpush1.msra.mxu0 0.0
    %2899 = vmatprep.subr.mxu0 0.0
    %2900 = vmatpush1.msra.mxu0 0.0
    %2901 = vmatprep.subr.mxu0 0.0
    %2902 = vmatpush1.msra.mxu0 0.0
    %2903 = vmatprep.subr.mxu0 0.0
    %2904 = vmatpush1.msra.mxu0 0.0
    %2905 = vmatprep.subr.mxu0 0.0
    %2906 = vmatpush1.msra.mxu0 0.0
    %2907 = vmatprep.subr.mxu0 0.0
    %2908 = vmatpush1.msra.mxu0 0.0
    %2909 = vmatprep.subr.mxu0 0.0
    %2910 = vmatpush1.msra.mxu0 0.0
    %2911 = vmatprep.subr.mxu0 0.0
    %2912 = vmatpush1.msra.mxu0 0.0
    %2913 = vmatprep.subr.mxu0 0.0
    %2914 = vmatpush1.msra.mxu0 0.0
    %2915 = vmatprep.subr.mxu0 0.0
    %2916 = vmatpush1.msra.mxu0 0.0
    %2917 = vmatprep.subr.mxu0 0.0
    %2918 = vmatpush1.msra.mxu0 0.0
    %2919 = vmatprep.subr.mxu0 0.0
    %2920 = vmatpush1.msra.mxu0 0.0
    %2921 = vmatprep.subr.mxu0 0.0
    %2922 = vmatpush1.msra.mxu0 0.0
    %2923 = vmatprep.subr.mxu0 0.0
    %2924 = vmatpush1.msra.mxu0 0.0
    %2925 = vmatprep.subr.mxu0 0.0
    %2926 = vmatpush1.msra.mxu0 0.0
    %2927 = vmatprep.subr.mxu0 0.0
    %2928 = vmatpush1.msra.mxu0 0.0
    %2929 = vmatprep.subr.mxu0 0.0
    %2930 = vmatpush1.msra.mxu0 0.0
    %2931 = vmatprep.subr.mxu0 0.0
    %2932 = vmatpush1.msra.mxu0 0.0
    %2933 = vmatprep.subr.mxu0 0.0
    %2934 = vmatpush1.msra.mxu0 0.0
    %2935 = vmatprep.subr.mxu0 0.0
    %2936 = vmatpush1.msra.mxu0 0.0
    %2937 = vmatprep.subr.mxu0 0.0
    %2938 = vmatpush1.msra.mxu0 0.0
    %2939 = vmatprep.subr.mxu0 0.0
    %2940 = vmatpush1.msra.mxu0 0.0
    %2941 = vmatprep.subr.mxu0 0.0
    %2942 = vmatpush1.msra.mxu0 0.0
    %2943 = vmatprep.subr.mxu0 0.0
    %2944 = vmatpush1.msra.mxu0 0.0
    %2945 = vmatprep.subr.mxu0 0.0
    %2946 = vmatpush1.msra.mxu0 0.0
    %2947 = vmatprep.subr.mxu0 0.0
    %2948 = vmatpush1.msra.mxu0 0.0
    %2949 = vmatprep.subr.mxu0 0.0
    %2950 = vmatpush1.msra.mxu0 0.0
    %2951 = vmatprep.mubr.f32.mxu0 0.0
    %2952 = vmatmul.mubr.f32.gmra.mrb[0].mxu0 %v2885
    %v2953 = vpop.f32.mrb[0].mxu0
    %v2954 = vadd.f32 %v2882, %v2953
    %v2955 = vpop.f32.mrb[0].mxu0
    %2956 = vdwg.mxu0
    %s2957 = scalar_lea.vmem [#allocation7], 16
    %v2958 = vld [vmem:[%s2957] sm:$0x1]
    %s2959 = scalar_lea.vmem [#allocation7], 17
    %v2960 = vld [vmem:[%s2959] sm:$0x1]
    %v2961 = vsel %vm353, %v2954, 0.0
    %2962 = vadd.xlane.f32.xlu0 %v2961
    %v2963 = vpop.xlane.xlu0 %2962
    %v2964 = vmul.f32 %v2963, %v357
    %v2965 = vmul.f32 %v2954, %v2954
    %v2966 = vsel %vm353, %v2965, 0.0
    %2967 = vadd.xlane.f32.xlu0 %v2966
    %v2968 = vpop.xlane.xlu0 %2967
    %v2969 = vmul.f32 %v2968, %v357
    %v2970 = vmul.f32 %v2964, %v2964
    %v2971 = vsub.f32 %v2969, %v2970
    %v2972 = vsub.f32 %v2954, %v2964
    %v2973 = vadd.f32 %v2971, 1e-05
    %v2974 = vrsqrt.pop %v2973
    %v2975 = vmul.f32 %v2972, %v2974
    %v2977 = vlaneseq
    %v2978 = vshrl.u32 %v2977, 7
    %v2979 = vsub.s32 0, %v2978
    %v2980 = vrot.slane %v2958, %v2979
    %v2982 = vmul.f32 %v2975, %v2980
    %v2984 = vlaneseq
    %v2985 = vshrl.u32 %v2984, 7
    %v2986 = vsub.s32 0, %v2985
    %v2987 = vrot.slane %v2960, %v2986
    %v2989 = vadd.f32 %v2982, %v2987
    %s2990 = scalar_lea.vmem %s5, 512
    %v2991 = vld [vmem:[%s2990] sm:$0xff]
    %v2992 = vld [vmem:[%s2990 + $0x8] sm:$0xff]
    %v2993 = vld [vmem:[%s2990 + $0x10] sm:$0xff]
    %v2994 = vld [vmem:[%s2990 + $0x18] sm:$0xff]
    %s2995 = scalar_lea.vmem [#allocation8], 16
    %v2996 = vld [vmem:[%s2995] sm:$0x1]
    %v2998 = vlaneseq
    %v2999 = vshrl.u32 %v2998, 7
    %v3000 = vsub.s32 0, %v2999
    %v3001 = vrot.slane %v2996, %v3000
    %v3004 = vsel %vm395, %v2989, 0
    %3006 = vmatprep.subr.mxu0 0.0
    %3007 = vmatpush1.msra.mxu0 %v2991
    %3008 = vmatprep.subr.mxu0 0.0
    %3009 = vmatpush1.msra.mxu0 %v2992
    %3010 = vmatprep.subr.mxu0 0.0
    %3011 = vmatpush1.msra.mxu0 %v2993
    %3012 = vmatprep.subr.mxu0 0.0
    %3013 = vmatpush1.msra.mxu0 %v2994
    %3014 = vmatprep.subr.mxu0 0.0
    %3015 = vmatpush1.msra.mxu0 0.0
    %3016 = vmatprep.subr.mxu0 0.0
    %3017 = vmatpush1.msra.mxu0 0.0
    %3018 = vmatprep.subr.mxu0 0.0
    %3019 = vmatpush1.msra.mxu0 0.0
    %3020 = vmatprep.subr.mxu0 0.0
    %3021 = vmatpush1.msra.mxu0 0.0
    %3022 = vmatprep.subr.mxu0 0.0
    %3023 = vmatpush1.msra.mxu0 0.0
    %3024 = vmatprep.subr.mxu0 0.0
    %3025 = vmatpush1.msra.mxu0 0.0
    %3026 = vmatprep.subr.mxu0 0.0
    %3027 = vmatpush1.msra.mxu0 0.0
    %3028 = vmatprep.subr.mxu0 0.0
    %3029 = vmatpush1.msra.mxu0 0.0
    %3030 = vmatprep.subr.mxu0 0.0
    %3031 = vmatpush1.msra.mxu0 0.0
    %3032 = vmatprep.subr.mxu0 0.0
    %3033 = vmatpush1.msra.mxu0 0.0
    %3034 = vmatprep.subr.mxu0 0.0
    %3035 = vmatpush1.msra.mxu0 0.0
    %3036 = vmatprep.subr.mxu0 0.0
    %3037 = vmatpush1.msra.mxu0 0.0
    %3038 = vmatprep.subr.mxu0 0.0
    %3039 = vmatpush1.msra.mxu0 0.0
    %3040 = vmatprep.subr.mxu0 0.0
    %3041 = vmatpush1.msra.mxu0 0.0
    %3042 = vmatprep.subr.mxu0 0.0
    %3043 = vmatpush1.msra.mxu0 0.0
    %3044 = vmatprep.subr.mxu0 0.0
    %3045 = vmatpush1.msra.mxu0 0.0
    %3046 = vmatprep.subr.mxu0 0.0
    %3047 = vmatpush1.msra.mxu0 0.0
    %3048 = vmatprep.subr.mxu0 0.0
    %3049 = vmatpush1.msra.mxu0 0.0
    %3050 = vmatprep.subr.mxu0 0.0
    %3051 = vmatpush1.msra.mxu0 0.0
    %3052 = vmatprep.subr.mxu0 0.0
    %3053 = vmatpush1.msra.mxu0 0.0
    %3054 = vmatprep.subr.mxu0 0.0
    %3055 = vmatpush1.msra.mxu0 0.0
    %3056 = vmatprep.subr.mxu0 0.0
    %3057 = vmatpush1.msra.mxu0 0.0
    %3058 = vmatprep.subr.mxu0 0.0
    %3059 = vmatpush1.msra.mxu0 0.0
    %3060 = vmatprep.subr.mxu0 0.0
    %3061 = vmatpush1.msra.mxu0 0.0
    %3062 = vmatprep.subr.mxu0 0.0
    %3063 = vmatpush1.msra.mxu0 0.0
    %3064 = vmatprep.subr.mxu0 0.0
    %3065 = vmatpush1.msra.mxu0 0.0
    %3066 = vmatprep.subr.mxu0 0.0
    %3067 = vmatpush1.msra.mxu0 0.0
    %3068 = vmatprep.subr.mxu0 0.0
    %3069 = vmatpush1.msra.mxu0 0.0
    %3070 = vmatprep.mubr.f32.mxu0 0.0
    %3071 = vmatmul.mubr.f32.gmra.mrb[0].mxu0 %v3004
    %v3072 = vpop.f32.mrb[0].mxu0
    %v3073 = vadd.f32 %v3001, %v3072
    %v3074 = vpop.f32.mrb[0].mxu0
    %3075 = vdwg.mxu0
    %s3076 = scalar_lea.vmem %s5, 544
    %v3077 = vld [vmem:[%s3076] sm:$0xff]
    %v3078 = vld [vmem:[%s3076 + $0x8] sm:$0xff]
    %v3079 = vld [vmem:[%s3076 + $0x10] sm:$0xff]
    %v3080 = vld [vmem:[%s3076 + $0x18] sm:$0xff]
    %s3081 = scalar_lea.vmem [#allocation8], 17
    %v3082 = vld [vmem:[%s3081] sm:$0x1]
    %v3084 = vlaneseq
    %v3085 = vshrl.u32 %v3084, 7
    %v3086 = vsub.s32 0, %v3085
    %v3087 = vrot.slane %v3082, %v3086
    %v3090 = vsel %vm395, %v3073, 0
    %3092 = vmatprep.subr.mxu0 0.0
    %3093 = vmatpush1.msra.mxu0 %v3077
    %3094 = vmatprep.subr.mxu0 0.0
    %3095 = vmatpush1.msra.mxu0 %v3078
    %3096 = vmatprep.subr.mxu0 0.0
    %3097 = vmatpush1.msra.mxu0 %v3079
    %3098 = vmatprep.subr.mxu0 0.0
    %3099 = vmatpush1.msra.mxu0 %v3080
    %3100 = vmatprep.subr.mxu0 0.0
    %3101 = vmatpush1.msra.mxu0 0.0
    %3102 = vmatprep.subr.mxu0 0.0
    %3103 = vmatpush1.msra.mxu0 0.0
    %3104 = vmatprep.subr.mxu0 0.0
    %3105 = vmatpush1.msra.mxu0 0.0
    %3106 = vmatprep.subr.mxu0 0.0
    %3107 = vmatpush1.msra.mxu0 0.0
    %3108 = vmatprep.subr.mxu0 0.0
    %3109 = vmatpush1.msra.mxu0 0.0
    %3110 = vmatprep.subr.mxu0 0.0
    %3111 = vmatpush1.msra.mxu0 0.0
    %3112 = vmatprep.subr.mxu0 0.0
    %3113 = vmatpush1.msra.mxu0 0.0
    %3114 = vmatprep.subr.mxu0 0.0
    %3115 = vmatpush1.msra.mxu0 0.0
    %3116 = vmatprep.subr.mxu0 0.0
    %3117 = vmatpush1.msra.mxu0 0.0
    %3118 = vmatprep.subr.mxu0 0.0
    %3119 = vmatpush1.msra.mxu0 0.0
    %3120 = vmatprep.subr.mxu0 0.0
    %3121 = vmatpush1.msra.mxu0 0.0
    %3122 = vmatprep.subr.mxu0 0.0
    %3123 = vmatpush1.msra.mxu0 0.0
    %3124 = vmatprep.subr.mxu0 0.0
    %3125 = vmatpush1.msra.mxu0 0.0
    %3126 = vmatprep.subr.mxu0 0.0
    %3127 = vmatpush1.msra.mxu0 0.0
    %3128 = vmatprep.subr.mxu0 0.0
    %3129 = vmatpush1.msra.mxu0 0.0
    %3130 = vmatprep.subr.mxu0 0.0
    %3131 = vmatpush1.msra.mxu0 0.0
    %3132 = vmatprep.subr.mxu0 0.0
    %3133 = vmatpush1.msra.mxu0 0.0
    %3134 = vmatprep.subr.mxu0 0.0
    %3135 = vmatpush1.msra.mxu0 0.0
    %3136 = vmatprep.subr.mxu0 0.0
    %3137 = vmatpush1.msra.mxu0 0.0
    %3138 = vmatprep.subr.mxu0 0.0
    %3139 = vmatpush1.msra.mxu0 0.0
    %3140 = vmatprep.subr.mxu0 0.0
    %3141 = vmatpush1.msra.mxu0 0.0
    %3142 = vmatprep.subr.mxu0 0.0
    %3143 = vmatpush1.msra.mxu0 0.0
    %3144 = vmatprep.subr.mxu0 0.0
    %3145 = vmatpush1.msra.mxu0 0.0
    %3146 = vmatprep.subr.mxu0 0.0
    %3147 = vmatpush1.msra.mxu0 0.0
    %3148 = vmatprep.subr.mxu0 0.0
    %3149 = vmatpush1.msra.mxu0 0.0
    %3150 = vmatprep.subr.mxu0 0.0
    %3151 = vmatpush1.msra.mxu0 0.0
    %3152 = vmatprep.subr.mxu0 0.0
    %3153 = vmatpush1.msra.mxu0 0.0
    %3154 = vmatprep.subr.mxu0 0.0
    %3155 = vmatpush1.msra.mxu0 0.0
    %3156 = vmatprep.mubr.f32.mxu0 0.0
    %3157 = vmatmul.mubr.f32.gmra.mrb[0].mxu0 %v3090
    %v3158 = vpop.f32.mrb[0].mxu0
    %v3159 = vadd.f32 %v3087, %v3158
    %v3160 = vpop.f32.mrb[0].mxu0
    %3161 = vdwg.mxu0
    %s3162 = scalar_lea.vmem [#allocation7], 18
    %v3163 = vld [vmem:[%s3162] sm:$0x1]
    %s3164 = scalar_lea.vmem [#allocation7], 19
    %v3165 = vld [vmem:[%s3164] sm:$0x1]
    %v3167 = vlaneseq
    %v3168 = vshrl.u32 %v3167, 7
    %v3169 = vsub.s32 0, %v3168
    %v3170 = vrot.slane %v3163, %v3169
    %v3172 = vmul.f32 %v2975, %v3170
    %v3174 = vlaneseq
    %v3175 = vshrl.u32 %v3174, 7
    %v3176 = vsub.s32 0, %v3175
    %v3177 = vrot.slane %v3165, %v3176
    %v3179 = vadd.f32 %v3172, %v3177
    %s3180 = scalar_lea.vmem %s5, 576
    %v3181 = vld [vmem:[%s3180] sm:$0xff]
    %v3182 = vld [vmem:[%s3180 + $0x8] sm:$0xff]
    %v3183 = vld [vmem:[%s3180 + $0x10] sm:$0xff]
    %v3184 = vld [vmem:[%s3180 + $0x18] sm:$0xff]
    %s3185 = scalar_lea.vmem [#allocation8], 18
    %v3186 = vld [vmem:[%s3185] sm:$0x1]
    %v3188 = vlaneseq
    %v3189 = vshrl.u32 %v3188, 7
    %v3190 = vsub.s32 0, %v3189
    %v3191 = vrot.slane %v3186, %v3190
    %v3194 = vsel %vm395, %v3179, 0
    %3196 = vmatprep.subr.mxu0 0.0
    %3197 = vmatpush1.msra.mxu0 %v3181
    %3198 = vmatprep.subr.mxu0 0.0
    %3199 = vmatpush1.msra.mxu0 %v3182
    %3200 = vmatprep.subr.mxu0 0.0
    %3201 = vmatpush1.msra.mxu0 %v3183
    %3202 = vmatprep.subr.mxu0 0.0
    %3203 = vmatpush1.msra.mxu0 %v3184
    %3204 = vmatprep.subr.mxu0 0.0
    %3205 = vmatpush1.msra.mxu0 0.0
    %3206 = vmatprep.subr.mxu0 0.0
    %3207 = vmatpush1.msra.mxu0 0.0
    %3208 = vmatprep.subr.mxu0 0.0
    %3209 = vmatpush1.msra.mxu0 0.0
    %3210 = vmatprep.subr.mxu0 0.0
    %3211 = vmatpush1.msra.mxu0 0.0
    %3212 = vmatprep.subr.mxu0 0.0
    %3213 = vmatpush1.msra.mxu0 0.0
    %3214 = vmatprep.subr.mxu0 0.0
    %3215 = vmatpush1.msra.mxu0 0.0
    %3216 = vmatprep.subr.mxu0 0.0
    %3217 = vmatpush1.msra.mxu0 0.0
    %3218 = vmatprep.subr.mxu0 0.0
    %3219 = vmatpush1.msra.mxu0 0.0
    %3220 = vmatprep.subr.mxu0 0.0
    %3221 = vmatpush1.msra.mxu0 0.0
    %3222 = vmatprep.subr.mxu0 0.0
    %3223 = vmatpush1.msra.mxu0 0.0
    %3224 = vmatprep.subr.mxu0 0.0
    %3225 = vmatpush1.msra.mxu0 0.0
    %3226 = vmatprep.subr.mxu0 0.0
    %3227 = vmatpush1.msra.mxu0 0.0
    %3228 = vmatprep.subr.mxu0 0.0
    %3229 = vmatpush1.msra.mxu0 0.0
    %3230 = vmatprep.subr.mxu0 0.0
    %3231 = vmatpush1.msra.mxu0 0.0
    %3232 = vmatprep.subr.mxu0 0.0
    %3233 = vmatpush1.msra.mxu0 0.0
    %3234 = vmatprep.subr.mxu0 0.0
    %3235 = vmatpush1.msra.mxu0 0.0
    %3236 = vmatprep.subr.mxu0 0.0
    %3237 = vmatpush1.msra.mxu0 0.0
    %3238 = vmatprep.subr.mxu0 0.0
    %3239 = vmatpush1.msra.mxu0 0.0
    %3240 = vmatprep.subr.mxu0 0.0
    %3241 = vmatpush1.msra.mxu0 0.0
    %3242 = vmatprep.subr.mxu0 0.0
    %3243 = vmatpush1.msra.mxu0 0.0
    %3244 = vmatprep.subr.mxu0 0.0
    %3245 = vmatpush1.msra.mxu0 0.0
    %3246 = vmatprep.subr.mxu0 0.0
    %3247 = vmatpush1.msra.mxu0 0.0
    %3248 = vmatprep.subr.mxu0 0.0
    %3249 = vmatpush1.msra.mxu0 0.0
    %3250 = vmatprep.subr.mxu0 0.0
    %3251 = vmatpush1.msra.mxu0 0.0
    %3252 = vmatprep.subr.mxu0 0.0
    %3253 = vmatpush1.msra.mxu0 0.0
    %3254 = vmatprep.subr.mxu0 0.0
    %3255 = vmatpush1.msra.mxu0 0.0
    %3256 = vmatprep.subr.mxu0 0.0
    %3257 = vmatpush1.msra.mxu0 0.0
    %3258 = vmatprep.subr.mxu0 0.0
    %3259 = vmatpush1.msra.mxu0 0.0
    %3260 = vmatprep.mubr.f32.mxu0 0.0
    %3261 = vmatmul.mubr.f32.gmra.mrb[0].mxu0 %v3194
    %v3262 = vpop.f32.mrb[0].mxu0
    %v3263 = vadd.f32 %v3191, %v3262
    %v3264 = vpop.f32.mrb[0].mxu0
    %3265 = vdwg.mxu0
    %s3266 = scalar_lea.vmem %s5, 608
    %v3267 = vld [vmem:[%s3266] sm:$0xff]
    %v3268 = vld [vmem:[%s3266 + $0x8] sm:$0xff]
    %v3269 = vld [vmem:[%s3266 + $0x10] sm:$0xff]
    %v3270 = vld [vmem:[%s3266 + $0x18] sm:$0xff]
    %s3271 = scalar_lea.vmem [#allocation8], 19
    %v3272 = vld [vmem:[%s3271] sm:$0x1]
    %v3274 = vlaneseq
    %v3275 = vshrl.u32 %v3274, 7
    %v3276 = vsub.s32 0, %v3275
    %v3277 = vrot.slane %v3272, %v3276
    %v3280 = vsel %vm395, %v3263, 0
    %3282 = vmatprep.subr.mxu0 0.0
    %3283 = vmatpush1.msra.mxu0 %v3267
    %3284 = vmatprep.subr.mxu0 0.0
    %3285 = vmatpush1.msra.mxu0 %v3268
    %3286 = vmatprep.subr.mxu0 0.0
    %3287 = vmatpush1.msra.mxu0 %v3269
    %3288 = vmatprep.subr.mxu0 0.0
    %3289 = vmatpush1.msra.mxu0 %v3270
    %3290 = vmatprep.subr.mxu0 0.0
    %3291 = vmatpush1.msra.mxu0 0.0
    %3292 = vmatprep.subr.mxu0 0.0
    %3293 = vmatpush1.msra.mxu0 0.0
    %3294 = vmatprep.subr.mxu0 0.0
    %3295 = vmatpush1.msra.mxu0 0.0
    %3296 = vmatprep.subr.mxu0 0.0
    %3297 = vmatpush1.msra.mxu0 0.0
    %3298 = vmatprep.subr.mxu0 0.0
    %3299 = vmatpush1.msra.mxu0 0.0
    %3300 = vmatprep.subr.mxu0 0.0
    %3301 = vmatpush1.msra.mxu0 0.0
    %3302 = vmatprep.subr.mxu0 0.0
    %3303 = vmatpush1.msra.mxu0 0.0
    %3304 = vmatprep.subr.mxu0 0.0
    %3305 = vmatpush1.msra.mxu0 0.0
    %3306 = vmatprep.subr.mxu0 0.0
    %3307 = vmatpush1.msra.mxu0 0.0
    %3308 = vmatprep.subr.mxu0 0.0
    %3309 = vmatpush1.msra.mxu0 0.0
    %3310 = vmatprep.subr.mxu0 0.0
    %3311 = vmatpush1.msra.mxu0 0.0
    %3312 = vmatprep.subr.mxu0 0.0
    %3313 = vmatpush1.msra.mxu0 0.0
    %3314 = vmatprep.subr.mxu0 0.0
    %3315 = vmatpush1.msra.mxu0 0.0
    %3316 = vmatprep.subr.mxu0 0.0
    %3317 = vmatpush1.msra.mxu0 0.0
    %3318 = vmatprep.subr.mxu0 0.0
    %3319 = vmatpush1.msra.mxu0 0.0
    %3320 = vmatprep.subr.mxu0 0.0
    %3321 = vmatpush1.msra.mxu0 0.0
    %3322 = vmatprep.subr.mxu0 0.0
    %3323 = vmatpush1.msra.mxu0 0.0
    %3324 = vmatprep.subr.mxu0 0.0
    %3325 = vmatpush1.msra.mxu0 0.0
    %3326 = vmatprep.subr.mxu0 0.0
    %3327 = vmatpush1.msra.mxu0 0.0
    %3328 = vmatprep.subr.mxu0 0.0
    %3329 = vmatpush1.msra.mxu0 0.0
    %3330 = vmatprep.subr.mxu0 0.0
    %3331 = vmatpush1.msra.mxu0 0.0
    %3332 = vmatprep.subr.mxu0 0.0
    %3333 = vmatpush1.msra.mxu0 0.0
    %3334 = vmatprep.subr.mxu0 0.0
    %3335 = vmatpush1.msra.mxu0 0.0
    %3336 = vmatprep.subr.mxu0 0.0
    %3337 = vmatpush1.msra.mxu0 0.0
    %3338 = vmatprep.subr.mxu0 0.0
    %3339 = vmatpush1.msra.mxu0 0.0
    %3340 = vmatprep.subr.mxu0 0.0
    %3341 = vmatpush1.msra.mxu0 0.0
    %3342 = vmatprep.subr.mxu0 0.0
    %3343 = vmatpush1.msra.mxu0 0.0
    %3344 = vmatprep.subr.mxu0 0.0
    %3345 = vmatpush1.msra.mxu0 0.0
    %3346 = vmatprep.mubr.f32.mxu0 0.0
    %3347 = vmatmul.mubr.f32.gmra.mrb[0].mxu0 %v3280
    %v3348 = vpop.f32.mrb[0].mxu0
    %v3349 = vadd.f32 %v3277, %v3348
    %v3350 = vpop.f32.mrb[0].mxu0
    %3351 = vdwg.mxu0
    %3352 = vset.pattern.permute.xlu0 4
    %3353 = vperm.xlu0 %3352, %v749
    %v3354 = vpop.permute.xlu0 %3353
    %v3356 = vmul.f32 %v3354, %v3159
    %v3357 = vadd.f32 %v2954, %v3356
    %3358 = vset.pattern.permute.xlu0 4
    %3359 = vperm.xlu0 %3358, %v761
    %v3360 = vpop.permute.xlu0 %3359
    %v3362 = vmul.f32 %v3360, %v3349
    %v3363 = vadd.f32 %v3357, %v3362
    %v3364 = vsel %vm353, %v3363, 0.0
    %3365 = vadd.xlane.f32.xlu0 %v3364
    %v3366 = vpop.xlane.xlu0 %3365
    %v3367 = vmul.f32 %v3366, %v357
    %v3368 = vmul.f32 %v3363, %v3363
    %v3369 = vsel %vm353, %v3368, 0.0
    %3370 = vadd.xlane.f32.xlu0 %v3369
    %v3371 = vpop.xlane.xlu0 %3370
    %v3372 = vmul.f32 %v3371, %v357
    %v3373 = vmul.f32 %v3367, %v3367
    %v3374 = vsub.f32 %v3372, %v3373
    %v3375 = vsub.f32 %v3363, %v3367
    %v3376 = vadd.f32 %v3374, 1e-05
    %v3377 = vrsqrt.pop %v3376
    %v3378 = vmul.f32 %v3375, %v3377
    %v3379 = vmul.f32 %v3378, %v3170
    %v3380 = vadd.f32 %v3379, %v3177
    %s3381 = scalar_lea.vmem %s7, 128
    %v3382 = vld [vmem:[%s3381] sm:$0xff]
    %v3383 = vld [vmem:[%s3381 + $0x8] sm:$0xff]
    %v3384 = vld [vmem:[%s3381 + $0x10] sm:$0xff]
    %v3385 = vld [vmem:[%s3381 + $0x18] sm:$0xff]
    %s3386 = scalar_lea.vmem [#allocation10], 4
    %v3387 = vld [vmem:[%s3386] sm:$0x1]
    %v3389 = vlaneseq
    %v3390 = vshrl.u32 %v3389, 7
    %v3391 = vsub.s32 0, %v3390
    %v3392 = vrot.slane %v3387, %v3391
    %v3395 = vsel %vm395, %v3380, 0
    %3397 = vmatprep.subr.mxu0 0.0
    %3398 = vmatpush1.msra.mxu0 %v3382
    %3399 = vmatprep.subr.mxu0 0.0
    %3400 = vmatpush1.msra.mxu0 %v3383
    %3401 = vmatprep.subr.mxu0 0.0
    %3402 = vmatpush1.msra.mxu0 %v3384
    %3403 = vmatprep.subr.mxu0 0.0
    %3404 = vmatpush1.msra.mxu0 %v3385
    %3405 = vmatprep.subr.mxu0 0.0
    %3406 = vmatpush1.msra.mxu0 0.0
    %3407 = vmatprep.subr.mxu0 0.0
    %3408 = vmatpush1.msra.mxu0 0.0
    %3409 = vmatprep.subr.mxu0 0.0
    %3410 = vmatpush1.msra.mxu0 0.0
    %3411 = vmatprep.subr.mxu0 0.0
    %3412 = vmatpush1.msra.mxu0 0.0
    %3413 = vmatprep.subr.mxu0 0.0
    %3414 = vmatpush1.msra.mxu0 0.0
    %3415 = vmatprep.subr.mxu0 0.0
    %3416 = vmatpush1.msra.mxu0 0.0
    %3417 = vmatprep.subr.mxu0 0.0
    %3418 = vmatpush1.msra.mxu0 0.0
    %3419 = vmatprep.subr.mxu0 0.0
    %3420 = vmatpush1.msra.mxu0 0.0
    %3421 = vmatprep.subr.mxu0 0.0
    %3422 = vmatpush1.msra.mxu0 0.0
    %3423 = vmatprep.subr.mxu0 0.0
    %3424 = vmatpush1.msra.mxu0 0.0
    %3425 = vmatprep.subr.mxu0 0.0
    %3426 = vmatpush1.msra.mxu0 0.0
    %3427 = vmatprep.subr.mxu0 0.0
    %3428 = vmatpush1.msra.mxu0 0.0
    %3429 = vmatprep.subr.mxu0 0.0
    %3430 = vmatpush1.msra.mxu0 0.0
    %3431 = vmatprep.subr.mxu0 0.0
    %3432 = vmatpush1.msra.mxu0 0.0
    %3433 = vmatprep.subr.mxu0 0.0
    %3434 = vmatpush1.msra.mxu0 0.0
    %3435 = vmatprep.subr.mxu0 0.0
    %3436 = vmatpush1.msra.mxu0 0.0
    %3437 = vmatprep.subr.mxu0 0.0
    %3438 = vmatpush1.msra.mxu0 0.0
    %3439 = vmatprep.subr.mxu0 0.0
    %3440 = vmatpush1.msra.mxu0 0.0
    %3441 = vmatprep.subr.mxu0 0.0
    %3442 = vmatpush1.msra.mxu0 0.0
    %3443 = vmatprep.subr.mxu0 0.0
    %3444 = vmatpush1.msra.mxu0 0.0
    %3445 = vmatprep.subr.mxu0 0.0
    %3446 = vmatpush1.msra.mxu0 0.0
    %3447 = vmatprep.subr.mxu0 0.0
    %3448 = vmatpush1.msra.mxu0 0.0
    %3449 = vmatprep.subr.mxu0 0.0
    %3450 = vmatpush1.msra.mxu0 0.0
    %3451 = vmatprep.subr.mxu0 0.0
    %3452 = vmatpush1.msra.mxu0 0.0
    %3453 = vmatprep.subr.mxu0 0.0
    %3454 = vmatpush1.msra.mxu0 0.0
    %3455 = vmatprep.subr.mxu0 0.0
    %3456 = vmatpush1.msra.mxu0 0.0
    %3457 = vmatprep.subr.mxu0 0.0
    %3458 = vmatpush1.msra.mxu0 0.0
    %3459 = vmatprep.subr.mxu0 0.0
    %3460 = vmatpush1.msra.mxu0 0.0
    %3461 = vmatprep.mubr.f32.mxu0 0.0
    %3462 = vmatmul.mubr.f32.gmra.mrb[0].mxu0 %v3395
    %v3463 = vpop.f32.mrb[0].mxu0
    %v3464 = vadd.f32 %v3392, %v3463
    %v3465 = vpop.f32.mrb[0].mxu0
    %3466 = vdwg.mxu0
    %v3467 = vmax.f32 %v3464, 0.0
    %s3468 = scalar_lea.vmem %s9, 512
    %v3469 = vld [vmem:[%s3468] sm:$0xff]
    %v3470 = vld [vmem:[%s3468 + $0x8] sm:$0xff]
    %v3471 = vld [vmem:[%s3468 + $0x10] sm:$0xff]
    %v3472 = vld [vmem:[%s3468 + $0x18] sm:$0xff]
    %v3473 = vld [vmem:[%s3468 + $0x20] sm:$0xff]
    %v3474 = vld [vmem:[%s3468 + $0x28] sm:$0xff]
    %v3475 = vld [vmem:[%s3468 + $0x30] sm:$0xff]
    %v3476 = vld [vmem:[%s3468 + $0x38] sm:$0xff]
    %v3477 = vld [vmem:[%s3468 + $0x40] sm:$0xff]
    %v3478 = vld [vmem:[%s3468 + $0x48] sm:$0xff]
    %v3479 = vld [vmem:[%s3468 + $0x50] sm:$0xff]
    %v3480 = vld [vmem:[%s3468 + $0x58] sm:$0xff]
    %v3481 = vld [vmem:[%s3468 + $0x60] sm:$0xff]
    %v3482 = vld [vmem:[%s3468 + $0x68] sm:$0xff]
    %v3483 = vld [vmem:[%s3468 + $0x70] sm:$0xff]
    %v3484 = vld [vmem:[%s3468 + $0x78] sm:$0xff]
    %3485 = vmatprep.subr.mxu0 0.0
    %3486 = vmatpush1.msra.mxu0 %v3469
    %3487 = vmatprep.subr.mxu0 0.0
    %3488 = vmatpush1.msra.mxu0 %v3470
    %3489 = vmatprep.subr.mxu0 0.0
    %3490 = vmatpush1.msra.mxu0 %v3471
    %3491 = vmatprep.subr.mxu0 0.0
    %3492 = vmatpush1.msra.mxu0 %v3472
    %3493 = vmatprep.subr.mxu0 0.0
    %3494 = vmatpush1.msra.mxu0 %v3473
    %3495 = vmatprep.subr.mxu0 0.0
    %3496 = vmatpush1.msra.mxu0 %v3474
    %3497 = vmatprep.subr.mxu0 0.0
    %3498 = vmatpush1.msra.mxu0 %v3475
    %3499 = vmatprep.subr.mxu0 0.0
    %3500 = vmatpush1.msra.mxu0 %v3476
    %3501 = vmatprep.subr.mxu0 0.0
    %3502 = vmatpush1.msra.mxu0 %v3477
    %3503 = vmatprep.subr.mxu0 0.0
    %3504 = vmatpush1.msra.mxu0 %v3478
    %3505 = vmatprep.subr.mxu0 0.0
    %3506 = vmatpush1.msra.mxu0 %v3479
    %3507 = vmatprep.subr.mxu0 0.0
    %3508 = vmatpush1.msra.mxu0 %v3480
    %3509 = vmatprep.subr.mxu0 0.0
    %3510 = vmatpush1.msra.mxu0 %v3481
    %3511 = vmatprep.subr.mxu0 0.0
    %3512 = vmatpush1.msra.mxu0 %v3482
    %3513 = vmatprep.subr.mxu0 0.0
    %3514 = vmatpush1.msra.mxu0 %v3483
    %3515 = vmatprep.subr.mxu0 0.0
    %3516 = vmatpush1.msra.mxu0 %v3484
    %3517 = vmatprep.subr.mxu0 0.0
    %3518 = vmatpush1.msra.mxu0 0.0
    %3519 = vmatprep.subr.mxu0 0.0
    %3520 = vmatpush1.msra.mxu0 0.0
    %3521 = vmatprep.subr.mxu0 0.0
    %3522 = vmatpush1.msra.mxu0 0.0
    %3523 = vmatprep.subr.mxu0 0.0
    %3524 = vmatpush1.msra.mxu0 0.0
    %3525 = vmatprep.subr.mxu0 0.0
    %3526 = vmatpush1.msra.mxu0 0.0
    %3527 = vmatprep.subr.mxu0 0.0
    %3528 = vmatpush1.msra.mxu0 0.0
    %3529 = vmatprep.subr.mxu0 0.0
    %3530 = vmatpush1.msra.mxu0 0.0
    %3531 = vmatprep.subr.mxu0 0.0
    %3532 = vmatpush1.msra.mxu0 0.0
    %3533 = vmatprep.subr.mxu0 0.0
    %3534 = vmatpush1.msra.mxu0 0.0
    %3535 = vmatprep.subr.mxu0 0.0
    %3536 = vmatpush1.msra.mxu0 0.0
    %3537 = vmatprep.subr.mxu0 0.0
    %3538 = vmatpush1.msra.mxu0 0.0
    %3539 = vmatprep.subr.mxu0 0.0
    %3540 = vmatpush1.msra.mxu0 0.0
    %3541 = vmatprep.subr.mxu0 0.0
    %3542 = vmatpush1.msra.mxu0 0.0
    %3543 = vmatprep.subr.mxu0 0.0
    %3544 = vmatpush1.msra.mxu0 0.0
    %3545 = vmatprep.subr.mxu0 0.0
    %3546 = vmatpush1.msra.mxu0 0.0
    %3547 = vmatprep.subr.mxu0 0.0
    %3548 = vmatpush1.msra.mxu0 0.0
    %3549 = vmatprep.mubr.f32.mxu0 0.0
    %3550 = vmatmul.mubr.f32.gmra.mrb[0].mxu0 %v3467
    %v3551 = vpop.f32.mrb[0].mxu0
    %v3552 = vadd.f32 0.0, %v3551
    %v3553 = vpop.f32.mrb[0].mxu0
    %3554 = vdwg.mxu0
    %v3555 = vadd.f32 %v3363, %v3552
    %s3556 = scalar_lea.vmem [#allocation11], 4
    %v3557 = vld [vmem:[%s3556] sm:$0x1]
    %v3559 = vlaneseq
    %v3560 = vshrl.u32 %v3559, 7
    %v3561 = vsub.s32 0, %v3560
    %v3562 = vrot.slane %v3557, %v3561
    %v3564 = vadd.f32 %v3555, %v3562
    %s3565 = scalar_lea.vmem [#allocation7], 20
    %v3566 = vld [vmem:[%s3565] sm:$0x1]
    %s3567 = scalar_lea.vmem [#allocation7], 21
    %v3568 = vld [vmem:[%s3567] sm:$0x1]
    %v3569 = vsel %vm353, %v3564, 0.0
    %3570 = vadd.xlane.f32.xlu0 %v3569
    %v3571 = vpop.xlane.xlu0 %3570
    %v3572 = vmul.f32 %v3571, %v357
    %v3573 = vmul.f32 %v3564, %v3564
    %v3574 = vsel %vm353, %v3573, 0.0
    %3575 = vadd.xlane.f32.xlu0 %v3574
    %v3576 = vpop.xlane.xlu0 %3575
    %v3577 = vmul.f32 %v3576, %v357
    %v3578 = vmul.f32 %v3572, %v3572
    %v3579 = vsub.f32 %v3577, %v3578
    %v3580 = vsub.f32 %v3564, %v3572
    %v3581 = vadd.f32 %v3579, 1e-05
    %v3582 = vrsqrt.pop %v3581
    %v3583 = vmul.f32 %v3580, %v3582
    %v3585 = vlaneseq
    %v3586 = vshrl.u32 %v3585, 7
    %v3587 = vsub.s32 0, %v3586
    %v3588 = vrot.slane %v3566, %v3587
    %v3590 = vmul.f32 %v3583, %v3588
    %v3592 = vlaneseq
    %v3593 = vshrl.u32 %v3592, 7
    %v3594 = vsub.s32 0, %v3593
    %v3595 = vrot.slane %v3568, %v3594
    %v3597 = vadd.f32 %v3590, %v3595
    %s3598 = scalar_lea.vmem %s5, 640
    %v3599 = vld [vmem:[%s3598] sm:$0xff]
    %v3600 = vld [vmem:[%s3598 + $0x8] sm:$0xff]
    %v3601 = vld [vmem:[%s3598 + $0x10] sm:$0xff]
    %v3602 = vld [vmem:[%s3598 + $0x18] sm:$0xff]
    %s3603 = scalar_lea.vmem [#allocation8], 20
    %v3604 = vld [vmem:[%s3603] sm:$0x1]
    %v3606 = vlaneseq
    %v3607 = vshrl.u32 %v3606, 7
    %v3608 = vsub.s32 0, %v3607
    %v3609 = vrot.slane %v3604, %v3608
    %v3612 = vsel %vm395, %v3597, 0
    %3614 = vmatprep.subr.mxu0 0.0
    %3615 = vmatpush1.msra.mxu0 %v3599
    %3616 = vmatprep.subr.mxu0 0.0
    %3617 = vmatpush1.msra.mxu0 %v3600
    %3618 = vmatprep.subr.mxu0 0.0
    %3619 = vmatpush1.msra.mxu0 %v3601
    %3620 = vmatprep.subr.mxu0 0.0
    %3621 = vmatpush1.msra.mxu0 %v3602
    %3622 = vmatprep.subr.mxu0 0.0
    %3623 = vmatpush1.msra.mxu0 0.0
    %3624 = vmatprep.subr.mxu0 0.0
    %3625 = vmatpush1.msra.mxu0 0.0
    %3626 = vmatprep.subr.mxu0 0.0
    %3627 = vmatpush1.msra.mxu0 0.0
    %3628 = vmatprep.subr.mxu0 0.0
    %3629 = vmatpush1.msra.mxu0 0.0
    %3630 = vmatprep.subr.mxu0 0.0
    %3631 = vmatpush1.msra.mxu0 0.0
    %3632 = vmatprep.subr.mxu0 0.0
    %3633 = vmatpush1.msra.mxu0 0.0
    %3634 = vmatprep.subr.mxu0 0.0
    %3635 = vmatpush1.msra.mxu0 0.0
    %3636 = vmatprep.subr.mxu0 0.0
    %3637 = vmatpush1.msra.mxu0 0.0
    %3638 = vmatprep.subr.mxu0 0.0
    %3639 = vmatpush1.msra.mxu0 0.0
    %3640 = vmatprep.subr.mxu0 0.0
    %3641 = vmatpush1.msra.mxu0 0.0
    %3642 = vmatprep.subr.mxu0 0.0
    %3643 = vmatpush1.msra.mxu0 0.0
    %3644 = vmatprep.subr.mxu0 0.0
    %3645 = vmatpush1.msra.mxu0 0.0
    %3646 = vmatprep.subr.mxu0 0.0
    %3647 = vmatpush1.msra.mxu0 0.0
    %3648 = vmatprep.subr.mxu0 0.0
    %3649 = vmatpush1.msra.mxu0 0.0
    %3650 = vmatprep.subr.mxu0 0.0
    %3651 = vmatpush1.msra.mxu0 0.0
    %3652 = vmatprep.subr.mxu0 0.0
    %3653 = vmatpush1.msra.mxu0 0.0
    %3654 = vmatprep.subr.mxu0 0.0
    %3655 = vmatpush1.msra.mxu0 0.0
    %3656 = vmatprep.subr.mxu0 0.0
    %3657 = vmatpush1.msra.mxu0 0.0
    %3658 = vmatprep.subr.mxu0 0.0
    %3659 = vmatpush1.msra.mxu0 0.0
    %3660 = vmatprep.subr.mxu0 0.0
    %3661 = vmatpush1.msra.mxu0 0.0
    %3662 = vmatprep.subr.mxu0 0.0
    %3663 = vmatpush1.msra.mxu0 0.0
    %3664 = vmatprep.subr.mxu0 0.0
    %3665 = vmatpush1.msra.mxu0 0.0
    %3666 = vmatprep.subr.mxu0 0.0
    %3667 = vmatpush1.msra.mxu0 0.0
    %3668 = vmatprep.subr.mxu0 0.0
    %3669 = vmatpush1.msra.mxu0 0.0
    %3670 = vmatprep.subr.mxu0 0.0
    %3671 = vmatpush1.msra.mxu0 0.0
    %3672 = vmatprep.subr.mxu0 0.0
    %3673 = vmatpush1.msra.mxu0 0.0
    %3674 = vmatprep.subr.mxu0 0.0
    %3675 = vmatpush1.msra.mxu0 0.0
    %3676 = vmatprep.subr.mxu0 0.0
    %3677 = vmatpush1.msra.mxu0 0.0
    %3678 = vmatprep.mubr.f32.mxu0 0.0
    %3679 = vmatmul.mubr.f32.gmra.mrb[0].mxu0 %v3612
    %v3680 = vpop.f32.mrb[0].mxu0
    %v3681 = vadd.f32 %v3609, %v3680
    %v3682 = vpop.f32.mrb[0].mxu0
    %3683 = vdwg.mxu0
    %s3684 = scalar_lea.vmem %s5, 672
    %v3685 = vld [vmem:[%s3684] sm:$0xff]
    %v3686 = vld [vmem:[%s3684 + $0x8] sm:$0xff]
    %v3687 = vld [vmem:[%s3684 + $0x10] sm:$0xff]
    %v3688 = vld [vmem:[%s3684 + $0x18] sm:$0xff]
    %s3689 = scalar_lea.vmem [#allocation8], 21
    %v3690 = vld [vmem:[%s3689] sm:$0x1]
    %v3692 = vlaneseq
    %v3693 = vshrl.u32 %v3692, 7
    %v3694 = vsub.s32 0, %v3693
    %v3695 = vrot.slane %v3690, %v3694
    %v3698 = vsel %vm395, %v3681, 0
    %3700 = vmatprep.subr.mxu0 0.0
    %3701 = vmatpush1.msra.mxu0 %v3685
    %3702 = vmatprep.subr.mxu0 0.0
    %3703 = vmatpush1.msra.mxu0 %v3686
    %3704 = vmatprep.subr.mxu0 0.0
    %3705 = vmatpush1.msra.mxu0 %v3687
    %3706 = vmatprep.subr.mxu0 0.0
    %3707 = vmatpush1.msra.mxu0 %v3688
    %3708 = vmatprep.subr.mxu0 0.0
    %3709 = vmatpush1.msra.mxu0 0.0
    %3710 = vmatprep.subr.mxu0 0.0
    %3711 = vmatpush1.msra.mxu0 0.0
    %3712 = vmatprep.subr.mxu0 0.0
    %3713 = vmatpush1.msra.mxu0 0.0
    %3714 = vmatprep.subr.mxu0 0.0
    %3715 = vmatpush1.msra.mxu0 0.0
    %3716 = vmatprep.subr.mxu0 0.0
    %3717 = vmatpush1.msra.mxu0 0.0
    %3718 = vmatprep.subr.mxu0 0.0
    %3719 = vmatpush1.msra.mxu0 0.0
    %3720 = vmatprep.subr.mxu0 0.0
    %3721 = vmatpush1.msra.mxu0 0.0
    %3722 = vmatprep.subr.mxu0 0.0
    %3723 = vmatpush1.msra.mxu0 0.0
    %3724 = vmatprep.subr.mxu0 0.0
    %3725 = vmatpush1.msra.mxu0 0.0
    %3726 = vmatprep.subr.mxu0 0.0
    %3727 = vmatpush1.msra.mxu0 0.0
    %3728 = vmatprep.subr.mxu0 0.0
    %3729 = vmatpush1.msra.mxu0 0.0
    %3730 = vmatprep.subr.mxu0 0.0
    %3731 = vmatpush1.msra.mxu0 0.0
    %3732 = vmatprep.subr.mxu0 0.0
    %3733 = vmatpush1.msra.mxu0 0.0
    %3734 = vmatprep.subr.mxu0 0.0
    %3735 = vmatpush1.msra.mxu0 0.0
    %3736 = vmatprep.subr.mxu0 0.0
    %3737 = vmatpush1.msra.mxu0 0.0
    %3738 = vmatprep.subr.mxu0 0.0
    %3739 = vmatpush1.msra.mxu0 0.0
    %3740 = vmatprep.subr.mxu0 0.0
    %3741 = vmatpush1.msra.mxu0 0.0
    %3742 = vmatprep.subr.mxu0 0.0
    %3743 = vmatpush1.msra.mxu0 0.0
    %3744 = vmatprep.subr.mxu0 0.0
    %3745 = vmatpush1.msra.mxu0 0.0
    %3746 = vmatprep.subr.mxu0 0.0
    %3747 = vmatpush1.msra.mxu0 0.0
    %3748 = vmatprep.subr.mxu0 0.0
    %3749 = vmatpush1.msra.mxu0 0.0
    %3750 = vmatprep.subr.mxu0 0.0
    %3751 = vmatpush1.msra.mxu0 0.0
    %3752 = vmatprep.subr.mxu0 0.0
    %3753 = vmatpush1.msra.mxu0 0.0
    %3754 = vmatprep.subr.mxu0 0.0
    %3755 = vmatpush1.msra.mxu0 0.0
    %3756 = vmatprep.subr.mxu0 0.0
    %3757 = vmatpush1.msra.mxu0 0.0
    %3758 = vmatprep.subr.mxu0 0.0
    %3759 = vmatpush1.msra.mxu0 0.0
    %3760 = vmatprep.subr.mxu0 0.0
    %3761 = vmatpush1.msra.mxu0 0.0
    %3762 = vmatprep.subr.mxu0 0.0
    %3763 = vmatpush1.msra.mxu0 0.0
    %3764 = vmatprep.mubr.f32.mxu0 0.0
    %3765 = vmatmul.mubr.f32.gmra.mrb[0].mxu0 %v3698
    %v3766 = vpop.f32.mrb[0].mxu0
    %v3767 = vadd.f32 %v3695, %v3766
    %v3768 = vpop.f32.mrb[0].mxu0
    %3769 = vdwg.mxu0
    %s3770 = scalar_lea.vmem [#allocation7], 22
    %v3771 = vld [vmem:[%s3770] sm:$0x1]
    %s3772 = scalar_lea.vmem [#allocation7], 23
    %v3773 = vld [vmem:[%s3772] sm:$0x1]
    %v3775 = vlaneseq
    %v3776 = vshrl.u32 %v3775, 7
    %v3777 = vsub.s32 0, %v3776
    %v3778 = vrot.slane %v3771, %v3777
    %v3780 = vmul.f32 %v3583, %v3778
    %v3782 = vlaneseq
    %v3783 = vshrl.u32 %v3782, 7
    %v3784 = vsub.s32 0, %v3783
    %v3785 = vrot.slane %v3773, %v3784
    %v3787 = vadd.f32 %v3780, %v3785
    %s3788 = scalar_lea.vmem %s5, 704
    %v3789 = vld [vmem:[%s3788] sm:$0xff]
    %v3790 = vld [vmem:[%s3788 + $0x8] sm:$0xff]
    %v3791 = vld [vmem:[%s3788 + $0x10] sm:$0xff]
    %v3792 = vld [vmem:[%s3788 + $0x18] sm:$0xff]
    %s3793 = scalar_lea.vmem [#allocation8], 22
    %v3794 = vld [vmem:[%s3793] sm:$0x1]
    %v3796 = vlaneseq
    %v3797 = vshrl.u32 %v3796, 7
    %v3798 = vsub.s32 0, %v3797
    %v3799 = vrot.slane %v3794, %v3798
    %v3802 = vsel %vm395, %v3787, 0
    %3804 = vmatprep.subr.mxu0 0.0
    %3805 = vmatpush1.msra.mxu0 %v3789
    %3806 = vmatprep.subr.mxu0 0.0
    %3807 = vmatpush1.msra.mxu0 %v3790
    %3808 = vmatprep.subr.mxu0 0.0
    %3809 = vmatpush1.msra.mxu0 %v3791
    %3810 = vmatprep.subr.mxu0 0.0
    %3811 = vmatpush1.msra.mxu0 %v3792
    %3812 = vmatprep.subr.mxu0 0.0
    %3813 = vmatpush1.msra.mxu0 0.0
    %3814 = vmatprep.subr.mxu0 0.0
    %3815 = vmatpush1.msra.mxu0 0.0
    %3816 = vmatprep.subr.mxu0 0.0
    %3817 = vmatpush1.msra.mxu0 0.0
    %3818 = vmatprep.subr.mxu0 0.0
    %3819 = vmatpush1.msra.mxu0 0.0
    %3820 = vmatprep.subr.mxu0 0.0
    %3821 = vmatpush1.msra.mxu0 0.0
    %3822 = vmatprep.subr.mxu0 0.0
    %3823 = vmatpush1.msra.mxu0 0.0
    %3824 = vmatprep.subr.mxu0 0.0
    %3825 = vmatpush1.msra.mxu0 0.0
    %3826 = vmatprep.subr.mxu0 0.0
    %3827 = vmatpush1.msra.mxu0 0.0
    %3828 = vmatprep.subr.mxu0 0.0
    %3829 = vmatpush1.msra.mxu0 0.0
    %3830 = vmatprep.subr.mxu0 0.0
    %3831 = vmatpush1.msra.mxu0 0.0
    %3832 = vmatprep.subr.mxu0 0.0
    %3833 = vmatpush1.msra.mxu0 0.0
    %3834 = vmatprep.subr.mxu0 0.0
    %3835 = vmatpush1.msra.mxu0 0.0
    %3836 = vmatprep.subr.mxu0 0.0
    %3837 = vmatpush1.msra.mxu0 0.0
    %3838 = vmatprep.subr.mxu0 0.0
    %3839 = vmatpush1.msra.mxu0 0.0
    %3840 = vmatprep.subr.mxu0 0.0
    %3841 = vmatpush1.msra.mxu0 0.0
    %3842 = vmatprep.subr.mxu0 0.0
    %3843 = vmatpush1.msra.mxu0 0.0
    %3844 = vmatprep.subr.mxu0 0.0
    %3845 = vmatpush1.msra.mxu0 0.0
    %3846 = vmatprep.subr.mxu0 0.0
    %3847 = vmatpush1.msra.mxu0 0.0
    %3848 = vmatprep.subr.mxu0 0.0
    %3849 = vmatpush1.msra.mxu0 0.0
    %3850 = vmatprep.subr.mxu0 0.0
    %3851 = vmatpush1.msra.mxu0 0.0
    %3852 = vmatprep.subr.mxu0 0.0
    %3853 = vmatpush1.msra.mxu0 0.0
    %3854 = vmatprep.subr.mxu0 0.0
    %3855 = vmatpush1.msra.mxu0 0.0
    %3856 = vmatprep.subr.mxu0 0.0
    %3857 = vmatpush1.msra.mxu0 0.0
    %3858 = vmatprep.subr.mxu0 0.0
    %3859 = vmatpush1.msra.mxu0 0.0
    %3860 = vmatprep.subr.mxu0 0.0
    %3861 = vmatpush1.msra.mxu0 0.0
    %3862 = vmatprep.subr.mxu0 0.0
    %3863 = vmatpush1.msra.mxu0 0.0
    %3864 = vmatprep.subr.mxu0 0.0
    %3865 = vmatpush1.msra.mxu0 0.0
    %3866 = vmatprep.subr.mxu0 0.0
    %3867 = vmatpush1.msra.mxu0 0.0
    %3868 = vmatprep.mubr.f32.mxu0 0.0
    %3869 = vmatmul.mubr.f32.gmra.mrb[0].mxu0 %v3802
    %v3870 = vpop.f32.mrb[0].mxu0
    %v3871 = vadd.f32 %v3799, %v3870
    %v3872 = vpop.f32.mrb[0].mxu0
    %3873 = vdwg.mxu0
    %s3874 = scalar_lea.vmem %s5, 736
    %v3875 = vld [vmem:[%s3874] sm:$0xff]
    %v3876 = vld [vmem:[%s3874 + $0x8] sm:$0xff]
    %v3877 = vld [vmem:[%s3874 + $0x10] sm:$0xff]
    %v3878 = vld [vmem:[%s3874 + $0x18] sm:$0xff]
    %s3879 = scalar_lea.vmem [#allocation8], 23
    %v3880 = vld [vmem:[%s3879] sm:$0x1]
    %v3882 = vlaneseq
    %v3883 = vshrl.u32 %v3882, 7
    %v3884 = vsub.s32 0, %v3883
    %v3885 = vrot.slane %v3880, %v3884
    %v3888 = vsel %vm395, %v3871, 0
    %3890 = vmatprep.subr.mxu0 0.0
    %3891 = vmatpush1.msra.mxu0 %v3875
    %3892 = vmatprep.subr.mxu0 0.0
    %3893 = vmatpush1.msra.mxu0 %v3876
    %3894 = vmatprep.subr.mxu0 0.0
    %3895 = vmatpush1.msra.mxu0 %v3877
    %3896 = vmatprep.subr.mxu0 0.0
    %3897 = vmatpush1.msra.mxu0 %v3878
    %3898 = vmatprep.subr.mxu0 0.0
    %3899 = vmatpush1.msra.mxu0 0.0
    %3900 = vmatprep.subr.mxu0 0.0
    %3901 = vmatpush1.msra.mxu0 0.0
    %3902 = vmatprep.subr.mxu0 0.0
    %3903 = vmatpush1.msra.mxu0 0.0
    %3904 = vmatprep.subr.mxu0 0.0
    %3905 = vmatpush1.msra.mxu0 0.0
    %3906 = vmatprep.subr.mxu0 0.0
    %3907 = vmatpush1.msra.mxu0 0.0
    %3908 = vmatprep.subr.mxu0 0.0
    %3909 = vmatpush1.msra.mxu0 0.0
    %3910 = vmatprep.subr.mxu0 0.0
    %3911 = vmatpush1.msra.mxu0 0.0
    %3912 = vmatprep.subr.mxu0 0.0
    %3913 = vmatpush1.msra.mxu0 0.0
    %3914 = vmatprep.subr.mxu0 0.0
    %3915 = vmatpush1.msra.mxu0 0.0
    %3916 = vmatprep.subr.mxu0 0.0
    %3917 = vmatpush1.msra.mxu0 0.0
    %3918 = vmatprep.subr.mxu0 0.0
    %3919 = vmatpush1.msra.mxu0 0.0
    %3920 = vmatprep.subr.mxu0 0.0
    %3921 = vmatpush1.msra.mxu0 0.0
    %3922 = vmatprep.subr.mxu0 0.0
    %3923 = vmatpush1.msra.mxu0 0.0
    %3924 = vmatprep.subr.mxu0 0.0
    %3925 = vmatpush1.msra.mxu0 0.0
    %3926 = vmatprep.subr.mxu0 0.0
    %3927 = vmatpush1.msra.mxu0 0.0
    %3928 = vmatprep.subr.mxu0 0.0
    %3929 = vmatpush1.msra.mxu0 0.0
    %3930 = vmatprep.subr.mxu0 0.0
    %3931 = vmatpush1.msra.mxu0 0.0
    %3932 = vmatprep.subr.mxu0 0.0
    %3933 = vmatpush1.msra.mxu0 0.0
    %3934 = vmatprep.subr.mxu0 0.0
    %3935 = vmatpush1.msra.mxu0 0.0
    %3936 = vmatprep.subr.mxu0 0.0
    %3937 = vmatpush1.msra.mxu0 0.0
    %3938 = vmatprep.subr.mxu0 0.0
    %3939 = vmatpush1.msra.mxu0 0.0
    %3940 = vmatprep.subr.mxu0 0.0
    %3941 = vmatpush1.msra.mxu0 0.0
    %3942 = vmatprep.subr.mxu0 0.0
    %3943 = vmatpush1.msra.mxu0 0.0
    %3944 = vmatprep.subr.mxu0 0.0
    %3945 = vmatpush1.msra.mxu0 0.0
    %3946 = vmatprep.subr.mxu0 0.0
    %3947 = vmatpush1.msra.mxu0 0.0
    %3948 = vmatprep.subr.mxu0 0.0
    %3949 = vmatpush1.msra.mxu0 0.0
    %3950 = vmatprep.subr.mxu0 0.0
    %3951 = vmatpush1.msra.mxu0 0.0
    %3952 = vmatprep.subr.mxu0 0.0
    %3953 = vmatpush1.msra.mxu0 0.0
    %3954 = vmatprep.mubr.f32.mxu0 0.0
    %3955 = vmatmul.mubr.f32.gmra.mrb[0].mxu0 %v3888
    %v3956 = vpop.f32.mrb[0].mxu0
    %v3957 = vadd.f32 %v3885, %v3956
    %v3958 = vpop.f32.mrb[0].mxu0
    %3959 = vdwg.mxu0
    %3960 = vset.pattern.permute.xlu0 5
    %3961 = vperm.xlu0 %3960, %v749
    %v3962 = vpop.permute.xlu0 %3961
    %v3964 = vmul.f32 %v3962, %v3767
    %v3965 = vadd.f32 %v3564, %v3964
    %3966 = vset.pattern.permute.xlu0 5
    %3967 = vperm.xlu0 %3966, %v761
    %v3968 = vpop.permute.xlu0 %3967
    %v3970 = vmul.f32 %v3968, %v3957
    %v3971 = vadd.f32 %v3965, %v3970
    %v3972 = vsel %vm353, %v3971, 0.0
    %3973 = vadd.xlane.f32.xlu0 %v3972
    %v3974 = vpop.xlane.xlu0 %3973
    %v3975 = vmul.f32 %v3974, %v357
    %v3976 = vmul.f32 %v3971, %v3971
    %v3977 = vsel %vm353, %v3976, 0.0
    %3978 = vadd.xlane.f32.xlu0 %v3977
    %v3979 = vpop.xlane.xlu0 %3978
    %v3980 = vmul.f32 %v3979, %v357
    %v3981 = vmul.f32 %v3975, %v3975
    %v3982 = vsub.f32 %v3980, %v3981
    %v3983 = vsub.f32 %v3971, %v3975
    %v3984 = vadd.f32 %v3982, 1e-05
    %v3985 = vrsqrt.pop %v3984
    %v3986 = vmul.f32 %v3983, %v3985
    %v3987 = vmul.f32 %v3986, %v3778
    %v3988 = vadd.f32 %v3987, %v3785
    %s3989 = scalar_lea.vmem %s7, 160
    %v3990 = vld [vmem:[%s3989] sm:$0xff]
    %v3991 = vld [vmem:[%s3989 + $0x8] sm:$0xff]
    %v3992 = vld [vmem:[%s3989 + $0x10] sm:$0xff]
    %v3993 = vld [vmem:[%s3989 + $0x18] sm:$0xff]
    %s3994 = scalar_lea.vmem [#allocation10], 5
    %v3995 = vld [vmem:[%s3994] sm:$0x1]
    %v3997 = vlaneseq
    %v3998 = vshrl.u32 %v3997, 7
    %v3999 = vsub.s32 0, %v3998
    %v4000 = vrot.slane %v3995, %v3999
    %v4003 = vsel %vm395, %v3988, 0
    %4005 = vmatprep.subr.mxu0 0.0
    %4006 = vmatpush1.msra.mxu0 %v3990
    %4007 = vmatprep.subr.mxu0 0.0
    %4008 = vmatpush1.msra.mxu0 %v3991
    %4009 = vmatprep.subr.mxu0 0.0
    %4010 = vmatpush1.msra.mxu0 %v3992
    %4011 = vmatprep.subr.mxu0 0.0
    %4012 = vmatpush1.msra.mxu0 %v3993
    %4013 = vmatprep.subr.mxu0 0.0
    %4014 = vmatpush1.msra.mxu0 0.0
    %4015 = vmatprep.subr.mxu0 0.0
    %4016 = vmatpush1.msra.mxu0 0.0
    %4017 = vmatprep.subr.mxu0 0.0
    %4018 = vmatpush1.msra.mxu0 0.0
    %4019 = vmatprep.subr.mxu0 0.0
    %4020 = vmatpush1.msra.mxu0 0.0
    %4021 = vmatprep.subr.mxu0 0.0
    %4022 = vmatpush1.msra.mxu0 0.0
    %4023 = vmatprep.subr.mxu0 0.0
    %4024 = vmatpush1.msra.mxu0 0.0
    %4025 = vmatprep.subr.mxu0 0.0
    %4026 = vmatpush1.msra.mxu0 0.0
    %4027 = vmatprep.subr.mxu0 0.0
    %4028 = vmatpush1.msra.mxu0 0.0
    %4029 = vmatprep.subr.mxu0 0.0
    %4030 = vmatpush1.msra.mxu0 0.0
    %4031 = vmatprep.subr.mxu0 0.0
    %4032 = vmatpush1.msra.mxu0 0.0
    %4033 = vmatprep.subr.mxu0 0.0
    %4034 = vmatpush1.msra.mxu0 0.0
    %4035 = vmatprep.subr.mxu0 0.0
    %4036 = vmatpush1.msra.mxu0 0.0
    %4037 = vmatprep.subr.mxu0 0.0
    %4038 = vmatpush1.msra.mxu0 0.0
    %4039 = vmatprep.subr.mxu0 0.0
    %4040 = vmatpush1.msra.mxu0 0.0
    %4041 = vmatprep.subr.mxu0 0.0
    %4042 = vmatpush1.msra.mxu0 0.0
    %4043 = vmatprep.subr.mxu0 0.0
    %4044 = vmatpush1.msra.mxu0 0.0
    %4045 = vmatprep.subr.mxu0 0.0
    %4046 = vmatpush1.msra.mxu0 0.0
    %4047 = vmatprep.subr.mxu0 0.0
    %4048 = vmatpush1.msra.mxu0 0.0
    %4049 = vmatprep.subr.mxu0 0.0
    %4050 = vmatpush1.msra.mxu0 0.0
    %4051 = vmatprep.subr.mxu0 0.0
    %4052 = vmatpush1.msra.mxu0 0.0
    %4053 = vmatprep.subr.mxu0 0.0
    %4054 = vmatpush1.msra.mxu0 0.0
    %4055 = vmatprep.subr.mxu0 0.0
    %4056 = vmatpush1.msra.mxu0 0.0
    %4057 = vmatprep.subr.mxu0 0.0
    %4058 = vmatpush1.msra.mxu0 0.0
    %4059 = vmatprep.subr.mxu0 0.0
    %4060 = vmatpush1.msra.mxu0 0.0
    %4061 = vmatprep.subr.mxu0 0.0
    %4062 = vmatpush1.msra.mxu0 0.0
    %4063 = vmatprep.subr.mxu0 0.0
    %4064 = vmatpush1.msra.mxu0 0.0
    %4065 = vmatprep.subr.mxu0 0.0
    %4066 = vmatpush1.msra.mxu0 0.0
    %4067 = vmatprep.subr.mxu0 0.0
    %4068 = vmatpush1.msra.mxu0 0.0
    %4069 = vmatprep.mubr.f32.mxu0 0.0
    %4070 = vmatmul.mubr.f32.gmra.mrb[0].mxu0 %v4003
    %v4071 = vpop.f32.mrb[0].mxu0
    %v4072 = vadd.f32 %v4000, %v4071
    %v4073 = vpop.f32.mrb[0].mxu0
    %4074 = vdwg.mxu0
    %v4075 = vmax.f32 %v4072, 0.0
    %s4076 = scalar_lea.vmem %s9, 640
    %v4077 = vld [vmem:[%s4076] sm:$0xff]
    %v4078 = vld [vmem:[%s4076 + $0x8] sm:$0xff]
    %v4079 = vld [vmem:[%s4076 + $0x10] sm:$0xff]
    %v4080 = vld [vmem:[%s4076 + $0x18] sm:$0xff]
    %v4081 = vld [vmem:[%s4076 + $0x20] sm:$0xff]
    %v4082 = vld [vmem:[%s4076 + $0x28] sm:$0xff]
    %v4083 = vld [vmem:[%s4076 + $0x30] sm:$0xff]
    %v4084 = vld [vmem:[%s4076 + $0x38] sm:$0xff]
    %v4085 = vld [vmem:[%s4076 + $0x40] sm:$0xff]
    %v4086 = vld [vmem:[%s4076 + $0x48] sm:$0xff]
    %v4087 = vld [vmem:[%s4076 + $0x50] sm:$0xff]
    %v4088 = vld [vmem:[%s4076 + $0x58] sm:$0xff]
    %v4089 = vld [vmem:[%s4076 + $0x60] sm:$0xff]
    %v4090 = vld [vmem:[%s4076 + $0x68] sm:$0xff]
    %v4091 = vld [vmem:[%s4076 + $0x70] sm:$0xff]
    %v4092 = vld [vmem:[%s4076 + $0x78] sm:$0xff]
    %4093 = vmatprep.subr.mxu0 0.0
    %4094 = vmatpush1.msra.mxu0 %v4077
    %4095 = vmatprep.subr.mxu0 0.0
    %4096 = vmatpush1.msra.mxu0 %v4078
    %4097 = vmatprep.subr.mxu0 0.0
    %4098 = vmatpush1.msra.mxu0 %v4079
    %4099 = vmatprep.subr.mxu0 0.0
    %4100 = vmatpush1.msra.mxu0 %v4080
    %4101 = vmatprep.subr.mxu0 0.0
    %4102 = vmatpush1.msra.mxu0 %v4081
    %4103 = vmatprep.subr.mxu0 0.0
    %4104 = vmatpush1.msra.mxu0 %v4082
    %4105 = vmatprep.subr.mxu0 0.0
    %4106 = vmatpush1.msra.mxu0 %v4083
    %4107 = vmatprep.subr.mxu0 0.0
    %4108 = vmatpush1.msra.mxu0 %v4084
    %4109 = vmatprep.subr.mxu0 0.0
    %4110 = vmatpush1.msra.mxu0 %v4085
    %4111 = vmatprep.subr.mxu0 0.0
    %4112 = vmatpush1.msra.mxu0 %v4086
    %4113 = vmatprep.subr.mxu0 0.0
    %4114 = vmatpush1.msra.mxu0 %v4087
    %4115 = vmatprep.subr.mxu0 0.0
    %4116 = vmatpush1.msra.mxu0 %v4088
    %4117 = vmatprep.subr.mxu0 0.0
    %4118 = vmatpush1.msra.mxu0 %v4089
    %4119 = vmatprep.subr.mxu0 0.0
    %4120 = vmatpush1.msra.mxu0 %v4090
    %4121 = vmatprep.subr.mxu0 0.0
    %4122 = vmatpush1.msra.mxu0 %v4091
    %4123 = vmatprep.subr.mxu0 0.0
    %4124 = vmatpush1.msra.mxu0 %v4092
    %4125 = vmatprep.subr.mxu0 0.0
    %4126 = vmatpush1.msra.mxu0 0.0
    %4127 = vmatprep.subr.mxu0 0.0
    %4128 = vmatpush1.msra.mxu0 0.0
    %4129 = vmatprep.subr.mxu0 0.0
    %4130 = vmatpush1.msra.mxu0 0.0
    %4131 = vmatprep.subr.mxu0 0.0
    %4132 = vmatpush1.msra.mxu0 0.0
    %4133 = vmatprep.subr.mxu0 0.0
    %4134 = vmatpush1.msra.mxu0 0.0
    %4135 = vmatprep.subr.mxu0 0.0
    %4136 = vmatpush1.msra.mxu0 0.0
    %4137 = vmatprep.subr.mxu0 0.0
    %4138 = vmatpush1.msra.mxu0 0.0
    %4139 = vmatprep.subr.mxu0 0.0
    %4140 = vmatpush1.msra.mxu0 0.0
    %4141 = vmatprep.subr.mxu0 0.0
    %4142 = vmatpush1.msra.mxu0 0.0
    %4143 = vmatprep.subr.mxu0 0.0
    %4144 = vmatpush1.msra.mxu0 0.0
    %4145 = vmatprep.subr.mxu0 0.0
    %4146 = vmatpush1.msra.mxu0 0.0
    %4147 = vmatprep.subr.mxu0 0.0
    %4148 = vmatpush1.msra.mxu0 0.0
    %4149 = vmatprep.subr.mxu0 0.0
    %4150 = vmatpush1.msra.mxu0 0.0
    %4151 = vmatprep.subr.mxu0 0.0
    %4152 = vmatpush1.msra.mxu0 0.0
    %4153 = vmatprep.subr.mxu0 0.0
    %4154 = vmatpush1.msra.mxu0 0.0
    %4155 = vmatprep.subr.mxu0 0.0
    %4156 = vmatpush1.msra.mxu0 0.0
    %4157 = vmatprep.mubr.f32.mxu0 0.0
    %4158 = vmatmul.mubr.f32.gmra.mrb[0].mxu0 %v4075
    %v4159 = vpop.f32.mrb[0].mxu0
    %v4160 = vadd.f32 0.0, %v4159
    %v4161 = vpop.f32.mrb[0].mxu0
    %4162 = vdwg.mxu0
    %v4163 = vadd.f32 %v3971, %v4160
    %s4164 = scalar_lea.vmem [#allocation11], 5
    %v4165 = vld [vmem:[%s4164] sm:$0x1]
    %v4167 = vlaneseq
    %v4168 = vshrl.u32 %v4167, 7
    %v4169 = vsub.s32 0, %v4168
    %v4170 = vrot.slane %v4165, %v4169
    %v4172 = vadd.f32 %v4163, %v4170
    %v4175 = vunpack.c.l.s4 1966171168
    %v4176 = vunpack.c.0.s8 %v4175
    %v4177 = vlaneseq
    %v4178 = vshrl.u32 %v4177, 7
    %v4179 = vsub.s32 %v4176, %v4178
    %v4180 = vrot.slane %v1572, %v4179
    %v4181 = vcombine.high %v4180, %v4180
    %v4183 = vunpack.c.l.s4 1966171168
    %v4184 = vunpack.c.0.s8 %v4183
    %v4185 = vlaneseq
    %v4186 = vshrl.u32 %v4185, 7
    %v4187 = vsub.s32 %v4184, %v4186
    %v4188 = vrot.slane %v4180, %v4187
    %v4190 = vunpack.c.l.s4 1966171168
    %v4191 = vunpack.c.0.s8 %v4190
    %v4192 = vlaneseq
    %v4193 = vshrl.u32 %v4192, 7
    %v4194 = vsub.s32 %v4191, %v4193
    %v4195 = vrot.slane %v4181, %v4194
    %v4200 = vunpack.c.l.s4 1966171168
    %v4201 = vunpack.c.0.s8 %v4200
    %v4202 = vlaneseq
    %v4203 = vshrl.u32 %v4202, 7
    %v4204 = vsub.s32 %v4201, %v4203
    %v4205 = vrot.slane %v2872, %v4204
    %v4206 = vcombine.high %v4205, %v4205
    %v4208 = vunpack.c.l.s4 1966171168
    %v4209 = vunpack.c.0.s8 %v4208
    %v4210 = vlaneseq
    %v4211 = vshrl.u32 %v4210, 7
    %v4212 = vsub.s32 %v4209, %v4211
    %v4213 = vrot.slane %v4205, %v4212
    %v4215 = vunpack.c.l.s4 1966171168
    %v4216 = vunpack.c.0.s8 %v4215
    %v4217 = vlaneseq
    %v4218 = vshrl.u32 %v4217, 7
    %v4219 = vsub.s32 %v4216, %v4218
    %v4220 = vrot.slane %v4206, %v4219
    %v4223 = vunpack.c.l.s4 1966171168
    %v4224 = vunpack.c.0.s8 %v4223
    %v4225 = vlaneseq
    %v4226 = vshrl.u32 %v4225, 7
    %v4227 = vsub.s32 %v4224, %v4226
    %v4228 = vrot.slane %v4172, %v4227
    %v4229 = vcombine.high %v4228, %v4228
    %v4231 = vunpack.c.l.s4 1966171168
    %v4232 = vunpack.c.0.s8 %v4231
    %v4233 = vlaneseq
    %v4234 = vshrl.u32 %v4233, 7
    %v4235 = vsub.s32 %v4232, %v4234
    %v4236 = vrot.slane %v4228, %v4235
    %v4238 = vunpack.c.l.s4 1966171168
    %v4239 = vunpack.c.0.s8 %v4238
    %v4240 = vlaneseq
    %v4241 = vshrl.u32 %v4240, 7
    %v4242 = vsub.s32 %v4239, %v4241
    %v4243 = vrot.slane %v4229, %v4242
    %v4244 = vlaneseq
    %v4245 = vshrl.u32 %v4244, 7
    %v4246 = vsub.s32 0, %v4245
    %v4247 = vrot.slane %v4213, %v4246
    %v4248 = vlaneseq
    %v4249 = vshrl.u32 %v4248, 7
    %v4250 = vsub.s32 0, %v4249
    %v4251 = vrot.slane %v4220, %v4250
    %v4254 = vlaneseq
    %v4255 = vshrl.u32 %v4254, 7
    %v4256 = vsub.s32 0, %v4255
    %v4257 = vrot.slane %v4236, %v4256
    %v4258 = vlaneseq
    %v4259 = vshrl.u32 %v4258, 7
    %v4260 = vsub.s32 0, %v4259
    %v4261 = vrot.slane %v4243, %v4260
    %vm4264 = vcmask 1040384
    %v4265 = vsel %vm4264, %v4188, %v4247
    %v4266 = vsel %vm4264, %v4195, %v4251
    %vm4267 = vcmask 1041408
    %v4268 = vsel %vm4267, %v4265, %v4257
    %v4269 = vsel %vm4267, %v4266, %v4261
    %v4270 = vld [vmem:[#allocation13] sm:$0x1]
    %s4271 = scalar_lea.vmem [#allocation13], 1
    %v4272 = vld [vmem:[%s4271] sm:$0x1]
    %vm4273 = vcmask 256000
    %v4274 = vsel %vm4273, %v4268, 0.0
    %4275 = vadd.xlane.f32.xlu0 %v4274
    %v4276 = vpop.xlane.xlu0 %4275
    %v4277 = vsel %vm4273, %v4269, 0.0
    %4278 = vadd.xlane.f32.xlu0 %v4277
    %v4279 = vpop.xlane.xlu0 %4278
    %v4280 = vmul.f32 %v4276, %v357
    %v4281 = vmul.f32 %v4279, %v357
    %v4282 = vmul.f32 %v4268, %v4268
    %v4283 = vmul.f32 %v4269, %v4269
    %v4284 = vsel %vm4273, %v4282, 0.0
    %4285 = vadd.xlane.f32.xlu0 %v4284
    %v4286 = vpop.xlane.xlu0 %4285
    %v4287 = vsel %vm4273, %v4283, 0.0
    %4288 = vadd.xlane.f32.xlu0 %v4287
    %v4289 = vpop.xlane.xlu0 %4288
    %v4290 = vmul.f32 %v4286, %v357
    %v4291 = vmul.f32 %v4289, %v357
    %v4292 = vmul.f32 %v4280, %v4280
    %v4293 = vmul.f32 %v4281, %v4281
    %v4294 = vsub.f32 %v4290, %v4292
    %v4295 = vsub.f32 %v4291, %v4293
    %v4296 = vsub.f32 %v4268, %v4280
    %v4297 = vsub.f32 %v4269, %v4281
    %v4298 = vadd.f32 %v4294, 1e-05
    %v4299 = vadd.f32 %v4295, 1e-05
    %v4300 = vrsqrt.pop %v4298
    %v4301 = vrsqrt.pop %v4299
    %v4302 = vmul.f32 %v4296, %v4300
    %v4303 = vmul.f32 %v4297, %v4301
    %v4305 = vlaneseq
    %v4306 = vshrl.u32 %v4305, 7
    %v4307 = vsub.s32 0, %v4306
    %v4308 = vrot.slane %v4270, %v4307
    %v4310 = vmul.f32 %v4302, %v4308
    %v4311 = vmul.f32 %v4303, %v4308
    %v4313 = vlaneseq
    %v4314 = vshrl.u32 %v4313, 7
    %v4315 = vsub.s32 0, %v4314
    %v4316 = vrot.slane %v4272, %v4315
    %v4318 = vadd.f32 %v4310, %v4316
    %v4319 = vadd.f32 %v4311, %v4316
    %v4323 = vunpack.c.l.s4 1966171168
    %v4324 = vunpack.c.0.s8 %v4323
    %v4325 = vlaneseq
    %v4326 = vshrl.u32 %v4325, 7
    %v4327 = vsub.s32 %v4324, %v4326
    %v4328 = vrot.slane %v4318, %v4327
    %v4329 = vcombine.high %v4328, %v4328
    %v4331 = vunpack.c.l.s4 1966171168
    %v4332 = vunpack.c.0.s8 %v4331
    %v4333 = vlaneseq
    %v4334 = vshrl.u32 %v4333, 7
    %v4335 = vsub.s32 %v4332, %v4334
    %v4336 = vrot.slane %v4328, %v4335
    %v4338 = vunpack.c.l.s4 1966171168
    %v4339 = vunpack.c.0.s8 %v4338
    %v4340 = vlaneseq
    %v4341 = vshrl.u32 %v4340, 7
    %v4342 = vsub.s32 %v4339, %v4341
    %v4343 = vrot.slane %v4329, %v4342
    %v4344 = vcombine.high %v4336, %v4336
    %v4346 = vunpack.c.l.s4 1966171168
    %v4347 = vunpack.c.0.s8 %v4346
    %v4348 = vlaneseq
    %v4349 = vshrl.u32 %v4348, 7
    %v4350 = vsub.s32 %v4347, %v4349
    %v4351 = vrot.slane %v4319, %v4350
    %v4352 = vcombine.high %v4351, %v4351
    %v4354 = vunpack.c.l.s4 1966171168
    %v4355 = vunpack.c.0.s8 %v4354
    %v4356 = vlaneseq
    %v4357 = vshrl.u32 %v4356, 7
    %v4358 = vsub.s32 %v4355, %v4357
    %v4359 = vrot.slane %v4351, %v4358
    %v4361 = vunpack.c.l.s4 1966171168
    %v4362 = vunpack.c.0.s8 %v4361
    %v4363 = vlaneseq
    %v4364 = vshrl.u32 %v4363, 7
    %v4365 = vsub.s32 %v4362, %v4364
    %v4366 = vrot.slane %v4352, %v4365
    %v4367 = vcombine.high %v4359, %v4359
    %v4368 = vld [vmem:[%s12] sm:$0xff]
    %v4369 = vld [vmem:[%s12 + $0x8] sm:$0xff]
    %v4370 = vld [vmem:[%s12 + $0x10] sm:$0xff]
    %v4371 = vld [vmem:[%s12 + $0x18] sm:$0xff]
    %v4372 = vld [vmem:[#allocation14] sm:$0x1]
    %v4374 = vlaneseq
    %v4375 = vshrl.u32 %v4374, 7
    %v4376 = vsub.s32 0, %v4375
    %v4377 = vrot.slane %v4372, %v4376
    %v4379 = vcombine.low %v4336, %v4343
    %v4380 = vcombine.low %v4344, %v4359
    %v4381 = vcombine.low %v4366, %v4367
    %v4383 = vunpack.c.l.s4 1966171168
    %v4384 = vunpack.c.0.s8 %v4383
    %v4385 = vlaneseq
    %v4386 = vshrl.u32 %v4385, 7
    %v4387 = vsub.s32 %v4384, %v4386
    %v4388 = vrot.slane %v4379, %v4387
    %v4390 = vunpack.c.l.s4 1966171168
    %v4391 = vunpack.c.0.s8 %v4390
    %v4392 = vlaneseq
    %v4393 = vshrl.u32 %v4392, 7
    %v4394 = vsub.s32 %v4391, %v4393
    %v4395 = vrot.slane %v4380, %v4394
    %v4397 = vunpack.c.l.s4 1966171168
    %v4398 = vunpack.c.0.s8 %v4397
    %v4399 = vlaneseq
    %v4400 = vshrl.u32 %v4399, 7
    %v4401 = vsub.s32 %v4398, %v4400
    %v4402 = vrot.slane %v4381, %v4401
    %v4403 = vcombine.low %v4388, %v4395
    %v4405 = vunpack.c.l.s4 1966171168
    %v4406 = vunpack.c.0.s8 %v4405
    %v4407 = vlaneseq
    %v4408 = vshrl.u32 %v4407, 7
    %v4409 = vsub.s32 %v4406, %v4408
    %v4410 = vrot.slane %v4403, %v4409
    %v4412 = vunpack.c.l.s4 1966171168
    %v4413 = vunpack.c.0.s8 %v4412
    %v4414 = vlaneseq
    %v4415 = vshrl.u32 %v4414, 7
    %v4416 = vsub.s32 %v4413, %v4415
    %v4417 = vrot.slane %v4402, %v4416
    %v4418 = vcombine.low %v4410, %v4417
    %v4419 = vsel %vm395, %v4418, 0
    %4421 = vmatprep.subr.mxu0 0.0
    %4422 = vmatpush1.msra.mxu0 %v4368
    %4423 = vmatprep.subr.mxu0 0.0
    %4424 = vmatpush1.msra.mxu0 %v4369
    %4425 = vmatprep.subr.mxu0 0.0
    %4426 = vmatpush1.msra.mxu0 %v4370
    %4427 = vmatprep.subr.mxu0 0.0
    %4428 = vmatpush1.msra.mxu0 %v4371
    %4429 = vmatprep.subr.mxu0 0.0
    %4430 = vmatpush1.msra.mxu0 0.0
    %4431 = vmatprep.subr.mxu0 0.0
    %4432 = vmatpush1.msra.mxu0 0.0
    %4433 = vmatprep.subr.mxu0 0.0
    %4434 = vmatpush1.msra.mxu0 0.0
    %4435 = vmatprep.subr.mxu0 0.0
    %4436 = vmatpush1.msra.mxu0 0.0
    %4437 = vmatprep.subr.mxu0 0.0
    %4438 = vmatpush1.msra.mxu0 0.0
    %4439 = vmatprep.subr.mxu0 0.0
    %4440 = vmatpush1.msra.mxu0 0.0
    %4441 = vmatprep.subr.mxu0 0.0
    %4442 = vmatpush1.msra.mxu0 0.0
    %4443 = vmatprep.subr.mxu0 0.0
    %4444 = vmatpush1.msra.mxu0 0.0
    %4445 = vmatprep.subr.mxu0 0.0
    %4446 = vmatpush1.msra.mxu0 0.0
    %4447 = vmatprep.subr.mxu0 0.0
    %4448 = vmatpush1.msra.mxu0 0.0
    %4449 = vmatprep.subr.mxu0 0.0
    %4450 = vmatpush1.msra.mxu0 0.0
    %4451 = vmatprep.subr.mxu0 0.0
    %4452 = vmatpush1.msra.mxu0 0.0
    %4453 = vmatprep.subr.mxu0 0.0
    %4454 = vmatpush1.msra.mxu0 0.0
    %4455 = vmatprep.subr.mxu0 0.0
    %4456 = vmatpush1.msra.mxu0 0.0
    %4457 = vmatprep.subr.mxu0 0.0
    %4458 = vmatpush1.msra.mxu0 0.0
    %4459 = vmatprep.subr.mxu0 0.0
    %4460 = vmatpush1.msra.mxu0 0.0
    %4461 = vmatprep.subr.mxu0 0.0
    %4462 = vmatpush1.msra.mxu0 0.0
    %4463 = vmatprep.subr.mxu0 0.0
    %4464 = vmatpush1.msra.mxu0 0.0
    %4465 = vmatprep.subr.mxu0 0.0
    %4466 = vmatpush1.msra.mxu0 0.0
    %4467 = vmatprep.subr.mxu0 0.0
    %4468 = vmatpush1.msra.mxu0 0.0
    %4469 = vmatprep.subr.mxu0 0.0
    %4470 = vmatpush1.msra.mxu0 0.0
    %4471 = vmatprep.subr.mxu0 0.0
    %4472 = vmatpush1.msra.mxu0 0.0
    %4473 = vmatprep.subr.mxu0 0.0
    %4474 = vmatpush1.msra.mxu0 0.0
    %4475 = vmatprep.subr.mxu0 0.0
    %4476 = vmatpush1.msra.mxu0 0.0
    %4477 = vmatprep.subr.mxu0 0.0
    %4478 = vmatpush1.msra.mxu0 0.0
    %4479 = vmatprep.subr.mxu0 0.0
    %4480 = vmatpush1.msra.mxu0 0.0
    %4481 = vmatprep.subr.mxu0 0.0
    %4482 = vmatpush1.msra.mxu0 0.0
    %4483 = vmatprep.subr.mxu0 0.0
    %4484 = vmatpush1.msra.mxu0 0.0
    %4485 = vmatprep.mubr.f32.mxu0 0.0
    %4486 = vmatmul.mubr.f32.gmra.mrb[0].mxu0 %v4419
    %v4487 = vpop.f32.mrb[0].mxu0
    %v4488 = vadd.f32 %v4377, %v4487
    %v4489 = vpop.f32.mrb[0].mxu0
    %4490 = vdwg.mxu0
    %v4492 = vcombine.high %v4488, %v4488
    %v4494 = vunpack.c.l.s4 1966171168
    %v4495 = vunpack.c.0.s8 %v4494
    %v4496 = vlaneseq
    %v4497 = vshrl.u32 %v4496, 7
    %v4498 = vsub.s32 %v4495, %v4497
    %v4499 = vrot.slane %v4488, %v4498
    %v4501 = vunpack.c.l.s4 1966171168
    %v4502 = vunpack.c.0.s8 %v4501
    %v4503 = vlaneseq
    %v4504 = vshrl.u32 %v4503, 7
    %v4505 = vsub.s32 %v4502, %v4504
    %v4506 = vrot.slane %v4492, %v4505
    %v4507 = vcombine.high %v4499, %v4499
    %v4508 = vcombine.high %v4506, %v4506
    %v4510 = vunpack.c.l.s4 1966171168
    %v4511 = vunpack.c.0.s8 %v4510
    %v4512 = vlaneseq
    %v4513 = vshrl.u32 %v4512, 7
    %v4514 = vsub.s32 %v4511, %v4513
    %v4515 = vrot.slane %v4499, %v4514
    %v4517 = vunpack.c.l.s4 1966171168
    %v4518 = vunpack.c.0.s8 %v4517
    %v4519 = vlaneseq
    %v4520 = vshrl.u32 %v4519, 7
    %v4521 = vsub.s32 %v4518, %v4520
    %v4522 = vrot.slane %v4506, %v4521
    %v4524 = vunpack.c.l.s4 1966171168
    %v4525 = vunpack.c.0.s8 %v4524
    %v4526 = vlaneseq
    %v4527 = vshrl.u32 %v4526, 7
    %v4528 = vsub.s32 %v4525, %v4527
    %v4529 = vrot.slane %v4507, %v4528
    %v4531 = vunpack.c.l.s4 1966171168
    %v4532 = vunpack.c.0.s8 %v4531
    %v4533 = vlaneseq
    %v4534 = vshrl.u32 %v4533, 7
    %v4535 = vsub.s32 %v4532, %v4534
    %v4536 = vrot.slane %v4508, %v4535
    %v4537 = vcombine.high %v4515, %v4515
    %v4538 = vcombine.high %v4529, %v4529
    %v4545 = vmul.f32 %v4515, 0.35355338
    %v4546 = vmul.f32 %v4529, 0.35355338
    %v4547 = vmul.f32 %v4537, 0.35355338
    %v4548 = vmul.f32 %v4538, 0.35355338
    %v4549 = vmul.f32 %v4522, 0.35355338
    %v4550 = vmul.f32 %v4536, 0.35355338
    %s4551 = scalar_lea.vmem %s12, 32
    %v4552 = vld [vmem:[%s4551] sm:$0xff]
    %v4553 = vld [vmem:[%s4551 + $0x8] sm:$0xff]
    %v4554 = vld [vmem:[%s4551 + $0x10] sm:$0xff]
    %v4555 = vld [vmem:[%s4551 + $0x18] sm:$0xff]
    %s4556 = scalar_lea.vmem [#allocation14], 1
    %v4557 = vld [vmem:[%s4556] sm:$0x1]
    %v4559 = vlaneseq
    %v4560 = vshrl.u32 %v4559, 7
    %v4561 = vsub.s32 0, %v4560
    %v4562 = vrot.slane %v4557, %v4561
    %4564 = vmatprep.subr.mxu0 0.0
    %4565 = vmatpush1.msra.mxu0 %v4552
    %4566 = vmatprep.subr.mxu0 0.0
    %4567 = vmatpush1.msra.mxu0 %v4553
    %4568 = vmatprep.subr.mxu0 0.0
    %4569 = vmatpush1.msra.mxu0 %v4554
    %4570 = vmatprep.subr.mxu0 0.0
    %4571 = vmatpush1.msra.mxu0 %v4555
    %4572 = vmatprep.subr.mxu0 0.0
    %4573 = vmatpush1.msra.mxu0 0.0
    %4574 = vmatprep.subr.mxu0 0.0
    %4575 = vmatpush1.msra.mxu0 0.0
    %4576 = vmatprep.subr.mxu0 0.0
    %4577 = vmatpush1.msra.mxu0 0.0
    %4578 = vmatprep.subr.mxu0 0.0
    %4579 = vmatpush1.msra.mxu0 0.0
    %4580 = vmatprep.subr.mxu0 0.0
    %4581 = vmatpush1.msra.mxu0 0.0
    %4582 = vmatprep.subr.mxu0 0.0
    %4583 = vmatpush1.msra.mxu0 0.0
    %4584 = vmatprep.subr.mxu0 0.0
    %4585 = vmatpush1.msra.mxu0 0.0
    %4586 = vmatprep.subr.mxu0 0.0
    %4587 = vmatpush1.msra.mxu0 0.0
    %4588 = vmatprep.subr.mxu0 0.0
    %4589 = vmatpush1.msra.mxu0 0.0
    %4590 = vmatprep.subr.mxu0 0.0
    %4591 = vmatpush1.msra.mxu0 0.0
    %4592 = vmatprep.subr.mxu0 0.0
    %4593 = vmatpush1.msra.mxu0 0.0
    %4594 = vmatprep.subr.mxu0 0.0
    %4595 = vmatpush1.msra.mxu0 0.0
    %4596 = vmatprep.subr.mxu0 0.0
    %4597 = vmatpush1.msra.mxu0 0.0
    %4598 = vmatprep.subr.mxu0 0.0
    %4599 = vmatpush1.msra.mxu0 0.0
    %4600 = vmatprep.subr.mxu0 0.0
    %4601 = vmatpush1.msra.mxu0 0.0
    %4602 = vmatprep.subr.mxu0 0.0
    %4603 = vmatpush1.msra.mxu0 0.0
    %4604 = vmatprep.subr.mxu0 0.0
    %4605 = vmatpush1.msra.mxu0 0.0
    %4606 = vmatprep.subr.mxu0 0.0
    %4607 = vmatpush1.msra.mxu0 0.0
    %4608 = vmatprep.subr.mxu0 0.0
    %4609 = vmatpush1.msra.mxu0 0.0
    %4610 = vmatprep.subr.mxu0 0.0
    %4611 = vmatpush1.msra.mxu0 0.0
    %4612 = vmatprep.subr.mxu0 0.0
    %4613 = vmatpush1.msra.mxu0 0.0
    %4614 = vmatprep.subr.mxu0 0.0
    %4615 = vmatpush1.msra.mxu0 0.0
    %4616 = vmatprep.subr.mxu0 0.0
    %4617 = vmatpush1.msra.mxu0 0.0
    %4618 = vmatprep.subr.mxu0 0.0
    %4619 = vmatpush1.msra.mxu0 0.0
    %4620 = vmatprep.subr.mxu0 0.0
    %4621 = vmatpush1.msra.mxu0 0.0
    %4622 = vmatprep.subr.mxu0 0.0
    %4623 = vmatpush1.msra.mxu0 0.0
    %4624 = vmatprep.subr.mxu0 0.0
    %4625 = vmatpush1.msra.mxu0 0.0
    %4626 = vmatprep.subr.mxu0 0.0
    %4627 = vmatpush1.msra.mxu0 0.0
    %4628 = vmatprep.mubr.f32.mxu0 0.0
    %4629 = vmatmul.mubr.f32.gmra.mrb[0].mxu0 %v4419
    %v4630 = vpop.f32.mrb[0].mxu0
    %v4631 = vadd.f32 %v4562, %v4630
    %v4632 = vpop.f32.mrb[0].mxu0
    %4633 = vdwg.mxu0
    %v4635 = vcombine.high %v4631, %v4631
    %v4637 = vunpack.c.l.s4 1966171168
    %v4638 = vunpack.c.0.s8 %v4637
    %v4639 = vlaneseq
    %v4640 = vshrl.u32 %v4639, 7
    %v4641 = vsub.s32 %v4638, %v4640
    %v4642 = vrot.slane %v4631, %v4641
    %v4644 = vunpack.c.l.s4 1966171168
    %v4645 = vunpack.c.0.s8 %v4644
    %v4646 = vlaneseq
    %v4647 = vshrl.u32 %v4646, 7
    %v4648 = vsub.s32 %v4645, %v4647
    %v4649 = vrot.slane %v4635, %v4648
    %v4650 = vcombine.high %v4642, %v4642
    %v4651 = vcombine.high %v4649, %v4649
    %v4653 = vunpack.c.l.s4 1966171168
    %v4654 = vunpack.c.0.s8 %v4653
    %v4655 = vlaneseq
    %v4656 = vshrl.u32 %v4655, 7
    %v4657 = vsub.s32 %v4654, %v4656
    %v4658 = vrot.slane %v4642, %v4657
    %v4660 = vunpack.c.l.s4 1966171168
    %v4661 = vunpack.c.0.s8 %v4660
    %v4662 = vlaneseq
    %v4663 = vshrl.u32 %v4662, 7
    %v4664 = vsub.s32 %v4661, %v4663
    %v4665 = vrot.slane %v4649, %v4664
    %v4667 = vunpack.c.l.s4 1966171168
    %v4668 = vunpack.c.0.s8 %v4667
    %v4669 = vlaneseq
    %v4670 = vshrl.u32 %v4669, 7
    %v4671 = vsub.s32 %v4668, %v4670
    %v4672 = vrot.slane %v4650, %v4671
    %v4674 = vunpack.c.l.s4 1966171168
    %v4675 = vunpack.c.0.s8 %v4674
    %v4676 = vlaneseq
    %v4677 = vshrl.u32 %v4676, 7
    %v4678 = vsub.s32 %v4675, %v4677
    %v4679 = vrot.slane %v4651, %v4678
    %v4680 = vcombine.high %v4658, %v4658
    %v4681 = vcombine.high %v4672, %v4672
    %s4682 = scalar_lea.vmem %s12, 64
    %v4683 = vld [vmem:[%s4682] sm:$0xff]
    %v4684 = vld [vmem:[%s4682 + $0x8] sm:$0xff]
    %v4685 = vld [vmem:[%s4682 + $0x10] sm:$0xff]
    %v4686 = vld [vmem:[%s4682 + $0x18] sm:$0xff]
    %s4687 = scalar_lea.vmem [#allocation14], 2
    %v4688 = vld [vmem:[%s4687] sm:$0x1]
    %v4690 = vlaneseq
    %v4691 = vshrl.u32 %v4690, 7
    %v4692 = vsub.s32 0, %v4691
    %v4693 = vrot.slane %v4688, %v4692
    %4695 = vmatprep.subr.mxu0 0.0
    %4696 = vmatpush1.msra.mxu0 %v4683
    %4697 = vmatprep.subr.mxu0 0.0
    %4698 = vmatpush1.msra.mxu0 %v4684
    %4699 = vmatprep.subr.mxu0 0.0
    %4700 = vmatpush1.msra.mxu0 %v4685
    %4701 = vmatprep.subr.mxu0 0.0
    %4702 = vmatpush1.msra.mxu0 %v4686
    %4703 = vmatprep.subr.mxu0 0.0
    %4704 = vmatpush1.msra.mxu0 0.0
    %4705 = vmatprep.subr.mxu0 0.0
    %4706 = vmatpush1.msra.mxu0 0.0
    %4707 = vmatprep.subr.mxu0 0.0
    %4708 = vmatpush1.msra.mxu0 0.0
    %4709 = vmatprep.subr.mxu0 0.0
    %4710 = vmatpush1.msra.mxu0 0.0
    %4711 = vmatprep.subr.mxu0 0.0
    %4712 = vmatpush1.msra.mxu0 0.0
    %4713 = vmatprep.subr.mxu0 0.0
    %4714 = vmatpush1.msra.mxu0 0.0
    %4715 = vmatprep.subr.mxu0 0.0
    %4716 = vmatpush1.msra.mxu0 0.0
    %4717 = vmatprep.subr.mxu0 0.0
    %4718 = vmatpush1.msra.mxu0 0.0
    %4719 = vmatprep.subr.mxu0 0.0
    %4720 = vmatpush1.msra.mxu0 0.0
    %4721 = vmatprep.subr.mxu0 0.0
    %4722 = vmatpush1.msra.mxu0 0.0
    %4723 = vmatprep.subr.mxu0 0.0
    %4724 = vmatpush1.msra.mxu0 0.0
    %4725 = vmatprep.subr.mxu0 0.0
    %4726 = vmatpush1.msra.mxu0 0.0
    %4727 = vmatprep.subr.mxu0 0.0
    %4728 = vmatpush1.msra.mxu0 0.0
    %4729 = vmatprep.subr.mxu0 0.0
    %4730 = vmatpush1.msra.mxu0 0.0
    %4731 = vmatprep.subr.mxu0 0.0
    %4732 = vmatpush1.msra.mxu0 0.0
    %4733 = vmatprep.subr.mxu0 0.0
    %4734 = vmatpush1.msra.mxu0 0.0
    %4735 = vmatprep.subr.mxu0 0.0
    %4736 = vmatpush1.msra.mxu0 0.0
    %4737 = vmatprep.subr.mxu0 0.0
    %4738 = vmatpush1.msra.mxu0 0.0
    %4739 = vmatprep.subr.mxu0 0.0
    %4740 = vmatpush1.msra.mxu0 0.0
    %4741 = vmatprep.subr.mxu0 0.0
    %4742 = vmatpush1.msra.mxu0 0.0
    %4743 = vmatprep.subr.mxu0 0.0
    %4744 = vmatpush1.msra.mxu0 0.0
    %4745 = vmatprep.subr.mxu0 0.0
    %4746 = vmatpush1.msra.mxu0 0.0
    %4747 = vmatprep.subr.mxu0 0.0
    %4748 = vmatpush1.msra.mxu0 0.0
    %4749 = vmatprep.subr.mxu0 0.0
    %4750 = vmatpush1.msra.mxu0 0.0
    %4751 = vmatprep.subr.mxu0 0.0
    %4752 = vmatpush1.msra.mxu0 0.0
    %4753 = vmatprep.subr.mxu0 0.0
    %4754 = vmatpush1.msra.mxu0 0.0
    %4755 = vmatprep.subr.mxu0 0.0
    %4756 = vmatpush1.msra.mxu0 0.0
    %4757 = vmatprep.subr.mxu0 0.0
    %4758 = vmatpush1.msra.mxu0 0.0
    %4759 = vmatprep.mubr.f32.mxu0 0.0
    %4760 = vmatmul.mubr.f32.gmra.mrb[0].mxu0 %v4419
    %v4761 = vpop.f32.mrb[0].mxu0
    %v4762 = vadd.f32 %v4693, %v4761
    %v4763 = vpop.f32.mrb[0].mxu0
    %4764 = vdwg.mxu0
    %v4766 = vcombine.high %v4762, %v4762
    %v4768 = vunpack.c.l.s4 1966171168
    %v4769 = vunpack.c.0.s8 %v4768
    %v4770 = vlaneseq
    %v4771 = vshrl.u32 %v4770, 7
    %v4772 = vsub.s32 %v4769, %v4771
    %v4773 = vrot.slane %v4762, %v4772
    %v4775 = vunpack.c.l.s4 1966171168
    %v4776 = vunpack.c.0.s8 %v4775
    %v4777 = vlaneseq
    %v4778 = vshrl.u32 %v4777, 7
    %v4779 = vsub.s32 %v4776, %v4778
    %v4780 = vrot.slane %v4766, %v4779
    %v4781 = vcombine.high %v4773, %v4773
    %v4782 = vcombine.high %v4780, %v4780
    %v4784 = vunpack.c.l.s4 1966171168
    %v4785 = vunpack.c.0.s8 %v4784
    %v4786 = vlaneseq
    %v4787 = vshrl.u32 %v4786, 7
    %v4788 = vsub.s32 %v4785, %v4787
    %v4789 = vrot.slane %v4773, %v4788
    %v4791 = vunpack.c.l.s4 1966171168
    %v4792 = vunpack.c.0.s8 %v4791
    %v4793 = vlaneseq
    %v4794 = vshrl.u32 %v4793, 7
    %v4795 = vsub.s32 %v4792, %v4794
    %v4796 = vrot.slane %v4780, %v4795
    %v4798 = vunpack.c.l.s4 1966171168
    %v4799 = vunpack.c.0.s8 %v4798
    %v4800 = vlaneseq
    %v4801 = vshrl.u32 %v4800, 7
    %v4802 = vsub.s32 %v4799, %v4801
    %v4803 = vrot.slane %v4781, %v4802
    %v4805 = vunpack.c.l.s4 1966171168
    %v4806 = vunpack.c.0.s8 %v4805
    %v4807 = vlaneseq
    %v4808 = vshrl.u32 %v4807, 7
    %v4809 = vsub.s32 %v4806, %v4808
    %v4810 = vrot.slane %v4782, %v4809
    %v4811 = vcombine.high %v4789, %v4789
    %v4812 = vcombine.high %v4803, %v4803
    %v4816 = vcombine.low %v4545, %v4546
    %v4818 = vunpack.c.l.s4 1966171168
    %v4819 = vunpack.c.0.s8 %v4818
    %v4820 = vlaneseq
    %v4821 = vshrl.u32 %v4820, 7
    %v4822 = vsub.s32 %v4819, %v4821
    %v4823 = vrot.slane %v4816, %v4822
    %v4825 = vunpack.c.l.s4 1966171168
    %v4826 = vunpack.c.0.s8 %v4825
    %v4827 = vlaneseq
    %v4828 = vshrl.u32 %v4827, 7
    %v4829 = vsub.s32 %v4826, %v4828
    %v4830 = vrot.slane %v4547, %v4829
    %v4831 = vcombine.low %v4823, %v4830
    %v4833 = vunpack.c.l.s4 1966171168
    %v4834 = vunpack.c.0.s8 %v4833
    %v4835 = vlaneseq
    %v4836 = vshrl.u32 %v4835, 7
    %v4837 = vsub.s32 %v4834, %v4836
    %v4838 = vrot.slane %v4831, %v4837
    %v4839 = vcombine.low %v4658, %v4672
    %v4841 = vunpack.c.l.s4 1966171168
    %v4842 = vunpack.c.0.s8 %v4841
    %v4843 = vlaneseq
    %v4844 = vshrl.u32 %v4843, 7
    %v4845 = vsub.s32 %v4842, %v4844
    %v4846 = vrot.slane %v4839, %v4845
    %v4848 = vunpack.c.l.s4 1966171168
    %v4849 = vunpack.c.0.s8 %v4848
    %v4850 = vlaneseq
    %v4851 = vshrl.u32 %v4850, 7
    %v4852 = vsub.s32 %v4849, %v4851
    %v4853 = vrot.slane %v4680, %v4852
    %v4854 = vcombine.low %v4846, %v4853
    %v4856 = vunpack.c.l.s4 1966171168
    %v4857 = vunpack.c.0.s8 %v4856
    %v4858 = vlaneseq
    %v4859 = vshrl.u32 %v4858, 7
    %v4860 = vsub.s32 %v4857, %v4859
    %v4861 = vrot.slane %v4854, %v4860
    %vm4862 = vcmask 64512
    %v4863 = vsel %vm4862, %v4838, 0
    %v4865 = vsel %vm4862, %v4861, 0
    %4867 = vmatprep.subr.mxu0 0.0
    %4868 = vmatpush1.xpose.msra.mxu0 %v4865
    %4869 = vmatprep.subr.mxu0 0.0
    %4870 = vmatpush1.xpose.msra.mxu0 0.0
    %4871 = vmatprep.subr.mxu0 0.0
    %4872 = vmatpush1.xpose.msra.mxu0 0.0
    %4873 = vmatprep.subr.mxu0 0.0
    %4874 = vmatpush1.xpose.msra.mxu0 0.0
    %4875 = vmatprep.subr.mxu0 0.0
    %4876 = vmatpush1.xpose.msra.mxu0 0.0
    %4877 = vmatprep.subr.mxu0 0.0
    %4878 = vmatpush1.xpose.msra.mxu0 0.0
    %4879 = vmatprep.subr.mxu0 0.0
    %4880 = vmatpush1.xpose.msra.mxu0 0.0
    %4881 = vmatprep.subr.mxu0 0.0
    %4882 = vmatpush1.xpose.msra.mxu0 0.0
    %4883 = vmatprep.subr.mxu0 0.0
    %4884 = vmatpush1.xpose.msra.mxu0 0.0
    %4885 = vmatprep.subr.mxu0 0.0
    %4886 = vmatpush1.xpose.msra.mxu0 0.0
    %4887 = vmatprep.subr.mxu0 0.0
    %4888 = vmatpush1.xpose.msra.mxu0 0.0
    %4889 = vmatprep.subr.mxu0 0.0
    %4890 = vmatpush1.xpose.msra.mxu0 0.0
    %4891 = vmatprep.subr.mxu0 0.0
    %4892 = vmatpush1.xpose.msra.mxu0 0.0
    %4893 = vmatprep.subr.mxu0 0.0
    %4894 = vmatpush1.xpose.msra.mxu0 0.0
    %4895 = vmatprep.subr.mxu0 0.0
    %4896 = vmatpush1.xpose.msra.mxu0 0.0
    %4897 = vmatprep.subr.mxu0 0.0
    %4898 = vmatpush1.xpose.msra.mxu0 0.0
    %4899 = vmatprep.subr.mxu0 0.0
    %4900 = vmatpush1.xpose.msra.mxu0 0.0
    %4901 = vmatprep.subr.mxu0 0.0
    %4902 = vmatpush1.xpose.msra.mxu0 0.0
    %4903 = vmatprep.subr.mxu0 0.0
    %4904 = vmatpush1.xpose.msra.mxu0 0.0
    %4905 = vmatprep.subr.mxu0 0.0
    %4906 = vmatpush1.xpose.msra.mxu0 0.0
    %4907 = vmatprep.subr.mxu0 0.0
    %4908 = vmatpush1.xpose.msra.mxu0 0.0
    %4909 = vmatprep.subr.mxu0 0.0
    %4910 = vmatpush1.xpose.msra.mxu0 0.0
    %4911 = vmatprep.subr.mxu0 0.0
    %4912 = vmatpush1.xpose.msra.mxu0 0.0
    %4913 = vmatprep.subr.mxu0 0.0
    %4914 = vmatpush1.xpose.msra.mxu0 0.0
    %4915 = vmatprep.subr.mxu0 0.0
    %4916 = vmatpush1.xpose.msra.mxu0 0.0
    %4917 = vmatprep.subr.mxu0 0.0
    %4918 = vmatpush1.xpose.msra.mxu0 0.0
    %4919 = vmatprep.subr.mxu0 0.0
    %4920 = vmatpush1.xpose.msra.mxu0 0.0
    %4921 = vmatprep.subr.mxu0 0.0
    %4922 = vmatpush1.xpose.msra.mxu0 0.0
    %4923 = vmatprep.subr.mxu0 0.0
    %4924 = vmatpush1.xpose.msra.mxu0 0.0
    %4925 = vmatprep.subr.mxu0 0.0
    %4926 = vmatpush1.xpose.msra.mxu0 0.0
    %4927 = vmatprep.subr.mxu0 0.0
    %4928 = vmatpush1.xpose.msra.mxu0 0.0
    %4929 = vmatprep.subr.mxu0 0.0
    %4930 = vmatpush1.xpose.msra.mxu0 0.0
    %4931 = vmatprep.mubr.f32.mxu0 0.0
    %4932 = vmatmul.mubr.f32.gmra.mrb[0].mxu0 %v4863
    %v4933 = vpop.f32.mrb[0].mxu0
    %v4934 = vadd.f32 0.0, %v4933
    %v4935 = vpop.f32.mrb[0].mxu0
    %4936 = vdwg.mxu0
    %v4940 = vcombine.low %v4548, %v4549
    %v4942 = vunpack.c.l.s4 1966171168
    %v4943 = vunpack.c.0.s8 %v4942
    %v4944 = vlaneseq
    %v4945 = vshrl.u32 %v4944, 7
    %v4946 = vsub.s32 %v4943, %v4945
    %v4947 = vrot.slane %v4940, %v4946
    %v4949 = vunpack.c.l.s4 1966171168
    %v4950 = vunpack.c.0.s8 %v4949
    %v4951 = vlaneseq
    %v4952 = vshrl.u32 %v4951, 7
    %v4953 = vsub.s32 %v4950, %v4952
    %v4954 = vrot.slane %v4550, %v4953
    %v4955 = vcombine.low %v4947, %v4954
    %v4957 = vunpack.c.l.s4 1966171168
    %v4958 = vunpack.c.0.s8 %v4957
    %v4959 = vlaneseq
    %v4960 = vshrl.u32 %v4959, 7
    %v4961 = vsub.s32 %v4958, %v4960
    %v4962 = vrot.slane %v4955, %v4961
    %v4963 = vcombine.low %v4681, %v4665
    %v4965 = vunpack.c.l.s4 1966171168
    %v4966 = vunpack.c.0.s8 %v4965
    %v4967 = vlaneseq
    %v4968 = vshrl.u32 %v4967, 7
    %v4969 = vsub.s32 %v4966, %v4968
    %v4970 = vrot.slane %v4963, %v4969
    %v4972 = vunpack.c.l.s4 1966171168
    %v4973 = vunpack.c.0.s8 %v4972
    %v4974 = vlaneseq
    %v4975 = vshrl.u32 %v4974, 7
    %v4976 = vsub.s32 %v4973, %v4975
    %v4977 = vrot.slane %v4679, %v4976
    %v4978 = vcombine.low %v4970, %v4977
    %v4980 = vunpack.c.l.s4 1966171168
    %v4981 = vunpack.c.0.s8 %v4980
    %v4982 = vlaneseq
    %v4983 = vshrl.u32 %v4982, 7
    %v4984 = vsub.s32 %v4981, %v4983
    %v4985 = vrot.slane %v4978, %v4984
    %v4986 = vsel %vm4862, %v4962, 0
    %v4988 = vsel %vm4862, %v4985, 0
    %4990 = vmatprep.subr.mxu0 0.0
    %4991 = vmatpush1.xpose.msra.mxu0 %v4988
    %4992 = vmatprep.subr.mxu0 0.0
    %4993 = vmatpush1.xpose.msra.mxu0 0.0
    %4994 = vmatprep.subr.mxu0 0.0
    %4995 = vmatpush1.xpose.msra.mxu0 0.0
    %4996 = vmatprep.subr.mxu0 0.0
    %4997 = vmatpush1.xpose.msra.mxu0 0.0
    %4998 = vmatprep.subr.mxu0 0.0
    %4999 = vmatpush1.xpose.msra.mxu0 0.0
    %5000 = vmatprep.subr.mxu0 0.0
    %5001 = vmatpush1.xpose.msra.mxu0 0.0
    %5002 = vmatprep.subr.mxu0 0.0
    %5003 = vmatpush1.xpose.msra.mxu0 0.0
    %5004 = vmatprep.subr.mxu0 0.0
    %5005 = vmatpush1.xpose.msra.mxu0 0.0
    %5006 = vmatprep.subr.mxu0 0.0
    %5007 = vmatpush1.xpose.msra.mxu0 0.0
    %5008 = vmatprep.subr.mxu0 0.0
    %5009 = vmatpush1.xpose.msra.mxu0 0.0
    %5010 = vmatprep.subr.mxu0 0.0
    %5011 = vmatpush1.xpose.msra.mxu0 0.0
    %5012 = vmatprep.subr.mxu0 0.0
    %5013 = vmatpush1.xpose.msra.mxu0 0.0
    %5014 = vmatprep.subr.mxu0 0.0
    %5015 = vmatpush1.xpose.msra.mxu0 0.0
    %5016 = vmatprep.subr.mxu0 0.0
    %5017 = vmatpush1.xpose.msra.mxu0 0.0
    %5018 = vmatprep.subr.mxu0 0.0
    %5019 = vmatpush1.xpose.msra.mxu0 0.0
    %5020 = vmatprep.subr.mxu0 0.0
    %5021 = vmatpush1.xpose.msra.mxu0 0.0
    %5022 = vmatprep.subr.mxu0 0.0
    %5023 = vmatpush1.xpose.msra.mxu0 0.0
    %5024 = vmatprep.subr.mxu0 0.0
    %5025 = vmatpush1.xpose.msra.mxu0 0.0
    %5026 = vmatprep.subr.mxu0 0.0
    %5027 = vmatpush1.xpose.msra.mxu0 0.0
    %5028 = vmatprep.subr.mxu0 0.0
    %5029 = vmatpush1.xpose.msra.mxu0 0.0
    %5030 = vmatprep.subr.mxu0 0.0
    %5031 = vmatpush1.xpose.msra.mxu0 0.0
    %5032 = vmatprep.subr.mxu0 0.0
    %5033 = vmatpush1.xpose.msra.mxu0 0.0
    %5034 = vmatprep.subr.mxu0 0.0
    %5035 = vmatpush1.xpose.msra.mxu0 0.0
    %5036 = vmatprep.subr.mxu0 0.0
    %5037 = vmatpush1.xpose.msra.mxu0 0.0
    %5038 = vmatprep.subr.mxu0 0.0
    %5039 = vmatpush1.xpose.msra.mxu0 0.0
    %5040 = vmatprep.subr.mxu0 0.0
    %5041 = vmatpush1.xpose.msra.mxu0 0.0
    %5042 = vmatprep.subr.mxu0 0.0
    %5043 = vmatpush1.xpose.msra.mxu0 0.0
    %5044 = vmatprep.subr.mxu0 0.0
    %5045 = vmatpush1.xpose.msra.mxu0 0.0
    %5046 = vmatprep.subr.mxu0 0.0
    %5047 = vmatpush1.xpose.msra.mxu0 0.0
    %5048 = vmatprep.subr.mxu0 0.0
    %5049 = vmatpush1.xpose.msra.mxu0 0.0
    %5050 = vmatprep.subr.mxu0 0.0
    %5051 = vmatpush1.xpose.msra.mxu0 0.0
    %5052 = vmatprep.subr.mxu0 0.0
    %5053 = vmatpush1.xpose.msra.mxu0 0.0
    %5054 = vmatprep.mubr.f32.mxu0 0.0
    %5055 = vmatmul.mubr.f32.gmra.mrb[0].mxu0 %v4986
    %v5056 = vpop.f32.mrb[0].mxu0
    %v5057 = vadd.f32 0.0, %v5056
    %v5058 = vpop.f32.mrb[0].mxu0
    %5059 = vdwg.mxu0
    %vm5060 = vcmask 18432
    %v5061 = vsel %vm5060, %v4934, -inf
    %5062 = vmax.xlane.f32.xlu0 %v5061
    %v5063 = vpop.xlane.xlu0 %5062
    %v5064 = vsel %vm5060, %v5057, -inf
    %5065 = vmax.xlane.f32.xlu0 %v5064
    %v5066 = vpop.xlane.xlu0 %5065
    %v5067 = vsub.f32 %v4934, %v5063
    %v5068 = vsub.f32 %v5057, %v5066
    %v5069 = vmul.f32 %v5067, 1.442695
    %v5070 = vpow.pop %v5069
    %v5071 = vmul.f32 %v5068, 1.442695
    %v5072 = vpow.pop %v5071
    %v5073 = vsel %vm5060, %v5070, 0.0
    %5074 = vadd.xlane.f32.xlu0 %v5073
    %v5075 = vpop.xlane.xlu0 %5074
    %v5076 = vsel %vm5060, %v5072, 0.0
    %5077 = vadd.xlane.f32.xlu0 %v5076
    %v5078 = vpop.xlane.xlu0 %5077
    %v5079 = vrcp.pop %v5075
    %v5080 = vrcp.pop %v5078
    %v5081 = vmul.f32 %v5070, %v5079
    %v5082 = vmul.f32 %v5072, %v5080
    %v5083 = vcombine.low %v4789, %v4803
    %v5085 = vunpack.c.l.s4 1966171168
    %v5086 = vunpack.c.0.s8 %v5085
    %v5087 = vlaneseq
    %v5088 = vshrl.u32 %v5087, 7
    %v5089 = vsub.s32 %v5086, %v5088
    %v5090 = vrot.slane %v5083, %v5089
    %v5092 = vunpack.c.l.s4 1966171168
    %v5093 = vunpack.c.0.s8 %v5092
    %v5094 = vlaneseq
    %v5095 = vshrl.u32 %v5094, 7
    %v5096 = vsub.s32 %v5093, %v5095
    %v5097 = vrot.slane %v4811, %v5096
    %v5098 = vcombine.low %v5090, %v5097
    %v5100 = vunpack.c.l.s4 1966171168
    %v5101 = vunpack.c.0.s8 %v5100
    %v5102 = vlaneseq
    %v5103 = vshrl.u32 %v5102, 7
    %v5104 = vsub.s32 %v5101, %v5103
    %v5105 = vrot.slane %v5098, %v5104
    %vm5106 = vcmask 23552
    %v5108 = vsel %vm5106, %v5081, 0
    %vm5110 = vcmask 1042432
    %v5111 = vsel %vm5110, %v5105, 0
    %5113 = vmatprep.subr.mxu0 0.0
    %5114 = vmatpush1.msra.mxu0 %v5111
    %5115 = vmatprep.subr.mxu0 0.0
    %5116 = vmatpush1.msra.mxu0 0.0
    %5117 = vmatprep.subr.mxu0 0.0
    %5118 = vmatpush1.msra.mxu0 0.0
    %5119 = vmatprep.subr.mxu0 0.0
    %5120 = vmatpush1.msra.mxu0 0.0
    %5121 = vmatprep.subr.mxu0 0.0
    %5122 = vmatpush1.msra.mxu0 0.0
    %5123 = vmatprep.subr.mxu0 0.0
    %5124 = vmatpush1.msra.mxu0 0.0
    %5125 = vmatprep.subr.mxu0 0.0
    %5126 = vmatpush1.msra.mxu0 0.0
    %5127 = vmatprep.subr.mxu0 0.0
    %5128 = vmatpush1.msra.mxu0 0.0
    %5129 = vmatprep.subr.mxu0 0.0
    %5130 = vmatpush1.msra.mxu0 0.0
    %5131 = vmatprep.subr.mxu0 0.0
    %5132 = vmatpush1.msra.mxu0 0.0
    %5133 = vmatprep.subr.mxu0 0.0
    %5134 = vmatpush1.msra.mxu0 0.0
    %5135 = vmatprep.subr.mxu0 0.0
    %5136 = vmatpush1.msra.mxu0 0.0
    %5137 = vmatprep.subr.mxu0 0.0
    %5138 = vmatpush1.msra.mxu0 0.0
    %5139 = vmatprep.subr.mxu0 0.0
    %5140 = vmatpush1.msra.mxu0 0.0
    %5141 = vmatprep.subr.mxu0 0.0
    %5142 = vmatpush1.msra.mxu0 0.0
    %5143 = vmatprep.subr.mxu0 0.0
    %5144 = vmatpush1.msra.mxu0 0.0
    %5145 = vmatprep.subr.mxu0 0.0
    %5146 = vmatpush1.msra.mxu0 0.0
    %5147 = vmatprep.subr.mxu0 0.0
    %5148 = vmatpush1.msra.mxu0 0.0
    %5149 = vmatprep.subr.mxu0 0.0
    %5150 = vmatpush1.msra.mxu0 0.0
    %5151 = vmatprep.subr.mxu0 0.0
    %5152 = vmatpush1.msra.mxu0 0.0
    %5153 = vmatprep.subr.mxu0 0.0
    %5154 = vmatpush1.msra.mxu0 0.0
    %5155 = vmatprep.subr.mxu0 0.0
    %5156 = vmatpush1.msra.mxu0 0.0
    %5157 = vmatprep.subr.mxu0 0.0
    %5158 = vmatpush1.msra.mxu0 0.0
    %5159 = vmatprep.subr.mxu0 0.0
    %5160 = vmatpush1.msra.mxu0 0.0
    %5161 = vmatprep.subr.mxu0 0.0
    %5162 = vmatpush1.msra.mxu0 0.0
    %5163 = vmatprep.subr.mxu0 0.0
    %5164 = vmatpush1.msra.mxu0 0.0
    %5165 = vmatprep.subr.mxu0 0.0
    %5166 = vmatpush1.msra.mxu0 0.0
    %5167 = vmatprep.subr.mxu0 0.0
    %5168 = vmatpush1.msra.mxu0 0.0
    %5169 = vmatprep.subr.mxu0 0.0
    %5170 = vmatpush1.msra.mxu0 0.0
    %5171 = vmatprep.subr.mxu0 0.0
    %5172 = vmatpush1.msra.mxu0 0.0
    %5173 = vmatprep.subr.mxu0 0.0
    %5174 = vmatpush1.msra.mxu0 0.0
    %5175 = vmatprep.subr.mxu0 0.0
    %5176 = vmatpush1.msra.mxu0 0.0
    %5177 = vmatprep.mubr.f32.mxu0 0.0
    %5178 = vmatmul.mubr.f32.gmra.mrb[0].mxu0 %v5108
    %v5179 = vpop.f32.mrb[0].mxu0
    %v5180 = vadd.f32 0.0, %v5179
    %v5181 = vpop.f32.mrb[0].mxu0
    %5182 = vdwg.mxu0
    %v5183 = vcombine.low %v4812, %v4796
    %v5185 = vunpack.c.l.s4 1966171168
    %v5186 = vunpack.c.0.s8 %v5185
    %v5187 = vlaneseq
    %v5188 = vshrl.u32 %v5187, 7
    %v5189 = vsub.s32 %v5186, %v5188
    %v5190 = vrot.slane %v5183, %v5189
    %v5192 = vunpack.c.l.s4 1966171168
    %v5193 = vunpack.c.0.s8 %v5192
    %v5194 = vlaneseq
    %v5195 = vshrl.u32 %v5194, 7
    %v5196 = vsub.s32 %v5193, %v5195
    %v5197 = vrot.slane %v4810, %v5196
    %v5198 = vcombine.low %v5190, %v5197
    %v5200 = vunpack.c.l.s4 1966171168
    %v5201 = vunpack.c.0.s8 %v5200
    %v5202 = vlaneseq
    %v5203 = vshrl.u32 %v5202, 7
    %v5204 = vsub.s32 %v5201, %v5203
    %v5205 = vrot.slane %v5198, %v5204
    %v5207 = vsel %vm5106, %v5082, 0
    %v5209 = vsel %vm5110, %v5205, 0
    %5211 = vmatprep.subr.mxu0 0.0
    %5212 = vmatpush1.msra.mxu0 %v5209
    %5213 = vmatprep.subr.mxu0 0.0
    %5214 = vmatpush1.msra.mxu0 0.0
    %5215 = vmatprep.subr.mxu0 0.0
    %5216 = vmatpush1.msra.mxu0 0.0
    %5217 = vmatprep.subr.mxu0 0.0
    %5218 = vmatpush1.msra.mxu0 0.0
    %5219 = vmatprep.subr.mxu0 0.0
    %5220 = vmatpush1.msra.mxu0 0.0
    %5221 = vmatprep.subr.mxu0 0.0
    %5222 = vmatpush1.msra.mxu0 0.0
    %5223 = vmatprep.subr.mxu0 0.0
    %5224 = vmatpush1.msra.mxu0 0.0
    %5225 = vmatprep.subr.mxu0 0.0
    %5226 = vmatpush1.msra.mxu0 0.0
    %5227 = vmatprep.subr.mxu0 0.0
    %5228 = vmatpush1.msra.mxu0 0.0
    %5229 = vmatprep.subr.mxu0 0.0
    %5230 = vmatpush1.msra.mxu0 0.0
    %5231 = vmatprep.subr.mxu0 0.0
    %5232 = vmatpush1.msra.mxu0 0.0
    %5233 = vmatprep.subr.mxu0 0.0
    %5234 = vmatpush1.msra.mxu0 0.0
    %5235 = vmatprep.subr.mxu0 0.0
    %5236 = vmatpush1.msra.mxu0 0.0
    %5237 = vmatprep.subr.mxu0 0.0
    %5238 = vmatpush1.msra.mxu0 0.0
    %5239 = vmatprep.subr.mxu0 0.0
    %5240 = vmatpush1.msra.mxu0 0.0
    %5241 = vmatprep.subr.mxu0 0.0
    %5242 = vmatpush1.msra.mxu0 0.0
    %5243 = vmatprep.subr.mxu0 0.0
    %5244 = vmatpush1.msra.mxu0 0.0
    %5245 = vmatprep.subr.mxu0 0.0
    %5246 = vmatpush1.msra.mxu0 0.0
    %5247 = vmatprep.subr.mxu0 0.0
    %5248 = vmatpush1.msra.mxu0 0.0
    %5249 = vmatprep.subr.mxu0 0.0
    %5250 = vmatpush1.msra.mxu0 0.0
    %5251 = vmatprep.subr.mxu0 0.0
    %5252 = vmatpush1.msra.mxu0 0.0
    %5253 = vmatprep.subr.mxu0 0.0
    %5254 = vmatpush1.msra.mxu0 0.0
    %5255 = vmatprep.subr.mxu0 0.0
    %5256 = vmatpush1.msra.mxu0 0.0
    %5257 = vmatprep.subr.mxu0 0.0
    %5258 = vmatpush1.msra.mxu0 0.0
    %5259 = vmatprep.subr.mxu0 0.0
    %5260 = vmatpush1.msra.mxu0 0.0
    %5261 = vmatprep.subr.mxu0 0.0
    %5262 = vmatpush1.msra.mxu0 0.0
    %5263 = vmatprep.subr.mxu0 0.0
    %5264 = vmatpush1.msra.mxu0 0.0
    %5265 = vmatprep.subr.mxu0 0.0
    %5266 = vmatpush1.msra.mxu0 0.0
    %5267 = vmatprep.subr.mxu0 0.0
    %5268 = vmatpush1.msra.mxu0 0.0
    %5269 = vmatprep.subr.mxu0 0.0
    %5270 = vmatpush1.msra.mxu0 0.0
    %5271 = vmatprep.subr.mxu0 0.0
    %5272 = vmatpush1.msra.mxu0 0.0
    %5273 = vmatprep.subr.mxu0 0.0
    %5274 = vmatpush1.msra.mxu0 0.0
    %5275 = vmatprep.mubr.f32.mxu0 0.0
    %5276 = vmatmul.mubr.f32.gmra.mrb[0].mxu0 %v5207
    %v5277 = vpop.f32.mrb[0].mxu0
    %v5278 = vadd.f32 0.0, %v5277
    %v5279 = vpop.f32.mrb[0].mxu0
    %5280 = vdwg.mxu0
    %5281 = vrot.lane.b32.xlu0 %v4838, 120
    %v5282 = vpop.permute.xlu0 %5281
    %5283 = vrot.lane.b32.xlu0 %v4861, 120
    %v5284 = vpop.permute.xlu0 %5283
    %v5285 = vsel %vm4862, %v5282, 0
    %v5287 = vsel %vm4862, %v5284, 0
    %5289 = vmatprep.subr.mxu0 0.0
    %5290 = vmatpush1.xpose.msra.mxu0 %v5287
    %5291 = vmatprep.subr.mxu0 0.0
    %5292 = vmatpush1.xpose.msra.mxu0 0.0
    %5293 = vmatprep.subr.mxu0 0.0
    %5294 = vmatpush1.xpose.msra.mxu0 0.0
    %5295 = vmatprep.subr.mxu0 0.0
    %5296 = vmatpush1.xpose.msra.mxu0 0.0
    %5297 = vmatprep.subr.mxu0 0.0
    %5298 = vmatpush1.xpose.msra.mxu0 0.0
    %5299 = vmatprep.subr.mxu0 0.0
    %5300 = vmatpush1.xpose.msra.mxu0 0.0
    %5301 = vmatprep.subr.mxu0 0.0
    %5302 = vmatpush1.xpose.msra.mxu0 0.0
    %5303 = vmatprep.subr.mxu0 0.0
    %5304 = vmatpush1.xpose.msra.mxu0 0.0
    %5305 = vmatprep.subr.mxu0 0.0
    %5306 = vmatpush1.xpose.msra.mxu0 0.0
    %5307 = vmatprep.subr.mxu0 0.0
    %5308 = vmatpush1.xpose.msra.mxu0 0.0
    %5309 = vmatprep.subr.mxu0 0.0
    %5310 = vmatpush1.xpose.msra.mxu0 0.0
    %5311 = vmatprep.subr.mxu0 0.0
    %5312 = vmatpush1.xpose.msra.mxu0 0.0
    %5313 = vmatprep.subr.mxu0 0.0
    %5314 = vmatpush1.xpose.msra.mxu0 0.0
    %5315 = vmatprep.subr.mxu0 0.0
    %5316 = vmatpush1.xpose.msra.mxu0 0.0
    %5317 = vmatprep.subr.mxu0 0.0
    %5318 = vmatpush1.xpose.msra.mxu0 0.0
    %5319 = vmatprep.subr.mxu0 0.0
    %5320 = vmatpush1.xpose.msra.mxu0 0.0
    %5321 = vmatprep.subr.mxu0 0.0
    %5322 = vmatpush1.xpose.msra.mxu0 0.0
    %5323 = vmatprep.subr.mxu0 0.0
    %5324 = vmatpush1.xpose.msra.mxu0 0.0
    %5325 = vmatprep.subr.mxu0 0.0
    %5326 = vmatpush1.xpose.msra.mxu0 0.0
    %5327 = vmatprep.subr.mxu0 0.0
    %5328 = vmatpush1.xpose.msra.mxu0 0.0
    %5329 = vmatprep.subr.mxu0 0.0
    %5330 = vmatpush1.xpose.msra.mxu0 0.0
    %5331 = vmatprep.subr.mxu0 0.0
    %5332 = vmatpush1.xpose.msra.mxu0 0.0
    %5333 = vmatprep.subr.mxu0 0.0
    %5334 = vmatpush1.xpose.msra.mxu0 0.0
    %5335 = vmatprep.subr.mxu0 0.0
    %5336 = vmatpush1.xpose.msra.mxu0 0.0
    %5337 = vmatprep.subr.mxu0 0.0
    %5338 = vmatpush1.xpose.msra.mxu0 0.0
    %5339 = vmatprep.subr.mxu0 0.0
    %5340 = vmatpush1.xpose.msra.mxu0 0.0
    %5341 = vmatprep.subr.mxu0 0.0
    %5342 = vmatpush1.xpose.msra.mxu0 0.0
    %5343 = vmatprep.subr.mxu0 0.0
    %5344 = vmatpush1.xpose.msra.mxu0 0.0
    %5345 = vmatprep.subr.mxu0 0.0
    %5346 = vmatpush1.xpose.msra.mxu0 0.0
    %5347 = vmatprep.subr.mxu0 0.0
    %5348 = vmatpush1.xpose.msra.mxu0 0.0
    %5349 = vmatprep.subr.mxu0 0.0
    %5350 = vmatpush1.xpose.msra.mxu0 0.0
    %5351 = vmatprep.subr.mxu0 0.0
    %5352 = vmatpush1.xpose.msra.mxu0 0.0
    %5353 = vmatprep.mubr.f32.mxu0 0.0
    %5354 = vmatmul.mubr.f32.gmra.mrb[0].mxu0 %v5285
    %v5355 = vpop.f32.mrb[0].mxu0
    %v5356 = vadd.f32 0.0, %v5355
    %v5357 = vpop.f32.mrb[0].mxu0
    %5358 = vdwg.mxu0
    %5359 = vrot.lane.b32.xlu0 %v4962, 120
    %v5360 = vpop.permute.xlu0 %5359
    %5361 = vrot.lane.b32.xlu0 %v4985, 120
    %v5362 = vpop.permute.xlu0 %5361
    %v5363 = vsel %vm4862, %v5360, 0
    %v5365 = vsel %vm4862, %v5362, 0
    %5367 = vmatprep.subr.mxu0 0.0
    %5368 = vmatpush1.xpose.msra.mxu0 %v5365
    %5369 = vmatprep.subr.mxu0 0.0
    %5370 = vmatpush1.xpose.msra.mxu0 0.0
    %5371 = vmatprep.subr.mxu0 0.0
    %5372 = vmatpush1.xpose.msra.mxu0 0.0
    %5373 = vmatprep.subr.mxu0 0.0
    %5374 = vmatpush1.xpose.msra.mxu0 0.0
    %5375 = vmatprep.subr.mxu0 0.0
    %5376 = vmatpush1.xpose.msra.mxu0 0.0
    %5377 = vmatprep.subr.mxu0 0.0
    %5378 = vmatpush1.xpose.msra.mxu0 0.0
    %5379 = vmatprep.subr.mxu0 0.0
    %5380 = vmatpush1.xpose.msra.mxu0 0.0
    %5381 = vmatprep.subr.mxu0 0.0
    %5382 = vmatpush1.xpose.msra.mxu0 0.0
    %5383 = vmatprep.subr.mxu0 0.0
    %5384 = vmatpush1.xpose.msra.mxu0 0.0
    %5385 = vmatprep.subr.mxu0 0.0
    %5386 = vmatpush1.xpose.msra.mxu0 0.0
    %5387 = vmatprep.subr.mxu0 0.0
    %5388 = vmatpush1.xpose.msra.mxu0 0.0
    %5389 = vmatprep.subr.mxu0 0.0
    %5390 = vmatpush1.xpose.msra.mxu0 0.0
    %5391 = vmatprep.subr.mxu0 0.0
    %5392 = vmatpush1.xpose.msra.mxu0 0.0
    %5393 = vmatprep.subr.mxu0 0.0
    %5394 = vmatpush1.xpose.msra.mxu0 0.0
    %5395 = vmatprep.subr.mxu0 0.0
    %5396 = vmatpush1.xpose.msra.mxu0 0.0
    %5397 = vmatprep.subr.mxu0 0.0
    %5398 = vmatpush1.xpose.msra.mxu0 0.0
    %5399 = vmatprep.subr.mxu0 0.0
    %5400 = vmatpush1.xpose.msra.mxu0 0.0
    %5401 = vmatprep.subr.mxu0 0.0
    %5402 = vmatpush1.xpose.msra.mxu0 0.0
    %5403 = vmatprep.subr.mxu0 0.0
    %5404 = vmatpush1.xpose.msra.mxu0 0.0
    %5405 = vmatprep.subr.mxu0 0.0
    %5406 = vmatpush1.xpose.msra.mxu0 0.0
    %5407 = vmatprep.subr.mxu0 0.0
    %5408 = vmatpush1.xpose.msra.mxu0 0.0
    %5409 = vmatprep.subr.mxu0 0.0
    %5410 = vmatpush1.xpose.msra.mxu0 0.0
    %5411 = vmatprep.subr.mxu0 0.0
    %5412 = vmatpush1.xpose.msra.mxu0 0.0
    %5413 = vmatprep.subr.mxu0 0.0
    %5414 = vmatpush1.xpose.msra.mxu0 0.0
    %5415 = vmatprep.subr.mxu0 0.0
    %5416 = vmatpush1.xpose.msra.mxu0 0.0
    %5417 = vmatprep.subr.mxu0 0.0
    %5418 = vmatpush1.xpose.msra.mxu0 0.0
    %5419 = vmatprep.subr.mxu0 0.0
    %5420 = vmatpush1.xpose.msra.mxu0 0.0
    %5421 = vmatprep.subr.mxu0 0.0
    %5422 = vmatpush1.xpose.msra.mxu0 0.0
    %5423 = vmatprep.subr.mxu0 0.0
    %5424 = vmatpush1.xpose.msra.mxu0 0.0
    %5425 = vmatprep.subr.mxu0 0.0
    %5426 = vmatpush1.xpose.msra.mxu0 0.0
    %5427 = vmatprep.subr.mxu0 0.0
    %5428 = vmatpush1.xpose.msra.mxu0 0.0
    %5429 = vmatprep.subr.mxu0 0.0
    %5430 = vmatpush1.xpose.msra.mxu0 0.0
    %5431 = vmatprep.mubr.f32.mxu0 0.0
    %5432 = vmatmul.mubr.f32.gmra.mrb[0].mxu0 %v5363
    %v5433 = vpop.f32.mrb[0].mxu0
    %v5434 = vadd.f32 0.0, %v5433
    %v5435 = vpop.f32.mrb[0].mxu0
    %5436 = vdwg.mxu0
    %v5437 = vsel %vm5060, %v5356, -inf
    %5438 = vmax.xlane.f32.xlu0 %v5437
    %v5439 = vpop.xlane.xlu0 %5438
    %v5440 = vsel %vm5060, %v5434, -inf
    %5441 = vmax.xlane.f32.xlu0 %v5440
    %v5442 = vpop.xlane.xlu0 %5441
    %v5443 = vsub.f32 %v5356, %v5439
    %v5444 = vsub.f32 %v5434, %v5442
    %v5445 = vmul.f32 %v5443, 1.442695
    %v5446 = vpow.pop %v5445
    %v5447 = vmul.f32 %v5444, 1.442695
    %v5448 = vpow.pop %v5447
    %v5449 = vsel %vm5060, %v5446, 0.0
    %5450 = vadd.xlane.f32.xlu0 %v5449
    %v5451 = vpop.xlane.xlu0 %5450
    %v5452 = vsel %vm5060, %v5448, 0.0
    %5453 = vadd.xlane.f32.xlu0 %v5452
    %v5454 = vpop.xlane.xlu0 %5453
    %v5455 = vrcp.pop %v5451
    %v5456 = vrcp.pop %v5454
    %v5457 = vmul.f32 %v5446, %v5455
    %v5458 = vmul.f32 %v5448, %v5456
    %5459 = vrot.lane.b32.xlu0 %v5105, 120
    %v5460 = vpop.permute.xlu0 %5459
    %v5462 = vsel %vm5106, %v5457, 0
    %v5464 = vsel %vm5110, %v5460, 0
    %5466 = vmatprep.subr.mxu0 0.0
    %5467 = vmatpush1.msra.mxu0 %v5464
    %5468 = vmatprep.subr.mxu0 0.0
    %5469 = vmatpush1.msra.mxu0 0.0
    %5470 = vmatprep.subr.mxu0 0.0
    %5471 = vmatpush1.msra.mxu0 0.0
    %5472 = vmatprep.subr.mxu0 0.0
    %5473 = vmatpush1.msra.mxu0 0.0
    %5474 = vmatprep.subr.mxu0 0.0
    %5475 = vmatpush1.msra.mxu0 0.0
    %5476 = vmatprep.subr.mxu0 0.0
    %5477 = vmatpush1.msra.mxu0 0.0
    %5478 = vmatprep.subr.mxu0 0.0
    %5479 = vmatpush1.msra.mxu0 0.0
    %5480 = vmatprep.subr.mxu0 0.0
    %5481 = vmatpush1.msra.mxu0 0.0
    %5482 = vmatprep.subr.mxu0 0.0
    %5483 = vmatpush1.msra.mxu0 0.0
    %5484 = vmatprep.subr.mxu0 0.0
    %5485 = vmatpush1.msra.mxu0 0.0
    %5486 = vmatprep.subr.mxu0 0.0
    %5487 = vmatpush1.msra.mxu0 0.0
    %5488 = vmatprep.subr.mxu0 0.0
    %5489 = vmatpush1.msra.mxu0 0.0
    %5490 = vmatprep.subr.mxu0 0.0
    %5491 = vmatpush1.msra.mxu0 0.0
    %5492 = vmatprep.subr.mxu0 0.0
    %5493 = vmatpush1.msra.mxu0 0.0
    %5494 = vmatprep.subr.mxu0 0.0
    %5495 = vmatpush1.msra.mxu0 0.0
    %5496 = vmatprep.subr.mxu0 0.0
    %5497 = vmatpush1.msra.mxu0 0.0
    %5498 = vmatprep.subr.mxu0 0.0
    %5499 = vmatpush1.msra.mxu0 0.0
    %5500 = vmatprep.subr.mxu0 0.0
    %5501 = vmatpush1.msra.mxu0 0.0
    %5502 = vmatprep.subr.mxu0 0.0
    %5503 = vmatpush1.msra.mxu0 0.0
    %5504 = vmatprep.subr.mxu0 0.0
    %5505 = vmatpush1.msra.mxu0 0.0
    %5506 = vmatprep.subr.mxu0 0.0
    %5507 = vmatpush1.msra.mxu0 0.0
    %5508 = vmatprep.subr.mxu0 0.0
    %5509 = vmatpush1.msra.mxu0 0.0
    %5510 = vmatprep.subr.mxu0 0.0
    %5511 = vmatpush1.msra.mxu0 0.0
    %5512 = vmatprep.subr.mxu0 0.0
    %5513 = vmatpush1.msra.mxu0 0.0
    %5514 = vmatprep.subr.mxu0 0.0
    %5515 = vmatpush1.msra.mxu0 0.0
    %5516 = vmatprep.subr.mxu0 0.0
    %5517 = vmatpush1.msra.mxu0 0.0
    %5518 = vmatprep.subr.mxu0 0.0
    %5519 = vmatpush1.msra.mxu0 0.0
    %5520 = vmatprep.subr.mxu0 0.0
    %5521 = vmatpush1.msra.mxu0 0.0
    %5522 = vmatprep.subr.mxu0 0.0
    %5523 = vmatpush1.msra.mxu0 0.0
    %5524 = vmatprep.subr.mxu0 0.0
    %5525 = vmatpush1.msra.mxu0 0.0
    %5526 = vmatprep.subr.mxu0 0.0
    %5527 = vmatpush1.msra.mxu0 0.0
    %5528 = vmatprep.subr.mxu0 0.0
    %5529 = vmatpush1.msra.mxu0 0.0
    %5530 = vmatprep.mubr.f32.mxu0 0.0
    %5531 = vmatmul.mubr.f32.gmra.mrb[0].mxu0 %v5462
    %v5532 = vpop.f32.mrb[0].mxu0
    %v5533 = vadd.f32 0.0, %v5532
    %v5534 = vpop.f32.mrb[0].mxu0
    %5535 = vdwg.mxu0
    %5536 = vrot.lane.b32.xlu0 %v5205, 120
    %v5537 = vpop.permute.xlu0 %5536
    %v5539 = vsel %vm5106, %v5458, 0
    %v5541 = vsel %vm5110, %v5537, 0
    %5543 = vmatprep.subr.mxu0 0.0
    %5544 = vmatpush1.msra.mxu0 %v5541
    %5545 = vmatprep.subr.mxu0 0.0
    %5546 = vmatpush1.msra.mxu0 0.0
    %5547 = vmatprep.subr.mxu0 0.0
    %5548 = vmatpush1.msra.mxu0 0.0
    %5549 = vmatprep.subr.mxu0 0.0
    %5550 = vmatpush1.msra.mxu0 0.0
    %5551 = vmatprep.subr.mxu0 0.0
    %5552 = vmatpush1.msra.mxu0 0.0
    %5553 = vmatprep.subr.mxu0 0.0
    %5554 = vmatpush1.msra.mxu0 0.0
    %5555 = vmatprep.subr.mxu0 0.0
    %5556 = vmatpush1.msra.mxu0 0.0
    %5557 = vmatprep.subr.mxu0 0.0
    %5558 = vmatpush1.msra.mxu0 0.0
    %5559 = vmatprep.subr.mxu0 0.0
    %5560 = vmatpush1.msra.mxu0 0.0
    %5561 = vmatprep.subr.mxu0 0.0
    %5562 = vmatpush1.msra.mxu0 0.0
    %5563 = vmatprep.subr.mxu0 0.0
    %5564 = vmatpush1.msra.mxu0 0.0
    %5565 = vmatprep.subr.mxu0 0.0
    %5566 = vmatpush1.msra.mxu0 0.0
    %5567 = vmatprep.subr.mxu0 0.0
    %5568 = vmatpush1.msra.mxu0 0.0
    %5569 = vmatprep.subr.mxu0 0.0
    %5570 = vmatpush1.msra.mxu0 0.0
    %5571 = vmatprep.subr.mxu0 0.0
    %5572 = vmatpush1.msra.mxu0 0.0
    %5573 = vmatprep.subr.mxu0 0.0
    %5574 = vmatpush1.msra.mxu0 0.0
    %5575 = vmatprep.subr.mxu0 0.0
    %5576 = vmatpush1.msra.mxu0 0.0
    %5577 = vmatprep.subr.mxu0 0.0
    %5578 = vmatpush1.msra.mxu0 0.0
    %5579 = vmatprep.subr.mxu0 0.0
    %5580 = vmatpush1.msra.mxu0 0.0
    %5581 = vmatprep.subr.mxu0 0.0
    %5582 = vmatpush1.msra.mxu0 0.0
    %5583 = vmatprep.subr.mxu0 0.0
    %5584 = vmatpush1.msra.mxu0 0.0
    %5585 = vmatprep.subr.mxu0 0.0
    %5586 = vmatpush1.msra.mxu0 0.0
    %5587 = vmatprep.subr.mxu0 0.0
    %5588 = vmatpush1.msra.mxu0 0.0
    %5589 = vmatprep.subr.mxu0 0.0
    %5590 = vmatpush1.msra.mxu0 0.0
    %5591 = vmatprep.subr.mxu0 0.0
    %5592 = vmatpush1.msra.mxu0 0.0
    %5593 = vmatprep.subr.mxu0 0.0
    %5594 = vmatpush1.msra.mxu0 0.0
    %5595 = vmatprep.subr.mxu0 0.0
    %5596 = vmatpush1.msra.mxu0 0.0
    %5597 = vmatprep.subr.mxu0 0.0
    %5598 = vmatpush1.msra.mxu0 0.0
    %5599 = vmatprep.subr.mxu0 0.0
    %5600 = vmatpush1.msra.mxu0 0.0
    %5601 = vmatprep.subr.mxu0 0.0
    %5602 = vmatpush1.msra.mxu0 0.0
    %5603 = vmatprep.subr.mxu0 0.0
    %5604 = vmatpush1.msra.mxu0 0.0
    %5605 = vmatprep.subr.mxu0 0.0
    %5606 = vmatpush1.msra.mxu0 0.0
    %5607 = vmatprep.mubr.f32.mxu0 0.0
    %5608 = vmatmul.mubr.f32.gmra.mrb[0].mxu0 %v5539
    %v5609 = vpop.f32.mrb[0].mxu0
    %v5610 = vadd.f32 0.0, %v5609
    %v5611 = vpop.f32.mrb[0].mxu0
    %5612 = vdwg.mxu0
    %5613 = vrot.lane.b32.xlu0 %v4838, 112
    %v5614 = vpop.permute.xlu0 %5613
    %5615 = vrot.lane.b32.xlu0 %v4861, 112
    %v5616 = vpop.permute.xlu0 %5615
    %v5617 = vsel %vm4862, %v5614, 0
    %v5619 = vsel %vm4862, %v5616, 0
    %5621 = vmatprep.subr.mxu0 0.0
    %5622 = vmatpush1.xpose.msra.mxu0 %v5619
    %5623 = vmatprep.subr.mxu0 0.0
    %5624 = vmatpush1.xpose.msra.mxu0 0.0
    %5625 = vmatprep.subr.mxu0 0.0
    %5626 = vmatpush1.xpose.msra.mxu0 0.0
    %5627 = vmatprep.subr.mxu0 0.0
    %5628 = vmatpush1.xpose.msra.mxu0 0.0
    %5629 = vmatprep.subr.mxu0 0.0
    %5630 = vmatpush1.xpose.msra.mxu0 0.0
    %5631 = vmatprep.subr.mxu0 0.0
    %5632 = vmatpush1.xpose.msra.mxu0 0.0
    %5633 = vmatprep.subr.mxu0 0.0
    %5634 = vmatpush1.xpose.msra.mxu0 0.0
    %5635 = vmatprep.subr.mxu0 0.0
    %5636 = vmatpush1.xpose.msra.mxu0 0.0
    %5637 = vmatprep.subr.mxu0 0.0
    %5638 = vmatpush1.xpose.msra.mxu0 0.0
    %5639 = vmatprep.subr.mxu0 0.0
    %5640 = vmatpush1.xpose.msra.mxu0 0.0
    %5641 = vmatprep.subr.mxu0 0.0
    %5642 = vmatpush1.xpose.msra.mxu0 0.0
    %5643 = vmatprep.subr.mxu0 0.0
    %5644 = vmatpush1.xpose.msra.mxu0 0.0
    %5645 = vmatprep.subr.mxu0 0.0
    %5646 = vmatpush1.xpose.msra.mxu0 0.0
    %5647 = vmatprep.subr.mxu0 0.0
    %5648 = vmatpush1.xpose.msra.mxu0 0.0
    %5649 = vmatprep.subr.mxu0 0.0
    %5650 = vmatpush1.xpose.msra.mxu0 0.0
    %5651 = vmatprep.subr.mxu0 0.0
    %5652 = vmatpush1.xpose.msra.mxu0 0.0
    %5653 = vmatprep.subr.mxu0 0.0
    %5654 = vmatpush1.xpose.msra.mxu0 0.0
    %5655 = vmatprep.subr.mxu0 0.0
    %5656 = vmatpush1.xpose.msra.mxu0 0.0
    %5657 = vmatprep.subr.mxu0 0.0
    %5658 = vmatpush1.xpose.msra.mxu0 0.0
    %5659 = vmatprep.subr.mxu0 0.0
    %5660 = vmatpush1.xpose.msra.mxu0 0.0
    %5661 = vmatprep.subr.mxu0 0.0
    %5662 = vmatpush1.xpose.msra.mxu0 0.0
    %5663 = vmatprep.subr.mxu0 0.0
    %5664 = vmatpush1.xpose.msra.mxu0 0.0
    %5665 = vmatprep.subr.mxu0 0.0
    %5666 = vmatpush1.xpose.msra.mxu0 0.0
    %5667 = vmatprep.subr.mxu0 0.0
    %5668 = vmatpush1.xpose.msra.mxu0 0.0
    %5669 = vmatprep.subr.mxu0 0.0
    %5670 = vmatpush1.xpose.msra.mxu0 0.0
    %5671 = vmatprep.subr.mxu0 0.0
    %5672 = vmatpush1.xpose.msra.mxu0 0.0
    %5673 = vmatprep.subr.mxu0 0.0
    %5674 = vmatpush1.xpose.msra.mxu0 0.0
    %5675 = vmatprep.subr.mxu0 0.0
    %5676 = vmatpush1.xpose.msra.mxu0 0.0
    %5677 = vmatprep.subr.mxu0 0.0
    %5678 = vmatpush1.xpose.msra.mxu0 0.0
    %5679 = vmatprep.subr.mxu0 0.0
    %5680 = vmatpush1.xpose.msra.mxu0 0.0
    %5681 = vmatprep.subr.mxu0 0.0
    %5682 = vmatpush1.xpose.msra.mxu0 0.0
    %5683 = vmatprep.subr.mxu0 0.0
    %5684 = vmatpush1.xpose.msra.mxu0 0.0
    %5685 = vmatprep.mubr.f32.mxu0 0.0
    %5686 = vmatmul.mubr.f32.gmra.mrb[0].mxu0 %v5617
    %v5687 = vpop.f32.mrb[0].mxu0
    %v5688 = vadd.f32 0.0, %v5687
    %v5689 = vpop.f32.mrb[0].mxu0
    %5690 = vdwg.mxu0
    %5691 = vrot.lane.b32.xlu0 %v4962, 112
    %v5692 = vpop.permute.xlu0 %5691
    %5693 = vrot.lane.b32.xlu0 %v4985, 112
    %v5694 = vpop.permute.xlu0 %5693
    %v5695 = vsel %vm4862, %v5692, 0
    %v5697 = vsel %vm4862, %v5694, 0
    %5699 = vmatprep.subr.mxu0 0.0
    %5700 = vmatpush1.xpose.msra.mxu0 %v5697
    %5701 = vmatprep.subr.mxu0 0.0
    %5702 = vmatpush1.xpose.msra.mxu0 0.0
    %5703 = vmatprep.subr.mxu0 0.0
    %5704 = vmatpush1.xpose.msra.mxu0 0.0
    %5705 = vmatprep.subr.mxu0 0.0
    %5706 = vmatpush1.xpose.msra.mxu0 0.0
    %5707 = vmatprep.subr.mxu0 0.0
    %5708 = vmatpush1.xpose.msra.mxu0 0.0
    %5709 = vmatprep.subr.mxu0 0.0
    %5710 = vmatpush1.xpose.msra.mxu0 0.0
    %5711 = vmatprep.subr.mxu0 0.0
    %5712 = vmatpush1.xpose.msra.mxu0 0.0
    %5713 = vmatprep.subr.mxu0 0.0
    %5714 = vmatpush1.xpose.msra.mxu0 0.0
    %5715 = vmatprep.subr.mxu0 0.0
    %5716 = vmatpush1.xpose.msra.mxu0 0.0
    %5717 = vmatprep.subr.mxu0 0.0
    %5718 = vmatpush1.xpose.msra.mxu0 0.0
    %5719 = vmatprep.subr.mxu0 0.0
    %5720 = vmatpush1.xpose.msra.mxu0 0.0
    %5721 = vmatprep.subr.mxu0 0.0
    %5722 = vmatpush1.xpose.msra.mxu0 0.0
    %5723 = vmatprep.subr.mxu0 0.0
    %5724 = vmatpush1.xpose.msra.mxu0 0.0
    %5725 = vmatprep.subr.mxu0 0.0
    %5726 = vmatpush1.xpose.msra.mxu0 0.0
    %5727 = vmatprep.subr.mxu0 0.0
    %5728 = vmatpush1.xpose.msra.mxu0 0.0
    %5729 = vmatprep.subr.mxu0 0.0
    %5730 = vmatpush1.xpose.msra.mxu0 0.0
    %5731 = vmatprep.subr.mxu0 0.0
    %5732 = vmatpush1.xpose.msra.mxu0 0.0
    %5733 = vmatprep.subr.mxu0 0.0
    %5734 = vmatpush1.xpose.msra.mxu0 0.0
    %5735 = vmatprep.subr.mxu0 0.0
    %5736 = vmatpush1.xpose.msra.mxu0 0.0
    %5737 = vmatprep.subr.mxu0 0.0
    %5738 = vmatpush1.xpose.msra.mxu0 0.0
    %5739 = vmatprep.subr.mxu0 0.0
    %5740 = vmatpush1.xpose.msra.mxu0 0.0
    %5741 = vmatprep.subr.mxu0 0.0
    %5742 = vmatpush1.xpose.msra.mxu0 0.0
    %5743 = vmatprep.subr.mxu0 0.0
    %5744 = vmatpush1.xpose.msra.mxu0 0.0
    %5745 = vmatprep.subr.mxu0 0.0
    %5746 = vmatpush1.xpose.msra.mxu0 0.0
    %5747 = vmatprep.subr.mxu0 0.0
    %5748 = vmatpush1.xpose.msra.mxu0 0.0
    %5749 = vmatprep.subr.mxu0 0.0
    %5750 = vmatpush1.xpose.msra.mxu0 0.0
    %5751 = vmatprep.subr.mxu0 0.0
    %5752 = vmatpush1.xpose.msra.mxu0 0.0
    %5753 = vmatprep.subr.mxu0 0.0
    %5754 = vmatpush1.xpose.msra.mxu0 0.0
    %5755 = vmatprep.subr.mxu0 0.0
    %5756 = vmatpush1.xpose.msra.mxu0 0.0
    %5757 = vmatprep.subr.mxu0 0.0
    %5758 = vmatpush1.xpose.msra.mxu0 0.0
    %5759 = vmatprep.subr.mxu0 0.0
    %5760 = vmatpush1.xpose.msra.mxu0 0.0
    %5761 = vmatprep.subr.mxu0 0.0
    %5762 = vmatpush1.xpose.msra.mxu0 0.0
    %5763 = vmatprep.mubr.f32.mxu0 0.0
    %5764 = vmatmul.mubr.f32.gmra.mrb[0].mxu0 %v5695
    %v5765 = vpop.f32.mrb[0].mxu0
    %v5766 = vadd.f32 0.0, %v5765
    %v5767 = vpop.f32.mrb[0].mxu0
    %5768 = vdwg.mxu0
    %v5769 = vsel %vm5060, %v5688, -inf
    %5770 = vmax.xlane.f32.xlu0 %v5769
    %v5771 = vpop.xlane.xlu0 %5770
    %v5772 = vsel %vm5060, %v5766, -inf
    %5773 = vmax.xlane.f32.xlu0 %v5772
    %v5774 = vpop.xlane.xlu0 %5773
    %v5775 = vsub.f32 %v5688, %v5771
    %v5776 = vsub.f32 %v5766, %v5774
    %v5777 = vmul.f32 %v5775, 1.442695
    %v5778 = vpow.pop %v5777
    %v5779 = vmul.f32 %v5776, 1.442695
    %v5780 = vpow.pop %v5779
    %v5781 = vsel %vm5060, %v5778, 0.0
    %5782 = vadd.xlane.f32.xlu0 %v5781
    %v5783 = vpop.xlane.xlu0 %5782
    %v5784 = vsel %vm5060, %v5780, 0.0
    %5785 = vadd.xlane.f32.xlu0 %v5784
    %v5786 = vpop.xlane.xlu0 %5785
    %v5787 = vrcp.pop %v5783
    %v5788 = vrcp.pop %v5786
    %v5789 = vmul.f32 %v5778, %v5787
    %v5790 = vmul.f32 %v5780, %v5788
    %5791 = vrot.lane.b32.xlu0 %v5105, 112
    %v5792 = vpop.permute.xlu0 %5791
    %v5794 = vsel %vm5106, %v5789, 0
    %v5796 = vsel %vm5110, %v5792, 0
    %5798 = vmatprep.subr.mxu0 0.0
    %5799 = vmatpush1.msra.mxu0 %v5796
    %5800 = vmatprep.subr.mxu0 0.0
    %5801 = vmatpush1.msra.mxu0 0.0
    %5802 = vmatprep.subr.mxu0 0.0
    %5803 = vmatpush1.msra.mxu0 0.0
    %5804 = vmatprep.subr.mxu0 0.0
    %5805 = vmatpush1.msra.mxu0 0.0
    %5806 = vmatprep.subr.mxu0 0.0
    %5807 = vmatpush1.msra.mxu0 0.0
    %5808 = vmatprep.subr.mxu0 0.0
    %5809 = vmatpush1.msra.mxu0 0.0
    %5810 = vmatprep.subr.mxu0 0.0
    %5811 = vmatpush1.msra.mxu0 0.0
    %5812 = vmatprep.subr.mxu0 0.0
    %5813 = vmatpush1.msra.mxu0 0.0
    %5814 = vmatprep.subr.mxu0 0.0
    %5815 = vmatpush1.msra.mxu0 0.0
    %5816 = vmatprep.subr.mxu0 0.0
    %5817 = vmatpush1.msra.mxu0 0.0
    %5818 = vmatprep.subr.mxu0 0.0
    %5819 = vmatpush1.msra.mxu0 0.0
    %5820 = vmatprep.subr.mxu0 0.0
    %5821 = vmatpush1.msra.mxu0 0.0
    %5822 = vmatprep.subr.mxu0 0.0
    %5823 = vmatpush1.msra.mxu0 0.0
    %5824 = vmatprep.subr.mxu0 0.0
    %5825 = vmatpush1.msra.mxu0 0.0
    %5826 = vmatprep.subr.mxu0 0.0
    %5827 = vmatpush1.msra.mxu0 0.0
    %5828 = vmatprep.subr.mxu0 0.0
    %5829 = vmatpush1.msra.mxu0 0.0
    %5830 = vmatprep.subr.mxu0 0.0
    %5831 = vmatpush1.msra.mxu0 0.0
    %5832 = vmatprep.subr.mxu0 0.0
    %5833 = vmatpush1.msra.mxu0 0.0
    %5834 = vmatprep.subr.mxu0 0.0
    %5835 = vmatpush1.msra.mxu0 0.0
    %5836 = vmatprep.subr.mxu0 0.0
    %5837 = vmatpush1.msra.mxu0 0.0
    %5838 = vmatprep.subr.mxu0 0.0
    %5839 = vmatpush1.msra.mxu0 0.0
    %5840 = vmatprep.subr.mxu0 0.0
    %5841 = vmatpush1.msra.mxu0 0.0
    %5842 = vmatprep.subr.mxu0 0.0
    %5843 = vmatpush1.msra.mxu0 0.0
    %5844 = vmatprep.subr.mxu0 0.0
    %5845 = vmatpush1.msra.mxu0 0.0
    %5846 = vmatprep.subr.mxu0 0.0
    %5847 = vmatpush1.msra.mxu0 0.0
    %5848 = vmatprep.subr.mxu0 0.0
    %5849 = vmatpush1.msra.mxu0 0.0
    %5850 = vmatprep.subr.mxu0 0.0
    %5851 = vmatpush1.msra.mxu0 0.0
    %5852 = vmatprep.subr.mxu0 0.0
    %5853 = vmatpush1.msra.mxu0 0.0
    %5854 = vmatprep.subr.mxu0 0.0
    %5855 = vmatpush1.msra.mxu0 0.0
    %5856 = vmatprep.subr.mxu0 0.0
    %5857 = vmatpush1.msra.mxu0 0.0
    %5858 = vmatprep.subr.mxu0 0.0
    %5859 = vmatpush1.msra.mxu0 0.0
    %5860 = vmatprep.subr.mxu0 0.0
    %5861 = vmatpush1.msra.mxu0 0.0
    %5862 = vmatprep.mubr.f32.mxu0 0.0
    %5863 = vmatmul.mubr.f32.gmra.mrb[0].mxu0 %v5794
    %v5864 = vpop.f32.mrb[0].mxu0
    %v5865 = vadd.f32 0.0, %v5864
    %v5866 = vpop.f32.mrb[0].mxu0
    %5867 = vdwg.mxu0
    %5868 = vrot.lane.b32.xlu0 %v5205, 112
    %v5869 = vpop.permute.xlu0 %5868
    %v5871 = vsel %vm5106, %v5790, 0
    %v5873 = vsel %vm5110, %v5869, 0
    %5875 = vmatprep.subr.mxu0 0.0
    %5876 = vmatpush1.msra.mxu0 %v5873
    %5877 = vmatprep.subr.mxu0 0.0
    %5878 = vmatpush1.msra.mxu0 0.0
    %5879 = vmatprep.subr.mxu0 0.0
    %5880 = vmatpush1.msra.mxu0 0.0
    %5881 = vmatprep.subr.mxu0 0.0
    %5882 = vmatpush1.msra.mxu0 0.0
    %5883 = vmatprep.subr.mxu0 0.0
    %5884 = vmatpush1.msra.mxu0 0.0
    %5885 = vmatprep.subr.mxu0 0.0
    %5886 = vmatpush1.msra.mxu0 0.0
    %5887 = vmatprep.subr.mxu0 0.0
    %5888 = vmatpush1.msra.mxu0 0.0
    %5889 = vmatprep.subr.mxu0 0.0
    %5890 = vmatpush1.msra.mxu0 0.0
    %5891 = vmatprep.subr.mxu0 0.0
    %5892 = vmatpush1.msra.mxu0 0.0
    %5893 = vmatprep.subr.mxu0 0.0
    %5894 = vmatpush1.msra.mxu0 0.0
    %5895 = vmatprep.subr.mxu0 0.0
    %5896 = vmatpush1.msra.mxu0 0.0
    %5897 = vmatprep.subr.mxu0 0.0
    %5898 = vmatpush1.msra.mxu0 0.0
    %5899 = vmatprep.subr.mxu0 0.0
    %5900 = vmatpush1.msra.mxu0 0.0
    %5901 = vmatprep.subr.mxu0 0.0
    %5902 = vmatpush1.msra.mxu0 0.0
    %5903 = vmatprep.subr.mxu0 0.0
    %5904 = vmatpush1.msra.mxu0 0.0
    %5905 = vmatprep.subr.mxu0 0.0
    %5906 = vmatpush1.msra.mxu0 0.0
    %5907 = vmatprep.subr.mxu0 0.0
    %5908 = vmatpush1.msra.mxu0 0.0
    %5909 = vmatprep.subr.mxu0 0.0
    %5910 = vmatpush1.msra.mxu0 0.0
    %5911 = vmatprep.subr.mxu0 0.0
    %5912 = vmatpush1.msra.mxu0 0.0
    %5913 = vmatprep.subr.mxu0 0.0
    %5914 = vmatpush1.msra.mxu0 0.0
    %5915 = vmatprep.subr.mxu0 0.0
    %5916 = vmatpush1.msra.mxu0 0.0
    %5917 = vmatprep.subr.mxu0 0.0
    %5918 = vmatpush1.msra.mxu0 0.0
    %5919 = vmatprep.subr.mxu0 0.0
    %5920 = vmatpush1.msra.mxu0 0.0
    %5921 = vmatprep.subr.mxu0 0.0
    %5922 = vmatpush1.msra.mxu0 0.0
    %5923 = vmatprep.subr.mxu0 0.0
    %5924 = vmatpush1.msra.mxu0 0.0
    %5925 = vmatprep.subr.mxu0 0.0
    %5926 = vmatpush1.msra.mxu0 0.0
    %5927 = vmatprep.subr.mxu0 0.0
    %5928 = vmatpush1.msra.mxu0 0.0
    %5929 = vmatprep.subr.mxu0 0.0
    %5930 = vmatpush1.msra.mxu0 0.0
    %5931 = vmatprep.subr.mxu0 0.0
    %5932 = vmatpush1.msra.mxu0 0.0
    %5933 = vmatprep.subr.mxu0 0.0
    %5934 = vmatpush1.msra.mxu0 0.0
    %5935 = vmatprep.subr.mxu0 0.0
    %5936 = vmatpush1.msra.mxu0 0.0
    %5937 = vmatprep.subr.mxu0 0.0
    %5938 = vmatpush1.msra.mxu0 0.0
    %5939 = vmatprep.mubr.f32.mxu0 0.0
    %5940 = vmatmul.mubr.f32.gmra.mrb[0].mxu0 %v5871
    %v5941 = vpop.f32.mrb[0].mxu0
    %v5942 = vadd.f32 0.0, %v5941
    %v5943 = vpop.f32.mrb[0].mxu0
    %5944 = vdwg.mxu0
    %5945 = vrot.lane.b32.xlu0 %v4838, 104
    %v5946 = vpop.permute.xlu0 %5945
    %5947 = vrot.lane.b32.xlu0 %v4861, 104
    %v5948 = vpop.permute.xlu0 %5947
    %v5949 = vsel %vm4862, %v5946, 0
    %v5951 = vsel %vm4862, %v5948, 0
    %5953 = vmatprep.subr.mxu0 0.0
    %5954 = vmatpush1.xpose.msra.mxu0 %v5951
    %5955 = vmatprep.subr.mxu0 0.0
    %5956 = vmatpush1.xpose.msra.mxu0 0.0
    %5957 = vmatprep.subr.mxu0 0.0
    %5958 = vmatpush1.xpose.msra.mxu0 0.0
    %5959 = vmatprep.subr.mxu0 0.0
    %5960 = vmatpush1.xpose.msra.mxu0 0.0
    %5961 = vmatprep.subr.mxu0 0.0
    %5962 = vmatpush1.xpose.msra.mxu0 0.0
    %5963 = vmatprep.subr.mxu0 0.0
    %5964 = vmatpush1.xpose.msra.mxu0 0.0
    %5965 = vmatprep.subr.mxu0 0.0
    %5966 = vmatpush1.xpose.msra.mxu0 0.0
    %5967 = vmatprep.subr.mxu0 0.0
    %5968 = vmatpush1.xpose.msra.mxu0 0.0
    %5969 = vmatprep.subr.mxu0 0.0
    %5970 = vmatpush1.xpose.msra.mxu0 0.0
    %5971 = vmatprep.subr.mxu0 0.0
    %5972 = vmatpush1.xpose.msra.mxu0 0.0
    %5973 = vmatprep.subr.mxu0 0.0
    %5974 = vmatpush1.xpose.msra.mxu0 0.0
    %5975 = vmatprep.subr.mxu0 0.0
    %5976 = vmatpush1.xpose.msra.mxu0 0.0
    %5977 = vmatprep.subr.mxu0 0.0
    %5978 = vmatpush1.xpose.msra.mxu0 0.0
    %5979 = vmatprep.subr.mxu0 0.0
    %5980 = vmatpush1.xpose.msra.mxu0 0.0
    %5981 = vmatprep.subr.mxu0 0.0
    %5982 = vmatpush1.xpose.msra.mxu0 0.0
    %5983 = vmatprep.subr.mxu0 0.0
    %5984 = vmatpush1.xpose.msra.mxu0 0.0
    %5985 = vmatprep.subr.mxu0 0.0
    %5986 = vmatpush1.xpose.msra.mxu0 0.0
    %5987 = vmatprep.subr.mxu0 0.0
    %5988 = vmatpush1.xpose.msra.mxu0 0.0
    %5989 = vmatprep.subr.mxu0 0.0
    %5990 = vmatpush1.xpose.msra.mxu0 0.0
    %5991 = vmatprep.subr.mxu0 0.0
    %5992 = vmatpush1.xpose.msra.mxu0 0.0
    %5993 = vmatprep.subr.mxu0 0.0
    %5994 = vmatpush1.xpose.msra.mxu0 0.0
    %5995 = vmatprep.subr.mxu0 0.0
    %5996 = vmatpush1.xpose.msra.mxu0 0.0
    %5997 = vmatprep.subr.mxu0 0.0
    %5998 = vmatpush1.xpose.msra.mxu0 0.0
    %5999 = vmatprep.subr.mxu0 0.0
    %6000 = vmatpush1.xpose.msra.mxu0 0.0
    %6001 = vmatprep.subr.mxu0 0.0
    %6002 = vmatpush1.xpose.msra.mxu0 0.0
    %6003 = vmatprep.subr.mxu0 0.0
    %6004 = vmatpush1.xpose.msra.mxu0 0.0
    %6005 = vmatprep.subr.mxu0 0.0
    %6006 = vmatpush1.xpose.msra.mxu0 0.0
    %6007 = vmatprep.subr.mxu0 0.0
    %6008 = vmatpush1.xpose.msra.mxu0 0.0
    %6009 = vmatprep.subr.mxu0 0.0
    %6010 = vmatpush1.xpose.msra.mxu0 0.0
    %6011 = vmatprep.subr.mxu0 0.0
    %6012 = vmatpush1.xpose.msra.mxu0 0.0
    %6013 = vmatprep.subr.mxu0 0.0
    %6014 = vmatpush1.xpose.msra.mxu0 0.0
    %6015 = vmatprep.subr.mxu0 0.0
    %6016 = vmatpush1.xpose.msra.mxu0 0.0
    %6017 = vmatprep.mubr.f32.mxu0 0.0
    %6018 = vmatmul.mubr.f32.gmra.mrb[0].mxu0 %v5949
    %v6019 = vpop.f32.mrb[0].mxu0
    %v6020 = vadd.f32 0.0, %v6019
    %v6021 = vpop.f32.mrb[0].mxu0
    %6022 = vdwg.mxu0
    %6023 = vrot.lane.b32.xlu0 %v4962, 104
    %v6024 = vpop.permute.xlu0 %6023
    %6025 = vrot.lane.b32.xlu0 %v4985, 104
    %v6026 = vpop.permute.xlu0 %6025
    %v6027 = vsel %vm4862, %v6024, 0
    %v6029 = vsel %vm4862, %v6026, 0
    %6031 = vmatprep.subr.mxu0 0.0
    %6032 = vmatpush1.xpose.msra.mxu0 %v6029
    %6033 = vmatprep.subr.mxu0 0.0
    %6034 = vmatpush1.xpose.msra.mxu0 0.0
    %6035 = vmatprep.subr.mxu0 0.0
    %6036 = vmatpush1.xpose.msra.mxu0 0.0
    %6037 = vmatprep.subr.mxu0 0.0
    %6038 = vmatpush1.xpose.msra.mxu0 0.0
    %6039 = vmatprep.subr.mxu0 0.0
    %6040 = vmatpush1.xpose.msra.mxu0 0.0
    %6041 = vmatprep.subr.mxu0 0.0
    %6042 = vmatpush1.xpose.msra.mxu0 0.0
    %6043 = vmatprep.subr.mxu0 0.0
    %6044 = vmatpush1.xpose.msra.mxu0 0.0
    %6045 = vmatprep.subr.mxu0 0.0
    %6046 = vmatpush1.xpose.msra.mxu0 0.0
    %6047 = vmatprep.subr.mxu0 0.0
    %6048 = vmatpush1.xpose.msra.mxu0 0.0
    %6049 = vmatprep.subr.mxu0 0.0
    %6050 = vmatpush1.xpose.msra.mxu0 0.0
    %6051 = vmatprep.subr.mxu0 0.0
    %6052 = vmatpush1.xpose.msra.mxu0 0.0
    %6053 = vmatprep.subr.mxu0 0.0
    %6054 = vmatpush1.xpose.msra.mxu0 0.0
    %6055 = vmatprep.subr.mxu0 0.0
    %6056 = vmatpush1.xpose.msra.mxu0 0.0
    %6057 = vmatprep.subr.mxu0 0.0
    %6058 = vmatpush1.xpose.msra.mxu0 0.0
    %6059 = vmatprep.subr.mxu0 0.0
    %6060 = vmatpush1.xpose.msra.mxu0 0.0
    %6061 = vmatprep.subr.mxu0 0.0
    %6062 = vmatpush1.xpose.msra.mxu0 0.0
    %6063 = vmatprep.subr.mxu0 0.0
    %6064 = vmatpush1.xpose.msra.mxu0 0.0
    %6065 = vmatprep.subr.mxu0 0.0
    %6066 = vmatpush1.xpose.msra.mxu0 0.0
    %6067 = vmatprep.subr.mxu0 0.0
    %6068 = vmatpush1.xpose.msra.mxu0 0.0
    %6069 = vmatprep.subr.mxu0 0.0
    %6070 = vmatpush1.xpose.msra.mxu0 0.0
    %6071 = vmatprep.subr.mxu0 0.0
    %6072 = vmatpush1.xpose.msra.mxu0 0.0
    %6073 = vmatprep.subr.mxu0 0.0
    %6074 = vmatpush1.xpose.msra.mxu0 0.0
    %6075 = vmatprep.subr.mxu0 0.0
    %6076 = vmatpush1.xpose.msra.mxu0 0.0
    %6077 = vmatprep.subr.mxu0 0.0
    %6078 = vmatpush1.xpose.msra.mxu0 0.0
    %6079 = vmatprep.subr.mxu0 0.0
    %6080 = vmatpush1.xpose.msra.mxu0 0.0
    %6081 = vmatprep.subr.mxu0 0.0
    %6082 = vmatpush1.xpose.msra.mxu0 0.0
    %6083 = vmatprep.subr.mxu0 0.0
    %6084 = vmatpush1.xpose.msra.mxu0 0.0
    %6085 = vmatprep.subr.mxu0 0.0
    %6086 = vmatpush1.xpose.msra.mxu0 0.0
    %6087 = vmatprep.subr.mxu0 0.0
    %6088 = vmatpush1.xpose.msra.mxu0 0.0
    %6089 = vmatprep.subr.mxu0 0.0
    %6090 = vmatpush1.xpose.msra.mxu0 0.0
    %6091 = vmatprep.subr.mxu0 0.0
    %6092 = vmatpush1.xpose.msra.mxu0 0.0
    %6093 = vmatprep.subr.mxu0 0.0
    %6094 = vmatpush1.xpose.msra.mxu0 0.0
    %6095 = vmatprep.mubr.f32.mxu0 0.0
    %6096 = vmatmul.mubr.f32.gmra.mrb[0].mxu0 %v6027
    %v6097 = vpop.f32.mrb[0].mxu0
    %v6098 = vadd.f32 0.0, %v6097
    %v6099 = vpop.f32.mrb[0].mxu0
    %6100 = vdwg.mxu0
    %v6101 = vsel %vm5060, %v6020, -inf
    %6102 = vmax.xlane.f32.xlu0 %v6101
    %v6103 = vpop.xlane.xlu0 %6102
    %v6104 = vsel %vm5060, %v6098, -inf
    %6105 = vmax.xlane.f32.xlu0 %v6104
    %v6106 = vpop.xlane.xlu0 %6105
    %v6107 = vsub.f32 %v6020, %v6103
    %v6108 = vsub.f32 %v6098, %v6106
    %v6109 = vmul.f32 %v6107, 1.442695
    %v6110 = vpow.pop %v6109
    %v6111 = vmul.f32 %v6108, 1.442695
    %v6112 = vpow.pop %v6111
    %v6113 = vsel %vm5060, %v6110, 0.0
    %6114 = vadd.xlane.f32.xlu0 %v6113
    %v6115 = vpop.xlane.xlu0 %6114
    %v6116 = vsel %vm5060, %v6112, 0.0
    %6117 = vadd.xlane.f32.xlu0 %v6116
    %v6118 = vpop.xlane.xlu0 %6117
    %v6119 = vrcp.pop %v6115
    %v6120 = vrcp.pop %v6118
    %v6121 = vmul.f32 %v6110, %v6119
    %v6122 = vmul.f32 %v6112, %v6120
    %6123 = vrot.lane.b32.xlu0 %v5105, 104
    %v6124 = vpop.permute.xlu0 %6123
    %v6126 = vsel %vm5106, %v6121, 0
    %v6128 = vsel %vm5110, %v6124, 0
    %6130 = vmatprep.subr.mxu0 0.0
    %6131 = vmatpush1.msra.mxu0 %v6128
    %6132 = vmatprep.subr.mxu0 0.0
    %6133 = vmatpush1.msra.mxu0 0.0
    %6134 = vmatprep.subr.mxu0 0.0
    %6135 = vmatpush1.msra.mxu0 0.0
    %6136 = vmatprep.subr.mxu0 0.0
    %6137 = vmatpush1.msra.mxu0 0.0
    %6138 = vmatprep.subr.mxu0 0.0
    %6139 = vmatpush1.msra.mxu0 0.0
    %6140 = vmatprep.subr.mxu0 0.0
    %6141 = vmatpush1.msra.mxu0 0.0
    %6142 = vmatprep.subr.mxu0 0.0
    %6143 = vmatpush1.msra.mxu0 0.0
    %6144 = vmatprep.subr.mxu0 0.0
    %6145 = vmatpush1.msra.mxu0 0.0
    %6146 = vmatprep.subr.mxu0 0.0
    %6147 = vmatpush1.msra.mxu0 0.0
    %6148 = vmatprep.subr.mxu0 0.0
    %6149 = vmatpush1.msra.mxu0 0.0
    %6150 = vmatprep.subr.mxu0 0.0
    %6151 = vmatpush1.msra.mxu0 0.0
    %6152 = vmatprep.subr.mxu0 0.0
    %6153 = vmatpush1.msra.mxu0 0.0
    %6154 = vmatprep.subr.mxu0 0.0
    %6155 = vmatpush1.msra.mxu0 0.0
    %6156 = vmatprep.subr.mxu0 0.0
    %6157 = vmatpush1.msra.mxu0 0.0
    %6158 = vmatprep.subr.mxu0 0.0
    %6159 = vmatpush1.msra.mxu0 0.0
    %6160 = vmatprep.subr.mxu0 0.0
    %6161 = vmatpush1.msra.mxu0 0.0
    %6162 = vmatprep.subr.mxu0 0.0
    %6163 = vmatpush1.msra.mxu0 0.0
    %6164 = vmatprep.subr.mxu0 0.0
    %6165 = vmatpush1.msra.mxu0 0.0
    %6166 = vmatprep.subr.mxu0 0.0
    %6167 = vmatpush1.msra.mxu0 0.0
    %6168 = vmatprep.subr.mxu0 0.0
    %6169 = vmatpush1.msra.mxu0 0.0
    %6170 = vmatprep.subr.mxu0 0.0
    %6171 = vmatpush1.msra.mxu0 0.0
    %6172 = vmatprep.subr.mxu0 0.0
    %6173 = vmatpush1.msra.mxu0 0.0
    %6174 = vmatprep.subr.mxu0 0.0
    %6175 = vmatpush1.msra.mxu0 0.0
    %6176 = vmatprep.subr.mxu0 0.0
    %6177 = vmatpush1.msra.mxu0 0.0
    %6178 = vmatprep.subr.mxu0 0.0
    %6179 = vmatpush1.msra.mxu0 0.0
    %6180 = vmatprep.subr.mxu0 0.0
    %6181 = vmatpush1.msra.mxu0 0.0
    %6182 = vmatprep.subr.mxu0 0.0
    %6183 = vmatpush1.msra.mxu0 0.0
    %6184 = vmatprep.subr.mxu0 0.0
    %6185 = vmatpush1.msra.mxu0 0.0
    %6186 = vmatprep.subr.mxu0 0.0
    %6187 = vmatpush1.msra.mxu0 0.0
    %6188 = vmatprep.subr.mxu0 0.0
    %6189 = vmatpush1.msra.mxu0 0.0
    %6190 = vmatprep.subr.mxu0 0.0
    %6191 = vmatpush1.msra.mxu0 0.0
    %6192 = vmatprep.subr.mxu0 0.0
    %6193 = vmatpush1.msra.mxu0 0.0
    %6194 = vmatprep.mubr.f32.mxu0 0.0
    %6195 = vmatmul.mubr.f32.gmra.mrb[0].mxu0 %v6126
    %v6196 = vpop.f32.mrb[0].mxu0
    %v6197 = vadd.f32 0.0, %v6196
    %v6198 = vpop.f32.mrb[0].mxu0
    %6199 = vdwg.mxu0
    %6200 = vrot.lane.b32.xlu0 %v5205, 104
    %v6201 = vpop.permute.xlu0 %6200
    %v6203 = vsel %vm5106, %v6122, 0
    %v6205 = vsel %vm5110, %v6201, 0
    %6207 = vmatprep.subr.mxu0 0.0
    %6208 = vmatpush1.msra.mxu0 %v6205
    %6209 = vmatprep.subr.mxu0 0.0
    %6210 = vmatpush1.msra.mxu0 0.0
    %6211 = vmatprep.subr.mxu0 0.0
    %6212 = vmatpush1.msra.mxu0 0.0
    %6213 = vmatprep.subr.mxu0 0.0
    %6214 = vmatpush1.msra.mxu0 0.0
    %6215 = vmatprep.subr.mxu0 0.0
    %6216 = vmatpush1.msra.mxu0 0.0
    %6217 = vmatprep.subr.mxu0 0.0
    %6218 = vmatpush1.msra.mxu0 0.0
    %6219 = vmatprep.subr.mxu0 0.0
    %6220 = vmatpush1.msra.mxu0 0.0
    %6221 = vmatprep.subr.mxu0 0.0
    %6222 = vmatpush1.msra.mxu0 0.0
    %6223 = vmatprep.subr.mxu0 0.0
    %6224 = vmatpush1.msra.mxu0 0.0
    %6225 = vmatprep.subr.mxu0 0.0
    %6226 = vmatpush1.msra.mxu0 0.0
    %6227 = vmatprep.subr.mxu0 0.0
    %6228 = vmatpush1.msra.mxu0 0.0
    %6229 = vmatprep.subr.mxu0 0.0
    %6230 = vmatpush1.msra.mxu0 0.0
    %6231 = vmatprep.subr.mxu0 0.0
    %6232 = vmatpush1.msra.mxu0 0.0
    %6233 = vmatprep.subr.mxu0 0.0
    %6234 = vmatpush1.msra.mxu0 0.0
    %6235 = vmatprep.subr.mxu0 0.0
    %6236 = vmatpush1.msra.mxu0 0.0
    %6237 = vmatprep.subr.mxu0 0.0
    %6238 = vmatpush1.msra.mxu0 0.0
    %6239 = vmatprep.subr.mxu0 0.0
    %6240 = vmatpush1.msra.mxu0 0.0
    %6241 = vmatprep.subr.mxu0 0.0
    %6242 = vmatpush1.msra.mxu0 0.0
    %6243 = vmatprep.subr.mxu0 0.0
    %6244 = vmatpush1.msra.mxu0 0.0
    %6245 = vmatprep.subr.mxu0 0.0
    %6246 = vmatpush1.msra.mxu0 0.0
    %6247 = vmatprep.subr.mxu0 0.0
    %6248 = vmatpush1.msra.mxu0 0.0
    %6249 = vmatprep.subr.mxu0 0.0
    %6250 = vmatpush1.msra.mxu0 0.0
    %6251 = vmatprep.subr.mxu0 0.0
    %6252 = vmatpush1.msra.mxu0 0.0
    %6253 = vmatprep.subr.mxu0 0.0
    %6254 = vmatpush1.msra.mxu0 0.0
    %6255 = vmatprep.subr.mxu0 0.0
    %6256 = vmatpush1.msra.mxu0 0.0
    %6257 = vmatprep.subr.mxu0 0.0
    %6258 = vmatpush1.msra.mxu0 0.0
    %6259 = vmatprep.subr.mxu0 0.0
    %6260 = vmatpush1.msra.mxu0 0.0
    %6261 = vmatprep.subr.mxu0 0.0
    %6262 = vmatpush1.msra.mxu0 0.0
    %6263 = vmatprep.subr.mxu0 0.0
    %6264 = vmatpush1.msra.mxu0 0.0
    %6265 = vmatprep.subr.mxu0 0.0
    %6266 = vmatpush1.msra.mxu0 0.0
    %6267 = vmatprep.subr.mxu0 0.0
    %6268 = vmatpush1.msra.mxu0 0.0
    %6269 = vmatprep.subr.mxu0 0.0
    %6270 = vmatpush1.msra.mxu0 0.0
    %6271 = vmatprep.mubr.f32.mxu0 0.0
    %6272 = vmatmul.mubr.f32.gmra.mrb[0].mxu0 %v6203
    %v6273 = vpop.f32.mrb[0].mxu0
    %v6274 = vadd.f32 0.0, %v6273
    %v6275 = vpop.f32.mrb[0].mxu0
    %6276 = vdwg.mxu0
    %6279 = vrot.lane.b32.xlu0 %v5533, 8
    %v6280 = vpop.permute.xlu0 %6279
    %6281 = vrot.lane.b32.xlu0 %v5610, 8
    %v6282 = vpop.permute.xlu0 %6281
    %6287 = vrot.lane.b32.xlu0 %v5865, 16
    %v6288 = vpop.permute.xlu0 %6287
    %6289 = vrot.lane.b32.xlu0 %v5942, 16
    %v6290 = vpop.permute.xlu0 %6289
    %6295 = vrot.lane.b32.xlu0 %v6197, 24
    %v6296 = vpop.permute.xlu0 %6295
    %6297 = vrot.lane.b32.xlu0 %v6274, 24
    %v6298 = vpop.permute.xlu0 %6297
    %v6301 = vsel %vm4862, %v5180, %v6280
    %v6302 = vsel %vm4862, %v5278, %v6282
    %v6303 = vsel %vm276, %v6301, %v6288
    %v6304 = vsel %vm276, %v6302, %v6290
    %vm6305 = vcmask 195584
    %v6306 = vsel %vm6305, %v6303, %v6296
    %v6307 = vsel %vm6305, %v6304, %v6298
    %v6311 = vunpack.c.l.s4 1966171168
    %v6312 = vunpack.c.0.s8 %v6311
    %v6313 = vlaneseq
    %v6314 = vshrl.u32 %v6313, 7
    %v6315 = vsub.s32 %v6312, %v6314
    %v6316 = vrot.slane %v6306, %v6315
    %v6317 = vcombine.high %v6316, %v6316
    %v6319 = vunpack.c.l.s4 1966171168
    %v6320 = vunpack.c.0.s8 %v6319
    %v6321 = vlaneseq
    %v6322 = vshrl.u32 %v6321, 7
    %v6323 = vsub.s32 %v6320, %v6322
    %v6324 = vrot.slane %v6316, %v6323
    %v6326 = vunpack.c.l.s4 1966171168
    %v6327 = vunpack.c.0.s8 %v6326
    %v6328 = vlaneseq
    %v6329 = vshrl.u32 %v6328, 7
    %v6330 = vsub.s32 %v6327, %v6329
    %v6331 = vrot.slane %v6317, %v6330
    %v6332 = vcombine.high %v6324, %v6324
    %v6334 = vunpack.c.l.s4 1966171168
    %v6335 = vunpack.c.0.s8 %v6334
    %v6336 = vlaneseq
    %v6337 = vshrl.u32 %v6336, 7
    %v6338 = vsub.s32 %v6335, %v6337
    %v6339 = vrot.slane %v6307, %v6338
    %v6340 = vcombine.high %v6339, %v6339
    %v6342 = vunpack.c.l.s4 1966171168
    %v6343 = vunpack.c.0.s8 %v6342
    %v6344 = vlaneseq
    %v6345 = vshrl.u32 %v6344, 7
    %v6346 = vsub.s32 %v6343, %v6345
    %v6347 = vrot.slane %v6339, %v6346
    %v6349 = vunpack.c.l.s4 1966171168
    %v6350 = vunpack.c.0.s8 %v6349
    %v6351 = vlaneseq
    %v6352 = vshrl.u32 %v6351, 7
    %v6353 = vsub.s32 %v6350, %v6352
    %v6354 = vrot.slane %v6340, %v6353
    %v6355 = vcombine.high %v6347, %v6347
    %v6356 = vld [vmem:[%s14] sm:$0xff]
    %v6357 = vld [vmem:[%s14 + $0x8] sm:$0xff]
    %v6358 = vld [vmem:[%s14 + $0x10] sm:$0xff]
    %v6359 = vld [vmem:[%s14 + $0x18] sm:$0xff]
    %v6360 = vld [vmem:[#allocation16] sm:$0x1]
    %v6362 = vlaneseq
    %v6363 = vshrl.u32 %v6362, 7
    %v6364 = vsub.s32 0, %v6363
    %v6365 = vrot.slane %v6360, %v6364
    %v6367 = vcombine.low %v6324, %v6331
    %v6368 = vcombine.low %v6332, %v6347
    %v6369 = vcombine.low %v6354, %v6355
    %v6371 = vunpack.c.l.s4 1966171168
    %v6372 = vunpack.c.0.s8 %v6371
    %v6373 = vlaneseq
    %v6374 = vshrl.u32 %v6373, 7
    %v6375 = vsub.s32 %v6372, %v6374
    %v6376 = vrot.slane %v6367, %v6375
    %v6378 = vunpack.c.l.s4 1966171168
    %v6379 = vunpack.c.0.s8 %v6378
    %v6380 = vlaneseq
    %v6381 = vshrl.u32 %v6380, 7
    %v6382 = vsub.s32 %v6379, %v6381
    %v6383 = vrot.slane %v6368, %v6382
    %v6385 = vunpack.c.l.s4 1966171168
    %v6386 = vunpack.c.0.s8 %v6385
    %v6387 = vlaneseq
    %v6388 = vshrl.u32 %v6387, 7
    %v6389 = vsub.s32 %v6386, %v6388
    %v6390 = vrot.slane %v6369, %v6389
    %v6391 = vcombine.low %v6376, %v6383
    %v6393 = vunpack.c.l.s4 1966171168
    %v6394 = vunpack.c.0.s8 %v6393
    %v6395 = vlaneseq
    %v6396 = vshrl.u32 %v6395, 7
    %v6397 = vsub.s32 %v6394, %v6396
    %v6398 = vrot.slane %v6391, %v6397
    %v6400 = vunpack.c.l.s4 1966171168
    %v6401 = vunpack.c.0.s8 %v6400
    %v6402 = vlaneseq
    %v6403 = vshrl.u32 %v6402, 7
    %v6404 = vsub.s32 %v6401, %v6403
    %v6405 = vrot.slane %v6390, %v6404
    %v6406 = vcombine.low %v6398, %v6405
    %v6407 = vsel %vm395, %v6406, 0
    %6409 = vmatprep.subr.mxu0 0.0
    %6410 = vmatpush1.msra.mxu0 %v6356
    %6411 = vmatprep.subr.mxu0 0.0
    %6412 = vmatpush1.msra.mxu0 %v6357
    %6413 = vmatprep.subr.mxu0 0.0
    %6414 = vmatpush1.msra.mxu0 %v6358
    %6415 = vmatprep.subr.mxu0 0.0
    %6416 = vmatpush1.msra.mxu0 %v6359
    %6417 = vmatprep.subr.mxu0 0.0
    %6418 = vmatpush1.msra.mxu0 0.0
    %6419 = vmatprep.subr.mxu0 0.0
    %6420 = vmatpush1.msra.mxu0 0.0
    %6421 = vmatprep.subr.mxu0 0.0
    %6422 = vmatpush1.msra.mxu0 0.0
    %6423 = vmatprep.subr.mxu0 0.0
    %6424 = vmatpush1.msra.mxu0 0.0
    %6425 = vmatprep.subr.mxu0 0.0
    %6426 = vmatpush1.msra.mxu0 0.0
    %6427 = vmatprep.subr.mxu0 0.0
    %6428 = vmatpush1.msra.mxu0 0.0
    %6429 = vmatprep.subr.mxu0 0.0
    %6430 = vmatpush1.msra.mxu0 0.0
    %6431 = vmatprep.subr.mxu0 0.0
    %6432 = vmatpush1.msra.mxu0 0.0
    %6433 = vmatprep.subr.mxu0 0.0
    %6434 = vmatpush1.msra.mxu0 0.0
    %6435 = vmatprep.subr.mxu0 0.0
    %6436 = vmatpush1.msra.mxu0 0.0
    %6437 = vmatprep.subr.mxu0 0.0
    %6438 = vmatpush1.msra.mxu0 0.0
    %6439 = vmatprep.subr.mxu0 0.0
    %6440 = vmatpush1.msra.mxu0 0.0
    %6441 = vmatprep.subr.mxu0 0.0
    %6442 = vmatpush1.msra.mxu0 0.0
    %6443 = vmatprep.subr.mxu0 0.0
    %6444 = vmatpush1.msra.mxu0 0.0
    %6445 = vmatprep.subr.mxu0 0.0
    %6446 = vmatpush1.msra.mxu0 0.0
    %6447 = vmatprep.subr.mxu0 0.0
    %6448 = vmatpush1.msra.mxu0 0.0
    %6449 = vmatprep.subr.mxu0 0.0
    %6450 = vmatpush1.msra.mxu0 0.0
    %6451 = vmatprep.subr.mxu0 0.0
    %6452 = vmatpush1.msra.mxu0 0.0
    %6453 = vmatprep.subr.mxu0 0.0
    %6454 = vmatpush1.msra.mxu0 0.0
    %6455 = vmatprep.subr.mxu0 0.0
    %6456 = vmatpush1.msra.mxu0 0.0
    %6457 = vmatprep.subr.mxu0 0.0
    %6458 = vmatpush1.msra.mxu0 0.0
    %6459 = vmatprep.subr.mxu0 0.0
    %6460 = vmatpush1.msra.mxu0 0.0
    %6461 = vmatprep.subr.mxu0 0.0
    %6462 = vmatpush1.msra.mxu0 0.0
    %6463 = vmatprep.subr.mxu0 0.0
    %6464 = vmatpush1.msra.mxu0 0.0
    %6465 = vmatprep.subr.mxu0 0.0
    %6466 = vmatpush1.msra.mxu0 0.0
    %6467 = vmatprep.subr.mxu0 0.0
    %6468 = vmatpush1.msra.mxu0 0.0
    %6469 = vmatprep.subr.mxu0 0.0
    %6470 = vmatpush1.msra.mxu0 0.0
    %6471 = vmatprep.subr.mxu0 0.0
    %6472 = vmatpush1.msra.mxu0 0.0
    %6473 = vmatprep.mubr.f32.mxu0 0.0
    %6474 = vmatmul.mubr.f32.gmra.mrb[0].mxu0 %v6407
    %v6475 = vpop.f32.mrb[0].mxu0
    %v6476 = vadd.f32 %v6365, %v6475
    %v6477 = vpop.f32.mrb[0].mxu0
    %6478 = vdwg.mxu0
    %v6480 = vcombine.high %v6476, %v6476
    %v6482 = vunpack.c.l.s4 1966171168
    %v6483 = vunpack.c.0.s8 %v6482
    %v6484 = vlaneseq
    %v6485 = vshrl.u32 %v6484, 7
    %v6486 = vsub.s32 %v6483, %v6485
    %v6487 = vrot.slane %v6476, %v6486
    %v6489 = vunpack.c.l.s4 1966171168
    %v6490 = vunpack.c.0.s8 %v6489
    %v6491 = vlaneseq
    %v6492 = vshrl.u32 %v6491, 7
    %v6493 = vsub.s32 %v6490, %v6492
    %v6494 = vrot.slane %v6480, %v6493
    %v6495 = vcombine.high %v6487, %v6487
    %v6496 = vcombine.high %v6494, %v6494
    %v6498 = vunpack.c.l.s4 1966171168
    %v6499 = vunpack.c.0.s8 %v6498
    %v6500 = vlaneseq
    %v6501 = vshrl.u32 %v6500, 7
    %v6502 = vsub.s32 %v6499, %v6501
    %v6503 = vrot.slane %v6487, %v6502
    %v6505 = vunpack.c.l.s4 1966171168
    %v6506 = vunpack.c.0.s8 %v6505
    %v6507 = vlaneseq
    %v6508 = vshrl.u32 %v6507, 7
    %v6509 = vsub.s32 %v6506, %v6508
    %v6510 = vrot.slane %v6494, %v6509
    %v6512 = vunpack.c.l.s4 1966171168
    %v6513 = vunpack.c.0.s8 %v6512
    %v6514 = vlaneseq
    %v6515 = vshrl.u32 %v6514, 7
    %v6516 = vsub.s32 %v6513, %v6515
    %v6517 = vrot.slane %v6495, %v6516
    %v6519 = vunpack.c.l.s4 1966171168
    %v6520 = vunpack.c.0.s8 %v6519
    %v6521 = vlaneseq
    %v6522 = vshrl.u32 %v6521, 7
    %v6523 = vsub.s32 %v6520, %v6522
    %v6524 = vrot.slane %v6496, %v6523
    %v6525 = vcombine.high %v6503, %v6503
    %v6526 = vcombine.high %v6517, %v6517
    %s6533 = scalar_lea.vmem [#allocation13], 2
    %v6534 = vld [vmem:[%s6533] sm:$0x1]
    %s6535 = scalar_lea.vmem [#allocation13], 3
    %v6536 = vld [vmem:[%s6535] sm:$0x1]
    %v6538 = vlaneseq
    %v6539 = vshrl.u32 %v6538, 7
    %v6540 = vsub.s32 0, %v6539
    %v6541 = vrot.slane %v6534, %v6540
    %v6543 = vmul.f32 %v4302, %v6541
    %v6544 = vmul.f32 %v4303, %v6541
    %v6546 = vlaneseq
    %v6547 = vshrl.u32 %v6546, 7
    %v6548 = vsub.s32 0, %v6547
    %v6549 = vrot.slane %v6536, %v6548
    %v6551 = vadd.f32 %v6543, %v6549
    %v6552 = vadd.f32 %v6544, %v6549
    %v6556 = vunpack.c.l.s4 1966171168
    %v6557 = vunpack.c.0.s8 %v6556
    %v6558 = vlaneseq
    %v6559 = vshrl.u32 %v6558, 7
    %v6560 = vsub.s32 %v6557, %v6559
    %v6561 = vrot.slane %v6551, %v6560
    %v6562 = vcombine.high %v6561, %v6561
    %v6564 = vunpack.c.l.s4 1966171168
    %v6565 = vunpack.c.0.s8 %v6564
    %v6566 = vlaneseq
    %v6567 = vshrl.u32 %v6566, 7
    %v6568 = vsub.s32 %v6565, %v6567
    %v6569 = vrot.slane %v6561, %v6568
    %v6571 = vunpack.c.l.s4 1966171168
    %v6572 = vunpack.c.0.s8 %v6571
    %v6573 = vlaneseq
    %v6574 = vshrl.u32 %v6573, 7
    %v6575 = vsub.s32 %v6572, %v6574
    %v6576 = vrot.slane %v6562, %v6575
    %v6577 = vcombine.high %v6569, %v6569
    %v6579 = vunpack.c.l.s4 1966171168
    %v6580 = vunpack.c.0.s8 %v6579
    %v6581 = vlaneseq
    %v6582 = vshrl.u32 %v6581, 7
    %v6583 = vsub.s32 %v6580, %v6582
    %v6584 = vrot.slane %v6552, %v6583
    %v6585 = vcombine.high %v6584, %v6584
    %v6587 = vunpack.c.l.s4 1966171168
    %v6588 = vunpack.c.0.s8 %v6587
    %v6589 = vlaneseq
    %v6590 = vshrl.u32 %v6589, 7
    %v6591 = vsub.s32 %v6588, %v6590
    %v6592 = vrot.slane %v6584, %v6591
    %v6594 = vunpack.c.l.s4 1966171168
    %v6595 = vunpack.c.0.s8 %v6594
    %v6596 = vlaneseq
    %v6597 = vshrl.u32 %v6596, 7
    %v6598 = vsub.s32 %v6595, %v6597
    %v6599 = vrot.slane %v6585, %v6598
    %v6600 = vcombine.high %v6592, %v6592
    %s6601 = scalar_lea.vmem %s12, 96
    %v6602 = vld [vmem:[%s6601] sm:$0xff]
    %v6603 = vld [vmem:[%s6601 + $0x8] sm:$0xff]
    %v6604 = vld [vmem:[%s6601 + $0x10] sm:$0xff]
    %v6605 = vld [vmem:[%s6601 + $0x18] sm:$0xff]
    %s6606 = scalar_lea.vmem [#allocation14], 3
    %v6607 = vld [vmem:[%s6606] sm:$0x1]
    %v6609 = vlaneseq
    %v6610 = vshrl.u32 %v6609, 7
    %v6611 = vsub.s32 0, %v6610
    %v6612 = vrot.slane %v6607, %v6611
    %v6614 = vcombine.low %v6569, %v6576
    %v6615 = vcombine.low %v6577, %v6592
    %v6616 = vcombine.low %v6599, %v6600
    %v6618 = vunpack.c.l.s4 1966171168
    %v6619 = vunpack.c.0.s8 %v6618
    %v6620 = vlaneseq
    %v6621 = vshrl.u32 %v6620, 7
    %v6622 = vsub.s32 %v6619, %v6621
    %v6623 = vrot.slane %v6614, %v6622
    %v6625 = vunpack.c.l.s4 1966171168
    %v6626 = vunpack.c.0.s8 %v6625
    %v6627 = vlaneseq
    %v6628 = vshrl.u32 %v6627, 7
    %v6629 = vsub.s32 %v6626, %v6628
    %v6630 = vrot.slane %v6615, %v6629
    %v6632 = vunpack.c.l.s4 1966171168
    %v6633 = vunpack.c.0.s8 %v6632
    %v6634 = vlaneseq
    %v6635 = vshrl.u32 %v6634, 7
    %v6636 = vsub.s32 %v6633, %v6635
    %v6637 = vrot.slane %v6616, %v6636
    %v6638 = vcombine.low %v6623, %v6630
    %v6640 = vunpack.c.l.s4 1966171168
    %v6641 = vunpack.c.0.s8 %v6640
    %v6642 = vlaneseq
    %v6643 = vshrl.u32 %v6642, 7
    %v6644 = vsub.s32 %v6641, %v6643
    %v6645 = vrot.slane %v6638, %v6644
    %v6647 = vunpack.c.l.s4 1966171168
    %v6648 = vunpack.c.0.s8 %v6647
    %v6649 = vlaneseq
    %v6650 = vshrl.u32 %v6649, 7
    %v6651 = vsub.s32 %v6648, %v6650
    %v6652 = vrot.slane %v6637, %v6651
    %v6653 = vcombine.low %v6645, %v6652
    %v6654 = vsel %vm395, %v6653, 0
    %6656 = vmatprep.subr.mxu0 0.0
    %6657 = vmatpush1.msra.mxu0 %v6602
    %6658 = vmatprep.subr.mxu0 0.0
    %6659 = vmatpush1.msra.mxu0 %v6603
    %6660 = vmatprep.subr.mxu0 0.0
    %6661 = vmatpush1.msra.mxu0 %v6604
    %6662 = vmatprep.subr.mxu0 0.0
    %6663 = vmatpush1.msra.mxu0 %v6605
    %6664 = vmatprep.subr.mxu0 0.0
    %6665 = vmatpush1.msra.mxu0 0.0
    %6666 = vmatprep.subr.mxu0 0.0
    %6667 = vmatpush1.msra.mxu0 0.0
    %6668 = vmatprep.subr.mxu0 0.0
    %6669 = vmatpush1.msra.mxu0 0.0
    %6670 = vmatprep.subr.mxu0 0.0
    %6671 = vmatpush1.msra.mxu0 0.0
    %6672 = vmatprep.subr.mxu0 0.0
    %6673 = vmatpush1.msra.mxu0 0.0
    %6674 = vmatprep.subr.mxu0 0.0
    %6675 = vmatpush1.msra.mxu0 0.0
    %6676 = vmatprep.subr.mxu0 0.0
    %6677 = vmatpush1.msra.mxu0 0.0
    %6678 = vmatprep.subr.mxu0 0.0
    %6679 = vmatpush1.msra.mxu0 0.0
    %6680 = vmatprep.subr.mxu0 0.0
    %6681 = vmatpush1.msra.mxu0 0.0
    %6682 = vmatprep.subr.mxu0 0.0
    %6683 = vmatpush1.msra.mxu0 0.0
    %6684 = vmatprep.subr.mxu0 0.0
    %6685 = vmatpush1.msra.mxu0 0.0
    %6686 = vmatprep.subr.mxu0 0.0
    %6687 = vmatpush1.msra.mxu0 0.0
    %6688 = vmatprep.subr.mxu0 0.0
    %6689 = vmatpush1.msra.mxu0 0.0
    %6690 = vmatprep.subr.mxu0 0.0
    %6691 = vmatpush1.msra.mxu0 0.0
    %6692 = vmatprep.subr.mxu0 0.0
    %6693 = vmatpush1.msra.mxu0 0.0
    %6694 = vmatprep.subr.mxu0 0.0
    %6695 = vmatpush1.msra.mxu0 0.0
    %6696 = vmatprep.subr.mxu0 0.0
    %6697 = vmatpush1.msra.mxu0 0.0
    %6698 = vmatprep.subr.mxu0 0.0
    %6699 = vmatpush1.msra.mxu0 0.0
    %6700 = vmatprep.subr.mxu0 0.0
    %6701 = vmatpush1.msra.mxu0 0.0
    %6702 = vmatprep.subr.mxu0 0.0
    %6703 = vmatpush1.msra.mxu0 0.0
    %6704 = vmatprep.subr.mxu0 0.0
    %6705 = vmatpush1.msra.mxu0 0.0
    %6706 = vmatprep.subr.mxu0 0.0
    %6707 = vmatpush1.msra.mxu0 0.0
    %6708 = vmatprep.subr.mxu0 0.0
    %6709 = vmatpush1.msra.mxu0 0.0
    %6710 = vmatprep.subr.mxu0 0.0
    %6711 = vmatpush1.msra.mxu0 0.0
    %6712 = vmatprep.subr.mxu0 0.0
    %6713 = vmatpush1.msra.mxu0 0.0
    %6714 = vmatprep.subr.mxu0 0.0
    %6715 = vmatpush1.msra.mxu0 0.0
    %6716 = vmatprep.subr.mxu0 0.0
    %6717 = vmatpush1.msra.mxu0 0.0
    %6718 = vmatprep.subr.mxu0 0.0
    %6719 = vmatpush1.msra.mxu0 0.0
    %6720 = vmatprep.mubr.f32.mxu0 0.0
    %6721 = vmatmul.mubr.f32.gmra.mrb[0].mxu0 %v6654
    %v6722 = vpop.f32.mrb[0].mxu0
    %v6723 = vadd.f32 %v6612, %v6722
    %v6724 = vpop.f32.mrb[0].mxu0
    %6725 = vdwg.mxu0
    %v6727 = vcombine.high %v6723, %v6723
    %v6729 = vunpack.c.l.s4 1966171168
    %v6730 = vunpack.c.0.s8 %v6729
    %v6731 = vlaneseq
    %v6732 = vshrl.u32 %v6731, 7
    %v6733 = vsub.s32 %v6730, %v6732
    %v6734 = vrot.slane %v6723, %v6733
    %v6736 = vunpack.c.l.s4 1966171168
    %v6737 = vunpack.c.0.s8 %v6736
    %v6738 = vlaneseq
    %v6739 = vshrl.u32 %v6738, 7
    %v6740 = vsub.s32 %v6737, %v6739
    %v6741 = vrot.slane %v6727, %v6740
    %v6742 = vcombine.high %v6734, %v6734
    %v6743 = vcombine.high %v6741, %v6741
    %v6745 = vunpack.c.l.s4 1966171168
    %v6746 = vunpack.c.0.s8 %v6745
    %v6747 = vlaneseq
    %v6748 = vshrl.u32 %v6747, 7
    %v6749 = vsub.s32 %v6746, %v6748
    %v6750 = vrot.slane %v6734, %v6749
    %v6752 = vunpack.c.l.s4 1966171168
    %v6753 = vunpack.c.0.s8 %v6752
    %v6754 = vlaneseq
    %v6755 = vshrl.u32 %v6754, 7
    %v6756 = vsub.s32 %v6753, %v6755
    %v6757 = vrot.slane %v6741, %v6756
    %v6759 = vunpack.c.l.s4 1966171168
    %v6760 = vunpack.c.0.s8 %v6759
    %v6761 = vlaneseq
    %v6762 = vshrl.u32 %v6761, 7
    %v6763 = vsub.s32 %v6760, %v6762
    %v6764 = vrot.slane %v6742, %v6763
    %v6766 = vunpack.c.l.s4 1966171168
    %v6767 = vunpack.c.0.s8 %v6766
    %v6768 = vlaneseq
    %v6769 = vshrl.u32 %v6768, 7
    %v6770 = vsub.s32 %v6767, %v6769
    %v6771 = vrot.slane %v6743, %v6770
    %v6772 = vcombine.high %v6750, %v6750
    %v6773 = vcombine.high %v6764, %v6764
    %v6780 = vmul.f32 %v6750, 0.35355338
    %v6781 = vmul.f32 %v6764, 0.35355338
    %v6782 = vmul.f32 %v6772, 0.35355338
    %v6783 = vmul.f32 %v6773, 0.35355338
    %v6784 = vmul.f32 %v6757, 0.35355338
    %v6785 = vmul.f32 %v6771, 0.35355338
    %s6786 = scalar_lea.vmem %s12, 128
    %v6787 = vld [vmem:[%s6786] sm:$0xff]
    %v6788 = vld [vmem:[%s6786 + $0x8] sm:$0xff]
    %v6789 = vld [vmem:[%s6786 + $0x10] sm:$0xff]
    %v6790 = vld [vmem:[%s6786 + $0x18] sm:$0xff]
    %s6791 = scalar_lea.vmem [#allocation14], 4
    %v6792 = vld [vmem:[%s6791] sm:$0x1]
    %v6794 = vlaneseq
    %v6795 = vshrl.u32 %v6794, 7
    %v6796 = vsub.s32 0, %v6795
    %v6797 = vrot.slane %v6792, %v6796
    %6799 = vmatprep.subr.mxu0 0.0
    %6800 = vmatpush1.msra.mxu0 %v6787
    %6801 = vmatprep.subr.mxu0 0.0
    %6802 = vmatpush1.msra.mxu0 %v6788
    %6803 = vmatprep.subr.mxu0 0.0
    %6804 = vmatpush1.msra.mxu0 %v6789
    %6805 = vmatprep.subr.mxu0 0.0
    %6806 = vmatpush1.msra.mxu0 %v6790
    %6807 = vmatprep.subr.mxu0 0.0
    %6808 = vmatpush1.msra.mxu0 0.0
    %6809 = vmatprep.subr.mxu0 0.0
    %6810 = vmatpush1.msra.mxu0 0.0
    %6811 = vmatprep.subr.mxu0 0.0
    %6812 = vmatpush1.msra.mxu0 0.0
    %6813 = vmatprep.subr.mxu0 0.0
    %6814 = vmatpush1.msra.mxu0 0.0
    %6815 = vmatprep.subr.mxu0 0.0
    %6816 = vmatpush1.msra.mxu0 0.0
    %6817 = vmatprep.subr.mxu0 0.0
    %6818 = vmatpush1.msra.mxu0 0.0
    %6819 = vmatprep.subr.mxu0 0.0
    %6820 = vmatpush1.msra.mxu0 0.0
    %6821 = vmatprep.subr.mxu0 0.0
    %6822 = vmatpush1.msra.mxu0 0.0
    %6823 = vmatprep.subr.mxu0 0.0
    %6824 = vmatpush1.msra.mxu0 0.0
    %6825 = vmatprep.subr.mxu0 0.0
    %6826 = vmatpush1.msra.mxu0 0.0
    %6827 = vmatprep.subr.mxu0 0.0
    %6828 = vmatpush1.msra.mxu0 0.0
    %6829 = vmatprep.subr.mxu0 0.0
    %6830 = vmatpush1.msra.mxu0 0.0
    %6831 = vmatprep.subr.mxu0 0.0
    %6832 = vmatpush1.msra.mxu0 0.0
    %6833 = vmatprep.subr.mxu0 0.0
    %6834 = vmatpush1.msra.mxu0 0.0
    %6835 = vmatprep.subr.mxu0 0.0
    %6836 = vmatpush1.msra.mxu0 0.0
    %6837 = vmatprep.subr.mxu0 0.0
    %6838 = vmatpush1.msra.mxu0 0.0
    %6839 = vmatprep.subr.mxu0 0.0
    %6840 = vmatpush1.msra.mxu0 0.0
    %6841 = vmatprep.subr.mxu0 0.0
    %6842 = vmatpush1.msra.mxu0 0.0
    %6843 = vmatprep.subr.mxu0 0.0
    %6844 = vmatpush1.msra.mxu0 0.0
    %6845 = vmatprep.subr.mxu0 0.0
    %6846 = vmatpush1.msra.mxu0 0.0
    %6847 = vmatprep.subr.mxu0 0.0
    %6848 = vmatpush1.msra.mxu0 0.0
    %6849 = vmatprep.subr.mxu0 0.0
    %6850 = vmatpush1.msra.mxu0 0.0
    %6851 = vmatprep.subr.mxu0 0.0
    %6852 = vmatpush1.msra.mxu0 0.0
    %6853 = vmatprep.subr.mxu0 0.0
    %6854 = vmatpush1.msra.mxu0 0.0
    %6855 = vmatprep.subr.mxu0 0.0
    %6856 = vmatpush1.msra.mxu0 0.0
    %6857 = vmatprep.subr.mxu0 0.0
    %6858 = vmatpush1.msra.mxu0 0.0
    %6859 = vmatprep.subr.mxu0 0.0
    %6860 = vmatpush1.msra.mxu0 0.0
    %6861 = vmatprep.subr.mxu0 0.0
    %6862 = vmatpush1.msra.mxu0 0.0
    %6863 = vmatprep.mubr.f32.mxu0 0.0
    %6864 = vmatmul.mubr.f32.gmra.mrb[0].mxu0 %v6654
    %v6865 = vpop.f32.mrb[0].mxu0
    %v6866 = vadd.f32 %v6797, %v6865
    %v6867 = vpop.f32.mrb[0].mxu0
    %6868 = vdwg.mxu0
    %v6870 = vcombine.high %v6866, %v6866
    %v6872 = vunpack.c.l.s4 1966171168
    %v6873 = vunpack.c.0.s8 %v6872
    %v6874 = vlaneseq
    %v6875 = vshrl.u32 %v6874, 7
    %v6876 = vsub.s32 %v6873, %v6875
    %v6877 = vrot.slane %v6866, %v6876
    %v6879 = vunpack.c.l.s4 1966171168
    %v6880 = vunpack.c.0.s8 %v6879
    %v6881 = vlaneseq
    %v6882 = vshrl.u32 %v6881, 7
    %v6883 = vsub.s32 %v6880, %v6882
    %v6884 = vrot.slane %v6870, %v6883
    %v6885 = vcombine.high %v6877, %v6877
    %v6886 = vcombine.high %v6884, %v6884
    %v6888 = vunpack.c.l.s4 1966171168
    %v6889 = vunpack.c.0.s8 %v6888
    %v6890 = vlaneseq
    %v6891 = vshrl.u32 %v6890, 7
    %v6892 = vsub.s32 %v6889, %v6891
    %v6893 = vrot.slane %v6877, %v6892
    %v6895 = vunpack.c.l.s4 1966171168
    %v6896 = vunpack.c.0.s8 %v6895
    %v6897 = vlaneseq
    %v6898 = vshrl.u32 %v6897, 7
    %v6899 = vsub.s32 %v6896, %v6898
    %v6900 = vrot.slane %v6884, %v6899
    %v6902 = vunpack.c.l.s4 1966171168
    %v6903 = vunpack.c.0.s8 %v6902
    %v6904 = vlaneseq
    %v6905 = vshrl.u32 %v6904, 7
    %v6906 = vsub.s32 %v6903, %v6905
    %v6907 = vrot.slane %v6885, %v6906
    %v6909 = vunpack.c.l.s4 1966171168
    %v6910 = vunpack.c.0.s8 %v6909
    %v6911 = vlaneseq
    %v6912 = vshrl.u32 %v6911, 7
    %v6913 = vsub.s32 %v6910, %v6912
    %v6914 = vrot.slane %v6886, %v6913
    %v6915 = vcombine.high %v6893, %v6893
    %v6916 = vcombine.high %v6907, %v6907
    %s6917 = scalar_lea.vmem %s12, 160
    %v6918 = vld [vmem:[%s6917] sm:$0xff]
    %v6919 = vld [vmem:[%s6917 + $0x8] sm:$0xff]
    %v6920 = vld [vmem:[%s6917 + $0x10] sm:$0xff]
    %v6921 = vld [vmem:[%s6917 + $0x18] sm:$0xff]
    %s6922 = scalar_lea.vmem [#allocation14], 5
    %v6923 = vld [vmem:[%s6922] sm:$0x1]
    %v6925 = vlaneseq
    %v6926 = vshrl.u32 %v6925, 7
    %v6927 = vsub.s32 0, %v6926
    %v6928 = vrot.slane %v6923, %v6927
    %6930 = vmatprep.subr.mxu0 0.0
    %6931 = vmatpush1.msra.mxu0 %v6918
    %6932 = vmatprep.subr.mxu0 0.0
    %6933 = vmatpush1.msra.mxu0 %v6919
    %6934 = vmatprep.subr.mxu0 0.0
    %6935 = vmatpush1.msra.mxu0 %v6920
    %6936 = vmatprep.subr.mxu0 0.0
    %6937 = vmatpush1.msra.mxu0 %v6921
    %6938 = vmatprep.subr.mxu0 0.0
    %6939 = vmatpush1.msra.mxu0 0.0
    %6940 = vmatprep.subr.mxu0 0.0
    %6941 = vmatpush1.msra.mxu0 0.0
    %6942 = vmatprep.subr.mxu0 0.0
    %6943 = vmatpush1.msra.mxu0 0.0
    %6944 = vmatprep.subr.mxu0 0.0
    %6945 = vmatpush1.msra.mxu0 0.0
    %6946 = vmatprep.subr.mxu0 0.0
    %6947 = vmatpush1.msra.mxu0 0.0
    %6948 = vmatprep.subr.mxu0 0.0
    %6949 = vmatpush1.msra.mxu0 0.0
    %6950 = vmatprep.subr.mxu0 0.0
    %6951 = vmatpush1.msra.mxu0 0.0
    %6952 = vmatprep.subr.mxu0 0.0
    %6953 = vmatpush1.msra.mxu0 0.0
    %6954 = vmatprep.subr.mxu0 0.0
    %6955 = vmatpush1.msra.mxu0 0.0
    %6956 = vmatprep.subr.mxu0 0.0
    %6957 = vmatpush1.msra.mxu0 0.0
    %6958 = vmatprep.subr.mxu0 0.0
    %6959 = vmatpush1.msra.mxu0 0.0
    %6960 = vmatprep.subr.mxu0 0.0
    %6961 = vmatpush1.msra.mxu0 0.0
    %6962 = vmatprep.subr.mxu0 0.0
    %6963 = vmatpush1.msra.mxu0 0.0
    %6964 = vmatprep.subr.mxu0 0.0
    %6965 = vmatpush1.msra.mxu0 0.0
    %6966 = vmatprep.subr.mxu0 0.0
    %6967 = vmatpush1.msra.mxu0 0.0
    %6968 = vmatprep.subr.mxu0 0.0
    %6969 = vmatpush1.msra.mxu0 0.0
    %6970 = vmatprep.subr.mxu0 0.0
    %6971 = vmatpush1.msra.mxu0 0.0
    %6972 = vmatprep.subr.mxu0 0.0
    %6973 = vmatpush1.msra.mxu0 0.0
    %6974 = vmatprep.subr.mxu0 0.0
    %6975 = vmatpush1.msra.mxu0 0.0
    %6976 = vmatprep.subr.mxu0 0.0
    %6977 = vmatpush1.msra.mxu0 0.0
    %6978 = vmatprep.subr.mxu0 0.0
    %6979 = vmatpush1.msra.mxu0 0.0
    %6980 = vmatprep.subr.mxu0 0.0
    %6981 = vmatpush1.msra.mxu0 0.0
    %6982 = vmatprep.subr.mxu0 0.0
    %6983 = vmatpush1.msra.mxu0 0.0
    %6984 = vmatprep.subr.mxu0 0.0
    %6985 = vmatpush1.msra.mxu0 0.0
    %6986 = vmatprep.subr.mxu0 0.0
    %6987 = vmatpush1.msra.mxu0 0.0
    %6988 = vmatprep.subr.mxu0 0.0
    %6989 = vmatpush1.msra.mxu0 0.0
    %6990 = vmatprep.subr.mxu0 0.0
    %6991 = vmatpush1.msra.mxu0 0.0
    %6992 = vmatprep.subr.mxu0 0.0
    %6993 = vmatpush1.msra.mxu0 0.0
    %6994 = vmatprep.mubr.f32.mxu0 0.0
    %6995 = vmatmul.mubr.f32.gmra.mrb[0].mxu0 %v6654
    %v6996 = vpop.f32.mrb[0].mxu0
    %v6997 = vadd.f32 %v6928, %v6996
    %v6998 = vpop.f32.mrb[0].mxu0
    %6999 = vdwg.mxu0
    %v7001 = vcombine.high %v6997, %v6997
    %v7003 = vunpack.c.l.s4 1966171168
    %v7004 = vunpack.c.0.s8 %v7003
    %v7005 = vlaneseq
    %v7006 = vshrl.u32 %v7005, 7
    %v7007 = vsub.s32 %v7004, %v7006
    %v7008 = vrot.slane %v6997, %v7007
    %v7010 = vunpack.c.l.s4 1966171168
    %v7011 = vunpack.c.0.s8 %v7010
    %v7012 = vlaneseq
    %v7013 = vshrl.u32 %v7012, 7
    %v7014 = vsub.s32 %v7011, %v7013
    %v7015 = vrot.slane %v7001, %v7014
    %v7016 = vcombine.high %v7008, %v7008
    %v7017 = vcombine.high %v7015, %v7015
    %v7019 = vunpack.c.l.s4 1966171168
    %v7020 = vunpack.c.0.s8 %v7019
    %v7021 = vlaneseq
    %v7022 = vshrl.u32 %v7021, 7
    %v7023 = vsub.s32 %v7020, %v7022
    %v7024 = vrot.slane %v7008, %v7023
    %v7026 = vunpack.c.l.s4 1966171168
    %v7027 = vunpack.c.0.s8 %v7026
    %v7028 = vlaneseq
    %v7029 = vshrl.u32 %v7028, 7
    %v7030 = vsub.s32 %v7027, %v7029
    %v7031 = vrot.slane %v7015, %v7030
    %v7033 = vunpack.c.l.s4 1966171168
    %v7034 = vunpack.c.0.s8 %v7033
    %v7035 = vlaneseq
    %v7036 = vshrl.u32 %v7035, 7
    %v7037 = vsub.s32 %v7034, %v7036
    %v7038 = vrot.slane %v7016, %v7037
    %v7040 = vunpack.c.l.s4 1966171168
    %v7041 = vunpack.c.0.s8 %v7040
    %v7042 = vlaneseq
    %v7043 = vshrl.u32 %v7042, 7
    %v7044 = vsub.s32 %v7041, %v7043
    %v7045 = vrot.slane %v7017, %v7044
    %v7046 = vcombine.high %v7024, %v7024
    %v7047 = vcombine.high %v7038, %v7038
    %v7051 = vcombine.low %v6780, %v6781
    %v7053 = vunpack.c.l.s4 1966171168
    %v7054 = vunpack.c.0.s8 %v7053
    %v7055 = vlaneseq
    %v7056 = vshrl.u32 %v7055, 7
    %v7057 = vsub.s32 %v7054, %v7056
    %v7058 = vrot.slane %v7051, %v7057
    %v7060 = vunpack.c.l.s4 1966171168
    %v7061 = vunpack.c.0.s8 %v7060
    %v7062 = vlaneseq
    %v7063 = vshrl.u32 %v7062, 7
    %v7064 = vsub.s32 %v7061, %v7063
    %v7065 = vrot.slane %v6782, %v7064
    %v7066 = vcombine.low %v7058, %v7065
    %v7068 = vunpack.c.l.s4 1966171168
    %v7069 = vunpack.c.0.s8 %v7068
    %v7070 = vlaneseq
    %v7071 = vshrl.u32 %v7070, 7
    %v7072 = vsub.s32 %v7069, %v7071
    %v7073 = vrot.slane %v7066, %v7072
    %v7074 = vcombine.low %v6893, %v6907
    %v7076 = vunpack.c.l.s4 1966171168
    %v7077 = vunpack.c.0.s8 %v7076
    %v7078 = vlaneseq
    %v7079 = vshrl.u32 %v7078, 7
    %v7080 = vsub.s32 %v7077, %v7079
    %v7081 = vrot.slane %v7074, %v7080
    %v7083 = vunpack.c.l.s4 1966171168
    %v7084 = vunpack.c.0.s8 %v7083
    %v7085 = vlaneseq
    %v7086 = vshrl.u32 %v7085, 7
    %v7087 = vsub.s32 %v7084, %v7086
    %v7088 = vrot.slane %v6915, %v7087
    %v7089 = vcombine.low %v7081, %v7088
    %v7091 = vunpack.c.l.s4 1966171168
    %v7092 = vunpack.c.0.s8 %v7091
    %v7093 = vlaneseq
    %v7094 = vshrl.u32 %v7093, 7
    %v7095 = vsub.s32 %v7092, %v7094
    %v7096 = vrot.slane %v7089, %v7095
    %v7097 = vsel %vm4862, %v7073, 0
    %v7099 = vsel %vm4862, %v7096, 0
    %7101 = vmatprep.subr.mxu0 0.0
    %7102 = vmatpush1.xpose.msra.mxu0 %v7099
    %7103 = vmatprep.subr.mxu0 0.0
    %7104 = vmatpush1.xpose.msra.mxu0 0.0
    %7105 = vmatprep.subr.mxu0 0.0
    %7106 = vmatpush1.xpose.msra.mxu0 0.0
    %7107 = vmatprep.subr.mxu0 0.0
    %7108 = vmatpush1.xpose.msra.mxu0 0.0
    %7109 = vmatprep.subr.mxu0 0.0
    %7110 = vmatpush1.xpose.msra.mxu0 0.0
    %7111 = vmatprep.subr.mxu0 0.0
    %7112 = vmatpush1.xpose.msra.mxu0 0.0
    %7113 = vmatprep.subr.mxu0 0.0
    %7114 = vmatpush1.xpose.msra.mxu0 0.0
    %7115 = vmatprep.subr.mxu0 0.0
    %7116 = vmatpush1.xpose.msra.mxu0 0.0
    %7117 = vmatprep.subr.mxu0 0.0
    %7118 = vmatpush1.xpose.msra.mxu0 0.0
    %7119 = vmatprep.subr.mxu0 0.0
    %7120 = vmatpush1.xpose.msra.mxu0 0.0
    %7121 = vmatprep.subr.mxu0 0.0
    %7122 = vmatpush1.xpose.msra.mxu0 0.0
    %7123 = vmatprep.subr.mxu0 0.0
    %7124 = vmatpush1.xpose.msra.mxu0 0.0
    %7125 = vmatprep.subr.mxu0 0.0
    %7126 = vmatpush1.xpose.msra.mxu0 0.0
    %7127 = vmatprep.subr.mxu0 0.0
    %7128 = vmatpush1.xpose.msra.mxu0 0.0
    %7129 = vmatprep.subr.mxu0 0.0
    %7130 = vmatpush1.xpose.msra.mxu0 0.0
    %7131 = vmatprep.subr.mxu0 0.0
    %7132 = vmatpush1.xpose.msra.mxu0 0.0
    %7133 = vmatprep.subr.mxu0 0.0
    %7134 = vmatpush1.xpose.msra.mxu0 0.0
    %7135 = vmatprep.subr.mxu0 0.0
    %7136 = vmatpush1.xpose.msra.mxu0 0.0
    %7137 = vmatprep.subr.mxu0 0.0
    %7138 = vmatpush1.xpose.msra.mxu0 0.0
    %7139 = vmatprep.subr.mxu0 0.0
    %7140 = vmatpush1.xpose.msra.mxu0 0.0
    %7141 = vmatprep.subr.mxu0 0.0
    %7142 = vmatpush1.xpose.msra.mxu0 0.0
    %7143 = vmatprep.subr.mxu0 0.0
    %7144 = vmatpush1.xpose.msra.mxu0 0.0
    %7145 = vmatprep.subr.mxu0 0.0
    %7146 = vmatpush1.xpose.msra.mxu0 0.0
    %7147 = vmatprep.subr.mxu0 0.0
    %7148 = vmatpush1.xpose.msra.mxu0 0.0
    %7149 = vmatprep.subr.mxu0 0.0
    %7150 = vmatpush1.xpose.msra.mxu0 0.0
    %7151 = vmatprep.subr.mxu0 0.0
    %7152 = vmatpush1.xpose.msra.mxu0 0.0
    %7153 = vmatprep.subr.mxu0 0.0
    %7154 = vmatpush1.xpose.msra.mxu0 0.0
    %7155 = vmatprep.subr.mxu0 0.0
    %7156 = vmatpush1.xpose.msra.mxu0 0.0
    %7157 = vmatprep.subr.mxu0 0.0
    %7158 = vmatpush1.xpose.msra.mxu0 0.0
    %7159 = vmatprep.subr.mxu0 0.0
    %7160 = vmatpush1.xpose.msra.mxu0 0.0
    %7161 = vmatprep.subr.mxu0 0.0
    %7162 = vmatpush1.xpose.msra.mxu0 0.0
    %7163 = vmatprep.subr.mxu0 0.0
    %7164 = vmatpush1.xpose.msra.mxu0 0.0
    %7165 = vmatprep.mubr.f32.mxu0 0.0
    %7166 = vmatmul.mubr.f32.gmra.mrb[0].mxu0 %v7097
    %v7167 = vpop.f32.mrb[0].mxu0
    %v7168 = vadd.f32 0.0, %v7167
    %v7169 = vpop.f32.mrb[0].mxu0
    %7170 = vdwg.mxu0
    %v7174 = vcombine.low %v6783, %v6784
    %v7176 = vunpack.c.l.s4 1966171168
    %v7177 = vunpack.c.0.s8 %v7176
    %v7178 = vlaneseq
    %v7179 = vshrl.u32 %v7178, 7
    %v7180 = vsub.s32 %v7177, %v7179
    %v7181 = vrot.slane %v7174, %v7180
    %v7183 = vunpack.c.l.s4 1966171168
    %v7184 = vunpack.c.0.s8 %v7183
    %v7185 = vlaneseq
    %v7186 = vshrl.u32 %v7185, 7
    %v7187 = vsub.s32 %v7184, %v7186
    %v7188 = vrot.slane %v6785, %v7187
    %v7189 = vcombine.low %v7181, %v7188
    %v7191 = vunpack.c.l.s4 1966171168
    %v7192 = vunpack.c.0.s8 %v7191
    %v7193 = vlaneseq
    %v7194 = vshrl.u32 %v7193, 7
    %v7195 = vsub.s32 %v7192, %v7194
    %v7196 = vrot.slane %v7189, %v7195
    %v7197 = vcombine.low %v6916, %v6900
    %v7199 = vunpack.c.l.s4 1966171168
    %v7200 = vunpack.c.0.s8 %v7199
    %v7201 = vlaneseq
    %v7202 = vshrl.u32 %v7201, 7
    %v7203 = vsub.s32 %v7200, %v7202
    %v7204 = vrot.slane %v7197, %v7203
    %v7206 = vunpack.c.l.s4 1966171168
    %v7207 = vunpack.c.0.s8 %v7206
    %v7208 = vlaneseq
    %v7209 = vshrl.u32 %v7208, 7
    %v7210 = vsub.s32 %v7207, %v7209
    %v7211 = vrot.slane %v6914, %v7210
    %v7212 = vcombine.low %v7204, %v7211
    %v7214 = vunpack.c.l.s4 1966171168
    %v7215 = vunpack.c.0.s8 %v7214
    %v7216 = vlaneseq
    %v7217 = vshrl.u32 %v7216, 7
    %v7218 = vsub.s32 %v7215, %v7217
    %v7219 = vrot.slane %v7212, %v7218
    %v7220 = vsel %vm4862, %v7196, 0
    %v7222 = vsel %vm4862, %v7219, 0
    %7224 = vmatprep.subr.mxu0 0.0
    %7225 = vmatpush1.xpose.msra.mxu0 %v7222
    %7226 = vmatprep.subr.mxu0 0.0
    %7227 = vmatpush1.xpose.msra.mxu0 0.0
    %7228 = vmatprep.subr.mxu0 0.0
    %7229 = vmatpush1.xpose.msra.mxu0 0.0
    %7230 = vmatprep.subr.mxu0 0.0
    %7231 = vmatpush1.xpose.msra.mxu0 0.0
    %7232 = vmatprep.subr.mxu0 0.0
    %7233 = vmatpush1.xpose.msra.mxu0 0.0
    %7234 = vmatprep.subr.mxu0 0.0
    %7235 = vmatpush1.xpose.msra.mxu0 0.0
    %7236 = vmatprep.subr.mxu0 0.0
    %7237 = vmatpush1.xpose.msra.mxu0 0.0
    %7238 = vmatprep.subr.mxu0 0.0
    %7239 = vmatpush1.xpose.msra.mxu0 0.0
    %7240 = vmatprep.subr.mxu0 0.0
    %7241 = vmatpush1.xpose.msra.mxu0 0.0
    %7242 = vmatprep.subr.mxu0 0.0
    %7243 = vmatpush1.xpose.msra.mxu0 0.0
    %7244 = vmatprep.subr.mxu0 0.0
    %7245 = vmatpush1.xpose.msra.mxu0 0.0
    %7246 = vmatprep.subr.mxu0 0.0
    %7247 = vmatpush1.xpose.msra.mxu0 0.0
    %7248 = vmatprep.subr.mxu0 0.0
    %7249 = vmatpush1.xpose.msra.mxu0 0.0
    %7250 = vmatprep.subr.mxu0 0.0
    %7251 = vmatpush1.xpose.msra.mxu0 0.0
    %7252 = vmatprep.subr.mxu0 0.0
    %7253 = vmatpush1.xpose.msra.mxu0 0.0
    %7254 = vmatprep.subr.mxu0 0.0
    %7255 = vmatpush1.xpose.msra.mxu0 0.0
    %7256 = vmatprep.subr.mxu0 0.0
    %7257 = vmatpush1.xpose.msra.mxu0 0.0
    %7258 = vmatprep.subr.mxu0 0.0
    %7259 = vmatpush1.xpose.msra.mxu0 0.0
    %7260 = vmatprep.subr.mxu0 0.0
    %7261 = vmatpush1.xpose.msra.mxu0 0.0
    %7262 = vmatprep.subr.mxu0 0.0
    %7263 = vmatpush1.xpose.msra.mxu0 0.0
    %7264 = vmatprep.subr.mxu0 0.0
    %7265 = vmatpush1.xpose.msra.mxu0 0.0
    %7266 = vmatprep.subr.mxu0 0.0
    %7267 = vmatpush1.xpose.msra.mxu0 0.0
    %7268 = vmatprep.subr.mxu0 0.0
    %7269 = vmatpush1.xpose.msra.mxu0 0.0
    %7270 = vmatprep.subr.mxu0 0.0
    %7271 = vmatpush1.xpose.msra.mxu0 0.0
    %7272 = vmatprep.subr.mxu0 0.0
    %7273 = vmatpush1.xpose.msra.mxu0 0.0
    %7274 = vmatprep.subr.mxu0 0.0
    %7275 = vmatpush1.xpose.msra.mxu0 0.0
    %7276 = vmatprep.subr.mxu0 0.0
    %7277 = vmatpush1.xpose.msra.mxu0 0.0
    %7278 = vmatprep.subr.mxu0 0.0
    %7279 = vmatpush1.xpose.msra.mxu0 0.0
    %7280 = vmatprep.subr.mxu0 0.0
    %7281 = vmatpush1.xpose.msra.mxu0 0.0
    %7282 = vmatprep.subr.mxu0 0.0
    %7283 = vmatpush1.xpose.msra.mxu0 0.0
    %7284 = vmatprep.subr.mxu0 0.0
    %7285 = vmatpush1.xpose.msra.mxu0 0.0
    %7286 = vmatprep.subr.mxu0 0.0
    %7287 = vmatpush1.xpose.msra.mxu0 0.0
    %7288 = vmatprep.mubr.f32.mxu0 0.0
    %7289 = vmatmul.mubr.f32.gmra.mrb[0].mxu0 %v7220
    %v7290 = vpop.f32.mrb[0].mxu0
    %v7291 = vadd.f32 0.0, %v7290
    %v7292 = vpop.f32.mrb[0].mxu0
    %7293 = vdwg.mxu0
    %v7294 = vsel %vm5060, %v7168, -inf
    %7295 = vmax.xlane.f32.xlu0 %v7294
    %v7296 = vpop.xlane.xlu0 %7295
    %v7297 = vsel %vm5060, %v7291, -inf
    %7298 = vmax.xlane.f32.xlu0 %v7297
    %v7299 = vpop.xlane.xlu0 %7298
    %v7300 = vsub.f32 %v7168, %v7296
    %v7301 = vsub.f32 %v7291, %v7299
    %v7302 = vmul.f32 %v7300, 1.442695
    %v7303 = vpow.pop %v7302
    %v7304 = vmul.f32 %v7301, 1.442695
    %v7305 = vpow.pop %v7304
    %v7306 = vsel %vm5060, %v7303, 0.0
    %7307 = vadd.xlane.f32.xlu0 %v7306
    %v7308 = vpop.xlane.xlu0 %7307
    %v7309 = vsel %vm5060, %v7305, 0.0
    %7310 = vadd.xlane.f32.xlu0 %v7309
    %v7311 = vpop.xlane.xlu0 %7310
    %v7312 = vrcp.pop %v7308
    %v7313 = vrcp.pop %v7311
    %v7314 = vmul.f32 %v7303, %v7312
    %v7315 = vmul.f32 %v7305, %v7313
    %v7316 = vcombine.low %v7024, %v7038
    %v7318 = vunpack.c.l.s4 1966171168
    %v7319 = vunpack.c.0.s8 %v7318
    %v7320 = vlaneseq
    %v7321 = vshrl.u32 %v7320, 7
    %v7322 = vsub.s32 %v7319, %v7321
    %v7323 = vrot.slane %v7316, %v7322
    %v7325 = vunpack.c.l.s4 1966171168
    %v7326 = vunpack.c.0.s8 %v7325
    %v7327 = vlaneseq
    %v7328 = vshrl.u32 %v7327, 7
    %v7329 = vsub.s32 %v7326, %v7328
    %v7330 = vrot.slane %v7046, %v7329
    %v7331 = vcombine.low %v7323, %v7330
    %v7333 = vunpack.c.l.s4 1966171168
    %v7334 = vunpack.c.0.s8 %v7333
    %v7335 = vlaneseq
    %v7336 = vshrl.u32 %v7335, 7
    %v7337 = vsub.s32 %v7334, %v7336
    %v7338 = vrot.slane %v7331, %v7337
    %v7340 = vsel %vm5106, %v7314, 0
    %v7342 = vsel %vm5110, %v7338, 0
    %7344 = vmatprep.subr.mxu0 0.0
    %7345 = vmatpush1.msra.mxu0 %v7342
    %7346 = vmatprep.subr.mxu0 0.0
    %7347 = vmatpush1.msra.mxu0 0.0
    %7348 = vmatprep.subr.mxu0 0.0
    %7349 = vmatpush1.msra.mxu0 0.0
    %7350 = vmatprep.subr.mxu0 0.0
    %7351 = vmatpush1.msra.mxu0 0.0
    %7352 = vmatprep.subr.mxu0 0.0
    %7353 = vmatpush1.msra.mxu0 0.0
    %7354 = vmatprep.subr.mxu0 0.0
    %7355 = vmatpush1.msra.mxu0 0.0
    %7356 = vmatprep.subr.mxu0 0.0
    %7357 = vmatpush1.msra.mxu0 0.0
    %7358 = vmatprep.subr.mxu0 0.0
    %7359 = vmatpush1.msra.mxu0 0.0
    %7360 = vmatprep.subr.mxu0 0.0
    %7361 = vmatpush1.msra.mxu0 0.0
    %7362 = vmatprep.subr.mxu0 0.0
    %7363 = vmatpush1.msra.mxu0 0.0
    %7364 = vmatprep.subr.mxu0 0.0
    %7365 = vmatpush1.msra.mxu0 0.0
    %7366 = vmatprep.subr.mxu0 0.0
    %7367 = vmatpush1.msra.mxu0 0.0
    %7368 = vmatprep.subr.mxu0 0.0
    %7369 = vmatpush1.msra.mxu0 0.0
    %7370 = vmatprep.subr.mxu0 0.0
    %7371 = vmatpush1.msra.mxu0 0.0
    %7372 = vmatprep.subr.mxu0 0.0
    %7373 = vmatpush1.msra.mxu0 0.0
    %7374 = vmatprep.subr.mxu0 0.0
    %7375 = vmatpush1.msra.mxu0 0.0
    %7376 = vmatprep.subr.mxu0 0.0
    %7377 = vmatpush1.msra.mxu0 0.0
    %7378 = vmatprep.subr.mxu0 0.0
    %7379 = vmatpush1.msra.mxu0 0.0
    %7380 = vmatprep.subr.mxu0 0.0
    %7381 = vmatpush1.msra.mxu0 0.0
    %7382 = vmatprep.subr.mxu0 0.0
    %7383 = vmatpush1.msra.mxu0 0.0
    %7384 = vmatprep.subr.mxu0 0.0
    %7385 = vmatpush1.msra.mxu0 0.0
    %7386 = vmatprep.subr.mxu0 0.0
    %7387 = vmatpush1.msra.mxu0 0.0
    %7388 = vmatprep.subr.mxu0 0.0
    %7389 = vmatpush1.msra.mxu0 0.0
    %7390 = vmatprep.subr.mxu0 0.0
    %7391 = vmatpush1.msra.mxu0 0.0
    %7392 = vmatprep.subr.mxu0 0.0
    %7393 = vmatpush1.msra.mxu0 0.0
    %7394 = vmatprep.subr.mxu0 0.0
    %7395 = vmatpush1.msra.mxu0 0.0
    %7396 = vmatprep.subr.mxu0 0.0
    %7397 = vmatpush1.msra.mxu0 0.0
    %7398 = vmatprep.subr.mxu0 0.0
    %7399 = vmatpush1.msra.mxu0 0.0
    %7400 = vmatprep.subr.mxu0 0.0
    %7401 = vmatpush1.msra.mxu0 0.0
    %7402 = vmatprep.subr.mxu0 0.0
    %7403 = vmatpush1.msra.mxu0 0.0
    %7404 = vmatprep.subr.mxu0 0.0
    %7405 = vmatpush1.msra.mxu0 0.0
    %7406 = vmatprep.subr.mxu0 0.0
    %7407 = vmatpush1.msra.mxu0 0.0
    %7408 = vmatprep.mubr.f32.mxu0 0.0
    %7409 = vmatmul.mubr.f32.gmra.mrb[0].mxu0 %v7340
    %v7410 = vpop.f32.mrb[0].mxu0
    %v7411 = vadd.f32 0.0, %v7410
    %v7412 = vpop.f32.mrb[0].mxu0
    %7413 = vdwg.mxu0
    %v7414 = vcombine.low %v7047, %v7031
    %v7416 = vunpack.c.l.s4 1966171168
    %v7417 = vunpack.c.0.s8 %v7416
    %v7418 = vlaneseq
    %v7419 = vshrl.u32 %v7418, 7
    %v7420 = vsub.s32 %v7417, %v7419
    %v7421 = vrot.slane %v7414, %v7420
    %v7423 = vunpack.c.l.s4 1966171168
    %v7424 = vunpack.c.0.s8 %v7423
    %v7425 = vlaneseq
    %v7426 = vshrl.u32 %v7425, 7
    %v7427 = vsub.s32 %v7424, %v7426
    %v7428 = vrot.slane %v7045, %v7427
    %v7429 = vcombine.low %v7421, %v7428
    %v7431 = vunpack.c.l.s4 1966171168
    %v7432 = vunpack.c.0.s8 %v7431
    %v7433 = vlaneseq
    %v7434 = vshrl.u32 %v7433, 7
    %v7435 = vsub.s32 %v7432, %v7434
    %v7436 = vrot.slane %v7429, %v7435
    %v7438 = vsel %vm5106, %v7315, 0
    %v7440 = vsel %vm5110, %v7436, 0
    %7442 = vmatprep.subr.mxu0 0.0
    %7443 = vmatpush1.msra.mxu0 %v7440
    %7444 = vmatprep.subr.mxu0 0.0
    %7445 = vmatpush1.msra.mxu0 0.0
    %7446 = vmatprep.subr.mxu0 0.0
    %7447 = vmatpush1.msra.mxu0 0.0
    %7448 = vmatprep.subr.mxu0 0.0
    %7449 = vmatpush1.msra.mxu0 0.0
    %7450 = vmatprep.subr.mxu0 0.0
    %7451 = vmatpush1.msra.mxu0 0.0
    %7452 = vmatprep.subr.mxu0 0.0
    %7453 = vmatpush1.msra.mxu0 0.0
    %7454 = vmatprep.subr.mxu0 0.0
    %7455 = vmatpush1.msra.mxu0 0.0
    %7456 = vmatprep.subr.mxu0 0.0
    %7457 = vmatpush1.msra.mxu0 0.0
    %7458 = vmatprep.subr.mxu0 0.0
    %7459 = vmatpush1.msra.mxu0 0.0
    %7460 = vmatprep.subr.mxu0 0.0
    %7461 = vmatpush1.msra.mxu0 0.0
    %7462 = vmatprep.subr.mxu0 0.0
    %7463 = vmatpush1.msra.mxu0 0.0
    %7464 = vmatprep.subr.mxu0 0.0
    %7465 = vmatpush1.msra.mxu0 0.0
    %7466 = vmatprep.subr.mxu0 0.0
    %7467 = vmatpush1.msra.mxu0 0.0
    %7468 = vmatprep.subr.mxu0 0.0
    %7469 = vmatpush1.msra.mxu0 0.0
    %7470 = vmatprep.subr.mxu0 0.0
    %7471 = vmatpush1.msra.mxu0 0.0
    %7472 = vmatprep.subr.mxu0 0.0
    %7473 = vmatpush1.msra.mxu0 0.0
    %7474 = vmatprep.subr.mxu0 0.0
    %7475 = vmatpush1.msra.mxu0 0.0
    %7476 = vmatprep.subr.mxu0 0.0
    %7477 = vmatpush1.msra.mxu0 0.0
    %7478 = vmatprep.subr.mxu0 0.0
    %7479 = vmatpush1.msra.mxu0 0.0
    %7480 = vmatprep.subr.mxu0 0.0
    %7481 = vmatpush1.msra.mxu0 0.0
    %7482 = vmatprep.subr.mxu0 0.0
    %7483 = vmatpush1.msra.mxu0 0.0
    %7484 = vmatprep.subr.mxu0 0.0
    %7485 = vmatpush1.msra.mxu0 0.0
    %7486 = vmatprep.subr.mxu0 0.0
    %7487 = vmatpush1.msra.mxu0 0.0
    %7488 = vmatprep.subr.mxu0 0.0
    %7489 = vmatpush1.msra.mxu0 0.0
    %7490 = vmatprep.subr.mxu0 0.0
    %7491 = vmatpush1.msra.mxu0 0.0
    %7492 = vmatprep.subr.mxu0 0.0
    %7493 = vmatpush1.msra.mxu0 0.0
    %7494 = vmatprep.subr.mxu0 0.0
    %7495 = vmatpush1.msra.mxu0 0.0
    %7496 = vmatprep.subr.mxu0 0.0
    %7497 = vmatpush1.msra.mxu0 0.0
    %7498 = vmatprep.subr.mxu0 0.0
    %7499 = vmatpush1.msra.mxu0 0.0
    %7500 = vmatprep.subr.mxu0 0.0
    %7501 = vmatpush1.msra.mxu0 0.0
    %7502 = vmatprep.subr.mxu0 0.0
    %7503 = vmatpush1.msra.mxu0 0.0
    %7504 = vmatprep.subr.mxu0 0.0
    %7505 = vmatpush1.msra.mxu0 0.0
    %7506 = vmatprep.mubr.f32.mxu0 0.0
    %7507 = vmatmul.mubr.f32.gmra.mrb[0].mxu0 %v7438
    %v7508 = vpop.f32.mrb[0].mxu0
    %v7509 = vadd.f32 0.0, %v7508
    %v7510 = vpop.f32.mrb[0].mxu0
    %7511 = vdwg.mxu0
    %7512 = vrot.lane.b32.xlu0 %v7073, 120
    %v7513 = vpop.permute.xlu0 %7512
    %7514 = vrot.lane.b32.xlu0 %v7096, 120
    %v7515 = vpop.permute.xlu0 %7514
    %v7516 = vsel %vm4862, %v7513, 0
    %v7518 = vsel %vm4862, %v7515, 0
    %7520 = vmatprep.subr.mxu0 0.0
    %7521 = vmatpush1.xpose.msra.mxu0 %v7518
    %7522 = vmatprep.subr.mxu0 0.0
    %7523 = vmatpush1.xpose.msra.mxu0 0.0
    %7524 = vmatprep.subr.mxu0 0.0
    %7525 = vmatpush1.xpose.msra.mxu0 0.0
    %7526 = vmatprep.subr.mxu0 0.0
    %7527 = vmatpush1.xpose.msra.mxu0 0.0
    %7528 = vmatprep.subr.mxu0 0.0
    %7529 = vmatpush1.xpose.msra.mxu0 0.0
    %7530 = vmatprep.subr.mxu0 0.0
    %7531 = vmatpush1.xpose.msra.mxu0 0.0
    %7532 = vmatprep.subr.mxu0 0.0
    %7533 = vmatpush1.xpose.msra.mxu0 0.0
    %7534 = vmatprep.subr.mxu0 0.0
    %7535 = vmatpush1.xpose.msra.mxu0 0.0
    %7536 = vmatprep.subr.mxu0 0.0
    %7537 = vmatpush1.xpose.msra.mxu0 0.0
    %7538 = vmatprep.subr.mxu0 0.0
    %7539 = vmatpush1.xpose.msra.mxu0 0.0
    %7540 = vmatprep.subr.mxu0 0.0
    %7541 = vmatpush1.xpose.msra.mxu0 0.0
    %7542 = vmatprep.subr.mxu0 0.0
    %7543 = vmatpush1.xpose.msra.mxu0 0.0
    %7544 = vmatprep.subr.mxu0 0.0
    %7545 = vmatpush1.xpose.msra.mxu0 0.0
    %7546 = vmatprep.subr.mxu0 0.0
    %7547 = vmatpush1.xpose.msra.mxu0 0.0
    %7548 = vmatprep.subr.mxu0 0.0
    %7549 = vmatpush1.xpose.msra.mxu0 0.0
    %7550 = vmatprep.subr.mxu0 0.0
    %7551 = vmatpush1.xpose.msra.mxu0 0.0
    %7552 = vmatprep.subr.mxu0 0.0
    %7553 = vmatpush1.xpose.msra.mxu0 0.0
    %7554 = vmatprep.subr.mxu0 0.0
    %7555 = vmatpush1.xpose.msra.mxu0 0.0
    %7556 = vmatprep.subr.mxu0 0.0
    %7557 = vmatpush1.xpose.msra.mxu0 0.0
    %7558 = vmatprep.subr.mxu0 0.0
    %7559 = vmatpush1.xpose.msra.mxu0 0.0
    %7560 = vmatprep.subr.mxu0 0.0
    %7561 = vmatpush1.xpose.msra.mxu0 0.0
    %7562 = vmatprep.subr.mxu0 0.0
    %7563 = vmatpush1.xpose.msra.mxu0 0.0
    %7564 = vmatprep.subr.mxu0 0.0
    %7565 = vmatpush1.xpose.msra.mxu0 0.0
    %7566 = vmatprep.subr.mxu0 0.0
    %7567 = vmatpush1.xpose.msra.mxu0 0.0
    %7568 = vmatprep.subr.mxu0 0.0
    %7569 = vmatpush1.xpose.msra.mxu0 0.0
    %7570 = vmatprep.subr.mxu0 0.0
    %7571 = vmatpush1.xpose.msra.mxu0 0.0
    %7572 = vmatprep.subr.mxu0 0.0
    %7573 = vmatpush1.xpose.msra.mxu0 0.0
    %7574 = vmatprep.subr.mxu0 0.0
    %7575 = vmatpush1.xpose.msra.mxu0 0.0
    %7576 = vmatprep.subr.mxu0 0.0
    %7577 = vmatpush1.xpose.msra.mxu0 0.0
    %7578 = vmatprep.subr.mxu0 0.0
    %7579 = vmatpush1.xpose.msra.mxu0 0.0
    %7580 = vmatprep.subr.mxu0 0.0
    %7581 = vmatpush1.xpose.msra.mxu0 0.0
    %7582 = vmatprep.subr.mxu0 0.0
    %7583 = vmatpush1.xpose.msra.mxu0 0.0
    %7584 = vmatprep.mubr.f32.mxu0 0.0
    %7585 = vmatmul.mubr.f32.gmra.mrb[0].mxu0 %v7516
    %v7586 = vpop.f32.mrb[0].mxu0
    %v7587 = vadd.f32 0.0, %v7586
    %v7588 = vpop.f32.mrb[0].mxu0
    %7589 = vdwg.mxu0
    %7590 = vrot.lane.b32.xlu0 %v7196, 120
    %v7591 = vpop.permute.xlu0 %7590
    %7592 = vrot.lane.b32.xlu0 %v7219, 120
    %v7593 = vpop.permute.xlu0 %7592
    %v7594 = vsel %vm4862, %v7591, 0
    %v7596 = vsel %vm4862, %v7593, 0
    %7598 = vmatprep.subr.mxu0 0.0
    %7599 = vmatpush1.xpose.msra.mxu0 %v7596
    %7600 = vmatprep.subr.mxu0 0.0
    %7601 = vmatpush1.xpose.msra.mxu0 0.0
    %7602 = vmatprep.subr.mxu0 0.0
    %7603 = vmatpush1.xpose.msra.mxu0 0.0
    %7604 = vmatprep.subr.mxu0 0.0
    %7605 = vmatpush1.xpose.msra.mxu0 0.0
    %7606 = vmatprep.subr.mxu0 0.0
    %7607 = vmatpush1.xpose.msra.mxu0 0.0
    %7608 = vmatprep.subr.mxu0 0.0
    %7609 = vmatpush1.xpose.msra.mxu0 0.0
    %7610 = vmatprep.subr.mxu0 0.0
    %7611 = vmatpush1.xpose.msra.mxu0 0.0
    %7612 = vmatprep.subr.mxu0 0.0
    %7613 = vmatpush1.xpose.msra.mxu0 0.0
    %7614 = vmatprep.subr.mxu0 0.0
    %7615 = vmatpush1.xpose.msra.mxu0 0.0
    %7616 = vmatprep.subr.mxu0 0.0
    %7617 = vmatpush1.xpose.msra.mxu0 0.0
    %7618 = vmatprep.subr.mxu0 0.0
    %7619 = vmatpush1.xpose.msra.mxu0 0.0
    %7620 = vmatprep.subr.mxu0 0.0
    %7621 = vmatpush1.xpose.msra.mxu0 0.0
    %7622 = vmatprep.subr.mxu0 0.0
    %7623 = vmatpush1.xpose.msra.mxu0 0.0
    %7624 = vmatprep.subr.mxu0 0.0
    %7625 = vmatpush1.xpose.msra.mxu0 0.0
    %7626 = vmatprep.subr.mxu0 0.0
    %7627 = vmatpush1.xpose.msra.mxu0 0.0
    %7628 = vmatprep.subr.mxu0 0.0
    %7629 = vmatpush1.xpose.msra.mxu0 0.0
    %7630 = vmatprep.subr.mxu0 0.0
    %7631 = vmatpush1.xpose.msra.mxu0 0.0
    %7632 = vmatprep.subr.mxu0 0.0
    %7633 = vmatpush1.xpose.msra.mxu0 0.0
    %7634 = vmatprep.subr.mxu0 0.0
    %7635 = vmatpush1.xpose.msra.mxu0 0.0
    %7636 = vmatprep.subr.mxu0 0.0
    %7637 = vmatpush1.xpose.msra.mxu0 0.0
    %7638 = vmatprep.subr.mxu0 0.0
    %7639 = vmatpush1.xpose.msra.mxu0 0.0
    %7640 = vmatprep.subr.mxu0 0.0
    %7641 = vmatpush1.xpose.msra.mxu0 0.0
    %7642 = vmatprep.subr.mxu0 0.0
    %7643 = vmatpush1.xpose.msra.mxu0 0.0
    %7644 = vmatprep.subr.mxu0 0.0
    %7645 = vmatpush1.xpose.msra.mxu0 0.0
    %7646 = vmatprep.subr.mxu0 0.0
    %7647 = vmatpush1.xpose.msra.mxu0 0.0
    %7648 = vmatprep.subr.mxu0 0.0
    %7649 = vmatpush1.xpose.msra.mxu0 0.0
    %7650 = vmatprep.subr.mxu0 0.0
    %7651 = vmatpush1.xpose.msra.mxu0 0.0
    %7652 = vmatprep.subr.mxu0 0.0
    %7653 = vmatpush1.xpose.msra.mxu0 0.0
    %7654 = vmatprep.subr.mxu0 0.0
    %7655 = vmatpush1.xpose.msra.mxu0 0.0
    %7656 = vmatprep.subr.mxu0 0.0
    %7657 = vmatpush1.xpose.msra.mxu0 0.0
    %7658 = vmatprep.subr.mxu0 0.0
    %7659 = vmatpush1.xpose.msra.mxu0 0.0
    %7660 = vmatprep.subr.mxu0 0.0
    %7661 = vmatpush1.xpose.msra.mxu0 0.0
    %7662 = vmatprep.mubr.f32.mxu0 0.0
    %7663 = vmatmul.mubr.f32.gmra.mrb[0].mxu0 %v7594
    %v7664 = vpop.f32.mrb[0].mxu0
    %v7665 = vadd.f32 0.0, %v7664
    %v7666 = vpop.f32.mrb[0].mxu0
    %7667 = vdwg.mxu0
    %v7668 = vsel %vm5060, %v7587, -inf
    %7669 = vmax.xlane.f32.xlu0 %v7668
    %v7670 = vpop.xlane.xlu0 %7669
    %v7671 = vsel %vm5060, %v7665, -inf
    %7672 = vmax.xlane.f32.xlu0 %v7671
    %v7673 = vpop.xlane.xlu0 %7672
    %v7674 = vsub.f32 %v7587, %v7670
    %v7675 = vsub.f32 %v7665, %v7673
    %v7676 = vmul.f32 %v7674, 1.442695
    %v7677 = vpow.pop %v7676
    %v7678 = vmul.f32 %v7675, 1.442695
    %v7679 = vpow.pop %v7678
    %v7680 = vsel %vm5060, %v7677, 0.0
    %7681 = vadd.xlane.f32.xlu0 %v7680
    %v7682 = vpop.xlane.xlu0 %7681
    %v7683 = vsel %vm5060, %v7679, 0.0
    %7684 = vadd.xlane.f32.xlu0 %v7683
    %v7685 = vpop.xlane.xlu0 %7684
    %v7686 = vrcp.pop %v7682
    %v7687 = vrcp.pop %v7685
    %v7688 = vmul.f32 %v7677, %v7686
    %v7689 = vmul.f32 %v7679, %v7687
    %7690 = vrot.lane.b32.xlu0 %v7338, 120
    %v7691 = vpop.permute.xlu0 %7690
    %v7693 = vsel %vm5106, %v7688, 0
    %v7695 = vsel %vm5110, %v7691, 0
    %7697 = vmatprep.subr.mxu0 0.0
    %7698 = vmatpush1.msra.mxu0 %v7695
    %7699 = vmatprep.subr.mxu0 0.0
    %7700 = vmatpush1.msra.mxu0 0.0
    %7701 = vmatprep.subr.mxu0 0.0
    %7702 = vmatpush1.msra.mxu0 0.0
    %7703 = vmatprep.subr.mxu0 0.0
    %7704 = vmatpush1.msra.mxu0 0.0
    %7705 = vmatprep.subr.mxu0 0.0
    %7706 = vmatpush1.msra.mxu0 0.0
    %7707 = vmatprep.subr.mxu0 0.0
    %7708 = vmatpush1.msra.mxu0 0.0
    %7709 = vmatprep.subr.mxu0 0.0
    %7710 = vmatpush1.msra.mxu0 0.0
    %7711 = vmatprep.subr.mxu0 0.0
    %7712 = vmatpush1.msra.mxu0 0.0
    %7713 = vmatprep.subr.mxu0 0.0
    %7714 = vmatpush1.msra.mxu0 0.0
    %7715 = vmatprep.subr.mxu0 0.0
    %7716 = vmatpush1.msra.mxu0 0.0
    %7717 = vmatprep.subr.mxu0 0.0
    %7718 = vmatpush1.msra.mxu0 0.0
    %7719 = vmatprep.subr.mxu0 0.0
    %7720 = vmatpush1.msra.mxu0 0.0
    %7721 = vmatprep.subr.mxu0 0.0
    %7722 = vmatpush1.msra.mxu0 0.0
    %7723 = vmatprep.subr.mxu0 0.0
    %7724 = vmatpush1.msra.mxu0 0.0
    %7725 = vmatprep.subr.mxu0 0.0
    %7726 = vmatpush1.msra.mxu0 0.0
    %7727 = vmatprep.subr.mxu0 0.0
    %7728 = vmatpush1.msra.mxu0 0.0
    %7729 = vmatprep.subr.mxu0 0.0
    %7730 = vmatpush1.msra.mxu0 0.0
    %7731 = vmatprep.subr.mxu0 0.0
    %7732 = vmatpush1.msra.mxu0 0.0
    %7733 = vmatprep.subr.mxu0 0.0
    %7734 = vmatpush1.msra.mxu0 0.0
    %7735 = vmatprep.subr.mxu0 0.0
    %7736 = vmatpush1.msra.mxu0 0.0
    %7737 = vmatprep.subr.mxu0 0.0
    %7738 = vmatpush1.msra.mxu0 0.0
    %7739 = vmatprep.subr.mxu0 0.0
    %7740 = vmatpush1.msra.mxu0 0.0
    %7741 = vmatprep.subr.mxu0 0.0
    %7742 = vmatpush1.msra.mxu0 0.0
    %7743 = vmatprep.subr.mxu0 0.0
    %7744 = vmatpush1.msra.mxu0 0.0
    %7745 = vmatprep.subr.mxu0 0.0
    %7746 = vmatpush1.msra.mxu0 0.0
    %7747 = vmatprep.subr.mxu0 0.0
    %7748 = vmatpush1.msra.mxu0 0.0
    %7749 = vmatprep.subr.mxu0 0.0
    %7750 = vmatpush1.msra.mxu0 0.0
    %7751 = vmatprep.subr.mxu0 0.0
    %7752 = vmatpush1.msra.mxu0 0.0
    %7753 = vmatprep.subr.mxu0 0.0
    %7754 = vmatpush1.msra.mxu0 0.0
    %7755 = vmatprep.subr.mxu0 0.0
    %7756 = vmatpush1.msra.mxu0 0.0
    %7757 = vmatprep.subr.mxu0 0.0
    %7758 = vmatpush1.msra.mxu0 0.0
    %7759 = vmatprep.subr.mxu0 0.0
    %7760 = vmatpush1.msra.mxu0 0.0
    %7761 = vmatprep.mubr.f32.mxu0 0.0
    %7762 = vmatmul.mubr.f32.gmra.mrb[0].mxu0 %v7693
    %v7763 = vpop.f32.mrb[0].mxu0
    %v7764 = vadd.f32 0.0, %v7763
    %v7765 = vpop.f32.mrb[0].mxu0
    %7766 = vdwg.mxu0
    %7767 = vrot.lane.b32.xlu0 %v7436, 120
    %v7768 = vpop.permute.xlu0 %7767
    %v7770 = vsel %vm5106, %v7689, 0
    %v7772 = vsel %vm5110, %v7768, 0
    %7774 = vmatprep.subr.mxu0 0.0
    %7775 = vmatpush1.msra.mxu0 %v7772
    %7776 = vmatprep.subr.mxu0 0.0
    %7777 = vmatpush1.msra.mxu0 0.0
    %7778 = vmatprep.subr.mxu0 0.0
    %7779 = vmatpush1.msra.mxu0 0.0
    %7780 = vmatprep.subr.mxu0 0.0
    %7781 = vmatpush1.msra.mxu0 0.0
    %7782 = vmatprep.subr.mxu0 0.0
    %7783 = vmatpush1.msra.mxu0 0.0
    %7784 = vmatprep.subr.mxu0 0.0
    %7785 = vmatpush1.msra.mxu0 0.0
    %7786 = vmatprep.subr.mxu0 0.0
    %7787 = vmatpush1.msra.mxu0 0.0
    %7788 = vmatprep.subr.mxu0 0.0
    %7789 = vmatpush1.msra.mxu0 0.0
    %7790 = vmatprep.subr.mxu0 0.0
    %7791 = vmatpush1.msra.mxu0 0.0
    %7792 = vmatprep.subr.mxu0 0.0
    %7793 = vmatpush1.msra.mxu0 0.0
    %7794 = vmatprep.subr.mxu0 0.0
    %7795 = vmatpush1.msra.mxu0 0.0
    %7796 = vmatprep.subr.mxu0 0.0
    %7797 = vmatpush1.msra.mxu0 0.0
    %7798 = vmatprep.subr.mxu0 0.0
    %7799 = vmatpush1.msra.mxu0 0.0
    %7800 = vmatprep.subr.mxu0 0.0
    %7801 = vmatpush1.msra.mxu0 0.0
    %7802 = vmatprep.subr.mxu0 0.0
    %7803 = vmatpush1.msra.mxu0 0.0
    %7804 = vmatprep.subr.mxu0 0.0
    %7805 = vmatpush1.msra.mxu0 0.0
    %7806 = vmatprep.subr.mxu0 0.0
    %7807 = vmatpush1.msra.mxu0 0.0
    %7808 = vmatprep.subr.mxu0 0.0
    %7809 = vmatpush1.msra.mxu0 0.0
    %7810 = vmatprep.subr.mxu0 0.0
    %7811 = vmatpush1.msra.mxu0 0.0
    %7812 = vmatprep.subr.mxu0 0.0
    %7813 = vmatpush1.msra.mxu0 0.0
    %7814 = vmatprep.subr.mxu0 0.0
    %7815 = vmatpush1.msra.mxu0 0.0
    %7816 = vmatprep.subr.mxu0 0.0
    %7817 = vmatpush1.msra.mxu0 0.0
    %7818 = vmatprep.subr.mxu0 0.0
    %7819 = vmatpush1.msra.mxu0 0.0
    %7820 = vmatprep.subr.mxu0 0.0
    %7821 = vmatpush1.msra.mxu0 0.0
    %7822 = vmatprep.subr.mxu0 0.0
    %7823 = vmatpush1.msra.mxu0 0.0
    %7824 = vmatprep.subr.mxu0 0.0
    %7825 = vmatpush1.msra.mxu0 0.0
    %7826 = vmatprep.subr.mxu0 0.0
    %7827 = vmatpush1.msra.mxu0 0.0
    %7828 = vmatprep.subr.mxu0 0.0
    %7829 = vmatpush1.msra.mxu0 0.0
    %7830 = vmatprep.subr.mxu0 0.0
    %7831 = vmatpush1.msra.mxu0 0.0
    %7832 = vmatprep.subr.mxu0 0.0
    %7833 = vmatpush1.msra.mxu0 0.0
    %7834 = vmatprep.subr.mxu0 0.0
    %7835 = vmatpush1.msra.mxu0 0.0
    %7836 = vmatprep.subr.mxu0 0.0
    %7837 = vmatpush1.msra.mxu0 0.0
    %7838 = vmatprep.mubr.f32.mxu0 0.0
    %7839 = vmatmul.mubr.f32.gmra.mrb[0].mxu0 %v7770
    %v7840 = vpop.f32.mrb[0].mxu0
    %v7841 = vadd.f32 0.0, %v7840
    %v7842 = vpop.f32.mrb[0].mxu0
    %7843 = vdwg.mxu0
    %7844 = vrot.lane.b32.xlu0 %v7073, 112
    %v7845 = vpop.permute.xlu0 %7844
    %7846 = vrot.lane.b32.xlu0 %v7096, 112
    %v7847 = vpop.permute.xlu0 %7846
    %v7848 = vsel %vm4862, %v7845, 0
    %v7850 = vsel %vm4862, %v7847, 0
    %7852 = vmatprep.subr.mxu0 0.0
    %7853 = vmatpush1.xpose.msra.mxu0 %v7850
    %7854 = vmatprep.subr.mxu0 0.0
    %7855 = vmatpush1.xpose.msra.mxu0 0.0
    %7856 = vmatprep.subr.mxu0 0.0
    %7857 = vmatpush1.xpose.msra.mxu0 0.0
    %7858 = vmatprep.subr.mxu0 0.0
    %7859 = vmatpush1.xpose.msra.mxu0 0.0
    %7860 = vmatprep.subr.mxu0 0.0
    %7861 = vmatpush1.xpose.msra.mxu0 0.0
    %7862 = vmatprep.subr.mxu0 0.0
    %7863 = vmatpush1.xpose.msra.mxu0 0.0
    %7864 = vmatprep.subr.mxu0 0.0
    %7865 = vmatpush1.xpose.msra.mxu0 0.0
    %7866 = vmatprep.subr.mxu0 0.0
    %7867 = vmatpush1.xpose.msra.mxu0 0.0
    %7868 = vmatprep.subr.mxu0 0.0
    %7869 = vmatpush1.xpose.msra.mxu0 0.0
    %7870 = vmatprep.subr.mxu0 0.0
    %7871 = vmatpush1.xpose.msra.mxu0 0.0
    %7872 = vmatprep.subr.mxu0 0.0
    %7873 = vmatpush1.xpose.msra.mxu0 0.0
    %7874 = vmatprep.subr.mxu0 0.0
    %7875 = vmatpush1.xpose.msra.mxu0 0.0
    %7876 = vmatprep.subr.mxu0 0.0
    %7877 = vmatpush1.xpose.msra.mxu0 0.0
    %7878 = vmatprep.subr.mxu0 0.0
    %7879 = vmatpush1.xpose.msra.mxu0 0.0
    %7880 = vmatprep.subr.mxu0 0.0
    %7881 = vmatpush1.xpose.msra.mxu0 0.0
    %7882 = vmatprep.subr.mxu0 0.0
    %7883 = vmatpush1.xpose.msra.mxu0 0.0
    %7884 = vmatprep.subr.mxu0 0.0
    %7885 = vmatpush1.xpose.msra.mxu0 0.0
    %7886 = vmatprep.subr.mxu0 0.0
    %7887 = vmatpush1.xpose.msra.mxu0 0.0
    %7888 = vmatprep.subr.mxu0 0.0
    %7889 = vmatpush1.xpose.msra.mxu0 0.0
    %7890 = vmatprep.subr.mxu0 0.0
    %7891 = vmatpush1.xpose.msra.mxu0 0.0
    %7892 = vmatprep.subr.mxu0 0.0
    %7893 = vmatpush1.xpose.msra.mxu0 0.0
    %7894 = vmatprep.subr.mxu0 0.0
    %7895 = vmatpush1.xpose.msra.mxu0 0.0
    %7896 = vmatprep.subr.mxu0 0.0
    %7897 = vmatpush1.xpose.msra.mxu0 0.0
    %7898 = vmatprep.subr.mxu0 0.0
    %7899 = vmatpush1.xpose.msra.mxu0 0.0
    %7900 = vmatprep.subr.mxu0 0.0
    %7901 = vmatpush1.xpose.msra.mxu0 0.0
    %7902 = vmatprep.subr.mxu0 0.0
    %7903 = vmatpush1.xpose.msra.mxu0 0.0
    %7904 = vmatprep.subr.mxu0 0.0
    %7905 = vmatpush1.xpose.msra.mxu0 0.0
    %7906 = vmatprep.subr.mxu0 0.0
    %7907 = vmatpush1.xpose.msra.mxu0 0.0
    %7908 = vmatprep.subr.mxu0 0.0
    %7909 = vmatpush1.xpose.msra.mxu0 0.0
    %7910 = vmatprep.subr.mxu0 0.0
    %7911 = vmatpush1.xpose.msra.mxu0 0.0
    %7912 = vmatprep.subr.mxu0 0.0
    %7913 = vmatpush1.xpose.msra.mxu0 0.0
    %7914 = vmatprep.subr.mxu0 0.0
    %7915 = vmatpush1.xpose.msra.mxu0 0.0
    %7916 = vmatprep.mubr.f32.mxu0 0.0
    %7917 = vmatmul.mubr.f32.gmra.mrb[0].mxu0 %v7848
    %v7918 = vpop.f32.mrb[0].mxu0
    %v7919 = vadd.f32 0.0, %v7918
    %v7920 = vpop.f32.mrb[0].mxu0
    %7921 = vdwg.mxu0
    %7922 = vrot.lane.b32.xlu0 %v7196, 112
    %v7923 = vpop.permute.xlu0 %7922
    %7924 = vrot.lane.b32.xlu0 %v7219, 112
    %v7925 = vpop.permute.xlu0 %7924
    %v7926 = vsel %vm4862, %v7923, 0
    %v7928 = vsel %vm4862, %v7925, 0
    %7930 = vmatprep.subr.mxu0 0.0
    %7931 = vmatpush1.xpose.msra.mxu0 %v7928
    %7932 = vmatprep.subr.mxu0 0.0
    %7933 = vmatpush1.xpose.msra.mxu0 0.0
    %7934 = vmatprep.subr.mxu0 0.0
    %7935 = vmatpush1.xpose.msra.mxu0 0.0
    %7936 = vmatprep.subr.mxu0 0.0
    %7937 = vmatpush1.xpose.msra.mxu0 0.0
    %7938 = vmatprep.subr.mxu0 0.0
    %7939 = vmatpush1.xpose.msra.mxu0 0.0
    %7940 = vmatprep.subr.mxu0 0.0
    %7941 = vmatpush1.xpose.msra.mxu0 0.0
    %7942 = vmatprep.subr.mxu0 0.0
    %7943 = vmatpush1.xpose.msra.mxu0 0.0
    %7944 = vmatprep.subr.mxu0 0.0
    %7945 = vmatpush1.xpose.msra.mxu0 0.0
    %7946 = vmatprep.subr.mxu0 0.0
    %7947 = vmatpush1.xpose.msra.mxu0 0.0
    %7948 = vmatprep.subr.mxu0 0.0
    %7949 = vmatpush1.xpose.msra.mxu0 0.0
    %7950 = vmatprep.subr.mxu0 0.0
    %7951 = vmatpush1.xpose.msra.mxu0 0.0
    %7952 = vmatprep.subr.mxu0 0.0
    %7953 = vmatpush1.xpose.msra.mxu0 0.0
    %7954 = vmatprep.subr.mxu0 0.0
    %7955 = vmatpush1.xpose.msra.mxu0 0.0
    %7956 = vmatprep.subr.mxu0 0.0
    %7957 = vmatpush1.xpose.msra.mxu0 0.0
    %7958 = vmatprep.subr.mxu0 0.0
    %7959 = vmatpush1.xpose.msra.mxu0 0.0
    %7960 = vmatprep.subr.mxu0 0.0
    %7961 = vmatpush1.xpose.msra.mxu0 0.0
    %7962 = vmatprep.subr.mxu0 0.0
    %7963 = vmatpush1.xpose.msra.mxu0 0.0
    %7964 = vmatprep.subr.mxu0 0.0
    %7965 = vmatpush1.xpose.msra.mxu0 0.0
    %7966 = vmatprep.subr.mxu0 0.0
    %7967 = vmatpush1.xpose.msra.mxu0 0.0
    %7968 = vmatprep.subr.mxu0 0.0
    %7969 = vmatpush1.xpose.msra.mxu0 0.0
    %7970 = vmatprep.subr.mxu0 0.0
    %7971 = vmatpush1.xpose.msra.mxu0 0.0
    %7972 = vmatprep.subr.mxu0 0.0
    %7973 = vmatpush1.xpose.msra.mxu0 0.0
    %7974 = vmatprep.subr.mxu0 0.0
    %7975 = vmatpush1.xpose.msra.mxu0 0.0
    %7976 = vmatprep.subr.mxu0 0.0
    %7977 = vmatpush1.xpose.msra.mxu0 0.0
    %7978 = vmatprep.subr.mxu0 0.0
    %7979 = vmatpush1.xpose.msra.mxu0 0.0
    %7980 = vmatprep.subr.mxu0 0.0
    %7981 = vmatpush1.xpose.msra.mxu0 0.0
    %7982 = vmatprep.subr.mxu0 0.0
    %7983 = vmatpush1.xpose.msra.mxu0 0.0
    %7984 = vmatprep.subr.mxu0 0.0
    %7985 = vmatpush1.xpose.msra.mxu0 0.0
    %7986 = vmatprep.subr.mxu0 0.0
    %7987 = vmatpush1.xpose.msra.mxu0 0.0
    %7988 = vmatprep.subr.mxu0 0.0
    %7989 = vmatpush1.xpose.msra.mxu0 0.0
    %7990 = vmatprep.subr.mxu0 0.0
    %7991 = vmatpush1.xpose.msra.mxu0 0.0
    %7992 = vmatprep.subr.mxu0 0.0
    %7993 = vmatpush1.xpose.msra.mxu0 0.0
    %7994 = vmatprep.mubr.f32.mxu0 0.0
    %7995 = vmatmul.mubr.f32.gmra.mrb[0].mxu0 %v7926
    %v7996 = vpop.f32.mrb[0].mxu0
    %v7997 = vadd.f32 0.0, %v7996
    %v7998 = vpop.f32.mrb[0].mxu0
    %7999 = vdwg.mxu0
    %v8000 = vsel %vm5060, %v7919, -inf
    %8001 = vmax.xlane.f32.xlu0 %v8000
    %v8002 = vpop.xlane.xlu0 %8001
    %v8003 = vsel %vm5060, %v7997, -inf
    %8004 = vmax.xlane.f32.xlu0 %v8003
    %v8005 = vpop.xlane.xlu0 %8004
    %v8006 = vsub.f32 %v7919, %v8002
    %v8007 = vsub.f32 %v7997, %v8005
    %v8008 = vmul.f32 %v8006, 1.442695
    %v8009 = vpow.pop %v8008
    %v8010 = vmul.f32 %v8007, 1.442695
    %v8011 = vpow.pop %v8010
    %v8012 = vsel %vm5060, %v8009, 0.0
    %8013 = vadd.xlane.f32.xlu0 %v8012
    %v8014 = vpop.xlane.xlu0 %8013
    %v8015 = vsel %vm5060, %v8011, 0.0
    %8016 = vadd.xlane.f32.xlu0 %v8015
    %v8017 = vpop.xlane.xlu0 %8016
    %v8018 = vrcp.pop %v8014
    %v8019 = vrcp.pop %v8017
    %v8020 = vmul.f32 %v8009, %v8018
    %v8021 = vmul.f32 %v8011, %v8019
    %8022 = vrot.lane.b32.xlu0 %v7338, 112
    %v8023 = vpop.permute.xlu0 %8022
    %v8025 = vsel %vm5106, %v8020, 0
    %v8027 = vsel %vm5110, %v8023, 0
    %8029 = vmatprep.subr.mxu0 0.0
    %8030 = vmatpush1.msra.mxu0 %v8027
    %8031 = vmatprep.subr.mxu0 0.0
    %8032 = vmatpush1.msra.mxu0 0.0
    %8033 = vmatprep.subr.mxu0 0.0
    %8034 = vmatpush1.msra.mxu0 0.0
    %8035 = vmatprep.subr.mxu0 0.0
    %8036 = vmatpush1.msra.mxu0 0.0
    %8037 = vmatprep.subr.mxu0 0.0
    %8038 = vmatpush1.msra.mxu0 0.0
    %8039 = vmatprep.subr.mxu0 0.0
    %8040 = vmatpush1.msra.mxu0 0.0
    %8041 = vmatprep.subr.mxu0 0.0
    %8042 = vmatpush1.msra.mxu0 0.0
    %8043 = vmatprep.subr.mxu0 0.0
    %8044 = vmatpush1.msra.mxu0 0.0
    %8045 = vmatprep.subr.mxu0 0.0
    %8046 = vmatpush1.msra.mxu0 0.0
    %8047 = vmatprep.subr.mxu0 0.0
    %8048 = vmatpush1.msra.mxu0 0.0
    %8049 = vmatprep.subr.mxu0 0.0
    %8050 = vmatpush1.msra.mxu0 0.0
    %8051 = vmatprep.subr.mxu0 0.0
    %8052 = vmatpush1.msra.mxu0 0.0
    %8053 = vmatprep.subr.mxu0 0.0
    %8054 = vmatpush1.msra.mxu0 0.0
    %8055 = vmatprep.subr.mxu0 0.0
    %8056 = vmatpush1.msra.mxu0 0.0
    %8057 = vmatprep.subr.mxu0 0.0
    %8058 = vmatpush1.msra.mxu0 0.0
    %8059 = vmatprep.subr.mxu0 0.0
    %8060 = vmatpush1.msra.mxu0 0.0
    %8061 = vmatprep.subr.mxu0 0.0
    %8062 = vmatpush1.msra.mxu0 0.0
    %8063 = vmatprep.subr.mxu0 0.0
    %8064 = vmatpush1.msra.mxu0 0.0
    %8065 = vmatprep.subr.mxu0 0.0
    %8066 = vmatpush1.msra.mxu0 0.0
    %8067 = vmatprep.subr.mxu0 0.0
    %8068 = vmatpush1.msra.mxu0 0.0
    %8069 = vmatprep.subr.mxu0 0.0
    %8070 = vmatpush1.msra.mxu0 0.0
    %8071 = vmatprep.subr.mxu0 0.0
    %8072 = vmatpush1.msra.mxu0 0.0
    %8073 = vmatprep.subr.mxu0 0.0
    %8074 = vmatpush1.msra.mxu0 0.0
    %8075 = vmatprep.subr.mxu0 0.0
    %8076 = vmatpush1.msra.mxu0 0.0
    %8077 = vmatprep.subr.mxu0 0.0
    %8078 = vmatpush1.msra.mxu0 0.0
    %8079 = vmatprep.subr.mxu0 0.0
    %8080 = vmatpush1.msra.mxu0 0.0
    %8081 = vmatprep.subr.mxu0 0.0
    %8082 = vmatpush1.msra.mxu0 0.0
    %8083 = vmatprep.subr.mxu0 0.0
    %8084 = vmatpush1.msra.mxu0 0.0
    %8085 = vmatprep.subr.mxu0 0.0
    %8086 = vmatpush1.msra.mxu0 0.0
    %8087 = vmatprep.subr.mxu0 0.0
    %8088 = vmatpush1.msra.mxu0 0.0
    %8089 = vmatprep.subr.mxu0 0.0
    %8090 = vmatpush1.msra.mxu0 0.0
    %8091 = vmatprep.subr.mxu0 0.0
    %8092 = vmatpush1.msra.mxu0 0.0
    %8093 = vmatprep.mubr.f32.mxu0 0.0
    %8094 = vmatmul.mubr.f32.gmra.mrb[0].mxu0 %v8025
    %v8095 = vpop.f32.mrb[0].mxu0
    %v8096 = vadd.f32 0.0, %v8095
    %v8097 = vpop.f32.mrb[0].mxu0
    %8098 = vdwg.mxu0
    %8099 = vrot.lane.b32.xlu0 %v7436, 112
    %v8100 = vpop.permute.xlu0 %8099
    %v8102 = vsel %vm5106, %v8021, 0
    %v8104 = vsel %vm5110, %v8100, 0
    %8106 = vmatprep.subr.mxu0 0.0
    %8107 = vmatpush1.msra.mxu0 %v8104
    %8108 = vmatprep.subr.mxu0 0.0
    %8109 = vmatpush1.msra.mxu0 0.0
    %8110 = vmatprep.subr.mxu0 0.0
    %8111 = vmatpush1.msra.mxu0 0.0
    %8112 = vmatprep.subr.mxu0 0.0
    %8113 = vmatpush1.msra.mxu0 0.0
    %8114 = vmatprep.subr.mxu0 0.0
    %8115 = vmatpush1.msra.mxu0 0.0
    %8116 = vmatprep.subr.mxu0 0.0
    %8117 = vmatpush1.msra.mxu0 0.0
    %8118 = vmatprep.subr.mxu0 0.0
    %8119 = vmatpush1.msra.mxu0 0.0
    %8120 = vmatprep.subr.mxu0 0.0
    %8121 = vmatpush1.msra.mxu0 0.0
    %8122 = vmatprep.subr.mxu0 0.0
    %8123 = vmatpush1.msra.mxu0 0.0
    %8124 = vmatprep.subr.mxu0 0.0
    %8125 = vmatpush1.msra.mxu0 0.0
    %8126 = vmatprep.subr.mxu0 0.0
    %8127 = vmatpush1.msra.mxu0 0.0
    %8128 = vmatprep.subr.mxu0 0.0
    %8129 = vmatpush1.msra.mxu0 0.0
    %8130 = vmatprep.subr.mxu0 0.0
    %8131 = vmatpush1.msra.mxu0 0.0
    %8132 = vmatprep.subr.mxu0 0.0
    %8133 = vmatpush1.msra.mxu0 0.0
    %8134 = vmatprep.subr.mxu0 0.0
    %8135 = vmatpush1.msra.mxu0 0.0
    %8136 = vmatprep.subr.mxu0 0.0
    %8137 = vmatpush1.msra.mxu0 0.0
    %8138 = vmatprep.subr.mxu0 0.0
    %8139 = vmatpush1.msra.mxu0 0.0
    %8140 = vmatprep.subr.mxu0 0.0
    %8141 = vmatpush1.msra.mxu0 0.0
    %8142 = vmatprep.subr.mxu0 0.0
    %8143 = vmatpush1.msra.mxu0 0.0
    %8144 = vmatprep.subr.mxu0 0.0
    %8145 = vmatpush1.msra.mxu0 0.0
    %8146 = vmatprep.subr.mxu0 0.0
    %8147 = vmatpush1.msra.mxu0 0.0
    %8148 = vmatprep.subr.mxu0 0.0
    %8149 = vmatpush1.msra.mxu0 0.0
    %8150 = vmatprep.subr.mxu0 0.0
    %8151 = vmatpush1.msra.mxu0 0.0
    %8152 = vmatprep.subr.mxu0 0.0
    %8153 = vmatpush1.msra.mxu0 0.0
    %8154 = vmatprep.subr.mxu0 0.0
    %8155 = vmatpush1.msra.mxu0 0.0
    %8156 = vmatprep.subr.mxu0 0.0
    %8157 = vmatpush1.msra.mxu0 0.0
    %8158 = vmatprep.subr.mxu0 0.0
    %8159 = vmatpush1.msra.mxu0 0.0
    %8160 = vmatprep.subr.mxu0 0.0
    %8161 = vmatpush1.msra.mxu0 0.0
    %8162 = vmatprep.subr.mxu0 0.0
    %8163 = vmatpush1.msra.mxu0 0.0
    %8164 = vmatprep.subr.mxu0 0.0
    %8165 = vmatpush1.msra.mxu0 0.0
    %8166 = vmatprep.subr.mxu0 0.0
    %8167 = vmatpush1.msra.mxu0 0.0
    %8168 = vmatprep.subr.mxu0 0.0
    %8169 = vmatpush1.msra.mxu0 0.0
    %8170 = vmatprep.mubr.f32.mxu0 0.0
    %8171 = vmatmul.mubr.f32.gmra.mrb[0].mxu0 %v8102
    %v8172 = vpop.f32.mrb[0].mxu0
    %v8173 = vadd.f32 0.0, %v8172
    %v8174 = vpop.f32.mrb[0].mxu0
    %8175 = vdwg.mxu0
    %8176 = vrot.lane.b32.xlu0 %v7073, 104
    %v8177 = vpop.permute.xlu0 %8176
    %8178 = vrot.lane.b32.xlu0 %v7096, 104
    %v8179 = vpop.permute.xlu0 %8178
    %v8180 = vsel %vm4862, %v8177, 0
    %v8182 = vsel %vm4862, %v8179, 0
    %8184 = vmatprep.subr.mxu0 0.0
    %8185 = vmatpush1.xpose.msra.mxu0 %v8182
    %8186 = vmatprep.subr.mxu0 0.0
    %8187 = vmatpush1.xpose.msra.mxu0 0.0
    %8188 = vmatprep.subr.mxu0 0.0
    %8189 = vmatpush1.xpose.msra.mxu0 0.0
    %8190 = vmatprep.subr.mxu0 0.0
    %8191 = vmatpush1.xpose.msra.mxu0 0.0
    %8192 = vmatprep.subr.mxu0 0.0
    %8193 = vmatpush1.xpose.msra.mxu0 0.0
    %8194 = vmatprep.subr.mxu0 0.0
    %8195 = vmatpush1.xpose.msra.mxu0 0.0
    %8196 = vmatprep.subr.mxu0 0.0
    %8197 = vmatpush1.xpose.msra.mxu0 0.0
    %8198 = vmatprep.subr.mxu0 0.0
    %8199 = vmatpush1.xpose.msra.mxu0 0.0
    %8200 = vmatprep.subr.mxu0 0.0
    %8201 = vmatpush1.xpose.msra.mxu0 0.0
    %8202 = vmatprep.subr.mxu0 0.0
    %8203 = vmatpush1.xpose.msra.mxu0 0.0
    %8204 = vmatprep.subr.mxu0 0.0
    %8205 = vmatpush1.xpose.msra.mxu0 0.0
    %8206 = vmatprep.subr.mxu0 0.0
    %8207 = vmatpush1.xpose.msra.mxu0 0.0
    %8208 = vmatprep.subr.mxu0 0.0
    %8209 = vmatpush1.xpose.msra.mxu0 0.0
    %8210 = vmatprep.subr.mxu0 0.0
    %8211 = vmatpush1.xpose.msra.mxu0 0.0
    %8212 = vmatprep.subr.mxu0 0.0
    %8213 = vmatpush1.xpose.msra.mxu0 0.0
    %8214 = vmatprep.subr.mxu0 0.0
    %8215 = vmatpush1.xpose.msra.mxu0 0.0
    %8216 = vmatprep.subr.mxu0 0.0
    %8217 = vmatpush1.xpose.msra.mxu0 0.0
    %8218 = vmatprep.subr.mxu0 0.0
    %8219 = vmatpush1.xpose.msra.mxu0 0.0
    %8220 = vmatprep.subr.mxu0 0.0
    %8221 = vmatpush1.xpose.msra.mxu0 0.0
    %8222 = vmatprep.subr.mxu0 0.0
    %8223 = vmatpush1.xpose.msra.mxu0 0.0
    %8224 = vmatprep.subr.mxu0 0.0
    %8225 = vmatpush1.xpose.msra.mxu0 0.0
    %8226 = vmatprep.subr.mxu0 0.0
    %8227 = vmatpush1.xpose.msra.mxu0 0.0
    %8228 = vmatprep.subr.mxu0 0.0
    %8229 = vmatpush1.xpose.msra.mxu0 0.0
    %8230 = vmatprep.subr.mxu0 0.0
    %8231 = vmatpush1.xpose.msra.mxu0 0.0
    %8232 = vmatprep.subr.mxu0 0.0
    %8233 = vmatpush1.xpose.msra.mxu0 0.0
    %8234 = vmatprep.subr.mxu0 0.0
    %8235 = vmatpush1.xpose.msra.mxu0 0.0
    %8236 = vmatprep.subr.mxu0 0.0
    %8237 = vmatpush1.xpose.msra.mxu0 0.0
    %8238 = vmatprep.subr.mxu0 0.0
    %8239 = vmatpush1.xpose.msra.mxu0 0.0
    %8240 = vmatprep.subr.mxu0 0.0
    %8241 = vmatpush1.xpose.msra.mxu0 0.0
    %8242 = vmatprep.subr.mxu0 0.0
    %8243 = vmatpush1.xpose.msra.mxu0 0.0
    %8244 = vmatprep.subr.mxu0 0.0
    %8245 = vmatpush1.xpose.msra.mxu0 0.0
    %8246 = vmatprep.subr.mxu0 0.0
    %8247 = vmatpush1.xpose.msra.mxu0 0.0
    %8248 = vmatprep.mubr.f32.mxu0 0.0
    %8249 = vmatmul.mubr.f32.gmra.mrb[0].mxu0 %v8180
    %v8250 = vpop.f32.mrb[0].mxu0
    %v8251 = vadd.f32 0.0, %v8250
    %v8252 = vpop.f32.mrb[0].mxu0
    %8253 = vdwg.mxu0
    %8254 = vrot.lane.b32.xlu0 %v7196, 104
    %v8255 = vpop.permute.xlu0 %8254
    %8256 = vrot.lane.b32.xlu0 %v7219, 104
    %v8257 = vpop.permute.xlu0 %8256
    %v8258 = vsel %vm4862, %v8255, 0
    %v8260 = vsel %vm4862, %v8257, 0
    %8262 = vmatprep.subr.mxu0 0.0
    %8263 = vmatpush1.xpose.msra.mxu0 %v8260
    %8264 = vmatprep.subr.mxu0 0.0
    %8265 = vmatpush1.xpose.msra.mxu0 0.0
    %8266 = vmatprep.subr.mxu0 0.0
    %8267 = vmatpush1.xpose.msra.mxu0 0.0
    %8268 = vmatprep.subr.mxu0 0.0
    %8269 = vmatpush1.xpose.msra.mxu0 0.0
    %8270 = vmatprep.subr.mxu0 0.0
    %8271 = vmatpush1.xpose.msra.mxu0 0.0
    %8272 = vmatprep.subr.mxu0 0.0
    %8273 = vmatpush1.xpose.msra.mxu0 0.0
    %8274 = vmatprep.subr.mxu0 0.0
    %8275 = vmatpush1.xpose.msra.mxu0 0.0
    %8276 = vmatprep.subr.mxu0 0.0
    %8277 = vmatpush1.xpose.msra.mxu0 0.0
    %8278 = vmatprep.subr.mxu0 0.0
    %8279 = vmatpush1.xpose.msra.mxu0 0.0
    %8280 = vmatprep.subr.mxu0 0.0
    %8281 = vmatpush1.xpose.msra.mxu0 0.0
    %8282 = vmatprep.subr.mxu0 0.0
    %8283 = vmatpush1.xpose.msra.mxu0 0.0
    %8284 = vmatprep.subr.mxu0 0.0
    %8285 = vmatpush1.xpose.msra.mxu0 0.0
    %8286 = vmatprep.subr.mxu0 0.0
    %8287 = vmatpush1.xpose.msra.mxu0 0.0
    %8288 = vmatprep.subr.mxu0 0.0
    %8289 = vmatpush1.xpose.msra.mxu0 0.0
    %8290 = vmatprep.subr.mxu0 0.0
    %8291 = vmatpush1.xpose.msra.mxu0 0.0
    %8292 = vmatprep.subr.mxu0 0.0
    %8293 = vmatpush1.xpose.msra.mxu0 0.0
    %8294 = vmatprep.subr.mxu0 0.0
    %8295 = vmatpush1.xpose.msra.mxu0 0.0
    %8296 = vmatprep.subr.mxu0 0.0
    %8297 = vmatpush1.xpose.msra.mxu0 0.0
    %8298 = vmatprep.subr.mxu0 0.0
    %8299 = vmatpush1.xpose.msra.mxu0 0.0
    %8300 = vmatprep.subr.mxu0 0.0
    %8301 = vmatpush1.xpose.msra.mxu0 0.0
    %8302 = vmatprep.subr.mxu0 0.0
    %8303 = vmatpush1.xpose.msra.mxu0 0.0
    %8304 = vmatprep.subr.mxu0 0.0
    %8305 = vmatpush1.xpose.msra.mxu0 0.0
    %8306 = vmatprep.subr.mxu0 0.0
    %8307 = vmatpush1.xpose.msra.mxu0 0.0
    %8308 = vmatprep.subr.mxu0 0.0
    %8309 = vmatpush1.xpose.msra.mxu0 0.0
    %8310 = vmatprep.subr.mxu0 0.0
    %8311 = vmatpush1.xpose.msra.mxu0 0.0
    %8312 = vmatprep.subr.mxu0 0.0
    %8313 = vmatpush1.xpose.msra.mxu0 0.0
    %8314 = vmatprep.subr.mxu0 0.0
    %8315 = vmatpush1.xpose.msra.mxu0 0.0
    %8316 = vmatprep.subr.mxu0 0.0
    %8317 = vmatpush1.xpose.msra.mxu0 0.0
    %8318 = vmatprep.subr.mxu0 0.0
    %8319 = vmatpush1.xpose.msra.mxu0 0.0
    %8320 = vmatprep.subr.mxu0 0.0
    %8321 = vmatpush1.xpose.msra.mxu0 0.0
    %8322 = vmatprep.subr.mxu0 0.0
    %8323 = vmatpush1.xpose.msra.mxu0 0.0
    %8324 = vmatprep.subr.mxu0 0.0
    %8325 = vmatpush1.xpose.msra.mxu0 0.0
    %8326 = vmatprep.mubr.f32.mxu0 0.0
    %8327 = vmatmul.mubr.f32.gmra.mrb[0].mxu0 %v8258
    %v8328 = vpop.f32.mrb[0].mxu0
    %v8329 = vadd.f32 0.0, %v8328
    %v8330 = vpop.f32.mrb[0].mxu0
    %8331 = vdwg.mxu0
    %v8332 = vsel %vm5060, %v8251, -inf
    %8333 = vmax.xlane.f32.xlu0 %v8332
    %v8334 = vpop.xlane.xlu0 %8333
    %v8335 = vsel %vm5060, %v8329, -inf
    %8336 = vmax.xlane.f32.xlu0 %v8335
    %v8337 = vpop.xlane.xlu0 %8336
    %v8338 = vsub.f32 %v8251, %v8334
    %v8339 = vsub.f32 %v8329, %v8337
    %v8340 = vmul.f32 %v8338, 1.442695
    %v8341 = vpow.pop %v8340
    %v8342 = vmul.f32 %v8339, 1.442695
    %v8343 = vpow.pop %v8342
    %v8344 = vsel %vm5060, %v8341, 0.0
    %8345 = vadd.xlane.f32.xlu0 %v8344
    %v8346 = vpop.xlane.xlu0 %8345
    %v8347 = vsel %vm5060, %v8343, 0.0
    %8348 = vadd.xlane.f32.xlu0 %v8347
    %v8349 = vpop.xlane.xlu0 %8348
    %v8350 = vrcp.pop %v8346
    %v8351 = vrcp.pop %v8349
    %v8352 = vmul.f32 %v8341, %v8350
    %v8353 = vmul.f32 %v8343, %v8351
    %8354 = vrot.lane.b32.xlu0 %v7338, 104
    %v8355 = vpop.permute.xlu0 %8354
    %v8357 = vsel %vm5106, %v8352, 0
    %v8359 = vsel %vm5110, %v8355, 0
    %8361 = vmatprep.subr.mxu0 0.0
    %8362 = vmatpush1.msra.mxu0 %v8359
    %8363 = vmatprep.subr.mxu0 0.0
    %8364 = vmatpush1.msra.mxu0 0.0
    %8365 = vmatprep.subr.mxu0 0.0
    %8366 = vmatpush1.msra.mxu0 0.0
    %8367 = vmatprep.subr.mxu0 0.0
    %8368 = vmatpush1.msra.mxu0 0.0
    %8369 = vmatprep.subr.mxu0 0.0
    %8370 = vmatpush1.msra.mxu0 0.0
    %8371 = vmatprep.subr.mxu0 0.0
    %8372 = vmatpush1.msra.mxu0 0.0
    %8373 = vmatprep.subr.mxu0 0.0
    %8374 = vmatpush1.msra.mxu0 0.0
    %8375 = vmatprep.subr.mxu0 0.0
    %8376 = vmatpush1.msra.mxu0 0.0
    %8377 = vmatprep.subr.mxu0 0.0
    %8378 = vmatpush1.msra.mxu0 0.0
    %8379 = vmatprep.subr.mxu0 0.0
    %8380 = vmatpush1.msra.mxu0 0.0
    %8381 = vmatprep.subr.mxu0 0.0
    %8382 = vmatpush1.msra.mxu0 0.0
    %8383 = vmatprep.subr.mxu0 0.0
    %8384 = vmatpush1.msra.mxu0 0.0
    %8385 = vmatprep.subr.mxu0 0.0
    %8386 = vmatpush1.msra.mxu0 0.0
    %8387 = vmatprep.subr.mxu0 0.0
    %8388 = vmatpush1.msra.mxu0 0.0
    %8389 = vmatprep.subr.mxu0 0.0
    %8390 = vmatpush1.msra.mxu0 0.0
    %8391 = vmatprep.subr.mxu0 0.0
    %8392 = vmatpush1.msra.mxu0 0.0
    %8393 = vmatprep.subr.mxu0 0.0
    %8394 = vmatpush1.msra.mxu0 0.0
    %8395 = vmatprep.subr.mxu0 0.0
    %8396 = vmatpush1.msra.mxu0 0.0
    %8397 = vmatprep.subr.mxu0 0.0
    %8398 = vmatpush1.msra.mxu0 0.0
    %8399 = vmatprep.subr.mxu0 0.0
    %8400 = vmatpush1.msra.mxu0 0.0
    %8401 = vmatprep.subr.mxu0 0.0
    %8402 = vmatpush1.msra.mxu0 0.0
    %8403 = vmatprep.subr.mxu0 0.0
    %8404 = vmatpush1.msra.mxu0 0.0
    %8405 = vmatprep.subr.mxu0 0.0
    %8406 = vmatpush1.msra.mxu0 0.0
    %8407 = vmatprep.subr.mxu0 0.0
    %8408 = vmatpush1.msra.mxu0 0.0
    %8409 = vmatprep.subr.mxu0 0.0
    %8410 = vmatpush1.msra.mxu0 0.0
    %8411 = vmatprep.subr.mxu0 0.0
    %8412 = vmatpush1.msra.mxu0 0.0
    %8413 = vmatprep.subr.mxu0 0.0
    %8414 = vmatpush1.msra.mxu0 0.0
    %8415 = vmatprep.subr.mxu0 0.0
    %8416 = vmatpush1.msra.mxu0 0.0
    %8417 = vmatprep.subr.mxu0 0.0
    %8418 = vmatpush1.msra.mxu0 0.0
    %8419 = vmatprep.subr.mxu0 0.0
    %8420 = vmatpush1.msra.mxu0 0.0
    %8421 = vmatprep.subr.mxu0 0.0
    %8422 = vmatpush1.msra.mxu0 0.0
    %8423 = vmatprep.subr.mxu0 0.0
    %8424 = vmatpush1.msra.mxu0 0.0
    %8425 = vmatprep.mubr.f32.mxu0 0.0
    %8426 = vmatmul.mubr.f32.gmra.mrb[0].mxu0 %v8357
    %v8427 = vpop.f32.mrb[0].mxu0
    %v8428 = vadd.f32 0.0, %v8427
    %v8429 = vpop.f32.mrb[0].mxu0
    %8430 = vdwg.mxu0
    %8431 = vrot.lane.b32.xlu0 %v7436, 104
    %v8432 = vpop.permute.xlu0 %8431
    %v8434 = vsel %vm5106, %v8353, 0
    %v8436 = vsel %vm5110, %v8432, 0
    %8438 = vmatprep.subr.mxu0 0.0
    %8439 = vmatpush1.msra.mxu0 %v8436
    %8440 = vmatprep.subr.mxu0 0.0
    %8441 = vmatpush1.msra.mxu0 0.0
    %8442 = vmatprep.subr.mxu0 0.0
    %8443 = vmatpush1.msra.mxu0 0.0
    %8444 = vmatprep.subr.mxu0 0.0
    %8445 = vmatpush1.msra.mxu0 0.0
    %8446 = vmatprep.subr.mxu0 0.0
    %8447 = vmatpush1.msra.mxu0 0.0
    %8448 = vmatprep.subr.mxu0 0.0
    %8449 = vmatpush1.msra.mxu0 0.0
    %8450 = vmatprep.subr.mxu0 0.0
    %8451 = vmatpush1.msra.mxu0 0.0
    %8452 = vmatprep.subr.mxu0 0.0
    %8453 = vmatpush1.msra.mxu0 0.0
    %8454 = vmatprep.subr.mxu0 0.0
    %8455 = vmatpush1.msra.mxu0 0.0
    %8456 = vmatprep.subr.mxu0 0.0
    %8457 = vmatpush1.msra.mxu0 0.0
    %8458 = vmatprep.subr.mxu0 0.0
    %8459 = vmatpush1.msra.mxu0 0.0
    %8460 = vmatprep.subr.mxu0 0.0
    %8461 = vmatpush1.msra.mxu0 0.0
    %8462 = vmatprep.subr.mxu0 0.0
    %8463 = vmatpush1.msra.mxu0 0.0
    %8464 = vmatprep.subr.mxu0 0.0
    %8465 = vmatpush1.msra.mxu0 0.0
    %8466 = vmatprep.subr.mxu0 0.0
    %8467 = vmatpush1.msra.mxu0 0.0
    %8468 = vmatprep.subr.mxu0 0.0
    %8469 = vmatpush1.msra.mxu0 0.0
    %8470 = vmatprep.subr.mxu0 0.0
    %8471 = vmatpush1.msra.mxu0 0.0
    %8472 = vmatprep.subr.mxu0 0.0
    %8473 = vmatpush1.msra.mxu0 0.0
    %8474 = vmatprep.subr.mxu0 0.0
    %8475 = vmatpush1.msra.mxu0 0.0
    %8476 = vmatprep.subr.mxu0 0.0
    %8477 = vmatpush1.msra.mxu0 0.0
    %8478 = vmatprep.subr.mxu0 0.0
    %8479 = vmatpush1.msra.mxu0 0.0
    %8480 = vmatprep.subr.mxu0 0.0
    %8481 = vmatpush1.msra.mxu0 0.0
    %8482 = vmatprep.subr.mxu0 0.0
    %8483 = vmatpush1.msra.mxu0 0.0
    %8484 = vmatprep.subr.mxu0 0.0
    %8485 = vmatpush1.msra.mxu0 0.0
    %8486 = vmatprep.subr.mxu0 0.0
    %8487 = vmatpush1.msra.mxu0 0.0
    %8488 = vmatprep.subr.mxu0 0.0
    %8489 = vmatpush1.msra.mxu0 0.0
    %8490 = vmatprep.subr.mxu0 0.0
    %8491 = vmatpush1.msra.mxu0 0.0
    %8492 = vmatprep.subr.mxu0 0.0
    %8493 = vmatpush1.msra.mxu0 0.0
    %8494 = vmatprep.subr.mxu0 0.0
    %8495 = vmatpush1.msra.mxu0 0.0
    %8496 = vmatprep.subr.mxu0 0.0
    %8497 = vmatpush1.msra.mxu0 0.0
    %8498 = vmatprep.subr.mxu0 0.0
    %8499 = vmatpush1.msra.mxu0 0.0
    %8500 = vmatprep.subr.mxu0 0.0
    %8501 = vmatpush1.msra.mxu0 0.0
    %8502 = vmatprep.mubr.f32.mxu0 0.0
    %8503 = vmatmul.mubr.f32.gmra.mrb[0].mxu0 %v8434
    %v8504 = vpop.f32.mrb[0].mxu0
    %v8505 = vadd.f32 0.0, %v8504
    %v8506 = vpop.f32.mrb[0].mxu0
    %8507 = vdwg.mxu0
    %8510 = vrot.lane.b32.xlu0 %v7764, 8
    %v8511 = vpop.permute.xlu0 %8510
    %8512 = vrot.lane.b32.xlu0 %v7841, 8
    %v8513 = vpop.permute.xlu0 %8512
    %8518 = vrot.lane.b32.xlu0 %v8096, 16
    %v8519 = vpop.permute.xlu0 %8518
    %8520 = vrot.lane.b32.xlu0 %v8173, 16
    %v8521 = vpop.permute.xlu0 %8520
    %8526 = vrot.lane.b32.xlu0 %v8428, 24
    %v8527 = vpop.permute.xlu0 %8526
    %8528 = vrot.lane.b32.xlu0 %v8505, 24
    %v8529 = vpop.permute.xlu0 %8528
    %v8532 = vsel %vm4862, %v7411, %v8511
    %v8533 = vsel %vm4862, %v7509, %v8513
    %v8534 = vsel %vm276, %v8532, %v8519
    %v8535 = vsel %vm276, %v8533, %v8521
    %v8536 = vsel %vm6305, %v8534, %v8527
    %v8537 = vsel %vm6305, %v8535, %v8529
    %v8541 = vunpack.c.l.s4 1966171168
    %v8542 = vunpack.c.0.s8 %v8541
    %v8543 = vlaneseq
    %v8544 = vshrl.u32 %v8543, 7
    %v8545 = vsub.s32 %v8542, %v8544
    %v8546 = vrot.slane %v8536, %v8545
    %v8547 = vcombine.high %v8546, %v8546
    %v8549 = vunpack.c.l.s4 1966171168
    %v8550 = vunpack.c.0.s8 %v8549
    %v8551 = vlaneseq
    %v8552 = vshrl.u32 %v8551, 7
    %v8553 = vsub.s32 %v8550, %v8552
    %v8554 = vrot.slane %v8546, %v8553
    %v8556 = vunpack.c.l.s4 1966171168
    %v8557 = vunpack.c.0.s8 %v8556
    %v8558 = vlaneseq
    %v8559 = vshrl.u32 %v8558, 7
    %v8560 = vsub.s32 %v8557, %v8559
    %v8561 = vrot.slane %v8547, %v8560
    %v8562 = vcombine.high %v8554, %v8554
    %v8564 = vunpack.c.l.s4 1966171168
    %v8565 = vunpack.c.0.s8 %v8564
    %v8566 = vlaneseq
    %v8567 = vshrl.u32 %v8566, 7
    %v8568 = vsub.s32 %v8565, %v8567
    %v8569 = vrot.slane %v8537, %v8568
    %v8570 = vcombine.high %v8569, %v8569
    %v8572 = vunpack.c.l.s4 1966171168
    %v8573 = vunpack.c.0.s8 %v8572
    %v8574 = vlaneseq
    %v8575 = vshrl.u32 %v8574, 7
    %v8576 = vsub.s32 %v8573, %v8575
    %v8577 = vrot.slane %v8569, %v8576
    %v8579 = vunpack.c.l.s4 1966171168
    %v8580 = vunpack.c.0.s8 %v8579
    %v8581 = vlaneseq
    %v8582 = vshrl.u32 %v8581, 7
    %v8583 = vsub.s32 %v8580, %v8582
    %v8584 = vrot.slane %v8570, %v8583
    %v8585 = vcombine.high %v8577, %v8577
    %s8586 = scalar_lea.vmem %s14, 32
    %v8587 = vld [vmem:[%s8586] sm:$0xff]
    %v8588 = vld [vmem:[%s8586 + $0x8] sm:$0xff]
    %v8589 = vld [vmem:[%s8586 + $0x10] sm:$0xff]
    %v8590 = vld [vmem:[%s8586 + $0x18] sm:$0xff]
    %s8591 = scalar_lea.vmem [#allocation16], 1
    %v8592 = vld [vmem:[%s8591] sm:$0x1]
    %v8594 = vlaneseq
    %v8595 = vshrl.u32 %v8594, 7
    %v8596 = vsub.s32 0, %v8595
    %v8597 = vrot.slane %v8592, %v8596
    %v8599 = vcombine.low %v8554, %v8561
    %v8600 = vcombine.low %v8562, %v8577
    %v8601 = vcombine.low %v8584, %v8585
    %v8603 = vunpack.c.l.s4 1966171168
    %v8604 = vunpack.c.0.s8 %v8603
    %v8605 = vlaneseq
    %v8606 = vshrl.u32 %v8605, 7
    %v8607 = vsub.s32 %v8604, %v8606
    %v8608 = vrot.slane %v8599, %v8607
    %v8610 = vunpack.c.l.s4 1966171168
    %v8611 = vunpack.c.0.s8 %v8610
    %v8612 = vlaneseq
    %v8613 = vshrl.u32 %v8612, 7
    %v8614 = vsub.s32 %v8611, %v8613
    %v8615 = vrot.slane %v8600, %v8614
    %v8617 = vunpack.c.l.s4 1966171168
    %v8618 = vunpack.c.0.s8 %v8617
    %v8619 = vlaneseq
    %v8620 = vshrl.u32 %v8619, 7
    %v8621 = vsub.s32 %v8618, %v8620
    %v8622 = vrot.slane %v8601, %v8621
    %v8623 = vcombine.low %v8608, %v8615
    %v8625 = vunpack.c.l.s4 1966171168
    %v8626 = vunpack.c.0.s8 %v8625
    %v8627 = vlaneseq
    %v8628 = vshrl.u32 %v8627, 7
    %v8629 = vsub.s32 %v8626, %v8628
    %v8630 = vrot.slane %v8623, %v8629
    %v8632 = vunpack.c.l.s4 1966171168
    %v8633 = vunpack.c.0.s8 %v8632
    %v8634 = vlaneseq
    %v8635 = vshrl.u32 %v8634, 7
    %v8636 = vsub.s32 %v8633, %v8635
    %v8637 = vrot.slane %v8622, %v8636
    %v8638 = vcombine.low %v8630, %v8637
    %v8639 = vsel %vm395, %v8638, 0
    %8641 = vmatprep.subr.mxu0 0.0
    %8642 = vmatpush1.msra.mxu0 %v8587
    %8643 = vmatprep.subr.mxu0 0.0
    %8644 = vmatpush1.msra.mxu0 %v8588
    %8645 = vmatprep.subr.mxu0 0.0
    %8646 = vmatpush1.msra.mxu0 %v8589
    %8647 = vmatprep.subr.mxu0 0.0
    %8648 = vmatpush1.msra.mxu0 %v8590
    %8649 = vmatprep.subr.mxu0 0.0
    %8650 = vmatpush1.msra.mxu0 0.0
    %8651 = vmatprep.subr.mxu0 0.0
    %8652 = vmatpush1.msra.mxu0 0.0
    %8653 = vmatprep.subr.mxu0 0.0
    %8654 = vmatpush1.msra.mxu0 0.0
    %8655 = vmatprep.subr.mxu0 0.0
    %8656 = vmatpush1.msra.mxu0 0.0
    %8657 = vmatprep.subr.mxu0 0.0
    %8658 = vmatpush1.msra.mxu0 0.0
    %8659 = vmatprep.subr.mxu0 0.0
    %8660 = vmatpush1.msra.mxu0 0.0
    %8661 = vmatprep.subr.mxu0 0.0
    %8662 = vmatpush1.msra.mxu0 0.0
    %8663 = vmatprep.subr.mxu0 0.0
    %8664 = vmatpush1.msra.mxu0 0.0
    %8665 = vmatprep.subr.mxu0 0.0
    %8666 = vmatpush1.msra.mxu0 0.0
    %8667 = vmatprep.subr.mxu0 0.0
    %8668 = vmatpush1.msra.mxu0 0.0
    %8669 = vmatprep.subr.mxu0 0.0
    %8670 = vmatpush1.msra.mxu0 0.0
    %8671 = vmatprep.subr.mxu0 0.0
    %8672 = vmatpush1.msra.mxu0 0.0
    %8673 = vmatprep.subr.mxu0 0.0
    %8674 = vmatpush1.msra.mxu0 0.0
    %8675 = vmatprep.subr.mxu0 0.0
    %8676 = vmatpush1.msra.mxu0 0.0
    %8677 = vmatprep.subr.mxu0 0.0
    %8678 = vmatpush1.msra.mxu0 0.0
    %8679 = vmatprep.subr.mxu0 0.0
    %8680 = vmatpush1.msra.mxu0 0.0
    %8681 = vmatprep.subr.mxu0 0.0
    %8682 = vmatpush1.msra.mxu0 0.0
    %8683 = vmatprep.subr.mxu0 0.0
    %8684 = vmatpush1.msra.mxu0 0.0
    %8685 = vmatprep.subr.mxu0 0.0
    %8686 = vmatpush1.msra.mxu0 0.0
    %8687 = vmatprep.subr.mxu0 0.0
    %8688 = vmatpush1.msra.mxu0 0.0
    %8689 = vmatprep.subr.mxu0 0.0
    %8690 = vmatpush1.msra.mxu0 0.0
    %8691 = vmatprep.subr.mxu0 0.0
    %8692 = vmatpush1.msra.mxu0 0.0
    %8693 = vmatprep.subr.mxu0 0.0
    %8694 = vmatpush1.msra.mxu0 0.0
    %8695 = vmatprep.subr.mxu0 0.0
    %8696 = vmatpush1.msra.mxu0 0.0
    %8697 = vmatprep.subr.mxu0 0.0
    %8698 = vmatpush1.msra.mxu0 0.0
    %8699 = vmatprep.subr.mxu0 0.0
    %8700 = vmatpush1.msra.mxu0 0.0
    %8701 = vmatprep.subr.mxu0 0.0
    %8702 = vmatpush1.msra.mxu0 0.0
    %8703 = vmatprep.subr.mxu0 0.0
    %8704 = vmatpush1.msra.mxu0 0.0
    %8705 = vmatprep.mubr.f32.mxu0 0.0
    %8706 = vmatmul.mubr.f32.gmra.mrb[0].mxu0 %v8639
    %v8707 = vpop.f32.mrb[0].mxu0
    %v8708 = vadd.f32 %v8597, %v8707
    %v8709 = vpop.f32.mrb[0].mxu0
    %8710 = vdwg.mxu0
    %v8712 = vcombine.high %v8708, %v8708
    %v8714 = vunpack.c.l.s4 1966171168
    %v8715 = vunpack.c.0.s8 %v8714
    %v8716 = vlaneseq
    %v8717 = vshrl.u32 %v8716, 7
    %v8718 = vsub.s32 %v8715, %v8717
    %v8719 = vrot.slane %v8708, %v8718
    %v8721 = vunpack.c.l.s4 1966171168
    %v8722 = vunpack.c.0.s8 %v8721
    %v8723 = vlaneseq
    %v8724 = vshrl.u32 %v8723, 7
    %v8725 = vsub.s32 %v8722, %v8724
    %v8726 = vrot.slane %v8712, %v8725
    %v8727 = vcombine.high %v8719, %v8719
    %v8728 = vcombine.high %v8726, %v8726
    %v8730 = vunpack.c.l.s4 1966171168
    %v8731 = vunpack.c.0.s8 %v8730
    %v8732 = vlaneseq
    %v8733 = vshrl.u32 %v8732, 7
    %v8734 = vsub.s32 %v8731, %v8733
    %v8735 = vrot.slane %v8719, %v8734
    %v8737 = vunpack.c.l.s4 1966171168
    %v8738 = vunpack.c.0.s8 %v8737
    %v8739 = vlaneseq
    %v8740 = vshrl.u32 %v8739, 7
    %v8741 = vsub.s32 %v8738, %v8740
    %v8742 = vrot.slane %v8726, %v8741
    %v8744 = vunpack.c.l.s4 1966171168
    %v8745 = vunpack.c.0.s8 %v8744
    %v8746 = vlaneseq
    %v8747 = vshrl.u32 %v8746, 7
    %v8748 = vsub.s32 %v8745, %v8747
    %v8749 = vrot.slane %v8727, %v8748
    %v8751 = vunpack.c.l.s4 1966171168
    %v8752 = vunpack.c.0.s8 %v8751
    %v8753 = vlaneseq
    %v8754 = vshrl.u32 %v8753, 7
    %v8755 = vsub.s32 %v8752, %v8754
    %v8756 = vrot.slane %v8728, %v8755
    %v8757 = vcombine.high %v8735, %v8735
    %v8758 = vcombine.high %v8749, %v8749
    %8765 = vset.pattern.permute.xlu0 6
    %8766 = vperm.xlu0 %8765, %v749
    %v8767 = vpop.permute.xlu0 %8766
    %v8769 = vmul.f32 %v8767, %v6503
    %v8770 = vmul.f32 %v8767, %v6517
    %v8771 = vmul.f32 %v8767, %v6525
    %v8772 = vmul.f32 %v8767, %v6526
    %v8773 = vmul.f32 %v8767, %v6510
    %v8774 = vmul.f32 %v8767, %v6524
    %v8781 = vcombine.low %v8769, %v8770
    %v8783 = vunpack.c.l.s4 1966171168
    %v8784 = vunpack.c.0.s8 %v8783
    %v8785 = vlaneseq
    %v8786 = vshrl.u32 %v8785, 7
    %v8787 = vsub.s32 %v8784, %v8786
    %v8788 = vrot.slane %v8781, %v8787
    %v8790 = vunpack.c.l.s4 1966171168
    %v8791 = vunpack.c.0.s8 %v8790
    %v8792 = vlaneseq
    %v8793 = vshrl.u32 %v8792, 7
    %v8794 = vsub.s32 %v8791, %v8793
    %v8795 = vrot.slane %v8771, %v8794
    %v8796 = vcombine.low %v8788, %v8795
    %v8798 = vunpack.c.l.s4 1966171168
    %v8799 = vunpack.c.0.s8 %v8798
    %v8800 = vlaneseq
    %v8801 = vshrl.u32 %v8800, 7
    %v8802 = vsub.s32 %v8799, %v8801
    %v8803 = vrot.slane %v8796, %v8802
    %v8804 = vcombine.low %v8772, %v8773
    %v8806 = vunpack.c.l.s4 1966171168
    %v8807 = vunpack.c.0.s8 %v8806
    %v8808 = vlaneseq
    %v8809 = vshrl.u32 %v8808, 7
    %v8810 = vsub.s32 %v8807, %v8809
    %v8811 = vrot.slane %v8804, %v8810
    %v8813 = vunpack.c.l.s4 1966171168
    %v8814 = vunpack.c.0.s8 %v8813
    %v8815 = vlaneseq
    %v8816 = vshrl.u32 %v8815, 7
    %v8817 = vsub.s32 %v8814, %v8816
    %v8818 = vrot.slane %v8774, %v8817
    %v8819 = vcombine.low %v8811, %v8818
    %v8821 = vunpack.c.l.s4 1966171168
    %v8822 = vunpack.c.0.s8 %v8821
    %v8823 = vlaneseq
    %v8824 = vshrl.u32 %v8823, 7
    %v8825 = vsub.s32 %v8822, %v8824
    %v8826 = vrot.slane %v8819, %v8825
    %v8829 = vadd.f32 %v4268, %v8803
    %v8830 = vadd.f32 %v4269, %v8826
    %8831 = vset.pattern.permute.xlu0 6
    %8832 = vperm.xlu0 %8831, %v761
    %v8833 = vpop.permute.xlu0 %8832
    %v8835 = vmul.f32 %v8833, %v8735
    %v8836 = vmul.f32 %v8833, %v8749
    %v8837 = vmul.f32 %v8833, %v8757
    %v8838 = vmul.f32 %v8833, %v8758
    %v8839 = vmul.f32 %v8833, %v8742
    %v8840 = vmul.f32 %v8833, %v8756
    %v8847 = vcombine.low %v8835, %v8836
    %v8849 = vunpack.c.l.s4 1966171168
    %v8850 = vunpack.c.0.s8 %v8849
    %v8851 = vlaneseq
    %v8852 = vshrl.u32 %v8851, 7
    %v8853 = vsub.s32 %v8850, %v8852
    %v8854 = vrot.slane %v8847, %v8853
    %v8856 = vunpack.c.l.s4 1966171168
    %v8857 = vunpack.c.0.s8 %v8856
    %v8858 = vlaneseq
    %v8859 = vshrl.u32 %v8858, 7
    %v8860 = vsub.s32 %v8857, %v8859
    %v8861 = vrot.slane %v8837, %v8860
    %v8862 = vcombine.low %v8854, %v8861
    %v8864 = vunpack.c.l.s4 1966171168
    %v8865 = vunpack.c.0.s8 %v8864
    %v8866 = vlaneseq
    %v8867 = vshrl.u32 %v8866, 7
    %v8868 = vsub.s32 %v8865, %v8867
    %v8869 = vrot.slane %v8862, %v8868
    %v8870 = vcombine.low %v8838, %v8839
    %v8872 = vunpack.c.l.s4 1966171168
    %v8873 = vunpack.c.0.s8 %v8872
    %v8874 = vlaneseq
    %v8875 = vshrl.u32 %v8874, 7
    %v8876 = vsub.s32 %v8873, %v8875
    %v8877 = vrot.slane %v8870, %v8876
    %v8879 = vunpack.c.l.s4 1966171168
    %v8880 = vunpack.c.0.s8 %v8879
    %v8881 = vlaneseq
    %v8882 = vshrl.u32 %v8881, 7
    %v8883 = vsub.s32 %v8880, %v8882
    %v8884 = vrot.slane %v8840, %v8883
    %v8885 = vcombine.low %v8877, %v8884
    %v8887 = vunpack.c.l.s4 1966171168
    %v8888 = vunpack.c.0.s8 %v8887
    %v8889 = vlaneseq
    %v8890 = vshrl.u32 %v8889, 7
    %v8891 = vsub.s32 %v8888, %v8890
    %v8892 = vrot.slane %v8885, %v8891
    %v8895 = vadd.f32 %v8829, %v8869
    %v8896 = vadd.f32 %v8830, %v8892
    %v8897 = vld [vmem:[%s6533] sm:$0x1]
    %v8898 = vld [vmem:[%s6535] sm:$0x1]
    %v8899 = vsel %vm4273, %v8895, 0.0
    %8900 = vadd.xlane.f32.xlu0 %v8899
    %v8901 = vpop.xlane.xlu0 %8900
    %v8902 = vsel %vm4273, %v8896, 0.0
    %8903 = vadd.xlane.f32.xlu0 %v8902
    %v8904 = vpop.xlane.xlu0 %8903
    %v8905 = vmul.f32 %v8901, %v357
    %v8906 = vmul.f32 %v8904, %v357
    %v8907 = vmul.f32 %v8895, %v8895
    %v8908 = vmul.f32 %v8896, %v8896
    %v8909 = vsel %vm4273, %v8907, 0.0
    %8910 = vadd.xlane.f32.xlu0 %v8909
    %v8911 = vpop.xlane.xlu0 %8910
    %v8912 = vsel %vm4273, %v8908, 0.0
    %8913 = vadd.xlane.f32.xlu0 %v8912
    %v8914 = vpop.xlane.xlu0 %8913
    %v8915 = vmul.f32 %v8911, %v357
    %v8916 = vmul.f32 %v8914, %v357
    %v8917 = vmul.f32 %v8905, %v8905
    %v8918 = vmul.f32 %v8906, %v8906
    %v8919 = vsub.f32 %v8915, %v8917
    %v8920 = vsub.f32 %v8916, %v8918
    %v8921 = vsub.f32 %v8895, %v8905
    %v8922 = vsub.f32 %v8896, %v8906
    %v8923 = vadd.f32 %v8919, 1e-05
    %v8924 = vadd.f32 %v8920, 1e-05
    %v8925 = vrsqrt.pop %v8923
    %v8926 = vrsqrt.pop %v8924
    %v8927 = vmul.f32 %v8921, %v8925
    %v8928 = vmul.f32 %v8922, %v8926
    %v8930 = vlaneseq
    %v8931 = vshrl.u32 %v8930, 7
    %v8932 = vsub.s32 0, %v8931
    %v8933 = vrot.slane %v8897, %v8932
    %v8935 = vmul.f32 %v8927, %v8933
    %v8936 = vmul.f32 %v8928, %v8933
    %v8938 = vlaneseq
    %v8939 = vshrl.u32 %v8938, 7
    %v8940 = vsub.s32 0, %v8939
    %v8941 = vrot.slane %v8898, %v8940
    %v8943 = vadd.f32 %v8935, %v8941
    %v8944 = vadd.f32 %v8936, %v8941
    %v8948 = vunpack.c.l.s4 1966171168
    %v8949 = vunpack.c.0.s8 %v8948
    %v8950 = vlaneseq
    %v8951 = vshrl.u32 %v8950, 7
    %v8952 = vsub.s32 %v8949, %v8951
    %v8953 = vrot.slane %v8943, %v8952
    %v8954 = vcombine.high %v8953, %v8953
    %v8956 = vunpack.c.l.s4 1966171168
    %v8957 = vunpack.c.0.s8 %v8956
    %v8958 = vlaneseq
    %v8959 = vshrl.u32 %v8958, 7
    %v8960 = vsub.s32 %v8957, %v8959
    %v8961 = vrot.slane %v8953, %v8960
    %v8963 = vunpack.c.l.s4 1966171168
    %v8964 = vunpack.c.0.s8 %v8963
    %v8965 = vlaneseq
    %v8966 = vshrl.u32 %v8965, 7
    %v8967 = vsub.s32 %v8964, %v8966
    %v8968 = vrot.slane %v8954, %v8967
    %v8969 = vcombine.high %v8961, %v8961
    %v8971 = vunpack.c.l.s4 1966171168
    %v8972 = vunpack.c.0.s8 %v8971
    %v8973 = vlaneseq
    %v8974 = vshrl.u32 %v8973, 7
    %v8975 = vsub.s32 %v8972, %v8974
    %v8976 = vrot.slane %v8944, %v8975
    %v8977 = vcombine.high %v8976, %v8976
    %v8979 = vunpack.c.l.s4 1966171168
    %v8980 = vunpack.c.0.s8 %v8979
    %v8981 = vlaneseq
    %v8982 = vshrl.u32 %v8981, 7
    %v8983 = vsub.s32 %v8980, %v8982
    %v8984 = vrot.slane %v8976, %v8983
    %v8986 = vunpack.c.l.s4 1966171168
    %v8987 = vunpack.c.0.s8 %v8986
    %v8988 = vlaneseq
    %v8989 = vshrl.u32 %v8988, 7
    %v8990 = vsub.s32 %v8987, %v8989
    %v8991 = vrot.slane %v8977, %v8990
    %v8992 = vcombine.high %v8984, %v8984
    %v8993 = vld [vmem:[#allocation17] sm:$0xff]
    %v8994 = vld [vmem:[#allocation17 + $0x8] sm:$0xff]
    %v8995 = vld [vmem:[#allocation17 + $0x10] sm:$0xff]
    %v8996 = vld [vmem:[#allocation17 + $0x18] sm:$0xff]
    %v8997 = vld [vmem:[#allocation19] sm:$0x1]
    %v8999 = vlaneseq
    %v9000 = vshrl.u32 %v8999, 7
    %v9001 = vsub.s32 0, %v9000
    %v9002 = vrot.slane %v8997, %v9001
    %v9004 = vcombine.low %v8961, %v8968
    %v9005 = vcombine.low %v8969, %v8984
    %v9006 = vcombine.low %v8991, %v8992
    %v9008 = vunpack.c.l.s4 1966171168
    %v9009 = vunpack.c.0.s8 %v9008
    %v9010 = vlaneseq
    %v9011 = vshrl.u32 %v9010, 7
    %v9012 = vsub.s32 %v9009, %v9011
    %v9013 = vrot.slane %v9004, %v9012
    %v9015 = vunpack.c.l.s4 1966171168
    %v9016 = vunpack.c.0.s8 %v9015
    %v9017 = vlaneseq
    %v9018 = vshrl.u32 %v9017, 7
    %v9019 = vsub.s32 %v9016, %v9018
    %v9020 = vrot.slane %v9005, %v9019
    %v9022 = vunpack.c.l.s4 1966171168
    %v9023 = vunpack.c.0.s8 %v9022
    %v9024 = vlaneseq
    %v9025 = vshrl.u32 %v9024, 7
    %v9026 = vsub.s32 %v9023, %v9025
    %v9027 = vrot.slane %v9006, %v9026
    %v9028 = vcombine.low %v9013, %v9020
    %v9030 = vunpack.c.l.s4 1966171168
    %v9031 = vunpack.c.0.s8 %v9030
    %v9032 = vlaneseq
    %v9033 = vshrl.u32 %v9032, 7
    %v9034 = vsub.s32 %v9031, %v9033
    %v9035 = vrot.slane %v9028, %v9034
    %v9037 = vunpack.c.l.s4 1966171168
    %v9038 = vunpack.c.0.s8 %v9037
    %v9039 = vlaneseq
    %v9040 = vshrl.u32 %v9039, 7
    %v9041 = vsub.s32 %v9038, %v9040
    %v9042 = vrot.slane %v9027, %v9041
    %v9043 = vcombine.low %v9035, %v9042
    %v9044 = vsel %vm395, %v9043, 0
    %9046 = vmatprep.subr.mxu0 0.0
    %9047 = vmatpush1.msra.mxu0 %v8993
    %9048 = vmatprep.subr.mxu0 0.0
    %9049 = vmatpush1.msra.mxu0 %v8994
    %9050 = vmatprep.subr.mxu0 0.0
    %9051 = vmatpush1.msra.mxu0 %v8995
    %9052 = vmatprep.subr.mxu0 0.0
    %9053 = vmatpush1.msra.mxu0 %v8996
    %9054 = vmatprep.subr.mxu0 0.0
    %9055 = vmatpush1.msra.mxu0 0.0
    %9056 = vmatprep.subr.mxu0 0.0
    %9057 = vmatpush1.msra.mxu0 0.0
    %9058 = vmatprep.subr.mxu0 0.0
    %9059 = vmatpush1.msra.mxu0 0.0
    %9060 = vmatprep.subr.mxu0 0.0
    %9061 = vmatpush1.msra.mxu0 0.0
    %9062 = vmatprep.subr.mxu0 0.0
    %9063 = vmatpush1.msra.mxu0 0.0
    %9064 = vmatprep.subr.mxu0 0.0
    %9065 = vmatpush1.msra.mxu0 0.0
    %9066 = vmatprep.subr.mxu0 0.0
    %9067 = vmatpush1.msra.mxu0 0.0
    %9068 = vmatprep.subr.mxu0 0.0
    %9069 = vmatpush1.msra.mxu0 0.0
    %9070 = vmatprep.subr.mxu0 0.0
    %9071 = vmatpush1.msra.mxu0 0.0
    %9072 = vmatprep.subr.mxu0 0.0
    %9073 = vmatpush1.msra.mxu0 0.0
    %9074 = vmatprep.subr.mxu0 0.0
    %9075 = vmatpush1.msra.mxu0 0.0
    %9076 = vmatprep.subr.mxu0 0.0
    %9077 = vmatpush1.msra.mxu0 0.0
    %9078 = vmatprep.subr.mxu0 0.0
    %9079 = vmatpush1.msra.mxu0 0.0
    %9080 = vmatprep.subr.mxu0 0.0
    %9081 = vmatpush1.msra.mxu0 0.0
    %9082 = vmatprep.subr.mxu0 0.0
    %9083 = vmatpush1.msra.mxu0 0.0
    %9084 = vmatprep.subr.mxu0 0.0
    %9085 = vmatpush1.msra.mxu0 0.0
    %9086 = vmatprep.subr.mxu0 0.0
    %9087 = vmatpush1.msra.mxu0 0.0
    %9088 = vmatprep.subr.mxu0 0.0
    %9089 = vmatpush1.msra.mxu0 0.0
    %9090 = vmatprep.subr.mxu0 0.0
    %9091 = vmatpush1.msra.mxu0 0.0
    %9092 = vmatprep.subr.mxu0 0.0
    %9093 = vmatpush1.msra.mxu0 0.0
    %9094 = vmatprep.subr.mxu0 0.0
    %9095 = vmatpush1.msra.mxu0 0.0
    %9096 = vmatprep.subr.mxu0 0.0
    %9097 = vmatpush1.msra.mxu0 0.0
    %9098 = vmatprep.subr.mxu0 0.0
    %9099 = vmatpush1.msra.mxu0 0.0
    %9100 = vmatprep.subr.mxu0 0.0
    %9101 = vmatpush1.msra.mxu0 0.0
    %9102 = vmatprep.subr.mxu0 0.0
    %9103 = vmatpush1.msra.mxu0 0.0
    %9104 = vmatprep.subr.mxu0 0.0
    %9105 = vmatpush1.msra.mxu0 0.0
    %9106 = vmatprep.subr.mxu0 0.0
    %9107 = vmatpush1.msra.mxu0 0.0
    %9108 = vmatprep.subr.mxu0 0.0
    %9109 = vmatpush1.msra.mxu0 0.0
    %9110 = vmatprep.mubr.f32.mxu0 0.0
    %9111 = vmatmul.mubr.f32.gmra.mrb[0].mxu0 %v9044
    %v9112 = vpop.f32.mrb[0].mxu0
    %v9113 = vadd.f32 %v9002, %v9112
    %v9114 = vpop.f32.mrb[0].mxu0
    %9115 = vdwg.mxu0
    %v9116 = vmax.f32 %v9113, 0.0
    %v9117 = vld [vmem:[%s18] sm:$0xff]
    %v9118 = vld [vmem:[%s18 + $0x8] sm:$0xff]
    %v9119 = vld [vmem:[%s18 + $0x10] sm:$0xff]
    %v9120 = vld [vmem:[%s18 + $0x18] sm:$0xff]
    %v9121 = vld [vmem:[%s18 + $0x20] sm:$0xff]
    %v9122 = vld [vmem:[%s18 + $0x28] sm:$0xff]
    %v9123 = vld [vmem:[%s18 + $0x30] sm:$0xff]
    %v9124 = vld [vmem:[%s18 + $0x38] sm:$0xff]
    %v9125 = vld [vmem:[%s18 + $0x40] sm:$0xff]
    %v9126 = vld [vmem:[%s18 + $0x48] sm:$0xff]
    %v9127 = vld [vmem:[%s18 + $0x50] sm:$0xff]
    %v9128 = vld [vmem:[%s18 + $0x58] sm:$0xff]
    %v9129 = vld [vmem:[%s18 + $0x60] sm:$0xff]
    %v9130 = vld [vmem:[%s18 + $0x68] sm:$0xff]
    %v9131 = vld [vmem:[%s18 + $0x70] sm:$0xff]
    %v9132 = vld [vmem:[%s18 + $0x78] sm:$0xff]
    %v9133 = vld [vmem:[#allocation20] sm:$0x1]
    %v9135 = vlaneseq
    %v9136 = vshrl.u32 %v9135, 7
    %v9137 = vsub.s32 0, %v9136
    %v9138 = vrot.slane %v9133, %v9137
    %9140 = vmatprep.subr.mxu0 0.0
    %9141 = vmatpush1.msra.mxu0 %v9117
    %9142 = vmatprep.subr.mxu0 0.0
    %9143 = vmatpush1.msra.mxu0 %v9118
    %9144 = vmatprep.subr.mxu0 0.0
    %9145 = vmatpush1.msra.mxu0 %v9119
    %9146 = vmatprep.subr.mxu0 0.0
    %9147 = vmatpush1.msra.mxu0 %v9120
    %9148 = vmatprep.subr.mxu0 0.0
    %9149 = vmatpush1.msra.mxu0 %v9121
    %9150 = vmatprep.subr.mxu0 0.0
    %9151 = vmatpush1.msra.mxu0 %v9122
    %9152 = vmatprep.subr.mxu0 0.0
    %9153 = vmatpush1.msra.mxu0 %v9123
    %9154 = vmatprep.subr.mxu0 0.0
    %9155 = vmatpush1.msra.mxu0 %v9124
    %9156 = vmatprep.subr.mxu0 0.0
    %9157 = vmatpush1.msra.mxu0 %v9125
    %9158 = vmatprep.subr.mxu0 0.0
    %9159 = vmatpush1.msra.mxu0 %v9126
    %9160 = vmatprep.subr.mxu0 0.0
    %9161 = vmatpush1.msra.mxu0 %v9127
    %9162 = vmatprep.subr.mxu0 0.0
    %9163 = vmatpush1.msra.mxu0 %v9128
    %9164 = vmatprep.subr.mxu0 0.0
    %9165 = vmatpush1.msra.mxu0 %v9129
    %9166 = vmatprep.subr.mxu0 0.0
    %9167 = vmatpush1.msra.mxu0 %v9130
    %9168 = vmatprep.subr.mxu0 0.0
    %9169 = vmatpush1.msra.mxu0 %v9131
    %9170 = vmatprep.subr.mxu0 0.0
    %9171 = vmatpush1.msra.mxu0 %v9132
    %9172 = vmatprep.subr.mxu0 0.0
    %9173 = vmatpush1.msra.mxu0 0.0
    %9174 = vmatprep.subr.mxu0 0.0
    %9175 = vmatpush1.msra.mxu0 0.0
    %9176 = vmatprep.subr.mxu0 0.0
    %9177 = vmatpush1.msra.mxu0 0.0
    %9178 = vmatprep.subr.mxu0 0.0
    %9179 = vmatpush1.msra.mxu0 0.0
    %9180 = vmatprep.subr.mxu0 0.0
    %9181 = vmatpush1.msra.mxu0 0.0
    %9182 = vmatprep.subr.mxu0 0.0
    %9183 = vmatpush1.msra.mxu0 0.0
    %9184 = vmatprep.subr.mxu0 0.0
    %9185 = vmatpush1.msra.mxu0 0.0
    %9186 = vmatprep.subr.mxu0 0.0
    %9187 = vmatpush1.msra.mxu0 0.0
    %9188 = vmatprep.subr.mxu0 0.0
    %9189 = vmatpush1.msra.mxu0 0.0
    %9190 = vmatprep.subr.mxu0 0.0
    %9191 = vmatpush1.msra.mxu0 0.0
    %9192 = vmatprep.subr.mxu0 0.0
    %9193 = vmatpush1.msra.mxu0 0.0
    %9194 = vmatprep.subr.mxu0 0.0
    %9195 = vmatpush1.msra.mxu0 0.0
    %9196 = vmatprep.subr.mxu0 0.0
    %9197 = vmatpush1.msra.mxu0 0.0
    %9198 = vmatprep.subr.mxu0 0.0
    %9199 = vmatpush1.msra.mxu0 0.0
    %9200 = vmatprep.subr.mxu0 0.0
    %9201 = vmatpush1.msra.mxu0 0.0
    %9202 = vmatprep.subr.mxu0 0.0
    %9203 = vmatpush1.msra.mxu0 0.0
    %9204 = vmatprep.mubr.f32.mxu0 0.0
    %9205 = vmatmul.mubr.f32.gmra.mrb[0].mxu0 %v9116
    %v9206 = vpop.f32.mrb[0].mxu0
    %v9207 = vadd.f32 %v9138, %v9206
    %v9208 = vpop.f32.mrb[0].mxu0
    %9209 = vdwg.mxu0
    %v9211 = vcombine.high %v9207, %v9207
    %v9213 = vunpack.c.l.s4 1966171168
    %v9214 = vunpack.c.0.s8 %v9213
    %v9215 = vlaneseq
    %v9216 = vshrl.u32 %v9215, 7
    %v9217 = vsub.s32 %v9214, %v9216
    %v9218 = vrot.slane %v9207, %v9217
    %v9220 = vunpack.c.l.s4 1966171168
    %v9221 = vunpack.c.0.s8 %v9220
    %v9222 = vlaneseq
    %v9223 = vshrl.u32 %v9222, 7
    %v9224 = vsub.s32 %v9221, %v9223
    %v9225 = vrot.slane %v9211, %v9224
    %v9226 = vcombine.high %v9218, %v9218
    %v9227 = vcombine.high %v9225, %v9225
    %v9229 = vunpack.c.l.s4 1966171168
    %v9230 = vunpack.c.0.s8 %v9229
    %v9231 = vlaneseq
    %v9232 = vshrl.u32 %v9231, 7
    %v9233 = vsub.s32 %v9230, %v9232
    %v9234 = vrot.slane %v9218, %v9233
    %v9236 = vunpack.c.l.s4 1966171168
    %v9237 = vunpack.c.0.s8 %v9236
    %v9238 = vlaneseq
    %v9239 = vshrl.u32 %v9238, 7
    %v9240 = vsub.s32 %v9237, %v9239
    %v9241 = vrot.slane %v9225, %v9240
    %v9243 = vunpack.c.l.s4 1966171168
    %v9244 = vunpack.c.0.s8 %v9243
    %v9245 = vlaneseq
    %v9246 = vshrl.u32 %v9245, 7
    %v9247 = vsub.s32 %v9244, %v9246
    %v9248 = vrot.slane %v9226, %v9247
    %v9250 = vunpack.c.l.s4 1966171168
    %v9251 = vunpack.c.0.s8 %v9250
    %v9252 = vlaneseq
    %v9253 = vshrl.u32 %v9252, 7
    %v9254 = vsub.s32 %v9251, %v9253
    %v9255 = vrot.slane %v9227, %v9254
    %v9256 = vcombine.high %v9234, %v9234
    %v9257 = vcombine.high %v9248, %v9248
    %v9258 = vcombine.low %v9234, %v9248
    %v9260 = vunpack.c.l.s4 1966171168
    %v9261 = vunpack.c.0.s8 %v9260
    %v9262 = vlaneseq
    %v9263 = vshrl.u32 %v9262, 7
    %v9264 = vsub.s32 %v9261, %v9263
    %v9265 = vrot.slane %v9258, %v9264
    %v9267 = vunpack.c.l.s4 1966171168
    %v9268 = vunpack.c.0.s8 %v9267
    %v9269 = vlaneseq
    %v9270 = vshrl.u32 %v9269, 7
    %v9271 = vsub.s32 %v9268, %v9270
    %v9272 = vrot.slane %v9256, %v9271
    %v9273 = vcombine.low %v9265, %v9272
    %v9275 = vunpack.c.l.s4 1966171168
    %v9276 = vunpack.c.0.s8 %v9275
    %v9277 = vlaneseq
    %v9278 = vshrl.u32 %v9277, 7
    %v9279 = vsub.s32 %v9276, %v9278
    %v9280 = vrot.slane %v9273, %v9279
    %v9281 = vcombine.low %v9257, %v9241
    %v9283 = vunpack.c.l.s4 1966171168
    %v9284 = vunpack.c.0.s8 %v9283
    %v9285 = vlaneseq
    %v9286 = vshrl.u32 %v9285, 7
    %v9287 = vsub.s32 %v9284, %v9286
    %v9288 = vrot.slane %v9281, %v9287
    %v9290 = vunpack.c.l.s4 1966171168
    %v9291 = vunpack.c.0.s8 %v9290
    %v9292 = vlaneseq
    %v9293 = vshrl.u32 %v9292, 7
    %v9294 = vsub.s32 %v9291, %v9293
    %v9295 = vrot.slane %v9255, %v9294
    %v9296 = vcombine.low %v9288, %v9295
    %v9298 = vunpack.c.l.s4 1966171168
    %v9299 = vunpack.c.0.s8 %v9298
    %v9300 = vlaneseq
    %v9301 = vshrl.u32 %v9300, 7
    %v9302 = vsub.s32 %v9299, %v9301
    %v9303 = vrot.slane %v9296, %v9302
    %v9306 = vadd.f32 %v8895, %v9280
    %v9307 = vadd.f32 %v8896, %v9303
    %v9308 = vsel %vm4273, %v9306, 0.0
    %v9309 = vrot.slane %v9308, 4
    %v9310 = vadd.f32 %v9308, %v9309
    %v9311 = vrot.slane %v9310, 2
    %v9312 = vadd.f32 %v9310, %v9311
    %v9313 = vrot.slane %v9312, 1
    %v9314 = vadd.f32 %v9312, %v9313
    %v9315 = vsel %vm4273, %v9307, 0.0
    %v9316 = vrot.slane %v9315, 4
    %v9317 = vadd.f32 %v9315, %v9316
    %v9318 = vrot.slane %v9317, 2
    %v9319 = vadd.f32 %v9317, %v9318
    %v9320 = vrot.slane %v9319, 1
    %v9321 = vadd.f32 %v9319, %v9320
    %v9322 = vrcp.pop 3.0
    %v9323 = vmul.f32 %v9314, %v9322
    %v9324 = vmul.f32 %v9321, %v9322
    %v9325 = vld [vmem:[%s20] sm:$0xff]
    %v9326 = vld [vmem:[%s20 + $0x8] sm:$0xff]
    %v9327 = vld [vmem:[%s20 + $0x10] sm:$0xff]
    %v9328 = vld [vmem:[%s20 + $0x18] sm:$0xff]
    %v9329 = vld [vmem:[#allocation22] sm:$0x1]
    %v9331 = vlaneseq
    %v9332 = vshrl.u32 %v9331, 7
    %v9333 = vsub.s32 0, %v9332
    %v9334 = vrot.slane %v9329, %v9333
    %vm9338 = vcmask 1041409
    %v9339 = vsel %vm9338, %v9324, %v9323
    %v9340 = vsel %vm395, %v9339, 0
    %9342 = vmatprep.subr.mxu0 0.0
    %9343 = vmatpush1.msra.mxu0 %v9325
    %9344 = vmatprep.subr.mxu0 0.0
    %9345 = vmatpush1.msra.mxu0 %v9326
    %9346 = vmatprep.subr.mxu0 0.0
    %9347 = vmatpush1.msra.mxu0 %v9327
    %9348 = vmatprep.subr.mxu0 0.0
    %9349 = vmatpush1.msra.mxu0 %v9328
    %9350 = vmatprep.subr.mxu0 0.0
    %9351 = vmatpush1.msra.mxu0 0.0
    %9352 = vmatprep.subr.mxu0 0.0
    %9353 = vmatpush1.msra.mxu0 0.0
    %9354 = vmatprep.subr.mxu0 0.0
    %9355 = vmatpush1.msra.mxu0 0.0
    %9356 = vmatprep.subr.mxu0 0.0
    %9357 = vmatpush1.msra.mxu0 0.0
    %9358 = vmatprep.subr.mxu0 0.0
    %9359 = vmatpush1.msra.mxu0 0.0
    %9360 = vmatprep.subr.mxu0 0.0
    %9361 = vmatpush1.msra.mxu0 0.0
    %9362 = vmatprep.subr.mxu0 0.0
    %9363 = vmatpush1.msra.mxu0 0.0
    %9364 = vmatprep.subr.mxu0 0.0
    %9365 = vmatpush1.msra.mxu0 0.0
    %9366 = vmatprep.subr.mxu0 0.0
    %9367 = vmatpush1.msra.mxu0 0.0
    %9368 = vmatprep.subr.mxu0 0.0
    %9369 = vmatpush1.msra.mxu0 0.0
    %9370 = vmatprep.subr.mxu0 0.0
    %9371 = vmatpush1.msra.mxu0 0.0
    %9372 = vmatprep.subr.mxu0 0.0
    %9373 = vmatpush1.msra.mxu0 0.0
    %9374 = vmatprep.subr.mxu0 0.0
    %9375 = vmatpush1.msra.mxu0 0.0
    %9376 = vmatprep.subr.mxu0 0.0
    %9377 = vmatpush1.msra.mxu0 0.0
    %9378 = vmatprep.subr.mxu0 0.0
    %9379 = vmatpush1.msra.mxu0 0.0
    %9380 = vmatprep.subr.mxu0 0.0
    %9381 = vmatpush1.msra.mxu0 0.0
    %9382 = vmatprep.subr.mxu0 0.0
    %9383 = vmatpush1.msra.mxu0 0.0
    %9384 = vmatprep.subr.mxu0 0.0
    %9385 = vmatpush1.msra.mxu0 0.0
    %9386 = vmatprep.subr.mxu0 0.0
    %9387 = vmatpush1.msra.mxu0 0.0
    %9388 = vmatprep.subr.mxu0 0.0
    %9389 = vmatpush1.msra.mxu0 0.0
    %9390 = vmatprep.subr.mxu0 0.0
    %9391 = vmatpush1.msra.mxu0 0.0
    %9392 = vmatprep.subr.mxu0 0.0
    %9393 = vmatpush1.msra.mxu0 0.0
    %9394 = vmatprep.subr.mxu0 0.0
    %9395 = vmatpush1.msra.mxu0 0.0
    %9396 = vmatprep.subr.mxu0 0.0
    %9397 = vmatpush1.msra.mxu0 0.0
    %9398 = vmatprep.subr.mxu0 0.0
    %9399 = vmatpush1.msra.mxu0 0.0
    %9400 = vmatprep.subr.mxu0 0.0
    %9401 = vmatpush1.msra.mxu0 0.0
    %9402 = vmatprep.subr.mxu0 0.0
    %9403 = vmatpush1.msra.mxu0 0.0
    %9404 = vmatprep.subr.mxu0 0.0
    %9405 = vmatpush1.msra.mxu0 0.0
    %9406 = vmatprep.mubr.f32.mxu0 0.0
    %9407 = vmatmul.mubr.f32.gmra.mrb[0].mxu0 %v9340
    %v9408 = vpop.f32.mrb[0].mxu0
    %v9409 = vadd.f32 %v9334, %v9408
    %v9410 = vpop.f32.mrb[0].mxu0
    %9411 = vdwg.mxu0
    %vm9412 = vcmask 33792
    %9413 = vst.msk [vmem:[#allocation25] sm:$0x3] %vm9412, %v9409
    // Predicated region
    $region150: #{gtn3d_forward.1} parent=1 // pred_check
      _
    $region151: #{gtn3d_forward.1} parent=1 // pred_check_branch
      %9415 = sbr.rel (0) target = $region153
    $region152: #{gtn3d_forward.1} parent=1 // pred_region
      %s9417 = ssub.s32 32, 32
      %9418 = vsyncadd [#allocation4], %s9417
      %s9420 = sshll.u32 [#allocation25], 4
      %s9421 = int_to_ptr.vmem [resolvable:$true] %s9420
      %9423 = dma.vmem_to_hbm [thread:$0]  %s9421, 32, %s23, [#allocation4]
    $region153: #{gtn3d_forward.1} parent=1 // pred_fallthru
      _
    // Predicated region
    $region154: #{gtn3d_forward.1} parent=1 // pred_check
      _
    $region155: #{gtn3d_forward.1} parent=1 // pred_check_branch
      %9425 = sbr.rel (0) target = $region157
    $region156: #{gtn3d_forward.1} parent=1 // pred_region
      %9426 = dma.done [#allocation4], 32
    $region157: #{gtn3d_forward.1} parent=1 // pred_fallthru
      _
    %9427 = vsyncpa [#allocation3], 1
    %9428 = vsyncpa [#allocation6], 1
    %9429 = vsyncpa [#allocation9], 1
    %9430 = vsyncpa [#allocation12], 1
    %9431 = vsyncpa [#allocation15], 1
    %9432 = vsyncpa [#allocation18], 1
    %9433 = vsyncpa [#allocation21], 1
    %9434 = vsyncpa [#allocation24], 1
    %9435 = vsyncpa [#allocation4], 1

</llo_original>
